<compile_context>
chip_gen: v7x
topology: tpu7x:2x2x1
jax: 0.10.0
libtpu: 0.0.40
codegen_flags: <defaults>
</compile_context>

<pallas_src>
import jax
import jax.numpy as jnp
from jax import lax
from jax.experimental import pallas as pl
from jax.experimental.pallas import tpu as pltpu


# ---------------------------------------------------------------------------
# Fused kernel
# ---------------------------------------------------------------------------

def _fire_body(x_in, sq_w_ref, sq_v_ref, dw_ref, wc_ref, ev_ref, pad_ref, masks,
               *, H, W, PT, residual):
    """One Fire block on resident (H*W, Cin) rows; returns (H*W, Cout) rows."""
    f32 = jnp.float32
    HW = H * W
    S = sq_w_ref.shape[1]
    PROWS = pad_ref.shape[0]

    # --- squeeze: 1x1 conv (+bias) -> ReLU -> BN (folded scale/shift) -------------------
    sv = sq_v_ref[...]                                            # (3, S): bias/scale/shift
    s = jnp.dot(x_in, sq_w_ref[...], preferred_element_type=f32) + sv[0:1, :]
    s = jnp.maximum(s, 0.0) * sv[1:2, :] + sv[2:3, :]             # (HW, S)

    # --- mixed depthwise conv: one zero-padded 7x7 tap table over full squeeze width ----
    # `s` goes once into a vertically zero-padded flat scratch; every tap is then a
    # contiguous sublane-offset window; horizontal halo is handled by per-kw column masks.
    pad_ref[0:PT, :] = jnp.zeros((PT, S), f32)                    # top zero border
    pad_ref[PT:PT + HW, :] = s                                    # interior (single store)
    pad_ref[PT + HW:PROWS, :] = jnp.zeros((PROWS - PT - HW, S), f32)  # bottom zero border

    wt = dw_ref[...]                                              # (49, S) tap table
    acc = None
    for kw in range(7):
        t = None
        for kh in range(7):
            off = PT + (kh - 3) * W + (kw - 3)
            tap = kh * 7 + kw
            term = pad_ref[off:off + HW, :] * wt[tap:tap + 1, :]
            t = term if t is None else t + term
        if kw != 3:                       # zero contributions that crossed a row edge
            t = t * masks[:, kw:kw + 1]
        acc = t if acc is None else acc + t
    d = acc                                                       # (HW, S), no extra scratch

    # --- expand1x1 + expand-pointwise as ONE MXU dot (K = 2S) ---------------------------
    # channel_shuffle(groups=2) and the concat are pre-folded into the combined weight.
    ev = ev_ref[...]                                              # (3, Cout): bias/scale/shift
    sd = jnp.concatenate([s, d], axis=-1)                         # (HW, 2S)
    y = jnp.dot(sd, wc_ref[...], preferred_element_type=f32) + ev[0:1, :]
    y = jnp.maximum(y, 0.0) * ev[1:2, :] + ev[2:3, :]
    if residual:
        y = y + x_in
    return y


def _make_resblock_kernel(H, W, first, residuals, PT):
    HW = H * W

    def kernel(*refs):
        # refs: x, masks, [bc_w, bc_v]?, (sq_w, sq_v, dw, wc, ev) x3, o_ref, pad x3
        pads = refs[-3:]
        o_ref = refs[-4]
        x_ref, m_ref = refs[0], refs[1]
        idx = 2
        if not first:
            bc_w_ref, bc_v_ref = refs[2], refs[3]
            idx = 4
        fire_refs = [refs[idx + 5 * i: idx + 5 * i + 5] for i in range(3)]

        x_rows = x_ref[...].T                 # (HW, Cin): NCHW->row layout folded in-kernel
        masks = m_ref[...]                    # (HW, 7) horizontal-halo validity masks
        cur = x_rows

        if not first:
            # BasicConv: 1x1 conv (no bias) -> BN -> ReLU
            bv = bc_v_ref[...]
            cur = jnp.dot(cur, bc_w_ref[...], preferred_element_type=jnp.float32)
            cur = jnp.maximum(cur * bv[0:1, :] + bv[1:2, :], 0.0)

        for i in range(3):
            cur = _fire_body(cur, *fire_refs[i], pads[i], masks,
                             H=H, W=W, PT=PT, residual=bool(residuals[i]))

        if first:
            o_ref[...] = cur                              # (HW, 256) lane-dense store
        else:
            cc = cur.shape[1]
            o_ref[:, 0:cc] = cur                          # fire-chain half
            o_ref[:, cc:] = x_rows                        # fused passthrough concat(x)
    return kernel


# ---------------------------------------------------------------------------
# Wrapper: one pallas_call per resblock (NCHW in / NCHW out)
# ---------------------------------------------------------------------------

def resblock_forward_pallas(x_nchw, p, pfl, first):
    N, C, H, W = x_nchw.shape
    HW = H * W
    PT = ((3 * W + 3 + 7) // 8) * 8           # sublane-aligned vertical halo (>= 3W+3)
    PROWS = 2 * PT + HW

    # per-kw column masks (1 where the horizontal tap stays inside the image row)
    w_idx = jnp.arange(HW, dtype=jnp.int32) % W
    kw_off = jnp.arange(7, dtype=jnp.int32) - 3
    masks = ((w_idx[:, None] + kw_off[None, :] >= 0) &
             (w_idx[:, None] + kw_off[None, :] < W)).astype(jnp.float32)   # (HW, 7)

    x3 = x_nchw.reshape(N, C, HW).astype(jnp.float32)   # free reshape, no XLA transpose

    args = [x3, masks]
    if not first:
        args += [pfl["bc_w"], pfl["bc_v"]]
    for f in pfl["fires"]:
        args += [f["sq_w"], f["sq_v"], f["dw"], f["wc"], f["ev"]]

    c_chain = pfl["fires"][-1]["wc"].shape[1]
    c_out = c_chain if first else c_chain + C

    in_specs = [pl.BlockSpec((None, C, HW), lambda n: (n, 0, 0))]
    in_specs += [pl.BlockSpec(a.shape, lambda n: (0, 0)) for a in args[1:]]

    s_list = [f["sq_w"].shape[1] for f in pfl["fires"]]
    kernel = _make_resblock_kernel(H, W, first, p["residuals"], PT)

    flops = 0
    for f in pfl["fires"]:
        cin, s = f["sq_w"].shape
        two_s, cout = f["wc"].shape
        flops += 2 * HW * (cin * s + two_s * cout) + 2 * HW * 49 * s
    if not first:
        flops += 2 * HW * pfl["bc_w"].shape[0] * pfl["bc_w"].shape[1]
    flops *= N
    bytes_accessed = sum(int(a.size) * 4 for a in args) + N * HW * c_out * 4

    out = pl.pallas_call(
        kernel,
        out_shape=jax.ShapeDtypeStruct((N, HW, c_out), jnp.float32),
        grid=(N,),
        in_specs=in_specs,
        out_specs=pl.BlockSpec((None, HW, c_out), lambda n: (n, 0, 0)),
        scratch_shapes=[pltpu.VMEM((PROWS, s), jnp.float32) for s in s_list],
        compiler_params=pltpu.CompilerParams(dimension_semantics=("parallel",)),
        cost_estimate=pl.CostEstimate(flops=flops, transcendentals=0,
                                      bytes_accessed=bytes_accessed),
    )(*args)

    # back to NCHW (single small XLA transpose; kernel output kept lane-dense)
    return jnp.transpose(out, (0, 2, 1)).reshape(N, c_out, H, W)


# ---------------------------------------------------------------------------
# Pure-JAX reference (mirrors the PyTorch op-by-op structure; used for checking)
# ---------------------------------------------------------------------------

def _channel_shuffle_last(y, groups):
    N, H, W, C = y.shape
    return y.reshape(N, H, W, groups, C // groups).swapaxes(-1, -2).reshape(N, H, W, C)


def fire_forward_ref(x, fp, residual):
    if residual:
        identity = x
    s = jnp.einsum("nhwc,cd->nhwd", x, fp["sq_w"]) + fp["sq_b"]
    s = jnp.maximum(s, 0.0) * fp["sq_scale"] + fp["sq_shift"]
    e1 = jnp.einsum("nhwc,cd->nhwd", s, fp["e1_w"]) + fp["e1_b"]
    e1 = jnp.maximum(e1, 0.0) * fp["e1_scale"] + fp["e1_shift"]
    parts, c0 = [], 0
    for w_dw, k in zip(fp["dw_ws"], fp["kernels"]):
        ci = w_dw.shape[1]
        wf = w_dw.reshape(k, k, 1, ci)
        parts.append(lax.conv_general_dilated(
            s[..., c0:c0 + ci], wf, (1, 1),
            [(k // 2, k // 2), (k // 2, k // 2)],
            dimension_numbers=("NHWC", "HWIO", "NHWC"),
            feature_group_count=ci))
        c0 += ci
    d = jnp.concatenate(parts, axis=-1)   # per-split channel_shuffle(groups=ci) is identity
    e3 = jnp.einsum("nhwc,cd->nhwd", d, fp["pt_w"]) + fp["pt_b"]
    e3 = jnp.maximum(e3, 0.0) * fp["e3_scale"] + fp["e3_shift"]
    y = _channel_shuffle_last(jnp.concatenate([e1, e3], axis=-1), 2)
    if residual:
        y = y + identity
    return y


def resblock_forward_ref(x_nchw, p, first):
    x = jnp.transpose(x_nchw, (0, 2, 3, 1)).astype(jnp.float32)
    if first:
        y = x
        for fp, r in zip(p["fires"], p["residuals"]):
            y = fire_forward_ref(y, fp, r)
        out = y
    else:
        x1 = jnp.einsum("nhwc,cd->nhwd", x, p["bc_w"])
        x1 = jnp.maximum(x1 * p["bc_scale"] + p["bc_shift"], 0.0)
        for fp, r in zip(p["fires"], p["residuals"]):
            x1 = fire_forward_ref(x1, fp, r)
        out = jnp.concatenate([x1, x], axis=-1)
    return jnp.transpose(out, (0, 3, 1, 2))


# ---------------------------------------------------------------------------
# Deterministic parameter init (reference form) + fusion into Pallas form
# ---------------------------------------------------------------------------

def _split_channels(c, g):
    sc = [c // g for _ in range(g)]
    sc[0] += c - sum(sc)
    return sc


def _init_bn(key, c):
    k1, k2, k3, k4 = jax.random.split(key, 4)
    gamma = 1.0 + 0.1 * jax.random.normal(k1, (c,), jnp.float32)
    beta = 0.1 * jax.random.normal(k2, (c,), jnp.float32)
    mean = 0.1 * jax.random.normal(k3, (c,), jnp.float32)
    var = 1.0 + 0.1 * jax.random.uniform(k4, (c,), jnp.float32)
    eps = 1e-5
    scale = gamma / jnp.sqrt(var + eps)
    shift = beta - mean * scale
    return scale, shift


def _init_fire(key, inplanes, s, e1, e3, kernels):
    ks = jax.random.split(key, 10)
    p = {"kernels": tuple(kernels)}
    p["sq_w"] = 0.1 * jax.random.normal(ks[0], (inplanes, s), jnp.float32)
    p["sq_b"] = 0.1 * jax.random.normal(ks[1], (s,), jnp.float32)
    p["sq_scale"], p["sq_shift"] = _init_bn(ks[2], s)
    p["e1_w"] = 0.1 * jax.random.normal(ks[3], (s, e1), jnp.float32)
    p["e1_b"] = 0.1 * jax.random.normal(ks[4], (e1,), jnp.float32)
    p["e1_scale"], p["e1_shift"] = _init_bn(ks[5], e1)
    splits = _split_channels(s, len(kernels))
    p["dw_ws"] = [0.1 * jax.random.normal(jax.random.fold_in(ks[6], i),
                                          (k * k, ci), jnp.float32)
                  for i, (ci, k) in enumerate(zip(splits, kernels))]
    p["pt_w"] = 0.1 * jax.random.normal(ks[7], (s, e3), jnp.float32)
    p["pt_b"] = 0.1 * jax.random.normal(ks[8], (e3,), jnp.float32)
    p["e3_scale"], p["e3_shift"] = _init_bn(ks[9], e3)
    return p


def init_resblock(key, first):
    p = {"residuals": [0, 1, 0]}
    if first:
        ks = jax.random.split(key, 3)
        p["fires"] = [_init_fire(ks[0], 96, 16, 64, 64, [3, 5, 7]),
                      _init_fire(ks[1], 128, 16, 64, 64, [3, 5, 7]),
                      _init_fire(ks[2], 128, 32, 128, 128, [3, 5, 7])]
    else:
        ks = jax.random.split(key, 5)
        p["bc_w"] = 0.1 * jax.random.normal(ks[0], (96, 48), jnp.float32)
        p["bc_scale"], p["bc_shift"] = _init_bn(ks[1], 48)
        p["fires"] = [_init_fire(ks[2], 48, 8, 32, 32, [3, 5, 7]),
                      _init_fire(ks[3], 64, 8, 32, 32, [3, 5, 7]),
                      _init_fire(ks[4], 64, 16, 80, 80, [3, 5, 7])]
    return p


def _interleave_vec(a, b):
    # out[2i] = a[i], out[2i+1] = b[i]   (channel_shuffle(groups=2) folded)
    return jnp.stack([a, b], axis=-1).reshape(-1)


def _fuse_fire(fp):
    """Derive the fused-kernel parameter set from the reference-form parameters."""
    S = fp["sq_w"].shape[1]
    E = fp["e1_w"].shape[1]
    assert fp["pt_w"].shape[1] == E
    # unified 7x7 depthwise tap table: 3x3 / 5x5 kernels zero-embedded at the center
    tab = jnp.zeros((49, S), jnp.float32)
    c0 = 0
    for w_dw, k in zip(fp["dw_ws"], fp["kernels"]):
        ci = w_dw.shape[1]
        off = (7 - k) // 2
        blk = jnp.zeros((7, 7, ci), jnp.float32)
        blk = blk.at[off:off + k, off:off + k, :].set(w_dw.reshape(k, k, ci))
        tab = tab.at[:, c0:c0 + ci].set(blk.reshape(49, ci))
        c0 += ci
    # combined expand weight (2S, 2E): rows [0:S] act on s (expand1x1 -> even columns),
    # rows [S:2S] act on d (pointwise -> odd columns); channel_shuffle(2) folded in.
    wc = jnp.zeros((2 * S, 2 * E), jnp.float32)
    wc = wc.at[:S, 0::2].set(fp["e1_w"])
    wc = wc.at[S:, 1::2].set(fp["pt_w"])
    sq_v = jnp.stack([fp["sq_b"], fp["sq_scale"], fp["sq_shift"]], axis=0)       # (3, S)
    ev = jnp.stack([_interleave_vec(fp["e1_b"], fp["pt_b"]),
                    _interleave_vec(fp["e1_scale"], fp["e3_scale"]),
                    _interleave_vec(fp["e1_shift"], fp["e3_shift"])], axis=0)    # (3, 2E)
    return {"sq_w": fp["sq_w"], "sq_v": sq_v, "dw": tab, "wc": wc, "ev": ev}


def fuse_resblock(p, first):
    for fp, r in zip(p["fires"], p["residuals"]):
        if r:
            assert fp["sq_w"].shape[0] == fp["e1_w"].shape[1] + fp["pt_w"].shape[1], \
                "residual Fire requires inplanes == expand1x1 + expand3x3 planes"
    pfl = {"fires": [_fuse_fire(fp) for fp in p["fires"]]}
    if not first:
        pfl["bc_w"] = p["bc_w"]
        pfl["bc_v"] = jnp.stack([p["bc_scale"], p["bc_shift"]], axis=0)          # (2, 48)
    return pfl


# ---------------------------------------------------------------------------
# Main
# ---------------------------------------------------------------------------

if __name__ == "__main__":
    key = jax.random.PRNGKey(0)
    kx, kp = jax.random.split(key)
    # Fire-block channel sizes are hard-coded in the module -> input must have 96 channels.
    x = jax.random.normal(kx, (2, 96, 8, 8), jnp.float32)  # NCHW, as in PyTorch

    for first in (False, True):
        params = init_resblock(jax.random.fold_in(kp, int(first)), first)
        fused = fuse_resblock(params, first)
        out = jax.block_until_ready(resblock_forward_pallas(x, params, fused, first))
        ref = resblock_forward_ref(x, params, first)
        assert out.shape == (2, 256, 8, 8), out.shape
        assert out.shape == ref.shape
        max_err = float(jnp.max(jnp.abs(out - ref)))
        assert max_err < 1e-3, f"first={first}: max abs err {max_err}"

    print("KERNEL_OK")
</pallas_src>

<mosaic_0001>
module attributes {stable_mosaic.version = 11 : i64} {
  func.func @kernel(%arg0: i32, %arg1: memref<1x96x64xf32, #tpu.memory_space<vmem>>, %arg2: memref<64x7xf32, #tpu.memory_space<vmem>>, %arg3: memref<96x48xf32, #tpu.memory_space<vmem>>, %arg4: memref<2x48xf32, #tpu.memory_space<vmem>>, %arg5: memref<48x8xf32, #tpu.memory_space<vmem>>, %arg6: memref<3x8xf32, #tpu.memory_space<vmem>>, %arg7: memref<49x8xf32, #tpu.memory_space<vmem>>, %arg8: memref<16x64xf32, #tpu.memory_space<vmem>>, %arg9: memref<3x64xf32, #tpu.memory_space<vmem>>, %arg10: memref<64x8xf32, #tpu.memory_space<vmem>>, %arg11: memref<3x8xf32, #tpu.memory_space<vmem>>, %arg12: memref<49x8xf32, #tpu.memory_space<vmem>>, %arg13: memref<16x64xf32, #tpu.memory_space<vmem>>, %arg14: memref<3x64xf32, #tpu.memory_space<vmem>>, %arg15: memref<64x16xf32, #tpu.memory_space<vmem>>, %arg16: memref<3x16xf32, #tpu.memory_space<vmem>>, %arg17: memref<49x16xf32, #tpu.memory_space<vmem>>, %arg18: memref<32x160xf32, #tpu.memory_space<vmem>>, %arg19: memref<3x160xf32, #tpu.memory_space<vmem>>, %arg20: memref<1x64x256xf32, #tpu.memory_space<vmem>>, %arg21: memref<128x8xf32, #tpu.memory_space<vmem>>, %arg22: memref<128x8xf32, #tpu.memory_space<vmem>>, %arg23: memref<128x16xf32, #tpu.memory_space<vmem>>) attributes {dimension_semantics = [#tpu.dimension_semantics<parallel>], iteration_bounds = array<i64: 2>, scalar_prefetch = 0 : i64, scratch_operands = 3 : i64, tpu.core_type = #tpu.core_type<tc>, window_params = [{transform_indices = @transform_0, window_bounds = array<i64: 1, 96, 64>}, {pipeline_mode = #tpu.pipeline_mode<synchronous>, transform_indices = @transform_1, window_bounds = array<i64: 64, 7>}, {pipeline_mode = #tpu.pipeline_mode<synchronous>, transform_indices = @transform_2, window_bounds = array<i64: 96, 48>}, {pipeline_mode = #tpu.pipeline_mode<synchronous>, transform_indices = @transform_3, window_bounds = array<i64: 2, 48>}, {pipeline_mode = #tpu.pipeline_mode<synchronous>, transform_indices = @transform_4, window_bounds = array<i64: 48, 8>}, {pipeline_mode = #tpu.pipeline_mode<synchronous>, transform_indices = @transform_5, window_bounds = array<i64: 3, 8>}, {pipeline_mode = #tpu.pipeline_mode<synchronous>, transform_indices = @transform_6, window_bounds = array<i64: 49, 8>}, {pipeline_mode = #tpu.pipeline_mode<synchronous>, transform_indices = @transform_7, window_bounds = array<i64: 16, 64>}, {pipeline_mode = #tpu.pipeline_mode<synchronous>, transform_indices = @transform_8, window_bounds = array<i64: 3, 64>}, {pipeline_mode = #tpu.pipeline_mode<synchronous>, transform_indices = @transform_9, window_bounds = array<i64: 64, 8>}, {pipeline_mode = #tpu.pipeline_mode<synchronous>, transform_indices = @transform_10, window_bounds = array<i64: 3, 8>}, {pipeline_mode = #tpu.pipeline_mode<synchronous>, transform_indices = @transform_11, window_bounds = array<i64: 49, 8>}, {pipeline_mode = #tpu.pipeline_mode<synchronous>, transform_indices = @transform_12, window_bounds = array<i64: 16, 64>}, {pipeline_mode = #tpu.pipeline_mode<synchronous>, transform_indices = @transform_13, window_bounds = array<i64: 3, 64>}, {pipeline_mode = #tpu.pipeline_mode<synchronous>, transform_indices = @transform_14, window_bounds = array<i64: 64, 16>}, {pipeline_mode = #tpu.pipeline_mode<synchronous>, transform_indices = @transform_15, window_bounds = array<i64: 3, 16>}, {pipeline_mode = #tpu.pipeline_mode<synchronous>, transform_indices = @transform_16, window_bounds = array<i64: 49, 16>}, {pipeline_mode = #tpu.pipeline_mode<synchronous>, transform_indices = @transform_17, window_bounds = array<i64: 32, 160>}, {pipeline_mode = #tpu.pipeline_mode<synchronous>, transform_indices = @transform_18, window_bounds = array<i64: 3, 160>}, {transform_indices = @transform_19, window_bounds = array<i64: 1, 64, 256>}]} {
    %c0 = arith.constant 0 : index
    %c0_0 = arith.constant 0 : index
    %c0_1 = arith.constant 0 : index
    %0 = vector.load %arg1[%c0, %c0_0, %c0_1] : memref<1x96x64xf32, #tpu.memory_space<vmem>>, vector<1x96x64xf32>
    %1 = vector.shape_cast %0 : vector<1x96x64xf32> to vector<96x64xf32>
    %2 = tpu.transpose %1, [1, 0] : vector<96x64xf32> -> vector<64x96xf32>
    %c0_2 = arith.constant 0 : index
    %c0_3 = arith.constant 0 : index
    %3 = vector.load %arg2[%c0_2, %c0_3] : memref<64x7xf32, #tpu.memory_space<vmem>>, vector<64x7xf32>
    %c0_4 = arith.constant 0 : index
    %c0_5 = arith.constant 0 : index
    %4 = vector.load %arg4[%c0_4, %c0_5] : memref<2x48xf32, #tpu.memory_space<vmem>>, vector<2x48xf32>
    %c0_6 = arith.constant 0 : index
    %c0_7 = arith.constant 0 : index
    %5 = vector.load %arg3[%c0_6, %c0_7] : memref<96x48xf32, #tpu.memory_space<vmem>>, vector<96x48xf32>
    %cst = arith.constant dense<0.000000e+00> : vector<64x48xf32>
    %6 = tpu.matmul %2, %5, %cst {dimension_numbers = #tpu.dot_dimension_numbers<[1], [0], [0], [1], [0, 0, 1, 1], [], []>} : vector<64x96xf32>, vector<96x48xf32>, vector<64x48xf32> -> vector<64x48xf32>
    %7 = vector.extract_strided_slice %4 {offsets = [0, 0], sizes = [1, 48], strides = [1, 1]} : vector<2x48xf32> to vector<1x48xf32>
    %8 = vector.broadcast %7 : vector<1x48xf32> to vector<64x48xf32>
    %9 = arith.mulf %6, %8 : vector<64x48xf32>
    %10 = vector.extract_strided_slice %4 {offsets = [1, 0], sizes = [1, 48], strides = [1, 1]} : vector<2x48xf32> to vector<1x48xf32>
    %11 = vector.broadcast %10 : vector<1x48xf32> to vector<64x48xf32>
    %12 = arith.addf %9, %11 : vector<64x48xf32>
    %cst_8 = arith.constant 0.000000e+00 : f32
    %13 = vector.broadcast %cst_8 : f32 to vector<64x48xf32>
    %14 = arith.maximumf %12, %13 : vector<64x48xf32>
    %c0_9 = arith.constant 0 : index
    %c0_10 = arith.constant 0 : index
    %15 = vector.load %arg6[%c0_9, %c0_10] : memref<3x8xf32, #tpu.memory_space<vmem>>, vector<3x8xf32>
    %c0_11 = arith.constant 0 : index
    %c0_12 = arith.constant 0 : index
    %16 = vector.load %arg5[%c0_11, %c0_12] : memref<48x8xf32, #tpu.memory_space<vmem>>, vector<48x8xf32>
    %cst_13 = arith.constant dense<0.000000e+00> : vector<64x8xf32>
    %17 = tpu.matmul %14, %16, %cst_13 {dimension_numbers = #tpu.dot_dimension_numbers<[1], [0], [0], [1], [0, 0, 1, 1], [], []>} : vector<64x48xf32>, vector<48x8xf32>, vector<64x8xf32> -> vector<64x8xf32>
    %18 = vector.extract_strided_slice %15 {offsets = [0, 0], sizes = [1, 8], strides = [1, 1]} : vector<3x8xf32> to vector<1x8xf32>
    %19 = vector.broadcast %18 : vector<1x8xf32> to vector<64x8xf32>
    %20 = arith.addf %17, %19 : vector<64x8xf32>
    %cst_14 = arith.constant 0.000000e+00 : f32
    %21 = vector.broadcast %cst_14 : f32 to vector<64x8xf32>
    %22 = arith.maximumf %20, %21 : vector<64x8xf32>
    %23 = vector.extract_strided_slice %15 {offsets = [1, 0], sizes = [1, 8], strides = [1, 1]} : vector<3x8xf32> to vector<1x8xf32>
    %24 = vector.broadcast %23 : vector<1x8xf32> to vector<64x8xf32>
    %25 = arith.mulf %22, %24 : vector<64x8xf32>
    %26 = vector.extract_strided_slice %15 {offsets = [2, 0], sizes = [1, 8], strides = [1, 1]} : vector<3x8xf32> to vector<1x8xf32>
    %27 = vector.broadcast %26 : vector<1x8xf32> to vector<64x8xf32>
    %28 = arith.addf %25, %27 : vector<64x8xf32>
    %cst_15 = arith.constant 0.000000e+00 : f32
    %29 = vector.broadcast %cst_15 : f32 to vector<32x8xf32>
    %c0_16 = arith.constant 0 : index
    %c0_17 = arith.constant 0 : index
    %30 = vector.load %arg21[%c0_16, %c0_17] : memref<128x8xf32, #tpu.memory_space<vmem>>, vector<32x8xf32>
    tpu.vector_store %arg21[%c0_16, %c0_17], %29 {strides = array<i32>} : memref<128x8xf32, #tpu.memory_space<vmem>>, vector<32x8xf32>,
    %c32 = arith.constant 32 : index
    %c0_18 = arith.constant 0 : index
    %31 = vector.load %arg21[%c32, %c0_18] : memref<128x8xf32, #tpu.memory_space<vmem>>, vector<64x8xf32>
    tpu.vector_store %arg21[%c32, %c0_18], %28 {strides = array<i32>} : memref<128x8xf32, #tpu.memory_space<vmem>>, vector<64x8xf32>,
    %cst_19 = arith.constant 0.000000e+00 : f32
    %32 = vector.broadcast %cst_19 : f32 to vector<32x8xf32>
    %c96 = arith.constant 96 : index
    %c0_20 = arith.constant 0 : index
    %33 = vector.load %arg21[%c96, %c0_20] : memref<128x8xf32, #tpu.memory_space<vmem>>, vector<32x8xf32>
    tpu.vector_store %arg21[%c96, %c0_20], %32 {strides = array<i32>} : memref<128x8xf32, #tpu.memory_space<vmem>>, vector<32x8xf32>,
    %c0_21 = arith.constant 0 : index
    %c0_22 = arith.constant 0 : index
    %34 = vector.load %arg7[%c0_21, %c0_22] : memref<49x8xf32, #tpu.memory_space<vmem>>, vector<49x8xf32>
    %c5 = arith.constant 5 : index
    %c0_23 = arith.constant 0 : index
    %35 = vector.load %arg21[%c5, %c0_23] : memref<128x8xf32, #tpu.memory_space<vmem>>, vector<64x8xf32>
    %36 = vector.extract_strided_slice %34 {offsets = [0, 0], sizes = [1, 8], strides = [1, 1]} : vector<49x8xf32> to vector<1x8xf32>
    %37 = vector.broadcast %36 : vector<1x8xf32> to vector<64x8xf32>
    %38 = arith.mulf %35, %37 : vector<64x8xf32>
    %c13 = arith.constant 13 : index
    %c0_24 = arith.constant 0 : index
    %39 = vector.load %arg21[%c13, %c0_24] : memref<128x8xf32, #tpu.memory_space<vmem>>, vector<64x8xf32>
    %40 = vector.extract_strided_slice %34 {offsets = [7, 0], sizes = [1, 8], strides = [1, 1]} : vector<49x8xf32> to vector<1x8xf32>
    %41 = vector.broadcast %40 : vector<1x8xf32> to vector<64x8xf32>
    %42 = arith.mulf %39, %41 : vector<64x8xf32>
    %43 = arith.addf %38, %42 : vector<64x8xf32>
    %c21 = arith.constant 21 : index
    %c0_25 = arith.constant 0 : index
    %44 = vector.load %arg21[%c21, %c0_25] : memref<128x8xf32, #tpu.memory_space<vmem>>, vector<64x8xf32>
    %45 = vector.extract_strided_slice %34 {offsets = [14, 0], sizes = [1, 8], strides = [1, 1]} : vector<49x8xf32> to vector<1x8xf32>
    %46 = vector.broadcast %45 : vector<1x8xf32> to vector<64x8xf32>
    %47 = arith.mulf %44, %46 : vector<64x8xf32>
    %48 = arith.addf %43, %47 : vector<64x8xf32>
    %c29 = arith.constant 29 : index
    %c0_26 = arith.constant 0 : index
    %49 = vector.load %arg21[%c29, %c0_26] : memref<128x8xf32, #tpu.memory_space<vmem>>, vector<64x8xf32>
    %50 = vector.extract_strided_slice %34 {offsets = [21, 0], sizes = [1, 8], strides = [1, 1]} : vector<49x8xf32> to vector<1x8xf32>
    %51 = vector.broadcast %50 : vector<1x8xf32> to vector<64x8xf32>
    %52 = arith.mulf %49, %51 : vector<64x8xf32>
    %53 = arith.addf %48, %52 : vector<64x8xf32>
    %c37 = arith.constant 37 : index
    %c0_27 = arith.constant 0 : index
    %54 = vector.load %arg21[%c37, %c0_27] : memref<128x8xf32, #tpu.memory_space<vmem>>, vector<64x8xf32>
    %55 = vector.extract_strided_slice %34 {offsets = [28, 0], sizes = [1, 8], strides = [1, 1]} : vector<49x8xf32> to vector<1x8xf32>
    %56 = vector.broadcast %55 : vector<1x8xf32> to vector<64x8xf32>
    %57 = arith.mulf %54, %56 : vector<64x8xf32>
    %58 = arith.addf %53, %57 : vector<64x8xf32>
    %c45 = arith.constant 45 : index
    %c0_28 = arith.constant 0 : index
    %59 = vector.load %arg21[%c45, %c0_28] : memref<128x8xf32, #tpu.memory_space<vmem>>, vector<64x8xf32>
    %60 = vector.extract_strided_slice %34 {offsets = [35, 0], sizes = [1, 8], strides = [1, 1]} : vector<49x8xf32> to vector<1x8xf32>
    %61 = vector.broadcast %60 : vector<1x8xf32> to vector<64x8xf32>
    %62 = arith.mulf %59, %61 : vector<64x8xf32>
    %63 = arith.addf %58, %62 : vector<64x8xf32>
    %c53 = arith.constant 53 : index
    %c0_29 = arith.constant 0 : index
    %64 = vector.load %arg21[%c53, %c0_29] : memref<128x8xf32, #tpu.memory_space<vmem>>, vector<64x8xf32>
    %65 = vector.extract_strided_slice %34 {offsets = [42, 0], sizes = [1, 8], strides = [1, 1]} : vector<49x8xf32> to vector<1x8xf32>
    %66 = vector.broadcast %65 : vector<1x8xf32> to vector<64x8xf32>
    %67 = arith.mulf %64, %66 : vector<64x8xf32>
    %68 = arith.addf %63, %67 : vector<64x8xf32>
    %69 = vector.extract_strided_slice %3 {offsets = [0, 0], sizes = [64, 1], strides = [1, 1]} : vector<64x7xf32> to vector<64x1xf32>
    %70 = vector.broadcast %69 : vector<64x1xf32> to vector<64x8xf32>
    %71 = arith.mulf %68, %70 : vector<64x8xf32>
    %c6 = arith.constant 6 : index
    %c0_30 = arith.constant 0 : index
    %72 = vector.load %arg21[%c6, %c0_30] : memref<128x8xf32, #tpu.memory_space<vmem>>, vector<64x8xf32>
    %73 = vector.extract_strided_slice %34 {offsets = [1, 0], sizes = [1, 8], strides = [1, 1]} : vector<49x8xf32> to vector<1x8xf32>
    %74 = vector.broadcast %73 : vector<1x8xf32> to vector<64x8xf32>
    %75 = arith.mulf %72, %74 : vector<64x8xf32>
    %c14 = arith.constant 14 : index
    %c0_31 = arith.constant 0 : index
    %76 = vector.load %arg21[%c14, %c0_31] : memref<128x8xf32, #tpu.memory_space<vmem>>, vector<64x8xf32>
    %77 = vector.extract_strided_slice %34 {offsets = [8, 0], sizes = [1, 8], strides = [1, 1]} : vector<49x8xf32> to vector<1x8xf32>
    %78 = vector.broadcast %77 : vector<1x8xf32> to vector<64x8xf32>
    %79 = arith.mulf %76, %78 : vector<64x8xf32>
    %80 = arith.addf %75, %79 : vector<64x8xf32>
    %c22 = arith.constant 22 : index
    %c0_32 = arith.constant 0 : index
    %81 = vector.load %arg21[%c22, %c0_32] : memref<128x8xf32, #tpu.memory_space<vmem>>, vector<64x8xf32>
    %82 = vector.extract_strided_slice %34 {offsets = [15, 0], sizes = [1, 8], strides = [1, 1]} : vector<49x8xf32> to vector<1x8xf32>
    %83 = vector.broadcast %82 : vector<1x8xf32> to vector<64x8xf32>
    %84 = arith.mulf %81, %83 : vector<64x8xf32>
    %85 = arith.addf %80, %84 : vector<64x8xf32>
    %c30 = arith.constant 30 : index
    %c0_33 = arith.constant 0 : index
    %86 = vector.load %arg21[%c30, %c0_33] : memref<128x8xf32, #tpu.memory_space<vmem>>, vector<64x8xf32>
    %87 = vector.extract_strided_slice %34 {offsets = [22, 0], sizes = [1, 8], strides = [1, 1]} : vector<49x8xf32> to vector<1x8xf32>
    %88 = vector.broadcast %87 : vector<1x8xf32> to vector<64x8xf32>
    %89 = arith.mulf %86, %88 : vector<64x8xf32>
    %90 = arith.addf %85, %89 : vector<64x8xf32>
    %c38 = arith.constant 38 : index
    %c0_34 = arith.constant 0 : index
    %91 = vector.load %arg21[%c38, %c0_34] : memref<128x8xf32, #tpu.memory_space<vmem>>, vector<64x8xf32>
    %92 = vector.extract_strided_slice %34 {offsets = [29, 0], sizes = [1, 8], strides = [1, 1]} : vector<49x8xf32> to vector<1x8xf32>
    %93 = vector.broadcast %92 : vector<1x8xf32> to vector<64x8xf32>
    %94 = arith.mulf %91, %93 : vector<64x8xf32>
    %95 = arith.addf %90, %94 : vector<64x8xf32>
    %c46 = arith.constant 46 : index
    %c0_35 = arith.constant 0 : index
    %96 = vector.load %arg21[%c46, %c0_35] : memref<128x8xf32, #tpu.memory_space<vmem>>, vector<64x8xf32>
    %97 = vector.extract_strided_slice %34 {offsets = [36, 0], sizes = [1, 8], strides = [1, 1]} : vector<49x8xf32> to vector<1x8xf32>
    %98 = vector.broadcast %97 : vector<1x8xf32> to vector<64x8xf32>
    %99 = arith.mulf %96, %98 : vector<64x8xf32>
    %100 = arith.addf %95, %99 : vector<64x8xf32>
    %c54 = arith.constant 54 : index
    %c0_36 = arith.constant 0 : index
    %101 = vector.load %arg21[%c54, %c0_36] : memref<128x8xf32, #tpu.memory_space<vmem>>, vector<64x8xf32>
    %102 = vector.extract_strided_slice %34 {offsets = [43, 0], sizes = [1, 8], strides = [1, 1]} : vector<49x8xf32> to vector<1x8xf32>
    %103 = vector.broadcast %102 : vector<1x8xf32> to vector<64x8xf32>
    %104 = arith.mulf %101, %103 : vector<64x8xf32>
    %105 = arith.addf %100, %104 : vector<64x8xf32>
    %106 = vector.extract_strided_slice %3 {offsets = [0, 1], sizes = [64, 1], strides = [1, 1]} : vector<64x7xf32> to vector<64x1xf32>
    %107 = vector.broadcast %106 : vector<64x1xf32> to vector<64x8xf32>
    %108 = arith.mulf %105, %107 : vector<64x8xf32>
    %109 = arith.addf %71, %108 : vector<64x8xf32>
    %c7 = arith.constant 7 : index
    %c0_37 = arith.constant 0 : index
    %110 = vector.load %arg21[%c7, %c0_37] : memref<128x8xf32, #tpu.memory_space<vmem>>, vector<64x8xf32>
    %111 = vector.extract_strided_slice %34 {offsets = [2, 0], sizes = [1, 8], strides = [1, 1]} : vector<49x8xf32> to vector<1x8xf32>
    %112 = vector.broadcast %111 : vector<1x8xf32> to vector<64x8xf32>
    %113 = arith.mulf %110, %112 : vector<64x8xf32>
    %c15 = arith.constant 15 : index
    %c0_38 = arith.constant 0 : index
    %114 = vector.load %arg21[%c15, %c0_38] : memref<128x8xf32, #tpu.memory_space<vmem>>, vector<64x8xf32>
    %115 = vector.extract_strided_slice %34 {offsets = [9, 0], sizes = [1, 8], strides = [1, 1]} : vector<49x8xf32> to vector<1x8xf32>
    %116 = vector.broadcast %115 : vector<1x8xf32> to vector<64x8xf32>
    %117 = arith.mulf %114, %116 : vector<64x8xf32>
    %118 = arith.addf %113, %117 : vector<64x8xf32>
    %c23 = arith.constant 23 : index
    %c0_39 = arith.constant 0 : index
    %119 = vector.load %arg21[%c23, %c0_39] : memref<128x8xf32, #tpu.memory_space<vmem>>, vector<64x8xf32>
    %120 = vector.extract_strided_slice %34 {offsets = [16, 0], sizes = [1, 8], strides = [1, 1]} : vector<49x8xf32> to vector<1x8xf32>
    %121 = vector.broadcast %120 : vector<1x8xf32> to vector<64x8xf32>
    %122 = arith.mulf %119, %121 : vector<64x8xf32>
    %123 = arith.addf %118, %122 : vector<64x8xf32>
    %c31 = arith.constant 31 : index
    %c0_40 = arith.constant 0 : index
    %124 = vector.load %arg21[%c31, %c0_40] : memref<128x8xf32, #tpu.memory_space<vmem>>, vector<64x8xf32>
    %125 = vector.extract_strided_slice %34 {offsets = [23, 0], sizes = [1, 8], strides = [1, 1]} : vector<49x8xf32> to vector<1x8xf32>
    %126 = vector.broadcast %125 : vector<1x8xf32> to vector<64x8xf32>
    %127 = arith.mulf %124, %126 : vector<64x8xf32>
    %128 = arith.addf %123, %127 : vector<64x8xf32>
    %c39 = arith.constant 39 : index
    %c0_41 = arith.constant 0 : index
    %129 = vector.load %arg21[%c39, %c0_41] : memref<128x8xf32, #tpu.memory_space<vmem>>, vector<64x8xf32>
    %130 = vector.extract_strided_slice %34 {offsets = [30, 0], sizes = [1, 8], strides = [1, 1]} : vector<49x8xf32> to vector<1x8xf32>
    %131 = vector.broadcast %130 : vector<1x8xf32> to vector<64x8xf32>
    %132 = arith.mulf %129, %131 : vector<64x8xf32>
    %133 = arith.addf %128, %132 : vector<64x8xf32>
    %c47 = arith.constant 47 : index
    %c0_42 = arith.constant 0 : index
    %134 = vector.load %arg21[%c47, %c0_42] : memref<128x8xf32, #tpu.memory_space<vmem>>, vector<64x8xf32>
    %135 = vector.extract_strided_slice %34 {offsets = [37, 0], sizes = [1, 8], strides = [1, 1]} : vector<49x8xf32> to vector<1x8xf32>
    %136 = vector.broadcast %135 : vector<1x8xf32> to vector<64x8xf32>
    %137 = arith.mulf %134, %136 : vector<64x8xf32>
    %138 = arith.addf %133, %137 : vector<64x8xf32>
    %c55 = arith.constant 55 : index
    %c0_43 = arith.constant 0 : index
    %139 = vector.load %arg21[%c55, %c0_43] : memref<128x8xf32, #tpu.memory_space<vmem>>, vector<64x8xf32>
    %140 = vector.extract_strided_slice %34 {offsets = [44, 0], sizes = [1, 8], strides = [1, 1]} : vector<49x8xf32> to vector<1x8xf32>
    %141 = vector.broadcast %140 : vector<1x8xf32> to vector<64x8xf32>
    %142 = arith.mulf %139, %141 : vector<64x8xf32>
    %143 = arith.addf %138, %142 : vector<64x8xf32>
    %144 = vector.extract_strided_slice %3 {offsets = [0, 2], sizes = [64, 1], strides = [1, 1]} : vector<64x7xf32> to vector<64x1xf32>
    %145 = vector.broadcast %144 : vector<64x1xf32> to vector<64x8xf32>
    %146 = arith.mulf %143, %145 : vector<64x8xf32>
    %147 = arith.addf %109, %146 : vector<64x8xf32>
    %c8 = arith.constant 8 : index
    %c0_44 = arith.constant 0 : index
    %148 = vector.load %arg21[%c8, %c0_44] : memref<128x8xf32, #tpu.memory_space<vmem>>, vector<64x8xf32>
    %149 = vector.extract_strided_slice %34 {offsets = [3, 0], sizes = [1, 8], strides = [1, 1]} : vector<49x8xf32> to vector<1x8xf32>
    %150 = vector.broadcast %149 : vector<1x8xf32> to vector<64x8xf32>
    %151 = arith.mulf %148, %150 : vector<64x8xf32>
    %c16 = arith.constant 16 : index
    %c0_45 = arith.constant 0 : index
    %152 = vector.load %arg21[%c16, %c0_45] : memref<128x8xf32, #tpu.memory_space<vmem>>, vector<64x8xf32>
    %153 = vector.extract_strided_slice %34 {offsets = [10, 0], sizes = [1, 8], strides = [1, 1]} : vector<49x8xf32> to vector<1x8xf32>
    %154 = vector.broadcast %153 : vector<1x8xf32> to vector<64x8xf32>
    %155 = arith.mulf %152, %154 : vector<64x8xf32>
    %156 = arith.addf %151, %155 : vector<64x8xf32>
    %c24 = arith.constant 24 : index
    %c0_46 = arith.constant 0 : index
    %157 = vector.load %arg21[%c24, %c0_46] : memref<128x8xf32, #tpu.memory_space<vmem>>, vector<64x8xf32>
    %158 = vector.extract_strided_slice %34 {offsets = [17, 0], sizes = [1, 8], strides = [1, 1]} : vector<49x8xf32> to vector<1x8xf32>
    %159 = vector.broadcast %158 : vector<1x8xf32> to vector<64x8xf32>
    %160 = arith.mulf %157, %159 : vector<64x8xf32>
    %161 = arith.addf %156, %160 : vector<64x8xf32>
    %c32_47 = arith.constant 32 : index
    %c0_48 = arith.constant 0 : index
    %162 = vector.load %arg21[%c32_47, %c0_48] : memref<128x8xf32, #tpu.memory_space<vmem>>, vector<64x8xf32>
    %163 = vector.extract_strided_slice %34 {offsets = [24, 0], sizes = [1, 8], strides = [1, 1]} : vector<49x8xf32> to vector<1x8xf32>
    %164 = vector.broadcast %163 : vector<1x8xf32> to vector<64x8xf32>
    %165 = arith.mulf %162, %164 : vector<64x8xf32>
    %166 = arith.addf %161, %165 : vector<64x8xf32>
    %c40 = arith.constant 40 : index
    %c0_49 = arith.constant 0 : index
    %167 = vector.load %arg21[%c40, %c0_49] : memref<128x8xf32, #tpu.memory_space<vmem>>, vector<64x8xf32>
    %168 = vector.extract_strided_slice %34 {offsets = [31, 0], sizes = [1, 8], strides = [1, 1]} : vector<49x8xf32> to vector<1x8xf32>
    %169 = vector.broadcast %168 : vector<1x8xf32> to vector<64x8xf32>
    %170 = arith.mulf %167, %169 : vector<64x8xf32>
    %171 = arith.addf %166, %170 : vector<64x8xf32>
    %c48 = arith.constant 48 : index
    %c0_50 = arith.constant 0 : index
    %172 = vector.load %arg21[%c48, %c0_50] : memref<128x8xf32, #tpu.memory_space<vmem>>, vector<64x8xf32>
    %173 = vector.extract_strided_slice %34 {offsets = [38, 0], sizes = [1, 8], strides = [1, 1]} : vector<49x8xf32> to vector<1x8xf32>
    %174 = vector.broadcast %173 : vector<1x8xf32> to vector<64x8xf32>
    %175 = arith.mulf %172, %174 : vector<64x8xf32>
    %176 = arith.addf %171, %175 : vector<64x8xf32>
    %c56 = arith.constant 56 : index
    %c0_51 = arith.constant 0 : index
    %177 = vector.load %arg21[%c56, %c0_51] : memref<128x8xf32, #tpu.memory_space<vmem>>, vector<64x8xf32>
    %178 = vector.extract_strided_slice %34 {offsets = [45, 0], sizes = [1, 8], strides = [1, 1]} : vector<49x8xf32> to vector<1x8xf32>
    %179 = vector.broadcast %178 : vector<1x8xf32> to vector<64x8xf32>
    %180 = arith.mulf %177, %179 : vector<64x8xf32>
    %181 = arith.addf %176, %180 : vector<64x8xf32>
    %182 = arith.addf %147, %181 : vector<64x8xf32>
    %c9 = arith.constant 9 : index
    %c0_52 = arith.constant 0 : index
    %183 = vector.load %arg21[%c9, %c0_52] : memref<128x8xf32, #tpu.memory_space<vmem>>, vector<64x8xf32>
    %184 = vector.extract_strided_slice %34 {offsets = [4, 0], sizes = [1, 8], strides = [1, 1]} : vector<49x8xf32> to vector<1x8xf32>
    %185 = vector.broadcast %184 : vector<1x8xf32> to vector<64x8xf32>
    %186 = arith.mulf %183, %185 : vector<64x8xf32>
    %c17 = arith.constant 17 : index
    %c0_53 = arith.constant 0 : index
    %187 = vector.load %arg21[%c17, %c0_53] : memref<128x8xf32, #tpu.memory_space<vmem>>, vector<64x8xf32>
    %188 = vector.extract_strided_slice %34 {offsets = [11, 0], sizes = [1, 8], strides = [1, 1]} : vector<49x8xf32> to vector<1x8xf32>
    %189 = vector.broadcast %188 : vector<1x8xf32> to vector<64x8xf32>
    %190 = arith.mulf %187, %189 : vector<64x8xf32>
    %191 = arith.addf %186, %190 : vector<64x8xf32>
    %c25 = arith.constant 25 : index
    %c0_54 = arith.constant 0 : index
    %192 = vector.load %arg21[%c25, %c0_54] : memref<128x8xf32, #tpu.memory_space<vmem>>, vector<64x8xf32>
    %193 = vector.extract_strided_slice %34 {offsets = [18, 0], sizes = [1, 8], strides = [1, 1]} : vector<49x8xf32> to vector<1x8xf32>
    %194 = vector.broadcast %193 : vector<1x8xf32> to vector<64x8xf32>
    %195 = arith.mulf %192, %194 : vector<64x8xf32>
    %196 = arith.addf %191, %195 : vector<64x8xf32>
    %c33 = arith.constant 33 : index
    %c0_55 = arith.constant 0 : index
    %197 = vector.load %arg21[%c33, %c0_55] : memref<128x8xf32, #tpu.memory_space<vmem>>, vector<64x8xf32>
    %198 = vector.extract_strided_slice %34 {offsets = [25, 0], sizes = [1, 8], strides = [1, 1]} : vector<49x8xf32> to vector<1x8xf32>
    %199 = vector.broadcast %198 : vector<1x8xf32> to vector<64x8xf32>
    %200 = arith.mulf %197, %199 : vector<64x8xf32>
    %201 = arith.addf %196, %200 : vector<64x8xf32>
    %c41 = arith.constant 41 : index
    %c0_56 = arith.constant 0 : index
    %202 = vector.load %arg21[%c41, %c0_56] : memref<128x8xf32, #tpu.memory_space<vmem>>, vector<64x8xf32>
    %203 = vector.extract_strided_slice %34 {offsets = [32, 0], sizes = [1, 8], strides = [1, 1]} : vector<49x8xf32> to vector<1x8xf32>
    %204 = vector.broadcast %203 : vector<1x8xf32> to vector<64x8xf32>
    %205 = arith.mulf %202, %204 : vector<64x8xf32>
    %206 = arith.addf %201, %205 : vector<64x8xf32>
    %c49 = arith.constant 49 : index
    %c0_57 = arith.constant 0 : index
    %207 = vector.load %arg21[%c49, %c0_57] : memref<128x8xf32, #tpu.memory_space<vmem>>, vector<64x8xf32>
    %208 = vector.extract_strided_slice %34 {offsets = [39, 0], sizes = [1, 8], strides = [1, 1]} : vector<49x8xf32> to vector<1x8xf32>
    %209 = vector.broadcast %208 : vector<1x8xf32> to vector<64x8xf32>
    %210 = arith.mulf %207, %209 : vector<64x8xf32>
    %211 = arith.addf %206, %210 : vector<64x8xf32>
    %c57 = arith.constant 57 : index
    %c0_58 = arith.constant 0 : index
    %212 = vector.load %arg21[%c57, %c0_58] : memref<128x8xf32, #tpu.memory_space<vmem>>, vector<64x8xf32>
    %213 = vector.extract_strided_slice %34 {offsets = [46, 0], sizes = [1, 8], strides = [1, 1]} : vector<49x8xf32> to vector<1x8xf32>
    %214 = vector.broadcast %213 : vector<1x8xf32> to vector<64x8xf32>
    %215 = arith.mulf %212, %214 : vector<64x8xf32>
    %216 = arith.addf %211, %215 : vector<64x8xf32>
    %217 = vector.extract_strided_slice %3 {offsets = [0, 4], sizes = [64, 1], strides = [1, 1]} : vector<64x7xf32> to vector<64x1xf32>
    %218 = vector.broadcast %217 : vector<64x1xf32> to vector<64x8xf32>
    %219 = arith.mulf %216, %218 : vector<64x8xf32>
    %220 = arith.addf %182, %219 : vector<64x8xf32>
    %c10 = arith.constant 10 : index
    %c0_59 = arith.constant 0 : index
    %221 = vector.load %arg21[%c10, %c0_59] : memref<128x8xf32, #tpu.memory_space<vmem>>, vector<64x8xf32>
    %222 = vector.extract_strided_slice %34 {offsets = [5, 0], sizes = [1, 8], strides = [1, 1]} : vector<49x8xf32> to vector<1x8xf32>
    %223 = vector.broadcast %222 : vector<1x8xf32> to vector<64x8xf32>
    %224 = arith.mulf %221, %223 : vector<64x8xf32>
    %c18 = arith.constant 18 : index
    %c0_60 = arith.constant 0 : index
    %225 = vector.load %arg21[%c18, %c0_60] : memref<128x8xf32, #tpu.memory_space<vmem>>, vector<64x8xf32>
    %226 = vector.extract_strided_slice %34 {offsets = [12, 0], sizes = [1, 8], strides = [1, 1]} : vector<49x8xf32> to vector<1x8xf32>
    %227 = vector.broadcast %226 : vector<1x8xf32> to vector<64x8xf32>
    %228 = arith.mulf %225, %227 : vector<64x8xf32>
    %229 = arith.addf %224, %228 : vector<64x8xf32>
    %c26 = arith.constant 26 : index
    %c0_61 = arith.constant 0 : index
    %230 = vector.load %arg21[%c26, %c0_61] : memref<128x8xf32, #tpu.memory_space<vmem>>, vector<64x8xf32>
    %231 = vector.extract_strided_slice %34 {offsets = [19, 0], sizes = [1, 8], strides = [1, 1]} : vector<49x8xf32> to vector<1x8xf32>
    %232 = vector.broadcast %231 : vector<1x8xf32> to vector<64x8xf32>
    %233 = arith.mulf %230, %232 : vector<64x8xf32>
    %234 = arith.addf %229, %233 : vector<64x8xf32>
    %c34 = arith.constant 34 : index
    %c0_62 = arith.constant 0 : index
    %235 = vector.load %arg21[%c34, %c0_62] : memref<128x8xf32, #tpu.memory_space<vmem>>, vector<64x8xf32>
    %236 = vector.extract_strided_slice %34 {offsets = [26, 0], sizes = [1, 8], strides = [1, 1]} : vector<49x8xf32> to vector<1x8xf32>
    %237 = vector.broadcast %236 : vector<1x8xf32> to vector<64x8xf32>
    %238 = arith.mulf %235, %237 : vector<64x8xf32>
    %239 = arith.addf %234, %238 : vector<64x8xf32>
    %c42 = arith.constant 42 : index
    %c0_63 = arith.constant 0 : index
    %240 = vector.load %arg21[%c42, %c0_63] : memref<128x8xf32, #tpu.memory_space<vmem>>, vector<64x8xf32>
    %241 = vector.extract_strided_slice %34 {offsets = [33, 0], sizes = [1, 8], strides = [1, 1]} : vector<49x8xf32> to vector<1x8xf32>
    %242 = vector.broadcast %241 : vector<1x8xf32> to vector<64x8xf32>
    %243 = arith.mulf %240, %242 : vector<64x8xf32>
    %244 = arith.addf %239, %243 : vector<64x8xf32>
    %c50 = arith.constant 50 : index
    %c0_64 = arith.constant 0 : index
    %245 = vector.load %arg21[%c50, %c0_64] : memref<128x8xf32, #tpu.memory_space<vmem>>, vector<64x8xf32>
    %246 = vector.extract_strided_slice %34 {offsets = [40, 0], sizes = [1, 8], strides = [1, 1]} : vector<49x8xf32> to vector<1x8xf32>
    %247 = vector.broadcast %246 : vector<1x8xf32> to vector<64x8xf32>
    %248 = arith.mulf %245, %247 : vector<64x8xf32>
    %249 = arith.addf %244, %248 : vector<64x8xf32>
    %c58 = arith.constant 58 : index
    %c0_65 = arith.constant 0 : index
    %250 = vector.load %arg21[%c58, %c0_65] : memref<128x8xf32, #tpu.memory_space<vmem>>, vector<64x8xf32>
    %251 = vector.extract_strided_slice %34 {offsets = [47, 0], sizes = [1, 8], strides = [1, 1]} : vector<49x8xf32> to vector<1x8xf32>
    %252 = vector.broadcast %251 : vector<1x8xf32> to vector<64x8xf32>
    %253 = arith.mulf %250, %252 : vector<64x8xf32>
    %254 = arith.addf %249, %253 : vector<64x8xf32>
    %255 = vector.extract_strided_slice %3 {offsets = [0, 5], sizes = [64, 1], strides = [1, 1]} : vector<64x7xf32> to vector<64x1xf32>
    %256 = vector.broadcast %255 : vector<64x1xf32> to vector<64x8xf32>
    %257 = arith.mulf %254, %256 : vector<64x8xf32>
    %258 = arith.addf %220, %257 : vector<64x8xf32>
    %c11 = arith.constant 11 : index
    %c0_66 = arith.constant 0 : index
    %259 = vector.load %arg21[%c11, %c0_66] : memref<128x8xf32, #tpu.memory_space<vmem>>, vector<64x8xf32>
    %260 = vector.extract_strided_slice %34 {offsets = [6, 0], sizes = [1, 8], strides = [1, 1]} : vector<49x8xf32> to vector<1x8xf32>
    %261 = vector.broadcast %260 : vector<1x8xf32> to vector<64x8xf32>
    %262 = arith.mulf %259, %261 : vector<64x8xf32>
    %c19 = arith.constant 19 : index
    %c0_67 = arith.constant 0 : index
    %263 = vector.load %arg21[%c19, %c0_67] : memref<128x8xf32, #tpu.memory_space<vmem>>, vector<64x8xf32>
    %264 = vector.extract_strided_slice %34 {offsets = [13, 0], sizes = [1, 8], strides = [1, 1]} : vector<49x8xf32> to vector<1x8xf32>
    %265 = vector.broadcast %264 : vector<1x8xf32> to vector<64x8xf32>
    %266 = arith.mulf %263, %265 : vector<64x8xf32>
    %267 = arith.addf %262, %266 : vector<64x8xf32>
    %c27 = arith.constant 27 : index
    %c0_68 = arith.constant 0 : index
    %268 = vector.load %arg21[%c27, %c0_68] : memref<128x8xf32, #tpu.memory_space<vmem>>, vector<64x8xf32>
    %269 = vector.extract_strided_slice %34 {offsets = [20, 0], sizes = [1, 8], strides = [1, 1]} : vector<49x8xf32> to vector<1x8xf32>
    %270 = vector.broadcast %269 : vector<1x8xf32> to vector<64x8xf32>
    %271 = arith.mulf %268, %270 : vector<64x8xf32>
    %272 = arith.addf %267, %271 : vector<64x8xf32>
    %c35 = arith.constant 35 : index
    %c0_69 = arith.constant 0 : index
    %273 = vector.load %arg21[%c35, %c0_69] : memref<128x8xf32, #tpu.memory_space<vmem>>, vector<64x8xf32>
    %274 = vector.extract_strided_slice %34 {offsets = [27, 0], sizes = [1, 8], strides = [1, 1]} : vector<49x8xf32> to vector<1x8xf32>
    %275 = vector.broadcast %274 : vector<1x8xf32> to vector<64x8xf32>
    %276 = arith.mulf %273, %275 : vector<64x8xf32>
    %277 = arith.addf %272, %276 : vector<64x8xf32>
    %c43 = arith.constant 43 : index
    %c0_70 = arith.constant 0 : index
    %278 = vector.load %arg21[%c43, %c0_70] : memref<128x8xf32, #tpu.memory_space<vmem>>, vector<64x8xf32>
    %279 = vector.extract_strided_slice %34 {offsets = [34, 0], sizes = [1, 8], strides = [1, 1]} : vector<49x8xf32> to vector<1x8xf32>
    %280 = vector.broadcast %279 : vector<1x8xf32> to vector<64x8xf32>
    %281 = arith.mulf %278, %280 : vector<64x8xf32>
    %282 = arith.addf %277, %281 : vector<64x8xf32>
    %c51 = arith.constant 51 : index
    %c0_71 = arith.constant 0 : index
    %283 = vector.load %arg21[%c51, %c0_71] : memref<128x8xf32, #tpu.memory_space<vmem>>, vector<64x8xf32>
    %284 = vector.extract_strided_slice %34 {offsets = [41, 0], sizes = [1, 8], strides = [1, 1]} : vector<49x8xf32> to vector<1x8xf32>
    %285 = vector.broadcast %284 : vector<1x8xf32> to vector<64x8xf32>
    %286 = arith.mulf %283, %285 : vector<64x8xf32>
    %287 = arith.addf %282, %286 : vector<64x8xf32>
    %c59 = arith.constant 59 : index
    %c0_72 = arith.constant 0 : index
    %288 = vector.load %arg21[%c59, %c0_72] : memref<128x8xf32, #tpu.memory_space<vmem>>, vector<64x8xf32>
    %289 = vector.extract_strided_slice %34 {offsets = [48, 0], sizes = [1, 8], strides = [1, 1]} : vector<49x8xf32> to vector<1x8xf32>
    %290 = vector.broadcast %289 : vector<1x8xf32> to vector<64x8xf32>
    %291 = arith.mulf %288, %290 : vector<64x8xf32>
    %292 = arith.addf %287, %291 : vector<64x8xf32>
    %293 = vector.extract_strided_slice %3 {offsets = [0, 6], sizes = [64, 1], strides = [1, 1]} : vector<64x7xf32> to vector<64x1xf32>
    %294 = vector.broadcast %293 : vector<64x1xf32> to vector<64x8xf32>
    %295 = arith.mulf %292, %294 : vector<64x8xf32>
    %296 = arith.addf %258, %295 : vector<64x8xf32>
    %c0_73 = arith.constant 0 : index
    %c0_74 = arith.constant 0 : index
    %297 = vector.load %arg9[%c0_73, %c0_74] : memref<3x64xf32, #tpu.memory_space<vmem>>, vector<3x64xf32>
    %298 = tpu.concatenate %28, %296 in 1 : vector<64x8xf32>, vector<64x8xf32> -> vector<64x16xf32>
    %c0_75 = arith.constant 0 : index
    %c0_76 = arith.constant 0 : index
    %299 = vector.load %arg8[%c0_75, %c0_76] : memref<16x64xf32, #tpu.memory_space<vmem>>, vector<16x64xf32>
    %cst_77 = arith.constant dense<0.000000e+00> : vector<64x64xf32>
    %300 = tpu.matmul %298, %299, %cst_77 {dimension_numbers = #tpu.dot_dimension_numbers<[1], [0], [0], [1], [0, 0, 1, 1], [], []>} : vector<64x16xf32>, vector<16x64xf32>, vector<64x64xf32> -> vector<64x64xf32>
    %301 = vector.extract_strided_slice %297 {offsets = [0, 0], sizes = [1, 64], strides = [1, 1]} : vector<3x64xf32> to vector<1x64xf32>
    %302 = vector.broadcast %301 : vector<1x64xf32> to vector<64x64xf32>
    %303 = arith.addf %300, %302 : vector<64x64xf32>
    %cst_78 = arith.constant 0.000000e+00 : f32
    %304 = vector.broadcast %cst_78 : f32 to vector<64x64xf32>
    %305 = arith.maximumf %303, %304 : vector<64x64xf32>
    %306 = vector.extract_strided_slice %297 {offsets = [1, 0], sizes = [1, 64], strides = [1, 1]} : vector<3x64xf32> to vector<1x64xf32>
    %307 = vector.broadcast %306 : vector<1x64xf32> to vector<64x64xf32>
    %308 = arith.mulf %305, %307 : vector<64x64xf32>
    %309 = vector.extract_strided_slice %297 {offsets = [2, 0], sizes = [1, 64], strides = [1, 1]} : vector<3x64xf32> to vector<1x64xf32>
    %310 = vector.broadcast %309 : vector<1x64xf32> to vector<64x64xf32>
    %311 = arith.addf %308, %310 : vector<64x64xf32>
    %c0_79 = arith.constant 0 : index
    %c0_80 = arith.constant 0 : index
    %312 = vector.load %arg11[%c0_79, %c0_80] : memref<3x8xf32, #tpu.memory_space<vmem>>, vector<3x8xf32>
    %c0_81 = arith.constant 0 : index
    %c0_82 = arith.constant 0 : index
    %313 = vector.load %arg10[%c0_81, %c0_82] : memref<64x8xf32, #tpu.memory_space<vmem>>, vector<64x8xf32>
    %cst_83 = arith.constant dense<0.000000e+00> : vector<64x8xf32>
    %314 = tpu.matmul %311, %313, %cst_83 {dimension_numbers = #tpu.dot_dimension_numbers<[1], [0], [0], [1], [0, 0, 1, 1], [], []>} : vector<64x64xf32>, vector<64x8xf32>, vector<64x8xf32> -> vector<64x8xf32>
    %315 = vector.extract_strided_slice %312 {offsets = [0, 0], sizes = [1, 8], strides = [1, 1]} : vector<3x8xf32> to vector<1x8xf32>
    %316 = vector.broadcast %315 : vector<1x8xf32> to vector<64x8xf32>
    %317 = arith.addf %314, %316 : vector<64x8xf32>
    %cst_84 = arith.constant 0.000000e+00 : f32
    %318 = vector.broadcast %cst_84 : f32 to vector<64x8xf32>
    %319 = arith.maximumf %317, %318 : vector<64x8xf32>
    %320 = vector.extract_strided_slice %312 {offsets = [1, 0], sizes = [1, 8], strides = [1, 1]} : vector<3x8xf32> to vector<1x8xf32>
    %321 = vector.broadcast %320 : vector<1x8xf32> to vector<64x8xf32>
    %322 = arith.mulf %319, %321 : vector<64x8xf32>
    %323 = vector.extract_strided_slice %312 {offsets = [2, 0], sizes = [1, 8], strides = [1, 1]} : vector<3x8xf32> to vector<1x8xf32>
    %324 = vector.broadcast %323 : vector<1x8xf32> to vector<64x8xf32>
    %325 = arith.addf %322, %324 : vector<64x8xf32>
    %cst_85 = arith.constant 0.000000e+00 : f32
    %326 = vector.broadcast %cst_85 : f32 to vector<32x8xf32>
    %c0_86 = arith.constant 0 : index
    %c0_87 = arith.constant 0 : index
    %327 = vector.load %arg22[%c0_86, %c0_87] : memref<128x8xf32, #tpu.memory_space<vmem>>, vector<32x8xf32>
    tpu.vector_store %arg22[%c0_86, %c0_87], %326 {strides = array<i32>} : memref<128x8xf32, #tpu.memory_space<vmem>>, vector<32x8xf32>,
    %c32_88 = arith.constant 32 : index
    %c0_89 = arith.constant 0 : index
    %328 = vector.load %arg22[%c32_88, %c0_89] : memref<128x8xf32, #tpu.memory_space<vmem>>, vector<64x8xf32>
    tpu.vector_store %arg22[%c32_88, %c0_89], %325 {strides = array<i32>} : memref<128x8xf32, #tpu.memory_space<vmem>>, vector<64x8xf32>,
    %cst_90 = arith.constant 0.000000e+00 : f32
    %329 = vector.broadcast %cst_90 : f32 to vector<32x8xf32>
    %c96_91 = arith.constant 96 : index
    %c0_92 = arith.constant 0 : index
    %330 = vector.load %arg22[%c96_91, %c0_92] : memref<128x8xf32, #tpu.memory_space<vmem>>, vector<32x8xf32>
    tpu.vector_store %arg22[%c96_91, %c0_92], %329 {strides = array<i32>} : memref<128x8xf32, #tpu.memory_space<vmem>>, vector<32x8xf32>,
    %c0_93 = arith.constant 0 : index
    %c0_94 = arith.constant 0 : index
    %331 = vector.load %arg12[%c0_93, %c0_94] : memref<49x8xf32, #tpu.memory_space<vmem>>, vector<49x8xf32>
    %c5_95 = arith.constant 5 : index
    %c0_96 = arith.constant 0 : index
    %332 = vector.load %arg22[%c5_95, %c0_96] : memref<128x8xf32, #tpu.memory_space<vmem>>, vector<64x8xf32>
    %333 = vector.extract_strided_slice %331 {offsets = [0, 0], sizes = [1, 8], strides = [1, 1]} : vector<49x8xf32> to vector<1x8xf32>
    %334 = vector.broadcast %333 : vector<1x8xf32> to vector<64x8xf32>
    %335 = arith.mulf %332, %334 : vector<64x8xf32>
    %c13_97 = arith.constant 13 : index
    %c0_98 = arith.constant 0 : index
    %336 = vector.load %arg22[%c13_97, %c0_98] : memref<128x8xf32, #tpu.memory_space<vmem>>, vector<64x8xf32>
    %337 = vector.extract_strided_slice %331 {offsets = [7, 0], sizes = [1, 8], strides = [1, 1]} : vector<49x8xf32> to vector<1x8xf32>
    %338 = vector.broadcast %337 : vector<1x8xf32> to vector<64x8xf32>
    %339 = arith.mulf %336, %338 : vector<64x8xf32>
    %340 = arith.addf %335, %339 : vector<64x8xf32>
    %c21_99 = arith.constant 21 : index
    %c0_100 = arith.constant 0 : index
    %341 = vector.load %arg22[%c21_99, %c0_100] : memref<128x8xf32, #tpu.memory_space<vmem>>, vector<64x8xf32>
    %342 = vector.extract_strided_slice %331 {offsets = [14, 0], sizes = [1, 8], strides = [1, 1]} : vector<49x8xf32> to vector<1x8xf32>
    %343 = vector.broadcast %342 : vector<1x8xf32> to vector<64x8xf32>
    %344 = arith.mulf %341, %343 : vector<64x8xf32>
    %345 = arith.addf %340, %344 : vector<64x8xf32>
    %c29_101 = arith.constant 29 : index
    %c0_102 = arith.constant 0 : index
    %346 = vector.load %arg22[%c29_101, %c0_102] : memref<128x8xf32, #tpu.memory_space<vmem>>, vector<64x8xf32>
    %347 = vector.extract_strided_slice %331 {offsets = [21, 0], sizes = [1, 8], strides = [1, 1]} : vector<49x8xf32> to vector<1x8xf32>
    %348 = vector.broadcast %347 : vector<1x8xf32> to vector<64x8xf32>
    %349 = arith.mulf %346, %348 : vector<64x8xf32>
    %350 = arith.addf %345, %349 : vector<64x8xf32>
    %c37_103 = arith.constant 37 : index
    %c0_104 = arith.constant 0 : index
    %351 = vector.load %arg22[%c37_103, %c0_104] : memref<128x8xf32, #tpu.memory_space<vmem>>, vector<64x8xf32>
    %352 = vector.extract_strided_slice %331 {offsets = [28, 0], sizes = [1, 8], strides = [1, 1]} : vector<49x8xf32> to vector<1x8xf32>
    %353 = vector.broadcast %352 : vector<1x8xf32> to vector<64x8xf32>
    %354 = arith.mulf %351, %353 : vector<64x8xf32>
    %355 = arith.addf %350, %354 : vector<64x8xf32>
    %c45_105 = arith.constant 45 : index
    %c0_106 = arith.constant 0 : index
    %356 = vector.load %arg22[%c45_105, %c0_106] : memref<128x8xf32, #tpu.memory_space<vmem>>, vector<64x8xf32>
    %357 = vector.extract_strided_slice %331 {offsets = [35, 0], sizes = [1, 8], strides = [1, 1]} : vector<49x8xf32> to vector<1x8xf32>
    %358 = vector.broadcast %357 : vector<1x8xf32> to vector<64x8xf32>
    %359 = arith.mulf %356, %358 : vector<64x8xf32>
    %360 = arith.addf %355, %359 : vector<64x8xf32>
    %c53_107 = arith.constant 53 : index
    %c0_108 = arith.constant 0 : index
    %361 = vector.load %arg22[%c53_107, %c0_108] : memref<128x8xf32, #tpu.memory_space<vmem>>, vector<64x8xf32>
    %362 = vector.extract_strided_slice %331 {offsets = [42, 0], sizes = [1, 8], strides = [1, 1]} : vector<49x8xf32> to vector<1x8xf32>
    %363 = vector.broadcast %362 : vector<1x8xf32> to vector<64x8xf32>
    %364 = arith.mulf %361, %363 : vector<64x8xf32>
    %365 = arith.addf %360, %364 : vector<64x8xf32>
    %366 = vector.extract_strided_slice %3 {offsets = [0, 0], sizes = [64, 1], strides = [1, 1]} : vector<64x7xf32> to vector<64x1xf32>
    %367 = vector.broadcast %366 : vector<64x1xf32> to vector<64x8xf32>
    %368 = arith.mulf %365, %367 : vector<64x8xf32>
    %c6_109 = arith.constant 6 : index
    %c0_110 = arith.constant 0 : index
    %369 = vector.load %arg22[%c6_109, %c0_110] : memref<128x8xf32, #tpu.memory_space<vmem>>, vector<64x8xf32>
    %370 = vector.extract_strided_slice %331 {offsets = [1, 0], sizes = [1, 8], strides = [1, 1]} : vector<49x8xf32> to vector<1x8xf32>
    %371 = vector.broadcast %370 : vector<1x8xf32> to vector<64x8xf32>
    %372 = arith.mulf %369, %371 : vector<64x8xf32>
    %c14_111 = arith.constant 14 : index
    %c0_112 = arith.constant 0 : index
    %373 = vector.load %arg22[%c14_111, %c0_112] : memref<128x8xf32, #tpu.memory_space<vmem>>, vector<64x8xf32>
    %374 = vector.extract_strided_slice %331 {offsets = [8, 0], sizes = [1, 8], strides = [1, 1]} : vector<49x8xf32> to vector<1x8xf32>
    %375 = vector.broadcast %374 : vector<1x8xf32> to vector<64x8xf32>
    %376 = arith.mulf %373, %375 : vector<64x8xf32>
    %377 = arith.addf %372, %376 : vector<64x8xf32>
    %c22_113 = arith.constant 22 : index
    %c0_114 = arith.constant 0 : index
    %378 = vector.load %arg22[%c22_113, %c0_114] : memref<128x8xf32, #tpu.memory_space<vmem>>, vector<64x8xf32>
    %379 = vector.extract_strided_slice %331 {offsets = [15, 0], sizes = [1, 8], strides = [1, 1]} : vector<49x8xf32> to vector<1x8xf32>
    %380 = vector.broadcast %379 : vector<1x8xf32> to vector<64x8xf32>
    %381 = arith.mulf %378, %380 : vector<64x8xf32>
    %382 = arith.addf %377, %381 : vector<64x8xf32>
    %c30_115 = arith.constant 30 : index
    %c0_116 = arith.constant 0 : index
    %383 = vector.load %arg22[%c30_115, %c0_116] : memref<128x8xf32, #tpu.memory_space<vmem>>, vector<64x8xf32>
    %384 = vector.extract_strided_slice %331 {offsets = [22, 0], sizes = [1, 8], strides = [1, 1]} : vector<49x8xf32> to vector<1x8xf32>
    %385 = vector.broadcast %384 : vector<1x8xf32> to vector<64x8xf32>
    %386 = arith.mulf %383, %385 : vector<64x8xf32>
    %387 = arith.addf %382, %386 : vector<64x8xf32>
    %c38_117 = arith.constant 38 : index
    %c0_118 = arith.constant 0 : index
    %388 = vector.load %arg22[%c38_117, %c0_118] : memref<128x8xf32, #tpu.memory_space<vmem>>, vector<64x8xf32>
    %389 = vector.extract_strided_slice %331 {offsets = [29, 0], sizes = [1, 8], strides = [1, 1]} : vector<49x8xf32> to vector<1x8xf32>
    %390 = vector.broadcast %389 : vector<1x8xf32> to vector<64x8xf32>
    %391 = arith.mulf %388, %390 : vector<64x8xf32>
    %392 = arith.addf %387, %391 : vector<64x8xf32>
    %c46_119 = arith.constant 46 : index
    %c0_120 = arith.constant 0 : index
    %393 = vector.load %arg22[%c46_119, %c0_120] : memref<128x8xf32, #tpu.memory_space<vmem>>, vector<64x8xf32>
    %394 = vector.extract_strided_slice %331 {offsets = [36, 0], sizes = [1, 8], strides = [1, 1]} : vector<49x8xf32> to vector<1x8xf32>
    %395 = vector.broadcast %394 : vector<1x8xf32> to vector<64x8xf32>
    %396 = arith.mulf %393, %395 : vector<64x8xf32>
    %397 = arith.addf %392, %396 : vector<64x8xf32>
    %c54_121 = arith.constant 54 : index
    %c0_122 = arith.constant 0 : index
    %398 = vector.load %arg22[%c54_121, %c0_122] : memref<128x8xf32, #tpu.memory_space<vmem>>, vector<64x8xf32>
    %399 = vector.extract_strided_slice %331 {offsets = [43, 0], sizes = [1, 8], strides = [1, 1]} : vector<49x8xf32> to vector<1x8xf32>
    %400 = vector.broadcast %399 : vector<1x8xf32> to vector<64x8xf32>
    %401 = arith.mulf %398, %400 : vector<64x8xf32>
    %402 = arith.addf %397, %401 : vector<64x8xf32>
    %403 = vector.extract_strided_slice %3 {offsets = [0, 1], sizes = [64, 1], strides = [1, 1]} : vector<64x7xf32> to vector<64x1xf32>
    %404 = vector.broadcast %403 : vector<64x1xf32> to vector<64x8xf32>
    %405 = arith.mulf %402, %404 : vector<64x8xf32>
    %406 = arith.addf %368, %405 : vector<64x8xf32>
    %c7_123 = arith.constant 7 : index
    %c0_124 = arith.constant 0 : index
    %407 = vector.load %arg22[%c7_123, %c0_124] : memref<128x8xf32, #tpu.memory_space<vmem>>, vector<64x8xf32>
    %408 = vector.extract_strided_slice %331 {offsets = [2, 0], sizes = [1, 8], strides = [1, 1]} : vector<49x8xf32> to vector<1x8xf32>
    %409 = vector.broadcast %408 : vector<1x8xf32> to vector<64x8xf32>
    %410 = arith.mulf %407, %409 : vector<64x8xf32>
    %c15_125 = arith.constant 15 : index
    %c0_126 = arith.constant 0 : index
    %411 = vector.load %arg22[%c15_125, %c0_126] : memref<128x8xf32, #tpu.memory_space<vmem>>, vector<64x8xf32>
    %412 = vector.extract_strided_slice %331 {offsets = [9, 0], sizes = [1, 8], strides = [1, 1]} : vector<49x8xf32> to vector<1x8xf32>
    %413 = vector.broadcast %412 : vector<1x8xf32> to vector<64x8xf32>
    %414 = arith.mulf %411, %413 : vector<64x8xf32>
    %415 = arith.addf %410, %414 : vector<64x8xf32>
    %c23_127 = arith.constant 23 : index
    %c0_128 = arith.constant 0 : index
    %416 = vector.load %arg22[%c23_127, %c0_128] : memref<128x8xf32, #tpu.memory_space<vmem>>, vector<64x8xf32>
    %417 = vector.extract_strided_slice %331 {offsets = [16, 0], sizes = [1, 8], strides = [1, 1]} : vector<49x8xf32> to vector<1x8xf32>
    %418 = vector.broadcast %417 : vector<1x8xf32> to vector<64x8xf32>
    %419 = arith.mulf %416, %418 : vector<64x8xf32>
    %420 = arith.addf %415, %419 : vector<64x8xf32>
    %c31_129 = arith.constant 31 : index
    %c0_130 = arith.constant 0 : index
    %421 = vector.load %arg22[%c31_129, %c0_130] : memref<128x8xf32, #tpu.memory_space<vmem>>, vector<64x8xf32>
    %422 = vector.extract_strided_slice %331 {offsets = [23, 0], sizes = [1, 8], strides = [1, 1]} : vector<49x8xf32> to vector<1x8xf32>
    %423 = vector.broadcast %422 : vector<1x8xf32> to vector<64x8xf32>
    %424 = arith.mulf %421, %423 : vector<64x8xf32>
    %425 = arith.addf %420, %424 : vector<64x8xf32>
    %c39_131 = arith.constant 39 : index
    %c0_132 = arith.constant 0 : index
    %426 = vector.load %arg22[%c39_131, %c0_132] : memref<128x8xf32, #tpu.memory_space<vmem>>, vector<64x8xf32>
    %427 = vector.extract_strided_slice %331 {offsets = [30, 0], sizes = [1, 8], strides = [1, 1]} : vector<49x8xf32> to vector<1x8xf32>
    %428 = vector.broadcast %427 : vector<1x8xf32> to vector<64x8xf32>
    %429 = arith.mulf %426, %428 : vector<64x8xf32>
    %430 = arith.addf %425, %429 : vector<64x8xf32>
    %c47_133 = arith.constant 47 : index
    %c0_134 = arith.constant 0 : index
    %431 = vector.load %arg22[%c47_133, %c0_134] : memref<128x8xf32, #tpu.memory_space<vmem>>, vector<64x8xf32>
    %432 = vector.extract_strided_slice %331 {offsets = [37, 0], sizes = [1, 8], strides = [1, 1]} : vector<49x8xf32> to vector<1x8xf32>
    %433 = vector.broadcast %432 : vector<1x8xf32> to vector<64x8xf32>
    %434 = arith.mulf %431, %433 : vector<64x8xf32>
    %435 = arith.addf %430, %434 : vector<64x8xf32>
    %c55_135 = arith.constant 55 : index
    %c0_136 = arith.constant 0 : index
    %436 = vector.load %arg22[%c55_135, %c0_136] : memref<128x8xf32, #tpu.memory_space<vmem>>, vector<64x8xf32>
    %437 = vector.extract_strided_slice %331 {offsets = [44, 0], sizes = [1, 8], strides = [1, 1]} : vector<49x8xf32> to vector<1x8xf32>
    %438 = vector.broadcast %437 : vector<1x8xf32> to vector<64x8xf32>
    %439 = arith.mulf %436, %438 : vector<64x8xf32>
    %440 = arith.addf %435, %439 : vector<64x8xf32>
    %441 = vector.extract_strided_slice %3 {offsets = [0, 2], sizes = [64, 1], strides = [1, 1]} : vector<64x7xf32> to vector<64x1xf32>
    %442 = vector.broadcast %441 : vector<64x1xf32> to vector<64x8xf32>
    %443 = arith.mulf %440, %442 : vector<64x8xf32>
    %444 = arith.addf %406, %443 : vector<64x8xf32>
    %c8_137 = arith.constant 8 : index
    %c0_138 = arith.constant 0 : index
    %445 = vector.load %arg22[%c8_137, %c0_138] : memref<128x8xf32, #tpu.memory_space<vmem>>, vector<64x8xf32>
    %446 = vector.extract_strided_slice %331 {offsets = [3, 0], sizes = [1, 8], strides = [1, 1]} : vector<49x8xf32> to vector<1x8xf32>
    %447 = vector.broadcast %446 : vector<1x8xf32> to vector<64x8xf32>
    %448 = arith.mulf %445, %447 : vector<64x8xf32>
    %c16_139 = arith.constant 16 : index
    %c0_140 = arith.constant 0 : index
    %449 = vector.load %arg22[%c16_139, %c0_140] : memref<128x8xf32, #tpu.memory_space<vmem>>, vector<64x8xf32>
    %450 = vector.extract_strided_slice %331 {offsets = [10, 0], sizes = [1, 8], strides = [1, 1]} : vector<49x8xf32> to vector<1x8xf32>
    %451 = vector.broadcast %450 : vector<1x8xf32> to vector<64x8xf32>
    %452 = arith.mulf %449, %451 : vector<64x8xf32>
    %453 = arith.addf %448, %452 : vector<64x8xf32>
    %c24_141 = arith.constant 24 : index
    %c0_142 = arith.constant 0 : index
    %454 = vector.load %arg22[%c24_141, %c0_142] : memref<128x8xf32, #tpu.memory_space<vmem>>, vector<64x8xf32>
    %455 = vector.extract_strided_slice %331 {offsets = [17, 0], sizes = [1, 8], strides = [1, 1]} : vector<49x8xf32> to vector<1x8xf32>
    %456 = vector.broadcast %455 : vector<1x8xf32> to vector<64x8xf32>
    %457 = arith.mulf %454, %456 : vector<64x8xf32>
    %458 = arith.addf %453, %457 : vector<64x8xf32>
    %c32_143 = arith.constant 32 : index
    %c0_144 = arith.constant 0 : index
    %459 = vector.load %arg22[%c32_143, %c0_144] : memref<128x8xf32, #tpu.memory_space<vmem>>, vector<64x8xf32>
    %460 = vector.extract_strided_slice %331 {offsets = [24, 0], sizes = [1, 8], strides = [1, 1]} : vector<49x8xf32> to vector<1x8xf32>
    %461 = vector.broadcast %460 : vector<1x8xf32> to vector<64x8xf32>
    %462 = arith.mulf %459, %461 : vector<64x8xf32>
    %463 = arith.addf %458, %462 : vector<64x8xf32>
    %c40_145 = arith.constant 40 : index
    %c0_146 = arith.constant 0 : index
    %464 = vector.load %arg22[%c40_145, %c0_146] : memref<128x8xf32, #tpu.memory_space<vmem>>, vector<64x8xf32>
    %465 = vector.extract_strided_slice %331 {offsets = [31, 0], sizes = [1, 8], strides = [1, 1]} : vector<49x8xf32> to vector<1x8xf32>
    %466 = vector.broadcast %465 : vector<1x8xf32> to vector<64x8xf32>
    %467 = arith.mulf %464, %466 : vector<64x8xf32>
    %468 = arith.addf %463, %467 : vector<64x8xf32>
    %c48_147 = arith.constant 48 : index
    %c0_148 = arith.constant 0 : index
    %469 = vector.load %arg22[%c48_147, %c0_148] : memref<128x8xf32, #tpu.memory_space<vmem>>, vector<64x8xf32>
    %470 = vector.extract_strided_slice %331 {offsets = [38, 0], sizes = [1, 8], strides = [1, 1]} : vector<49x8xf32> to vector<1x8xf32>
    %471 = vector.broadcast %470 : vector<1x8xf32> to vector<64x8xf32>
    %472 = arith.mulf %469, %471 : vector<64x8xf32>
    %473 = arith.addf %468, %472 : vector<64x8xf32>
    %c56_149 = arith.constant 56 : index
    %c0_150 = arith.constant 0 : index
    %474 = vector.load %arg22[%c56_149, %c0_150] : memref<128x8xf32, #tpu.memory_space<vmem>>, vector<64x8xf32>
    %475 = vector.extract_strided_slice %331 {offsets = [45, 0], sizes = [1, 8], strides = [1, 1]} : vector<49x8xf32> to vector<1x8xf32>
    %476 = vector.broadcast %475 : vector<1x8xf32> to vector<64x8xf32>
    %477 = arith.mulf %474, %476 : vector<64x8xf32>
    %478 = arith.addf %473, %477 : vector<64x8xf32>
    %479 = arith.addf %444, %478 : vector<64x8xf32>
    %c9_151 = arith.constant 9 : index
    %c0_152 = arith.constant 0 : index
    %480 = vector.load %arg22[%c9_151, %c0_152] : memref<128x8xf32, #tpu.memory_space<vmem>>, vector<64x8xf32>
    %481 = vector.extract_strided_slice %331 {offsets = [4, 0], sizes = [1, 8], strides = [1, 1]} : vector<49x8xf32> to vector<1x8xf32>
    %482 = vector.broadcast %481 : vector<1x8xf32> to vector<64x8xf32>
    %483 = arith.mulf %480, %482 : vector<64x8xf32>
    %c17_153 = arith.constant 17 : index
    %c0_154 = arith.constant 0 : index
    %484 = vector.load %arg22[%c17_153, %c0_154] : memref<128x8xf32, #tpu.memory_space<vmem>>, vector<64x8xf32>
    %485 = vector.extract_strided_slice %331 {offsets = [11, 0], sizes = [1, 8], strides = [1, 1]} : vector<49x8xf32> to vector<1x8xf32>
    %486 = vector.broadcast %485 : vector<1x8xf32> to vector<64x8xf32>
    %487 = arith.mulf %484, %486 : vector<64x8xf32>
    %488 = arith.addf %483, %487 : vector<64x8xf32>
    %c25_155 = arith.constant 25 : index
    %c0_156 = arith.constant 0 : index
    %489 = vector.load %arg22[%c25_155, %c0_156] : memref<128x8xf32, #tpu.memory_space<vmem>>, vector<64x8xf32>
    %490 = vector.extract_strided_slice %331 {offsets = [18, 0], sizes = [1, 8], strides = [1, 1]} : vector<49x8xf32> to vector<1x8xf32>
    %491 = vector.broadcast %490 : vector<1x8xf32> to vector<64x8xf32>
    %492 = arith.mulf %489, %491 : vector<64x8xf32>
    %493 = arith.addf %488, %492 : vector<64x8xf32>
    %c33_157 = arith.constant 33 : index
    %c0_158 = arith.constant 0 : index
    %494 = vector.load %arg22[%c33_157, %c0_158] : memref<128x8xf32, #tpu.memory_space<vmem>>, vector<64x8xf32>
    %495 = vector.extract_strided_slice %331 {offsets = [25, 0], sizes = [1, 8], strides = [1, 1]} : vector<49x8xf32> to vector<1x8xf32>
    %496 = vector.broadcast %495 : vector<1x8xf32> to vector<64x8xf32>
    %497 = arith.mulf %494, %496 : vector<64x8xf32>
    %498 = arith.addf %493, %497 : vector<64x8xf32>
    %c41_159 = arith.constant 41 : index
    %c0_160 = arith.constant 0 : index
    %499 = vector.load %arg22[%c41_159, %c0_160] : memref<128x8xf32, #tpu.memory_space<vmem>>, vector<64x8xf32>
    %500 = vector.extract_strided_slice %331 {offsets = [32, 0], sizes = [1, 8], strides = [1, 1]} : vector<49x8xf32> to vector<1x8xf32>
    %501 = vector.broadcast %500 : vector<1x8xf32> to vector<64x8xf32>
    %502 = arith.mulf %499, %501 : vector<64x8xf32>
    %503 = arith.addf %498, %502 : vector<64x8xf32>
    %c49_161 = arith.constant 49 : index
    %c0_162 = arith.constant 0 : index
    %504 = vector.load %arg22[%c49_161, %c0_162] : memref<128x8xf32, #tpu.memory_space<vmem>>, vector<64x8xf32>
    %505 = vector.extract_strided_slice %331 {offsets = [39, 0], sizes = [1, 8], strides = [1, 1]} : vector<49x8xf32> to vector<1x8xf32>
    %506 = vector.broadcast %505 : vector<1x8xf32> to vector<64x8xf32>
    %507 = arith.mulf %504, %506 : vector<64x8xf32>
    %508 = arith.addf %503, %507 : vector<64x8xf32>
    %c57_163 = arith.constant 57 : index
    %c0_164 = arith.constant 0 : index
    %509 = vector.load %arg22[%c57_163, %c0_164] : memref<128x8xf32, #tpu.memory_space<vmem>>, vector<64x8xf32>
    %510 = vector.extract_strided_slice %331 {offsets = [46, 0], sizes = [1, 8], strides = [1, 1]} : vector<49x8xf32> to vector<1x8xf32>
    %511 = vector.broadcast %510 : vector<1x8xf32> to vector<64x8xf32>
    %512 = arith.mulf %509, %511 : vector<64x8xf32>
    %513 = arith.addf %508, %512 : vector<64x8xf32>
    %514 = vector.extract_strided_slice %3 {offsets = [0, 4], sizes = [64, 1], strides = [1, 1]} : vector<64x7xf32> to vector<64x1xf32>
    %515 = vector.broadcast %514 : vector<64x1xf32> to vector<64x8xf32>
    %516 = arith.mulf %513, %515 : vector<64x8xf32>
    %517 = arith.addf %479, %516 : vector<64x8xf32>
    %c10_165 = arith.constant 10 : index
    %c0_166 = arith.constant 0 : index
    %518 = vector.load %arg22[%c10_165, %c0_166] : memref<128x8xf32, #tpu.memory_space<vmem>>, vector<64x8xf32>
    %519 = vector.extract_strided_slice %331 {offsets = [5, 0], sizes = [1, 8], strides = [1, 1]} : vector<49x8xf32> to vector<1x8xf32>
    %520 = vector.broadcast %519 : vector<1x8xf32> to vector<64x8xf32>
    %521 = arith.mulf %518, %520 : vector<64x8xf32>
    %c18_167 = arith.constant 18 : index
    %c0_168 = arith.constant 0 : index
    %522 = vector.load %arg22[%c18_167, %c0_168] : memref<128x8xf32, #tpu.memory_space<vmem>>, vector<64x8xf32>
    %523 = vector.extract_strided_slice %331 {offsets = [12, 0], sizes = [1, 8], strides = [1, 1]} : vector<49x8xf32> to vector<1x8xf32>
    %524 = vector.broadcast %523 : vector<1x8xf32> to vector<64x8xf32>
    %525 = arith.mulf %522, %524 : vector<64x8xf32>
    %526 = arith.addf %521, %525 : vector<64x8xf32>
    %c26_169 = arith.constant 26 : index
    %c0_170 = arith.constant 0 : index
    %527 = vector.load %arg22[%c26_169, %c0_170] : memref<128x8xf32, #tpu.memory_space<vmem>>, vector<64x8xf32>
    %528 = vector.extract_strided_slice %331 {offsets = [19, 0], sizes = [1, 8], strides = [1, 1]} : vector<49x8xf32> to vector<1x8xf32>
    %529 = vector.broadcast %528 : vector<1x8xf32> to vector<64x8xf32>
    %530 = arith.mulf %527, %529 : vector<64x8xf32>
    %531 = arith.addf %526, %530 : vector<64x8xf32>
    %c34_171 = arith.constant 34 : index
    %c0_172 = arith.constant 0 : index
    %532 = vector.load %arg22[%c34_171, %c0_172] : memref<128x8xf32, #tpu.memory_space<vmem>>, vector<64x8xf32>
    %533 = vector.extract_strided_slice %331 {offsets = [26, 0], sizes = [1, 8], strides = [1, 1]} : vector<49x8xf32> to vector<1x8xf32>
    %534 = vector.broadcast %533 : vector<1x8xf32> to vector<64x8xf32>
    %535 = arith.mulf %532, %534 : vector<64x8xf32>
    %536 = arith.addf %531, %535 : vector<64x8xf32>
    %c42_173 = arith.constant 42 : index
    %c0_174 = arith.constant 0 : index
    %537 = vector.load %arg22[%c42_173, %c0_174] : memref<128x8xf32, #tpu.memory_space<vmem>>, vector<64x8xf32>
    %538 = vector.extract_strided_slice %331 {offsets = [33, 0], sizes = [1, 8], strides = [1, 1]} : vector<49x8xf32> to vector<1x8xf32>
    %539 = vector.broadcast %538 : vector<1x8xf32> to vector<64x8xf32>
    %540 = arith.mulf %537, %539 : vector<64x8xf32>
    %541 = arith.addf %536, %540 : vector<64x8xf32>
    %c50_175 = arith.constant 50 : index
    %c0_176 = arith.constant 0 : index
    %542 = vector.load %arg22[%c50_175, %c0_176] : memref<128x8xf32, #tpu.memory_space<vmem>>, vector<64x8xf32>
    %543 = vector.extract_strided_slice %331 {offsets = [40, 0], sizes = [1, 8], strides = [1, 1]} : vector<49x8xf32> to vector<1x8xf32>
    %544 = vector.broadcast %543 : vector<1x8xf32> to vector<64x8xf32>
    %545 = arith.mulf %542, %544 : vector<64x8xf32>
    %546 = arith.addf %541, %545 : vector<64x8xf32>
    %c58_177 = arith.constant 58 : index
    %c0_178 = arith.constant 0 : index
    %547 = vector.load %arg22[%c58_177, %c0_178] : memref<128x8xf32, #tpu.memory_space<vmem>>, vector<64x8xf32>
    %548 = vector.extract_strided_slice %331 {offsets = [47, 0], sizes = [1, 8], strides = [1, 1]} : vector<49x8xf32> to vector<1x8xf32>
    %549 = vector.broadcast %548 : vector<1x8xf32> to vector<64x8xf32>
    %550 = arith.mulf %547, %549 : vector<64x8xf32>
    %551 = arith.addf %546, %550 : vector<64x8xf32>
    %552 = vector.extract_strided_slice %3 {offsets = [0, 5], sizes = [64, 1], strides = [1, 1]} : vector<64x7xf32> to vector<64x1xf32>
    %553 = vector.broadcast %552 : vector<64x1xf32> to vector<64x8xf32>
    %554 = arith.mulf %551, %553 : vector<64x8xf32>
    %555 = arith.addf %517, %554 : vector<64x8xf32>
    %c11_179 = arith.constant 11 : index
    %c0_180 = arith.constant 0 : index
    %556 = vector.load %arg22[%c11_179, %c0_180] : memref<128x8xf32, #tpu.memory_space<vmem>>, vector<64x8xf32>
    %557 = vector.extract_strided_slice %331 {offsets = [6, 0], sizes = [1, 8], strides = [1, 1]} : vector<49x8xf32> to vector<1x8xf32>
    %558 = vector.broadcast %557 : vector<1x8xf32> to vector<64x8xf32>
    %559 = arith.mulf %556, %558 : vector<64x8xf32>
    %c19_181 = arith.constant 19 : index
    %c0_182 = arith.constant 0 : index
    %560 = vector.load %arg22[%c19_181, %c0_182] : memref<128x8xf32, #tpu.memory_space<vmem>>, vector<64x8xf32>
    %561 = vector.extract_strided_slice %331 {offsets = [13, 0], sizes = [1, 8], strides = [1, 1]} : vector<49x8xf32> to vector<1x8xf32>
    %562 = vector.broadcast %561 : vector<1x8xf32> to vector<64x8xf32>
    %563 = arith.mulf %560, %562 : vector<64x8xf32>
    %564 = arith.addf %559, %563 : vector<64x8xf32>
    %c27_183 = arith.constant 27 : index
    %c0_184 = arith.constant 0 : index
    %565 = vector.load %arg22[%c27_183, %c0_184] : memref<128x8xf32, #tpu.memory_space<vmem>>, vector<64x8xf32>
    %566 = vector.extract_strided_slice %331 {offsets = [20, 0], sizes = [1, 8], strides = [1, 1]} : vector<49x8xf32> to vector<1x8xf32>
    %567 = vector.broadcast %566 : vector<1x8xf32> to vector<64x8xf32>
    %568 = arith.mulf %565, %567 : vector<64x8xf32>
    %569 = arith.addf %564, %568 : vector<64x8xf32>
    %c35_185 = arith.constant 35 : index
    %c0_186 = arith.constant 0 : index
    %570 = vector.load %arg22[%c35_185, %c0_186] : memref<128x8xf32, #tpu.memory_space<vmem>>, vector<64x8xf32>
    %571 = vector.extract_strided_slice %331 {offsets = [27, 0], sizes = [1, 8], strides = [1, 1]} : vector<49x8xf32> to vector<1x8xf32>
    %572 = vector.broadcast %571 : vector<1x8xf32> to vector<64x8xf32>
    %573 = arith.mulf %570, %572 : vector<64x8xf32>
    %574 = arith.addf %569, %573 : vector<64x8xf32>
    %c43_187 = arith.constant 43 : index
    %c0_188 = arith.constant 0 : index
    %575 = vector.load %arg22[%c43_187, %c0_188] : memref<128x8xf32, #tpu.memory_space<vmem>>, vector<64x8xf32>
    %576 = vector.extract_strided_slice %331 {offsets = [34, 0], sizes = [1, 8], strides = [1, 1]} : vector<49x8xf32> to vector<1x8xf32>
    %577 = vector.broadcast %576 : vector<1x8xf32> to vector<64x8xf32>
    %578 = arith.mulf %575, %577 : vector<64x8xf32>
    %579 = arith.addf %574, %578 : vector<64x8xf32>
    %c51_189 = arith.constant 51 : index
    %c0_190 = arith.constant 0 : index
    %580 = vector.load %arg22[%c51_189, %c0_190] : memref<128x8xf32, #tpu.memory_space<vmem>>, vector<64x8xf32>
    %581 = vector.extract_strided_slice %331 {offsets = [41, 0], sizes = [1, 8], strides = [1, 1]} : vector<49x8xf32> to vector<1x8xf32>
    %582 = vector.broadcast %581 : vector<1x8xf32> to vector<64x8xf32>
    %583 = arith.mulf %580, %582 : vector<64x8xf32>
    %584 = arith.addf %579, %583 : vector<64x8xf32>
    %c59_191 = arith.constant 59 : index
    %c0_192 = arith.constant 0 : index
    %585 = vector.load %arg22[%c59_191, %c0_192] : memref<128x8xf32, #tpu.memory_space<vmem>>, vector<64x8xf32>
    %586 = vector.extract_strided_slice %331 {offsets = [48, 0], sizes = [1, 8], strides = [1, 1]} : vector<49x8xf32> to vector<1x8xf32>
    %587 = vector.broadcast %586 : vector<1x8xf32> to vector<64x8xf32>
    %588 = arith.mulf %585, %587 : vector<64x8xf32>
    %589 = arith.addf %584, %588 : vector<64x8xf32>
    %590 = vector.extract_strided_slice %3 {offsets = [0, 6], sizes = [64, 1], strides = [1, 1]} : vector<64x7xf32> to vector<64x1xf32>
    %591 = vector.broadcast %590 : vector<64x1xf32> to vector<64x8xf32>
    %592 = arith.mulf %589, %591 : vector<64x8xf32>
    %593 = arith.addf %555, %592 : vector<64x8xf32>
    %c0_193 = arith.constant 0 : index
    %c0_194 = arith.constant 0 : index
    %594 = vector.load %arg14[%c0_193, %c0_194] : memref<3x64xf32, #tpu.memory_space<vmem>>, vector<3x64xf32>
    %595 = tpu.concatenate %325, %593 in 1 : vector<64x8xf32>, vector<64x8xf32> -> vector<64x16xf32>
    %c0_195 = arith.constant 0 : index
    %c0_196 = arith.constant 0 : index
    %596 = vector.load %arg13[%c0_195, %c0_196] : memref<16x64xf32, #tpu.memory_space<vmem>>, vector<16x64xf32>
    %cst_197 = arith.constant dense<0.000000e+00> : vector<64x64xf32>
    %597 = tpu.matmul %595, %596, %cst_197 {dimension_numbers = #tpu.dot_dimension_numbers<[1], [0], [0], [1], [0, 0, 1, 1], [], []>} : vector<64x16xf32>, vector<16x64xf32>, vector<64x64xf32> -> vector<64x64xf32>
    %598 = vector.extract_strided_slice %594 {offsets = [0, 0], sizes = [1, 64], strides = [1, 1]} : vector<3x64xf32> to vector<1x64xf32>
    %599 = vector.broadcast %598 : vector<1x64xf32> to vector<64x64xf32>
    %600 = arith.addf %597, %599 : vector<64x64xf32>
    %cst_198 = arith.constant 0.000000e+00 : f32
    %601 = vector.broadcast %cst_198 : f32 to vector<64x64xf32>
    %602 = arith.maximumf %600, %601 : vector<64x64xf32>
    %603 = vector.extract_strided_slice %594 {offsets = [1, 0], sizes = [1, 64], strides = [1, 1]} : vector<3x64xf32> to vector<1x64xf32>
    %604 = vector.broadcast %603 : vector<1x64xf32> to vector<64x64xf32>
    %605 = arith.mulf %602, %604 : vector<64x64xf32>
    %606 = vector.extract_strided_slice %594 {offsets = [2, 0], sizes = [1, 64], strides = [1, 1]} : vector<3x64xf32> to vector<1x64xf32>
    %607 = vector.broadcast %606 : vector<1x64xf32> to vector<64x64xf32>
    %608 = arith.addf %605, %607 : vector<64x64xf32>
    %609 = arith.addf %608, %311 : vector<64x64xf32>
    %c0_199 = arith.constant 0 : index
    %c0_200 = arith.constant 0 : index
    %610 = vector.load %arg16[%c0_199, %c0_200] : memref<3x16xf32, #tpu.memory_space<vmem>>, vector<3x16xf32>
    %c0_201 = arith.constant 0 : index
    %c0_202 = arith.constant 0 : index
    %611 = vector.load %arg15[%c0_201, %c0_202] : memref<64x16xf32, #tpu.memory_space<vmem>>, vector<64x16xf32>
    %cst_203 = arith.constant dense<0.000000e+00> : vector<64x16xf32>
    %612 = tpu.matmul %609, %611, %cst_203 {dimension_numbers = #tpu.dot_dimension_numbers<[1], [0], [0], [1], [0, 0, 1, 1], [], []>} : vector<64x64xf32>, vector<64x16xf32>, vector<64x16xf32> -> vector<64x16xf32>
    %613 = vector.extract_strided_slice %610 {offsets = [0, 0], sizes = [1, 16], strides = [1, 1]} : vector<3x16xf32> to vector<1x16xf32>
    %614 = vector.broadcast %613 : vector<1x16xf32> to vector<64x16xf32>
    %615 = arith.addf %612, %614 : vector<64x16xf32>
    %cst_204 = arith.constant 0.000000e+00 : f32
    %616 = vector.broadcast %cst_204 : f32 to vector<64x16xf32>
    %617 = arith.maximumf %615, %616 : vector<64x16xf32>
    %618 = vector.extract_strided_slice %610 {offsets = [1, 0], sizes = [1, 16], strides = [1, 1]} : vector<3x16xf32> to vector<1x16xf32>
    %619 = vector.broadcast %618 : vector<1x16xf32> to vector<64x16xf32>
    %620 = arith.mulf %617, %619 : vector<64x16xf32>
    %621 = vector.extract_strided_slice %610 {offsets = [2, 0], sizes = [1, 16], strides = [1, 1]} : vector<3x16xf32> to vector<1x16xf32>
    %622 = vector.broadcast %621 : vector<1x16xf32> to vector<64x16xf32>
    %623 = arith.addf %620, %622 : vector<64x16xf32>
    %cst_205 = arith.constant 0.000000e+00 : f32
    %624 = vector.broadcast %cst_205 : f32 to vector<32x16xf32>
    %c0_206 = arith.constant 0 : index
    %c0_207 = arith.constant 0 : index
    %625 = vector.load %arg23[%c0_206, %c0_207] : memref<128x16xf32, #tpu.memory_space<vmem>>, vector<32x16xf32>
    tpu.vector_store %arg23[%c0_206, %c0_207], %624 {strides = array<i32>} : memref<128x16xf32, #tpu.memory_space<vmem>>, vector<32x16xf32>,
    %c32_208 = arith.constant 32 : index
    %c0_209 = arith.constant 0 : index
    %626 = vector.load %arg23[%c32_208, %c0_209] : memref<128x16xf32, #tpu.memory_space<vmem>>, vector<64x16xf32>
    tpu.vector_store %arg23[%c32_208, %c0_209], %623 {strides = array<i32>} : memref<128x16xf32, #tpu.memory_space<vmem>>, vector<64x16xf32>,
    %cst_210 = arith.constant 0.000000e+00 : f32
    %627 = vector.broadcast %cst_210 : f32 to vector<32x16xf32>
    %c96_211 = arith.constant 96 : index
    %c0_212 = arith.constant 0 : index
    %628 = vector.load %arg23[%c96_211, %c0_212] : memref<128x16xf32, #tpu.memory_space<vmem>>, vector<32x16xf32>
    tpu.vector_store %arg23[%c96_211, %c0_212], %627 {strides = array<i32>} : memref<128x16xf32, #tpu.memory_space<vmem>>, vector<32x16xf32>,
    %c0_213 = arith.constant 0 : index
    %c0_214 = arith.constant 0 : index
    %629 = vector.load %arg17[%c0_213, %c0_214] : memref<49x16xf32, #tpu.memory_space<vmem>>, vector<49x16xf32>
    %c5_215 = arith.constant 5 : index
    %c0_216 = arith.constant 0 : index
    %630 = vector.load %arg23[%c5_215, %c0_216] : memref<128x16xf32, #tpu.memory_space<vmem>>, vector<64x16xf32>
    %631 = vector.extract_strided_slice %629 {offsets = [0, 0], sizes = [1, 16], strides = [1, 1]} : vector<49x16xf32> to vector<1x16xf32>
    %632 = vector.broadcast %631 : vector<1x16xf32> to vector<64x16xf32>
    %633 = arith.mulf %630, %632 : vector<64x16xf32>
    %c13_217 = arith.constant 13 : index
    %c0_218 = arith.constant 0 : index
    %634 = vector.load %arg23[%c13_217, %c0_218] : memref<128x16xf32, #tpu.memory_space<vmem>>, vector<64x16xf32>
    %635 = vector.extract_strided_slice %629 {offsets = [7, 0], sizes = [1, 16], strides = [1, 1]} : vector<49x16xf32> to vector<1x16xf32>
    %636 = vector.broadcast %635 : vector<1x16xf32> to vector<64x16xf32>
    %637 = arith.mulf %634, %636 : vector<64x16xf32>
    %638 = arith.addf %633, %637 : vector<64x16xf32>
    %c21_219 = arith.constant 21 : index
    %c0_220 = arith.constant 0 : index
    %639 = vector.load %arg23[%c21_219, %c0_220] : memref<128x16xf32, #tpu.memory_space<vmem>>, vector<64x16xf32>
    %640 = vector.extract_strided_slice %629 {offsets = [14, 0], sizes = [1, 16], strides = [1, 1]} : vector<49x16xf32> to vector<1x16xf32>
    %641 = vector.broadcast %640 : vector<1x16xf32> to vector<64x16xf32>
    %642 = arith.mulf %639, %641 : vector<64x16xf32>
    %643 = arith.addf %638, %642 : vector<64x16xf32>
    %c29_221 = arith.constant 29 : index
    %c0_222 = arith.constant 0 : index
    %644 = vector.load %arg23[%c29_221, %c0_222] : memref<128x16xf32, #tpu.memory_space<vmem>>, vector<64x16xf32>
    %645 = vector.extract_strided_slice %629 {offsets = [21, 0], sizes = [1, 16], strides = [1, 1]} : vector<49x16xf32> to vector<1x16xf32>
    %646 = vector.broadcast %645 : vector<1x16xf32> to vector<64x16xf32>
    %647 = arith.mulf %644, %646 : vector<64x16xf32>
    %648 = arith.addf %643, %647 : vector<64x16xf32>
    %c37_223 = arith.constant 37 : index
    %c0_224 = arith.constant 0 : index
    %649 = vector.load %arg23[%c37_223, %c0_224] : memref<128x16xf32, #tpu.memory_space<vmem>>, vector<64x16xf32>
    %650 = vector.extract_strided_slice %629 {offsets = [28, 0], sizes = [1, 16], strides = [1, 1]} : vector<49x16xf32> to vector<1x16xf32>
    %651 = vector.broadcast %650 : vector<1x16xf32> to vector<64x16xf32>
    %652 = arith.mulf %649, %651 : vector<64x16xf32>
    %653 = arith.addf %648, %652 : vector<64x16xf32>
    %c45_225 = arith.constant 45 : index
    %c0_226 = arith.constant 0 : index
    %654 = vector.load %arg23[%c45_225, %c0_226] : memref<128x16xf32, #tpu.memory_space<vmem>>, vector<64x16xf32>
    %655 = vector.extract_strided_slice %629 {offsets = [35, 0], sizes = [1, 16], strides = [1, 1]} : vector<49x16xf32> to vector<1x16xf32>
    %656 = vector.broadcast %655 : vector<1x16xf32> to vector<64x16xf32>
    %657 = arith.mulf %654, %656 : vector<64x16xf32>
    %658 = arith.addf %653, %657 : vector<64x16xf32>
    %c53_227 = arith.constant 53 : index
    %c0_228 = arith.constant 0 : index
    %659 = vector.load %arg23[%c53_227, %c0_228] : memref<128x16xf32, #tpu.memory_space<vmem>>, vector<64x16xf32>
    %660 = vector.extract_strided_slice %629 {offsets = [42, 0], sizes = [1, 16], strides = [1, 1]} : vector<49x16xf32> to vector<1x16xf32>
    %661 = vector.broadcast %660 : vector<1x16xf32> to vector<64x16xf32>
    %662 = arith.mulf %659, %661 : vector<64x16xf32>
    %663 = arith.addf %658, %662 : vector<64x16xf32>
    %664 = vector.extract_strided_slice %3 {offsets = [0, 0], sizes = [64, 1], strides = [1, 1]} : vector<64x7xf32> to vector<64x1xf32>
    %665 = vector.broadcast %664 : vector<64x1xf32> to vector<64x16xf32>
    %666 = arith.mulf %663, %665 : vector<64x16xf32>
    %c6_229 = arith.constant 6 : index
    %c0_230 = arith.constant 0 : index
    %667 = vector.load %arg23[%c6_229, %c0_230] : memref<128x16xf32, #tpu.memory_space<vmem>>, vector<64x16xf32>
    %668 = vector.extract_strided_slice %629 {offsets = [1, 0], sizes = [1, 16], strides = [1, 1]} : vector<49x16xf32> to vector<1x16xf32>
    %669 = vector.broadcast %668 : vector<1x16xf32> to vector<64x16xf32>
    %670 = arith.mulf %667, %669 : vector<64x16xf32>
    %c14_231 = arith.constant 14 : index
    %c0_232 = arith.constant 0 : index
    %671 = vector.load %arg23[%c14_231, %c0_232] : memref<128x16xf32, #tpu.memory_space<vmem>>, vector<64x16xf32>
    %672 = vector.extract_strided_slice %629 {offsets = [8, 0], sizes = [1, 16], strides = [1, 1]} : vector<49x16xf32> to vector<1x16xf32>
    %673 = vector.broadcast %672 : vector<1x16xf32> to vector<64x16xf32>
    %674 = arith.mulf %671, %673 : vector<64x16xf32>
    %675 = arith.addf %670, %674 : vector<64x16xf32>
    %c22_233 = arith.constant 22 : index
    %c0_234 = arith.constant 0 : index
    %676 = vector.load %arg23[%c22_233, %c0_234] : memref<128x16xf32, #tpu.memory_space<vmem>>, vector<64x16xf32>
    %677 = vector.extract_strided_slice %629 {offsets = [15, 0], sizes = [1, 16], strides = [1, 1]} : vector<49x16xf32> to vector<1x16xf32>
    %678 = vector.broadcast %677 : vector<1x16xf32> to vector<64x16xf32>
    %679 = arith.mulf %676, %678 : vector<64x16xf32>
    %680 = arith.addf %675, %679 : vector<64x16xf32>
    %c30_235 = arith.constant 30 : index
    %c0_236 = arith.constant 0 : index
    %681 = vector.load %arg23[%c30_235, %c0_236] : memref<128x16xf32, #tpu.memory_space<vmem>>, vector<64x16xf32>
    %682 = vector.extract_strided_slice %629 {offsets = [22, 0], sizes = [1, 16], strides = [1, 1]} : vector<49x16xf32> to vector<1x16xf32>
    %683 = vector.broadcast %682 : vector<1x16xf32> to vector<64x16xf32>
    %684 = arith.mulf %681, %683 : vector<64x16xf32>
    %685 = arith.addf %680, %684 : vector<64x16xf32>
    %c38_237 = arith.constant 38 : index
    %c0_238 = arith.constant 0 : index
    %686 = vector.load %arg23[%c38_237, %c0_238] : memref<128x16xf32, #tpu.memory_space<vmem>>, vector<64x16xf32>
    %687 = vector.extract_strided_slice %629 {offsets = [29, 0], sizes = [1, 16], strides = [1, 1]} : vector<49x16xf32> to vector<1x16xf32>
    %688 = vector.broadcast %687 : vector<1x16xf32> to vector<64x16xf32>
    %689 = arith.mulf %686, %688 : vector<64x16xf32>
    %690 = arith.addf %685, %689 : vector<64x16xf32>
    %c46_239 = arith.constant 46 : index
    %c0_240 = arith.constant 0 : index
    %691 = vector.load %arg23[%c46_239, %c0_240] : memref<128x16xf32, #tpu.memory_space<vmem>>, vector<64x16xf32>
    %692 = vector.extract_strided_slice %629 {offsets = [36, 0], sizes = [1, 16], strides = [1, 1]} : vector<49x16xf32> to vector<1x16xf32>
    %693 = vector.broadcast %692 : vector<1x16xf32> to vector<64x16xf32>
    %694 = arith.mulf %691, %693 : vector<64x16xf32>
    %695 = arith.addf %690, %694 : vector<64x16xf32>
    %c54_241 = arith.constant 54 : index
    %c0_242 = arith.constant 0 : index
    %696 = vector.load %arg23[%c54_241, %c0_242] : memref<128x16xf32, #tpu.memory_space<vmem>>, vector<64x16xf32>
    %697 = vector.extract_strided_slice %629 {offsets = [43, 0], sizes = [1, 16], strides = [1, 1]} : vector<49x16xf32> to vector<1x16xf32>
    %698 = vector.broadcast %697 : vector<1x16xf32> to vector<64x16xf32>
    %699 = arith.mulf %696, %698 : vector<64x16xf32>
    %700 = arith.addf %695, %699 : vector<64x16xf32>
    %701 = vector.extract_strided_slice %3 {offsets = [0, 1], sizes = [64, 1], strides = [1, 1]} : vector<64x7xf32> to vector<64x1xf32>
    %702 = vector.broadcast %701 : vector<64x1xf32> to vector<64x16xf32>
    %703 = arith.mulf %700, %702 : vector<64x16xf32>
    %704 = arith.addf %666, %703 : vector<64x16xf32>
    %c7_243 = arith.constant 7 : index
    %c0_244 = arith.constant 0 : index
    %705 = vector.load %arg23[%c7_243, %c0_244] : memref<128x16xf32, #tpu.memory_space<vmem>>, vector<64x16xf32>
    %706 = vector.extract_strided_slice %629 {offsets = [2, 0], sizes = [1, 16], strides = [1, 1]} : vector<49x16xf32> to vector<1x16xf32>
    %707 = vector.broadcast %706 : vector<1x16xf32> to vector<64x16xf32>
    %708 = arith.mulf %705, %707 : vector<64x16xf32>
    %c15_245 = arith.constant 15 : index
    %c0_246 = arith.constant 0 : index
    %709 = vector.load %arg23[%c15_245, %c0_246] : memref<128x16xf32, #tpu.memory_space<vmem>>, vector<64x16xf32>
    %710 = vector.extract_strided_slice %629 {offsets = [9, 0], sizes = [1, 16], strides = [1, 1]} : vector<49x16xf32> to vector<1x16xf32>
    %711 = vector.broadcast %710 : vector<1x16xf32> to vector<64x16xf32>
    %712 = arith.mulf %709, %711 : vector<64x16xf32>
    %713 = arith.addf %708, %712 : vector<64x16xf32>
    %c23_247 = arith.constant 23 : index
    %c0_248 = arith.constant 0 : index
    %714 = vector.load %arg23[%c23_247, %c0_248] : memref<128x16xf32, #tpu.memory_space<vmem>>, vector<64x16xf32>
    %715 = vector.extract_strided_slice %629 {offsets = [16, 0], sizes = [1, 16], strides = [1, 1]} : vector<49x16xf32> to vector<1x16xf32>
    %716 = vector.broadcast %715 : vector<1x16xf32> to vector<64x16xf32>
    %717 = arith.mulf %714, %716 : vector<64x16xf32>
    %718 = arith.addf %713, %717 : vector<64x16xf32>
    %c31_249 = arith.constant 31 : index
    %c0_250 = arith.constant 0 : index
    %719 = vector.load %arg23[%c31_249, %c0_250] : memref<128x16xf32, #tpu.memory_space<vmem>>, vector<64x16xf32>
    %720 = vector.extract_strided_slice %629 {offsets = [23, 0], sizes = [1, 16], strides = [1, 1]} : vector<49x16xf32> to vector<1x16xf32>
    %721 = vector.broadcast %720 : vector<1x16xf32> to vector<64x16xf32>
    %722 = arith.mulf %719, %721 : vector<64x16xf32>
    %723 = arith.addf %718, %722 : vector<64x16xf32>
    %c39_251 = arith.constant 39 : index
    %c0_252 = arith.constant 0 : index
    %724 = vector.load %arg23[%c39_251, %c0_252] : memref<128x16xf32, #tpu.memory_space<vmem>>, vector<64x16xf32>
    %725 = vector.extract_strided_slice %629 {offsets = [30, 0], sizes = [1, 16], strides = [1, 1]} : vector<49x16xf32> to vector<1x16xf32>
    %726 = vector.broadcast %725 : vector<1x16xf32> to vector<64x16xf32>
    %727 = arith.mulf %724, %726 : vector<64x16xf32>
    %728 = arith.addf %723, %727 : vector<64x16xf32>
    %c47_253 = arith.constant 47 : index
    %c0_254 = arith.constant 0 : index
    %729 = vector.load %arg23[%c47_253, %c0_254] : memref<128x16xf32, #tpu.memory_space<vmem>>, vector<64x16xf32>
    %730 = vector.extract_strided_slice %629 {offsets = [37, 0], sizes = [1, 16], strides = [1, 1]} : vector<49x16xf32> to vector<1x16xf32>
    %731 = vector.broadcast %730 : vector<1x16xf32> to vector<64x16xf32>
    %732 = arith.mulf %729, %731 : vector<64x16xf32>
    %733 = arith.addf %728, %732 : vector<64x16xf32>
    %c55_255 = arith.constant 55 : index
    %c0_256 = arith.constant 0 : index
    %734 = vector.load %arg23[%c55_255, %c0_256] : memref<128x16xf32, #tpu.memory_space<vmem>>, vector<64x16xf32>
    %735 = vector.extract_strided_slice %629 {offsets = [44, 0], sizes = [1, 16], strides = [1, 1]} : vector<49x16xf32> to vector<1x16xf32>
    %736 = vector.broadcast %735 : vector<1x16xf32> to vector<64x16xf32>
    %737 = arith.mulf %734, %736 : vector<64x16xf32>
    %738 = arith.addf %733, %737 : vector<64x16xf32>
    %739 = vector.extract_strided_slice %3 {offsets = [0, 2], sizes = [64, 1], strides = [1, 1]} : vector<64x7xf32> to vector<64x1xf32>
    %740 = vector.broadcast %739 : vector<64x1xf32> to vector<64x16xf32>
    %741 = arith.mulf %738, %740 : vector<64x16xf32>
    %742 = arith.addf %704, %741 : vector<64x16xf32>
    %c8_257 = arith.constant 8 : index
    %c0_258 = arith.constant 0 : index
    %743 = vector.load %arg23[%c8_257, %c0_258] : memref<128x16xf32, #tpu.memory_space<vmem>>, vector<64x16xf32>
    %744 = vector.extract_strided_slice %629 {offsets = [3, 0], sizes = [1, 16], strides = [1, 1]} : vector<49x16xf32> to vector<1x16xf32>
    %745 = vector.broadcast %744 : vector<1x16xf32> to vector<64x16xf32>
    %746 = arith.mulf %743, %745 : vector<64x16xf32>
    %c16_259 = arith.constant 16 : index
    %c0_260 = arith.constant 0 : index
    %747 = vector.load %arg23[%c16_259, %c0_260] : memref<128x16xf32, #tpu.memory_space<vmem>>, vector<64x16xf32>
    %748 = vector.extract_strided_slice %629 {offsets = [10, 0], sizes = [1, 16], strides = [1, 1]} : vector<49x16xf32> to vector<1x16xf32>
    %749 = vector.broadcast %748 : vector<1x16xf32> to vector<64x16xf32>
    %750 = arith.mulf %747, %749 : vector<64x16xf32>
    %751 = arith.addf %746, %750 : vector<64x16xf32>
    %c24_261 = arith.constant 24 : index
    %c0_262 = arith.constant 0 : index
    %752 = vector.load %arg23[%c24_261, %c0_262] : memref<128x16xf32, #tpu.memory_space<vmem>>, vector<64x16xf32>
    %753 = vector.extract_strided_slice %629 {offsets = [17, 0], sizes = [1, 16], strides = [1, 1]} : vector<49x16xf32> to vector<1x16xf32>
    %754 = vector.broadcast %753 : vector<1x16xf32> to vector<64x16xf32>
    %755 = arith.mulf %752, %754 : vector<64x16xf32>
    %756 = arith.addf %751, %755 : vector<64x16xf32>
    %c32_263 = arith.constant 32 : index
    %c0_264 = arith.constant 0 : index
    %757 = vector.load %arg23[%c32_263, %c0_264] : memref<128x16xf32, #tpu.memory_space<vmem>>, vector<64x16xf32>
    %758 = vector.extract_strided_slice %629 {offsets = [24, 0], sizes = [1, 16], strides = [1, 1]} : vector<49x16xf32> to vector<1x16xf32>
    %759 = vector.broadcast %758 : vector<1x16xf32> to vector<64x16xf32>
    %760 = arith.mulf %757, %759 : vector<64x16xf32>
    %761 = arith.addf %756, %760 : vector<64x16xf32>
    %c40_265 = arith.constant 40 : index
    %c0_266 = arith.constant 0 : index
    %762 = vector.load %arg23[%c40_265, %c0_266] : memref<128x16xf32, #tpu.memory_space<vmem>>, vector<64x16xf32>
    %763 = vector.extract_strided_slice %629 {offsets = [31, 0], sizes = [1, 16], strides = [1, 1]} : vector<49x16xf32> to vector<1x16xf32>
    %764 = vector.broadcast %763 : vector<1x16xf32> to vector<64x16xf32>
    %765 = arith.mulf %762, %764 : vector<64x16xf32>
    %766 = arith.addf %761, %765 : vector<64x16xf32>
    %c48_267 = arith.constant 48 : index
    %c0_268 = arith.constant 0 : index
    %767 = vector.load %arg23[%c48_267, %c0_268] : memref<128x16xf32, #tpu.memory_space<vmem>>, vector<64x16xf32>
    %768 = vector.extract_strided_slice %629 {offsets = [38, 0], sizes = [1, 16], strides = [1, 1]} : vector<49x16xf32> to vector<1x16xf32>
    %769 = vector.broadcast %768 : vector<1x16xf32> to vector<64x16xf32>
    %770 = arith.mulf %767, %769 : vector<64x16xf32>
    %771 = arith.addf %766, %770 : vector<64x16xf32>
    %c56_269 = arith.constant 56 : index
    %c0_270 = arith.constant 0 : index
    %772 = vector.load %arg23[%c56_269, %c0_270] : memref<128x16xf32, #tpu.memory_space<vmem>>, vector<64x16xf32>
    %773 = vector.extract_strided_slice %629 {offsets = [45, 0], sizes = [1, 16], strides = [1, 1]} : vector<49x16xf32> to vector<1x16xf32>
    %774 = vector.broadcast %773 : vector<1x16xf32> to vector<64x16xf32>
    %775 = arith.mulf %772, %774 : vector<64x16xf32>
    %776 = arith.addf %771, %775 : vector<64x16xf32>
    %777 = arith.addf %742, %776 : vector<64x16xf32>
    %c9_271 = arith.constant 9 : index
    %c0_272 = arith.constant 0 : index
    %778 = vector.load %arg23[%c9_271, %c0_272] : memref<128x16xf32, #tpu.memory_space<vmem>>, vector<64x16xf32>
    %779 = vector.extract_strided_slice %629 {offsets = [4, 0], sizes = [1, 16], strides = [1, 1]} : vector<49x16xf32> to vector<1x16xf32>
    %780 = vector.broadcast %779 : vector<1x16xf32> to vector<64x16xf32>
    %781 = arith.mulf %778, %780 : vector<64x16xf32>
    %c17_273 = arith.constant 17 : index
    %c0_274 = arith.constant 0 : index
    %782 = vector.load %arg23[%c17_273, %c0_274] : memref<128x16xf32, #tpu.memory_space<vmem>>, vector<64x16xf32>
    %783 = vector.extract_strided_slice %629 {offsets = [11, 0], sizes = [1, 16], strides = [1, 1]} : vector<49x16xf32> to vector<1x16xf32>
    %784 = vector.broadcast %783 : vector<1x16xf32> to vector<64x16xf32>
    %785 = arith.mulf %782, %784 : vector<64x16xf32>
    %786 = arith.addf %781, %785 : vector<64x16xf32>
    %c25_275 = arith.constant 25 : index
    %c0_276 = arith.constant 0 : index
    %787 = vector.load %arg23[%c25_275, %c0_276] : memref<128x16xf32, #tpu.memory_space<vmem>>, vector<64x16xf32>
    %788 = vector.extract_strided_slice %629 {offsets = [18, 0], sizes = [1, 16], strides = [1, 1]} : vector<49x16xf32> to vector<1x16xf32>
    %789 = vector.broadcast %788 : vector<1x16xf32> to vector<64x16xf32>
    %790 = arith.mulf %787, %789 : vector<64x16xf32>
    %791 = arith.addf %786, %790 : vector<64x16xf32>
    %c33_277 = arith.constant 33 : index
    %c0_278 = arith.constant 0 : index
    %792 = vector.load %arg23[%c33_277, %c0_278] : memref<128x16xf32, #tpu.memory_space<vmem>>, vector<64x16xf32>
    %793 = vector.extract_strided_slice %629 {offsets = [25, 0], sizes = [1, 16], strides = [1, 1]} : vector<49x16xf32> to vector<1x16xf32>
    %794 = vector.broadcast %793 : vector<1x16xf32> to vector<64x16xf32>
    %795 = arith.mulf %792, %794 : vector<64x16xf32>
    %796 = arith.addf %791, %795 : vector<64x16xf32>
    %c41_279 = arith.constant 41 : index
    %c0_280 = arith.constant 0 : index
    %797 = vector.load %arg23[%c41_279, %c0_280] : memref<128x16xf32, #tpu.memory_space<vmem>>, vector<64x16xf32>
    %798 = vector.extract_strided_slice %629 {offsets = [32, 0], sizes = [1, 16], strides = [1, 1]} : vector<49x16xf32> to vector<1x16xf32>
    %799 = vector.broadcast %798 : vector<1x16xf32> to vector<64x16xf32>
    %800 = arith.mulf %797, %799 : vector<64x16xf32>
    %801 = arith.addf %796, %800 : vector<64x16xf32>
    %c49_281 = arith.constant 49 : index
    %c0_282 = arith.constant 0 : index
    %802 = vector.load %arg23[%c49_281, %c0_282] : memref<128x16xf32, #tpu.memory_space<vmem>>, vector<64x16xf32>
    %803 = vector.extract_strided_slice %629 {offsets = [39, 0], sizes = [1, 16], strides = [1, 1]} : vector<49x16xf32> to vector<1x16xf32>
    %804 = vector.broadcast %803 : vector<1x16xf32> to vector<64x16xf32>
    %805 = arith.mulf %802, %804 : vector<64x16xf32>
    %806 = arith.addf %801, %805 : vector<64x16xf32>
    %c57_283 = arith.constant 57 : index
    %c0_284 = arith.constant 0 : index
    %807 = vector.load %arg23[%c57_283, %c0_284] : memref<128x16xf32, #tpu.memory_space<vmem>>, vector<64x16xf32>
    %808 = vector.extract_strided_slice %629 {offsets = [46, 0], sizes = [1, 16], strides = [1, 1]} : vector<49x16xf32> to vector<1x16xf32>
    %809 = vector.broadcast %808 : vector<1x16xf32> to vector<64x16xf32>
    %810 = arith.mulf %807, %809 : vector<64x16xf32>
    %811 = arith.addf %806, %810 : vector<64x16xf32>
    %812 = vector.extract_strided_slice %3 {offsets = [0, 4], sizes = [64, 1], strides = [1, 1]} : vector<64x7xf32> to vector<64x1xf32>
    %813 = vector.broadcast %812 : vector<64x1xf32> to vector<64x16xf32>
    %814 = arith.mulf %811, %813 : vector<64x16xf32>
    %815 = arith.addf %777, %814 : vector<64x16xf32>
    %c10_285 = arith.constant 10 : index
    %c0_286 = arith.constant 0 : index
    %816 = vector.load %arg23[%c10_285, %c0_286] : memref<128x16xf32, #tpu.memory_space<vmem>>, vector<64x16xf32>
    %817 = vector.extract_strided_slice %629 {offsets = [5, 0], sizes = [1, 16], strides = [1, 1]} : vector<49x16xf32> to vector<1x16xf32>
    %818 = vector.broadcast %817 : vector<1x16xf32> to vector<64x16xf32>
    %819 = arith.mulf %816, %818 : vector<64x16xf32>
    %c18_287 = arith.constant 18 : index
    %c0_288 = arith.constant 0 : index
    %820 = vector.load %arg23[%c18_287, %c0_288] : memref<128x16xf32, #tpu.memory_space<vmem>>, vector<64x16xf32>
    %821 = vector.extract_strided_slice %629 {offsets = [12, 0], sizes = [1, 16], strides = [1, 1]} : vector<49x16xf32> to vector<1x16xf32>
    %822 = vector.broadcast %821 : vector<1x16xf32> to vector<64x16xf32>
    %823 = arith.mulf %820, %822 : vector<64x16xf32>
    %824 = arith.addf %819, %823 : vector<64x16xf32>
    %c26_289 = arith.constant 26 : index
    %c0_290 = arith.constant 0 : index
    %825 = vector.load %arg23[%c26_289, %c0_290] : memref<128x16xf32, #tpu.memory_space<vmem>>, vector<64x16xf32>
    %826 = vector.extract_strided_slice %629 {offsets = [19, 0], sizes = [1, 16], strides = [1, 1]} : vector<49x16xf32> to vector<1x16xf32>
    %827 = vector.broadcast %826 : vector<1x16xf32> to vector<64x16xf32>
    %828 = arith.mulf %825, %827 : vector<64x16xf32>
    %829 = arith.addf %824, %828 : vector<64x16xf32>
    %c34_291 = arith.constant 34 : index
    %c0_292 = arith.constant 0 : index
    %830 = vector.load %arg23[%c34_291, %c0_292] : memref<128x16xf32, #tpu.memory_space<vmem>>, vector<64x16xf32>
    %831 = vector.extract_strided_slice %629 {offsets = [26, 0], sizes = [1, 16], strides = [1, 1]} : vector<49x16xf32> to vector<1x16xf32>
    %832 = vector.broadcast %831 : vector<1x16xf32> to vector<64x16xf32>
    %833 = arith.mulf %830, %832 : vector<64x16xf32>
    %834 = arith.addf %829, %833 : vector<64x16xf32>
    %c42_293 = arith.constant 42 : index
    %c0_294 = arith.constant 0 : index
    %835 = vector.load %arg23[%c42_293, %c0_294] : memref<128x16xf32, #tpu.memory_space<vmem>>, vector<64x16xf32>
    %836 = vector.extract_strided_slice %629 {offsets = [33, 0], sizes = [1, 16], strides = [1, 1]} : vector<49x16xf32> to vector<1x16xf32>
    %837 = vector.broadcast %836 : vector<1x16xf32> to vector<64x16xf32>
    %838 = arith.mulf %835, %837 : vector<64x16xf32>
    %839 = arith.addf %834, %838 : vector<64x16xf32>
    %c50_295 = arith.constant 50 : index
    %c0_296 = arith.constant 0 : index
    %840 = vector.load %arg23[%c50_295, %c0_296] : memref<128x16xf32, #tpu.memory_space<vmem>>, vector<64x16xf32>
    %841 = vector.extract_strided_slice %629 {offsets = [40, 0], sizes = [1, 16], strides = [1, 1]} : vector<49x16xf32> to vector<1x16xf32>
    %842 = vector.broadcast %841 : vector<1x16xf32> to vector<64x16xf32>
    %843 = arith.mulf %840, %842 : vector<64x16xf32>
    %844 = arith.addf %839, %843 : vector<64x16xf32>
    %c58_297 = arith.constant 58 : index
    %c0_298 = arith.constant 0 : index
    %845 = vector.load %arg23[%c58_297, %c0_298] : memref<128x16xf32, #tpu.memory_space<vmem>>, vector<64x16xf32>
    %846 = vector.extract_strided_slice %629 {offsets = [47, 0], sizes = [1, 16], strides = [1, 1]} : vector<49x16xf32> to vector<1x16xf32>
    %847 = vector.broadcast %846 : vector<1x16xf32> to vector<64x16xf32>
    %848 = arith.mulf %845, %847 : vector<64x16xf32>
    %849 = arith.addf %844, %848 : vector<64x16xf32>
    %850 = vector.extract_strided_slice %3 {offsets = [0, 5], sizes = [64, 1], strides = [1, 1]} : vector<64x7xf32> to vector<64x1xf32>
    %851 = vector.broadcast %850 : vector<64x1xf32> to vector<64x16xf32>
    %852 = arith.mulf %849, %851 : vector<64x16xf32>
    %853 = arith.addf %815, %852 : vector<64x16xf32>
    %c11_299 = arith.constant 11 : index
    %c0_300 = arith.constant 0 : index
    %854 = vector.load %arg23[%c11_299, %c0_300] : memref<128x16xf32, #tpu.memory_space<vmem>>, vector<64x16xf32>
    %855 = vector.extract_strided_slice %629 {offsets = [6, 0], sizes = [1, 16], strides = [1, 1]} : vector<49x16xf32> to vector<1x16xf32>
    %856 = vector.broadcast %855 : vector<1x16xf32> to vector<64x16xf32>
    %857 = arith.mulf %854, %856 : vector<64x16xf32>
    %c19_301 = arith.constant 19 : index
    %c0_302 = arith.constant 0 : index
    %858 = vector.load %arg23[%c19_301, %c0_302] : memref<128x16xf32, #tpu.memory_space<vmem>>, vector<64x16xf32>
    %859 = vector.extract_strided_slice %629 {offsets = [13, 0], sizes = [1, 16], strides = [1, 1]} : vector<49x16xf32> to vector<1x16xf32>
    %860 = vector.broadcast %859 : vector<1x16xf32> to vector<64x16xf32>
    %861 = arith.mulf %858, %860 : vector<64x16xf32>
    %862 = arith.addf %857, %861 : vector<64x16xf32>
    %c27_303 = arith.constant 27 : index
    %c0_304 = arith.constant 0 : index
    %863 = vector.load %arg23[%c27_303, %c0_304] : memref<128x16xf32, #tpu.memory_space<vmem>>, vector<64x16xf32>
    %864 = vector.extract_strided_slice %629 {offsets = [20, 0], sizes = [1, 16], strides = [1, 1]} : vector<49x16xf32> to vector<1x16xf32>
    %865 = vector.broadcast %864 : vector<1x16xf32> to vector<64x16xf32>
    %866 = arith.mulf %863, %865 : vector<64x16xf32>
    %867 = arith.addf %862, %866 : vector<64x16xf32>
    %c35_305 = arith.constant 35 : index
    %c0_306 = arith.constant 0 : index
    %868 = vector.load %arg23[%c35_305, %c0_306] : memref<128x16xf32, #tpu.memory_space<vmem>>, vector<64x16xf32>
    %869 = vector.extract_strided_slice %629 {offsets = [27, 0], sizes = [1, 16], strides = [1, 1]} : vector<49x16xf32> to vector<1x16xf32>
    %870 = vector.broadcast %869 : vector<1x16xf32> to vector<64x16xf32>
    %871 = arith.mulf %868, %870 : vector<64x16xf32>
    %872 = arith.addf %867, %871 : vector<64x16xf32>
    %c43_307 = arith.constant 43 : index
    %c0_308 = arith.constant 0 : index
    %873 = vector.load %arg23[%c43_307, %c0_308] : memref<128x16xf32, #tpu.memory_space<vmem>>, vector<64x16xf32>
    %874 = vector.extract_strided_slice %629 {offsets = [34, 0], sizes = [1, 16], strides = [1, 1]} : vector<49x16xf32> to vector<1x16xf32>
    %875 = vector.broadcast %874 : vector<1x16xf32> to vector<64x16xf32>
    %876 = arith.mulf %873, %875 : vector<64x16xf32>
    %877 = arith.addf %872, %876 : vector<64x16xf32>
    %c51_309 = arith.constant 51 : index
    %c0_310 = arith.constant 0 : index
    %878 = vector.load %arg23[%c51_309, %c0_310] : memref<128x16xf32, #tpu.memory_space<vmem>>, vector<64x16xf32>
    %879 = vector.extract_strided_slice %629 {offsets = [41, 0], sizes = [1, 16], strides = [1, 1]} : vector<49x16xf32> to vector<1x16xf32>
    %880 = vector.broadcast %879 : vector<1x16xf32> to vector<64x16xf32>
    %881 = arith.mulf %878, %880 : vector<64x16xf32>
    %882 = arith.addf %877, %881 : vector<64x16xf32>
    %c59_311 = arith.constant 59 : index
    %c0_312 = arith.constant 0 : index
    %883 = vector.load %arg23[%c59_311, %c0_312] : memref<128x16xf32, #tpu.memory_space<vmem>>, vector<64x16xf32>
    %884 = vector.extract_strided_slice %629 {offsets = [48, 0], sizes = [1, 16], strides = [1, 1]} : vector<49x16xf32> to vector<1x16xf32>
    %885 = vector.broadcast %884 : vector<1x16xf32> to vector<64x16xf32>
    %886 = arith.mulf %883, %885 : vector<64x16xf32>
    %887 = arith.addf %882, %886 : vector<64x16xf32>
    %888 = vector.extract_strided_slice %3 {offsets = [0, 6], sizes = [64, 1], strides = [1, 1]} : vector<64x7xf32> to vector<64x1xf32>
    %889 = vector.broadcast %888 : vector<64x1xf32> to vector<64x16xf32>
    %890 = arith.mulf %887, %889 : vector<64x16xf32>
    %891 = arith.addf %853, %890 : vector<64x16xf32>
    %c0_313 = arith.constant 0 : index
    %c0_314 = arith.constant 0 : index
    %892 = vector.load %arg19[%c0_313, %c0_314] : memref<3x160xf32, #tpu.memory_space<vmem>>, vector<3x160xf32>
    %893 = tpu.concatenate %623, %891 in 1 : vector<64x16xf32>, vector<64x16xf32> -> vector<64x32xf32>
    %c0_315 = arith.constant 0 : index
    %c0_316 = arith.constant 0 : index
    %894 = vector.load %arg18[%c0_315, %c0_316] : memref<32x160xf32, #tpu.memory_space<vmem>>, vector<32x160xf32>
    %cst_317 = arith.constant dense<0.000000e+00> : vector<64x160xf32>
    %895 = tpu.matmul %893, %894, %cst_317 {dimension_numbers = #tpu.dot_dimension_numbers<[1], [0], [0], [1], [0, 0, 1, 1], [], []>} : vector<64x32xf32>, vector<32x160xf32>, vector<64x160xf32> -> vector<64x160xf32>
    %896 = vector.extract_strided_slice %892 {offsets = [0, 0], sizes = [1, 160], strides = [1, 1]} : vector<3x160xf32> to vector<1x160xf32>
    %897 = vector.broadcast %896 : vector<1x160xf32> to vector<64x160xf32>
    %898 = arith.addf %895, %897 : vector<64x160xf32>
    %cst_318 = arith.constant 0.000000e+00 : f32
    %899 = vector.broadcast %cst_318 : f32 to vector<64x160xf32>
    %900 = arith.maximumf %898, %899 : vector<64x160xf32>
    %901 = vector.extract_strided_slice %892 {offsets = [1, 0], sizes = [1, 160], strides = [1, 1]} : vector<3x160xf32> to vector<1x160xf32>
    %902 = vector.broadcast %901 : vector<1x160xf32> to vector<64x160xf32>
    %903 = arith.mulf %900, %902 : vector<64x160xf32>
    %904 = vector.extract_strided_slice %892 {offsets = [2, 0], sizes = [1, 160], strides = [1, 1]} : vector<3x160xf32> to vector<1x160xf32>
    %905 = vector.broadcast %904 : vector<1x160xf32> to vector<64x160xf32>
    %906 = arith.addf %903, %905 : vector<64x160xf32>
    %c0_319 = arith.constant 0 : index
    %c0_320 = arith.constant 0 : index
    %c0_321 = arith.constant 0 : index
    %907 = vector.load %arg20[%c0_319, %c0_320, %c0_321] : memref<1x64x256xf32, #tpu.memory_space<vmem>>, vector<1x64x160xf32>
    %908 = vector.shape_cast %907 : vector<1x64x160xf32> to vector<64x160xf32>
    %909 = vector.shape_cast %906 : vector<64x160xf32> to vector<1x64x160xf32>
    tpu.vector_store %arg20[%c0_319, %c0_320, %c0_321], %909 {strides = array<i32>} : memref<1x64x256xf32, #tpu.memory_space<vmem>>, vector<1x64x160xf32>,
    %c0_322 = arith.constant 0 : index
    %c0_323 = arith.constant 0 : index
    %c160 = arith.constant 160 : index
    %910 = vector.load %arg20[%c0_322, %c0_323, %c160] : memref<1x64x256xf32, #tpu.memory_space<vmem>>, vector<1x64x96xf32>
    %911 = vector.shape_cast %910 : vector<1x64x96xf32> to vector<64x96xf32>
    %912 = vector.shape_cast %2 : vector<64x96xf32> to vector<1x64x96xf32>
    tpu.vector_store %arg20[%c0_322, %c0_323, %c160], %912 {strides = array<i32>} : memref<1x64x256xf32, #tpu.memory_space<vmem>>, vector<1x64x96xf32>,
    return
  }
  func.func @transform_0(%arg0: i32) -> (i32, i32, i32) {
    %c0_i32 = arith.constant 0 : i32
    %c0_i32_0 = arith.constant 0 : i32
    %c0_i32_1 = arith.constant 0 : i32
    return %arg0, %c0_i32, %c0_i32_0 : i32, i32, i32
  }
  func.func @transform_1(%arg0: i32) -> (i32, i32) {
    %c0_i32 = arith.constant 0 : i32
    %c0_i32_0 = arith.constant 0 : i32
    %c0_i32_1 = arith.constant 0 : i32
    return %c0_i32, %c0_i32_0 : i32, i32
  }
  func.func @transform_2(%arg0: i32) -> (i32, i32) {
    %c0_i32 = arith.constant 0 : i32
    %c0_i32_0 = arith.constant 0 : i32
    %c0_i32_1 = arith.constant 0 : i32
    return %c0_i32, %c0_i32_0 : i32, i32
  }
  func.func @transform_3(%arg0: i32) -> (i32, i32) {
    %c0_i32 = arith.constant 0 : i32
    %c0_i32_0 = arith.constant 0 : i32
    %c0_i32_1 = arith.constant 0 : i32
    return %c0_i32, %c0_i32_0 : i32, i32
  }
  func.func @transform_4(%arg0: i32) -> (i32, i32) {
    %c0_i32 = arith.constant 0 : i32
    %c0_i32_0 = arith.constant 0 : i32
    %c0_i32_1 = arith.constant 0 : i32
    return %c0_i32, %c0_i32_0 : i32, i32
  }
  func.func @transform_5(%arg0: i32) -> (i32, i32) {
    %c0_i32 = arith.constant 0 : i32
    %c0_i32_0 = arith.constant 0 : i32
    %c0_i32_1 = arith.constant 0 : i32
    return %c0_i32, %c0_i32_0 : i32, i32
  }
  func.func @transform_6(%arg0: i32) -> (i32, i32) {
    %c0_i32 = arith.constant 0 : i32
    %c0_i32_0 = arith.constant 0 : i32
    %c0_i32_1 = arith.constant 0 : i32
    return %c0_i32, %c0_i32_0 : i32, i32
  }
  func.func @transform_7(%arg0: i32) -> (i32, i32) {
    %c0_i32 = arith.constant 0 : i32
    %c0_i32_0 = arith.constant 0 : i32
    %c0_i32_1 = arith.constant 0 : i32
    return %c0_i32, %c0_i32_0 : i32, i32
  }
  func.func @transform_8(%arg0: i32) -> (i32, i32) {
    %c0_i32 = arith.constant 0 : i32
    %c0_i32_0 = arith.constant 0 : i32
    %c0_i32_1 = arith.constant 0 : i32
    return %c0_i32, %c0_i32_0 : i32, i32
  }
  func.func @transform_9(%arg0: i32) -> (i32, i32) {
    %c0_i32 = arith.constant 0 : i32
    %c0_i32_0 = arith.constant 0 : i32
    %c0_i32_1 = arith.constant 0 : i32
    return %c0_i32, %c0_i32_0 : i32, i32
  }
  func.func @transform_10(%arg0: i32) -> (i32, i32) {
    %c0_i32 = arith.constant 0 : i32
    %c0_i32_0 = arith.constant 0 : i32
    %c0_i32_1 = arith.constant 0 : i32
    return %c0_i32, %c0_i32_0 : i32, i32
  }
  func.func @transform_11(%arg0: i32) -> (i32, i32) {
    %c0_i32 = arith.constant 0 : i32
    %c0_i32_0 = arith.constant 0 : i32
    %c0_i32_1 = arith.constant 0 : i32
    return %c0_i32, %c0_i32_0 : i32, i32
  }
  func.func @transform_12(%arg0: i32) -> (i32, i32) {
    %c0_i32 = arith.constant 0 : i32
    %c0_i32_0 = arith.constant 0 : i32
    %c0_i32_1 = arith.constant 0 : i32
    return %c0_i32, %c0_i32_0 : i32, i32
  }
  func.func @transform_13(%arg0: i32) -> (i32, i32) {
    %c0_i32 = arith.constant 0 : i32
    %c0_i32_0 = arith.constant 0 : i32
    %c0_i32_1 = arith.constant 0 : i32
    return %c0_i32, %c0_i32_0 : i32, i32
  }
  func.func @transform_14(%arg0: i32) -> (i32, i32) {
    %c0_i32 = arith.constant 0 : i32
    %c0_i32_0 = arith.constant 0 : i32
    %c0_i32_1 = arith.constant 0 : i32
    return %c0_i32, %c0_i32_0 : i32, i32
  }
  func.func @transform_15(%arg0: i32) -> (i32, i32) {
    %c0_i32 = arith.constant 0 : i32
    %c0_i32_0 = arith.constant 0 : i32
    %c0_i32_1 = arith.constant 0 : i32
    return %c0_i32, %c0_i32_0 : i32, i32
  }
  func.func @transform_16(%arg0: i32) -> (i32, i32) {
    %c0_i32 = arith.constant 0 : i32
    %c0_i32_0 = arith.constant 0 : i32
    %c0_i32_1 = arith.constant 0 : i32
    return %c0_i32, %c0_i32_0 : i32, i32
  }
  func.func @transform_17(%arg0: i32) -> (i32, i32) {
    %c0_i32 = arith.constant 0 : i32
    %c0_i32_0 = arith.constant 0 : i32
    %c0_i32_1 = arith.constant 0 : i32
    return %c0_i32, %c0_i32_0 : i32, i32
  }
  func.func @transform_18(%arg0: i32) -> (i32, i32) {
    %c0_i32 = arith.constant 0 : i32
    %c0_i32_0 = arith.constant 0 : i32
    %c0_i32_1 = arith.constant 0 : i32
    return %c0_i32, %c0_i32_0 : i32, i32
  }
  func.func @transform_19(%arg0: i32) -> (i32, i32, i32) {
    %c0_i32 = arith.constant 0 : i32
    %c0_i32_0 = arith.constant 0 : i32
    %c0_i32_1 = arith.constant 0 : i32
    return %arg0, %c0_i32, %c0_i32_0 : i32, i32, i32
  }
}

</mosaic_0001>

<llo_original>
// kernel: tpu_custom_call.1
$region0: #{tpu_custom_call.1}
  #allocation0 [shape = 'u32[]', space=smem, size = 0x4, offset = 0x4, fixed_abs, tag = 'smem constant byte address 0x4 - core index']
  #allocation1 [shape = 'u32[144,128]{1,0:T(1,128)}', space=vmem, size = 0x12000, scoped, tag = 'internal scratch']
  #allocation2 [shape = 'f32[128,8]{1,0:T(8,128)}', space=vmem, size = 0x10000, scoped, tag = 'scratch operand']
  #allocation3 [shape = 'f32[128,8]{1,0:T(8,128)}', space=vmem, size = 0x10000, scoped, tag = 'scratch operand']
  #allocation4 [shape = 'f32[128,16]{1,0:T(8,128)}', space=vmem, size = 0x10000, scoped, tag = 'scratch operand']
  %s0 = inlined_call_operand.vmem [shape: f32[2,96,64], index: 0, kind: input, shape index: {}]
  %s1 = inlined_call_operand.vmem [shape: f32[64,7], index: 1, kind: input, shape index: {}]
  %s2 = inlined_call_operand.vmem [shape: f32[96,48], index: 2, kind: input, shape index: {}]
  %s3 = inlined_call_operand.vmem [shape: f32[2,48], index: 3, kind: input, shape index: {}]
  %s4 = inlined_call_operand.vmem [shape: f32[48,8], index: 4, kind: input, shape index: {}]
  %s5 = inlined_call_operand.vmem [shape: f32[3,8], index: 5, kind: input, shape index: {}]
  %s6 = inlined_call_operand.vmem [shape: f32[49,8], index: 6, kind: input, shape index: {}]
  %s7 = inlined_call_operand.vmem [shape: f32[16,64], index: 7, kind: input, shape index: {}]
  %s8 = inlined_call_operand.vmem [shape: f32[3,64], index: 8, kind: input, shape index: {}]
  %s9 = inlined_call_operand.vmem [shape: f32[64,8], index: 9, kind: input, shape index: {}]
  %s10 = inlined_call_operand.vmem [shape: f32[3,8], index: 10, kind: input, shape index: {}]
  %s11 = inlined_call_operand.vmem [shape: f32[49,8], index: 11, kind: input, shape index: {}]
  %s12 = inlined_call_operand.vmem [shape: f32[16,64], index: 12, kind: input, shape index: {}]
  %s13 = inlined_call_operand.vmem [shape: f32[3,64], index: 13, kind: input, shape index: {}]
  %s14 = inlined_call_operand.vmem [shape: f32[64,16], index: 14, kind: input, shape index: {}]
  %s15 = inlined_call_operand.vmem [shape: f32[3,16], index: 15, kind: input, shape index: {}]
  %s16 = inlined_call_operand.vmem [shape: f32[49,16], index: 16, kind: input, shape index: {}]
  %s17 = inlined_call_operand.vmem [shape: f32[32,160], index: 17, kind: input, shape index: {}]
  %s18 = inlined_call_operand.vmem [shape: f32[3,160], index: 18, kind: input, shape index: {}]
  %s19 = inlined_call_operand.hbm [shape: f32[2,64,256], index: 19, kind: output, shape index: {}]
  %s20 = sld [smem:[#allocation0]]
  $region109: #{tpu_custom_call.1} parent=0
    _
  %s22 = ssub.s32 1, %s20
  %s23 = scalar_select 0, %s22, %s20
  $region1: #{tpu_custom_call.1} parent=0
    #allocation5 [shape = 'u8[131072]{0}', space=vmem, size = 0x20000, scoped, tag = 'output window, operand 0']
    #allocation6 [shape = 's32[2]{0}', space=sflag, size = 0x8, scoped, tag = 'scoped memory for tpu_custom_call.1']
    %24 = vsyncpa [#allocation6], 0
    %s25 = scalar_lea.sflag [#allocation6], 1
    %26 = vsyncpa %s25, 0
    loop: start=0, step=1, limit=4
    $region2: #{tpu_custom_call.1} parent=1 // loop_pre_header
      _
    $region3: #{tpu_custom_call.1} parent=1 // loop_header
      %s28 = sphi 0, %s32
      %p29 = scmp.ge.s32.totalorder %s28, 4
      %s38 = sphi 0, %s40
      %s41 = sphi 0, %s38
      %s42 = sphi 0, %s41
      %s58 = sphi 0, %s42
      %s62 = sphi 0, %s62
      %s64 = sphi 0, %s62
      %s65 = sphi 0, %s64
      %s79 = sphi 0, %s65
      %s83 = sphi 0, %s83
      %s85 = sphi 0, %s83
      %s86 = sphi 0, %s85
      %s100 = sphi 0, %s86
      %s104 = sphi 0, %s104
      %s106 = sphi 0, %s104
      %s107 = sphi 0, %s106
      %s121 = sphi 0, %s107
      %s125 = sphi 0, %s125
      %s127 = sphi 0, %s125
      %s128 = sphi 0, %s127
      %s142 = sphi 0, %s128
      %s146 = sphi 0, %s146
      %s148 = sphi 0, %s146
      %s149 = sphi 0, %s148
      %s163 = sphi 0, %s149
      %s167 = sphi 0, %s167
      %s169 = sphi 0, %s167
      %s170 = sphi 0, %s169
      %s184 = sphi 0, %s170
      %s188 = sphi 0, %s188
      %s190 = sphi 0, %s188
      %s191 = sphi 0, %s190
      %s205 = sphi 0, %s191
      %s209 = sphi 0, %s209
      %s211 = sphi 0, %s209
      %s212 = sphi 0, %s211
      %s226 = sphi 0, %s212
      %s230 = sphi 0, %s230
      %s232 = sphi 0, %s230
      %s233 = sphi 0, %s232
      %s247 = sphi 0, %s233
      %s251 = sphi 0, %s251
      %s253 = sphi 0, %s251
      %s254 = sphi 0, %s253
      %s268 = sphi 0, %s254
      %s272 = sphi 0, %s272
      %s274 = sphi 0, %s272
      %s275 = sphi 0, %s274
      %s289 = sphi 0, %s275
      %s293 = sphi 0, %s293
      %s295 = sphi 0, %s293
      %s296 = sphi 0, %s295
      %s310 = sphi 0, %s296
      %s314 = sphi 0, %s314
      %s316 = sphi 0, %s314
      %s317 = sphi 0, %s316
      %s331 = sphi 0, %s317
      %s335 = sphi 0, %s335
      %s337 = sphi 0, %s335
      %s338 = sphi 0, %s337
      %s352 = sphi 0, %s338
      %s356 = sphi 0, %s356
      %s358 = sphi 0, %s356
      %s359 = sphi 0, %s358
      %s373 = sphi 0, %s359
      %s377 = sphi 0, %s377
      %s379 = sphi 0, %s377
      %s380 = sphi 0, %s379
      %s394 = sphi 0, %s380
      %s398 = sphi 0, %s398
      %s400 = sphi 0, %s398
      %s401 = sphi 0, %s400
      %s415 = sphi 0, %s401
      %s419 = sphi 0, %s419
      %s421 = sphi 0, %s419
      %s422 = sphi 0, %s421
      %s436 = sphi 0, %s422
      %s442 = sphi 0, %s444
      %s445 = sphi 0, %s442
      %s446 = sphi 0, %s445
      %s462 = sphi 0, %s446
    $region4: #{tpu_custom_call.1} parent=1 // loop_header_branch
      %31 = sbr.rel (%p29) target = $region8
    $region5: #{tpu_custom_call.1} parent=1 // loop_body
      %s33 = ssub.s32 %s28, 1
      %s34 = ssub.s32 %s28, 2
      %s35 = sadd.s32 %s28, 1
      %s36 = ssub.s32 %s28, %s35
      %p37 = scmp.eq.s32.totalorder %s36, 0
      %s39 = sadd.s32 %s38, 1
      %s40 = scalar_select %p37, %s38, %s39
      %p43 = pneg %p37
      %p44 = scmp.eq.s32.totalorder %s28, 1
      %p45 = por %p43, %p44
      %p46 = scmp.ne.s32.totalorder %s38, %s41
      %p47 = scmp.eq.s32.totalorder %s28, 0
      %p48 = por %p46, %p47
      %p49 = scmp.ne.s32.totalorder %s38, %s41
      %p50 = scmp.eq.s32.totalorder %s33, 1
      %p51 = por %p49, %p50
      %p52 = scmp.ne.s32.totalorder %s41, %s42
      %p53 = scmp.eq.s32.totalorder %s33, 0
      %p54 = por %p52, %p53
      %p55 = scmp.ne.s32.totalorder %s41, %s42
      %p56 = scmp.eq.s32.totalorder %s34, 1
      %p57 = por %p55, %p56
      %p59 = scmp.ne.s32.totalorder %s42, %s58
      %p60 = scmp.eq.s32.totalorder %s34, 0
      %p61 = por %p59, %p60
      %s63 = sadd.s32 %s62, 1
      %p66 = scmp.eq.s32.totalorder %s28, 1
      %p67 = scmp.ne.s32.totalorder %s62, %s64
      %p68 = scmp.eq.s32.totalorder %s28, 0
      %p69 = por %p67, %p68
      %p70 = scmp.ne.s32.totalorder %s62, %s64
      %p71 = scmp.eq.s32.totalorder %s33, 1
      %p72 = por %p70, %p71
      %p73 = scmp.ne.s32.totalorder %s64, %s65
      %p74 = scmp.eq.s32.totalorder %s33, 0
      %p75 = por %p73, %p74
      %p76 = scmp.ne.s32.totalorder %s64, %s65
      %p77 = scmp.eq.s32.totalorder %s34, 1
      %p78 = por %p76, %p77
      %p80 = scmp.ne.s32.totalorder %s65, %s79
      %p81 = scmp.eq.s32.totalorder %s34, 0
      %p82 = por %p80, %p81
      %s84 = sadd.s32 %s83, 1
      %p87 = scmp.eq.s32.totalorder %s28, 1
      %p88 = scmp.ne.s32.totalorder %s83, %s85
      %p89 = scmp.eq.s32.totalorder %s28, 0
      %p90 = por %p88, %p89
      %p91 = scmp.ne.s32.totalorder %s83, %s85
      %p92 = scmp.eq.s32.totalorder %s33, 1
      %p93 = por %p91, %p92
      %p94 = scmp.ne.s32.totalorder %s85, %s86
      %p95 = scmp.eq.s32.totalorder %s33, 0
      %p96 = por %p94, %p95
      %p97 = scmp.ne.s32.totalorder %s85, %s86
      %p98 = scmp.eq.s32.totalorder %s34, 1
      %p99 = por %p97, %p98
      %p101 = scmp.ne.s32.totalorder %s86, %s100
      %p102 = scmp.eq.s32.totalorder %s34, 0
      %p103 = por %p101, %p102
      %s105 = sadd.s32 %s104, 1
      %p108 = scmp.eq.s32.totalorder %s28, 1
      %p109 = scmp.ne.s32.totalorder %s104, %s106
      %p110 = scmp.eq.s32.totalorder %s28, 0
      %p111 = por %p109, %p110
      %p112 = scmp.ne.s32.totalorder %s104, %s106
      %p113 = scmp.eq.s32.totalorder %s33, 1
      %p114 = por %p112, %p113
      %p115 = scmp.ne.s32.totalorder %s106, %s107
      %p116 = scmp.eq.s32.totalorder %s33, 0
      %p117 = por %p115, %p116
      %p118 = scmp.ne.s32.totalorder %s106, %s107
      %p119 = scmp.eq.s32.totalorder %s34, 1
      %p120 = por %p118, %p119
      %p122 = scmp.ne.s32.totalorder %s107, %s121
      %p123 = scmp.eq.s32.totalorder %s34, 0
      %p124 = por %p122, %p123
      %s126 = sadd.s32 %s125, 1
      %p129 = scmp.eq.s32.totalorder %s28, 1
      %p130 = scmp.ne.s32.totalorder %s125, %s127
      %p131 = scmp.eq.s32.totalorder %s28, 0
      %p132 = por %p130, %p131
      %p133 = scmp.ne.s32.totalorder %s125, %s127
      %p134 = scmp.eq.s32.totalorder %s33, 1
      %p135 = por %p133, %p134
      %p136 = scmp.ne.s32.totalorder %s127, %s128
      %p137 = scmp.eq.s32.totalorder %s33, 0
      %p138 = por %p136, %p137
      %p139 = scmp.ne.s32.totalorder %s127, %s128
      %p140 = scmp.eq.s32.totalorder %s34, 1
      %p141 = por %p139, %p140
      %p143 = scmp.ne.s32.totalorder %s128, %s142
      %p144 = scmp.eq.s32.totalorder %s34, 0
      %p145 = por %p143, %p144
      %s147 = sadd.s32 %s146, 1
      %p150 = scmp.eq.s32.totalorder %s28, 1
      %p151 = scmp.ne.s32.totalorder %s146, %s148
      %p152 = scmp.eq.s32.totalorder %s28, 0
      %p153 = por %p151, %p152
      %p154 = scmp.ne.s32.totalorder %s146, %s148
      %p155 = scmp.eq.s32.totalorder %s33, 1
      %p156 = por %p154, %p155
      %p157 = scmp.ne.s32.totalorder %s148, %s149
      %p158 = scmp.eq.s32.totalorder %s33, 0
      %p159 = por %p157, %p158
      %p160 = scmp.ne.s32.totalorder %s148, %s149
      %p161 = scmp.eq.s32.totalorder %s34, 1
      %p162 = por %p160, %p161
      %p164 = scmp.ne.s32.totalorder %s149, %s163
      %p165 = scmp.eq.s32.totalorder %s34, 0
      %p166 = por %p164, %p165
      %s168 = sadd.s32 %s167, 1
      %p171 = scmp.eq.s32.totalorder %s28, 1
      %p172 = scmp.ne.s32.totalorder %s167, %s169
      %p173 = scmp.eq.s32.totalorder %s28, 0
      %p174 = por %p172, %p173
      %p175 = scmp.ne.s32.totalorder %s167, %s169
      %p176 = scmp.eq.s32.totalorder %s33, 1
      %p177 = por %p175, %p176
      %p178 = scmp.ne.s32.totalorder %s169, %s170
      %p179 = scmp.eq.s32.totalorder %s33, 0
      %p180 = por %p178, %p179
      %p181 = scmp.ne.s32.totalorder %s169, %s170
      %p182 = scmp.eq.s32.totalorder %s34, 1
      %p183 = por %p181, %p182
      %p185 = scmp.ne.s32.totalorder %s170, %s184
      %p186 = scmp.eq.s32.totalorder %s34, 0
      %p187 = por %p185, %p186
      %s189 = sadd.s32 %s188, 1
      %p192 = scmp.eq.s32.totalorder %s28, 1
      %p193 = scmp.ne.s32.totalorder %s188, %s190
      %p194 = scmp.eq.s32.totalorder %s28, 0
      %p195 = por %p193, %p194
      %p196 = scmp.ne.s32.totalorder %s188, %s190
      %p197 = scmp.eq.s32.totalorder %s33, 1
      %p198 = por %p196, %p197
      %p199 = scmp.ne.s32.totalorder %s190, %s191
      %p200 = scmp.eq.s32.totalorder %s33, 0
      %p201 = por %p199, %p200
      %p202 = scmp.ne.s32.totalorder %s190, %s191
      %p203 = scmp.eq.s32.totalorder %s34, 1
      %p204 = por %p202, %p203
      %p206 = scmp.ne.s32.totalorder %s191, %s205
      %p207 = scmp.eq.s32.totalorder %s34, 0
      %p208 = por %p206, %p207
      %s210 = sadd.s32 %s209, 1
      %p213 = scmp.eq.s32.totalorder %s28, 1
      %p214 = scmp.ne.s32.totalorder %s209, %s211
      %p215 = scmp.eq.s32.totalorder %s28, 0
      %p216 = por %p214, %p215
      %p217 = scmp.ne.s32.totalorder %s209, %s211
      %p218 = scmp.eq.s32.totalorder %s33, 1
      %p219 = por %p217, %p218
      %p220 = scmp.ne.s32.totalorder %s211, %s212
      %p221 = scmp.eq.s32.totalorder %s33, 0
      %p222 = por %p220, %p221
      %p223 = scmp.ne.s32.totalorder %s211, %s212
      %p224 = scmp.eq.s32.totalorder %s34, 1
      %p225 = por %p223, %p224
      %p227 = scmp.ne.s32.totalorder %s212, %s226
      %p228 = scmp.eq.s32.totalorder %s34, 0
      %p229 = por %p227, %p228
      %s231 = sadd.s32 %s230, 1
      %p234 = scmp.eq.s32.totalorder %s28, 1
      %p235 = scmp.ne.s32.totalorder %s230, %s232
      %p236 = scmp.eq.s32.totalorder %s28, 0
      %p237 = por %p235, %p236
      %p238 = scmp.ne.s32.totalorder %s230, %s232
      %p239 = scmp.eq.s32.totalorder %s33, 1
      %p240 = por %p238, %p239
      %p241 = scmp.ne.s32.totalorder %s232, %s233
      %p242 = scmp.eq.s32.totalorder %s33, 0
      %p243 = por %p241, %p242
      %p244 = scmp.ne.s32.totalorder %s232, %s233
      %p245 = scmp.eq.s32.totalorder %s34, 1
      %p246 = por %p244, %p245
      %p248 = scmp.ne.s32.totalorder %s233, %s247
      %p249 = scmp.eq.s32.totalorder %s34, 0
      %p250 = por %p248, %p249
      %s252 = sadd.s32 %s251, 1
      %p255 = scmp.eq.s32.totalorder %s28, 1
      %p256 = scmp.ne.s32.totalorder %s251, %s253
      %p257 = scmp.eq.s32.totalorder %s28, 0
      %p258 = por %p256, %p257
      %p259 = scmp.ne.s32.totalorder %s251, %s253
      %p260 = scmp.eq.s32.totalorder %s33, 1
      %p261 = por %p259, %p260
      %p262 = scmp.ne.s32.totalorder %s253, %s254
      %p263 = scmp.eq.s32.totalorder %s33, 0
      %p264 = por %p262, %p263
      %p265 = scmp.ne.s32.totalorder %s253, %s254
      %p266 = scmp.eq.s32.totalorder %s34, 1
      %p267 = por %p265, %p266
      %p269 = scmp.ne.s32.totalorder %s254, %s268
      %p270 = scmp.eq.s32.totalorder %s34, 0
      %p271 = por %p269, %p270
      %s273 = sadd.s32 %s272, 1
      %p276 = scmp.eq.s32.totalorder %s28, 1
      %p277 = scmp.ne.s32.totalorder %s272, %s274
      %p278 = scmp.eq.s32.totalorder %s28, 0
      %p279 = por %p277, %p278
      %p280 = scmp.ne.s32.totalorder %s272, %s274
      %p281 = scmp.eq.s32.totalorder %s33, 1
      %p282 = por %p280, %p281
      %p283 = scmp.ne.s32.totalorder %s274, %s275
      %p284 = scmp.eq.s32.totalorder %s33, 0
      %p285 = por %p283, %p284
      %p286 = scmp.ne.s32.totalorder %s274, %s275
      %p287 = scmp.eq.s32.totalorder %s34, 1
      %p288 = por %p286, %p287
      %p290 = scmp.ne.s32.totalorder %s275, %s289
      %p291 = scmp.eq.s32.totalorder %s34, 0
      %p292 = por %p290, %p291
      %s294 = sadd.s32 %s293, 1
      %p297 = scmp.eq.s32.totalorder %s28, 1
      %p298 = scmp.ne.s32.totalorder %s293, %s295
      %p299 = scmp.eq.s32.totalorder %s28, 0
      %p300 = por %p298, %p299
      %p301 = scmp.ne.s32.totalorder %s293, %s295
      %p302 = scmp.eq.s32.totalorder %s33, 1
      %p303 = por %p301, %p302
      %p304 = scmp.ne.s32.totalorder %s295, %s296
      %p305 = scmp.eq.s32.totalorder %s33, 0
      %p306 = por %p304, %p305
      %p307 = scmp.ne.s32.totalorder %s295, %s296
      %p308 = scmp.eq.s32.totalorder %s34, 1
      %p309 = por %p307, %p308
      %p311 = scmp.ne.s32.totalorder %s296, %s310
      %p312 = scmp.eq.s32.totalorder %s34, 0
      %p313 = por %p311, %p312
      %s315 = sadd.s32 %s314, 1
      %p318 = scmp.eq.s32.totalorder %s28, 1
      %p319 = scmp.ne.s32.totalorder %s314, %s316
      %p320 = scmp.eq.s32.totalorder %s28, 0
      %p321 = por %p319, %p320
      %p322 = scmp.ne.s32.totalorder %s314, %s316
      %p323 = scmp.eq.s32.totalorder %s33, 1
      %p324 = por %p322, %p323
      %p325 = scmp.ne.s32.totalorder %s316, %s317
      %p326 = scmp.eq.s32.totalorder %s33, 0
      %p327 = por %p325, %p326
      %p328 = scmp.ne.s32.totalorder %s316, %s317
      %p329 = scmp.eq.s32.totalorder %s34, 1
      %p330 = por %p328, %p329
      %p332 = scmp.ne.s32.totalorder %s317, %s331
      %p333 = scmp.eq.s32.totalorder %s34, 0
      %p334 = por %p332, %p333
      %s336 = sadd.s32 %s335, 1
      %p339 = scmp.eq.s32.totalorder %s28, 1
      %p340 = scmp.ne.s32.totalorder %s335, %s337
      %p341 = scmp.eq.s32.totalorder %s28, 0
      %p342 = por %p340, %p341
      %p343 = scmp.ne.s32.totalorder %s335, %s337
      %p344 = scmp.eq.s32.totalorder %s33, 1
      %p345 = por %p343, %p344
      %p346 = scmp.ne.s32.totalorder %s337, %s338
      %p347 = scmp.eq.s32.totalorder %s33, 0
      %p348 = por %p346, %p347
      %p349 = scmp.ne.s32.totalorder %s337, %s338
      %p350 = scmp.eq.s32.totalorder %s34, 1
      %p351 = por %p349, %p350
      %p353 = scmp.ne.s32.totalorder %s338, %s352
      %p354 = scmp.eq.s32.totalorder %s34, 0
      %p355 = por %p353, %p354
      %s357 = sadd.s32 %s356, 1
      %p360 = scmp.eq.s32.totalorder %s28, 1
      %p361 = scmp.ne.s32.totalorder %s356, %s358
      %p362 = scmp.eq.s32.totalorder %s28, 0
      %p363 = por %p361, %p362
      %p364 = scmp.ne.s32.totalorder %s356, %s358
      %p365 = scmp.eq.s32.totalorder %s33, 1
      %p366 = por %p364, %p365
      %p367 = scmp.ne.s32.totalorder %s358, %s359
      %p368 = scmp.eq.s32.totalorder %s33, 0
      %p369 = por %p367, %p368
      %p370 = scmp.ne.s32.totalorder %s358, %s359
      %p371 = scmp.eq.s32.totalorder %s34, 1
      %p372 = por %p370, %p371
      %p374 = scmp.ne.s32.totalorder %s359, %s373
      %p375 = scmp.eq.s32.totalorder %s34, 0
      %p376 = por %p374, %p375
      %s378 = sadd.s32 %s377, 1
      %p381 = scmp.eq.s32.totalorder %s28, 1
      %p382 = scmp.ne.s32.totalorder %s377, %s379
      %p383 = scmp.eq.s32.totalorder %s28, 0
      %p384 = por %p382, %p383
      %p385 = scmp.ne.s32.totalorder %s377, %s379
      %p386 = scmp.eq.s32.totalorder %s33, 1
      %p387 = por %p385, %p386
      %p388 = scmp.ne.s32.totalorder %s379, %s380
      %p389 = scmp.eq.s32.totalorder %s33, 0
      %p390 = por %p388, %p389
      %p391 = scmp.ne.s32.totalorder %s379, %s380
      %p392 = scmp.eq.s32.totalorder %s34, 1
      %p393 = por %p391, %p392
      %p395 = scmp.ne.s32.totalorder %s380, %s394
      %p396 = scmp.eq.s32.totalorder %s34, 0
      %p397 = por %p395, %p396
      %s399 = sadd.s32 %s398, 1
      %p402 = scmp.eq.s32.totalorder %s28, 1
      %p403 = scmp.ne.s32.totalorder %s398, %s400
      %p404 = scmp.eq.s32.totalorder %s28, 0
      %p405 = por %p403, %p404
      %p406 = scmp.ne.s32.totalorder %s398, %s400
      %p407 = scmp.eq.s32.totalorder %s33, 1
      %p408 = por %p406, %p407
      %p409 = scmp.ne.s32.totalorder %s400, %s401
      %p410 = scmp.eq.s32.totalorder %s33, 0
      %p411 = por %p409, %p410
      %p412 = scmp.ne.s32.totalorder %s400, %s401
      %p413 = scmp.eq.s32.totalorder %s34, 1
      %p414 = por %p412, %p413
      %p416 = scmp.ne.s32.totalorder %s401, %s415
      %p417 = scmp.eq.s32.totalorder %s34, 0
      %p418 = por %p416, %p417
      %s420 = sadd.s32 %s419, 1
      %p423 = scmp.eq.s32.totalorder %s28, 1
      %p424 = scmp.ne.s32.totalorder %s419, %s421
      %p425 = scmp.eq.s32.totalorder %s28, 0
      %p426 = por %p424, %p425
      %p427 = scmp.ne.s32.totalorder %s419, %s421
      %p428 = scmp.eq.s32.totalorder %s33, 1
      %p429 = por %p427, %p428
      %p430 = scmp.ne.s32.totalorder %s421, %s422
      %p431 = scmp.eq.s32.totalorder %s33, 0
      %p432 = por %p430, %p431
      %p433 = scmp.ne.s32.totalorder %s421, %s422
      %p434 = scmp.eq.s32.totalorder %s34, 1
      %p435 = por %p433, %p434
      %p437 = scmp.ne.s32.totalorder %s422, %s436
      %p438 = scmp.eq.s32.totalorder %s34, 0
      %p439 = por %p437, %p438
      %s440 = ssub.s32 %s28, %s35
      %p441 = scmp.eq.s32.totalorder %s440, 0
      %s443 = sadd.s32 %s442, 1
      %s444 = scalar_select %p441, %s442, %s443
      %p447 = pneg %p441
      %p448 = scmp.eq.s32.totalorder %s28, 1
      %p449 = por %p447, %p448
      %p450 = scmp.ne.s32.totalorder %s442, %s445
      %p451 = scmp.eq.s32.totalorder %s28, 0
      %p452 = por %p450, %p451
      %p453 = scmp.ne.s32.totalorder %s442, %s445
      %p454 = scmp.eq.s32.totalorder %s33, 1
      %p455 = por %p453, %p454
      %p456 = scmp.ne.s32.totalorder %s445, %s446
      %p457 = scmp.eq.s32.totalorder %s33, 0
      %p458 = por %p456, %p457
      %p459 = scmp.ne.s32.totalorder %s445, %s446
      %p460 = scmp.eq.s32.totalorder %s34, 1
      %p461 = por %p459, %p460
      %p463 = scmp.ne.s32.totalorder %s446, %s462
      %p464 = scmp.eq.s32.totalorder %s34, 0
      %p465 = por %p463, %p464
      %p466 = scmp.le.s32.totalorder 1, %s28
      %p467 = scmp.lt.s32.totalorder %s28, 3
      %p468 = pnand %p466, %p467
      %p469 = pneg %p468
      // Predicated region
      $region9: #{tpu_custom_call.1} parent=5 // pred_check
        _
      $region10: #{tpu_custom_call.1} parent=5 // pred_check_branch
        %471 = sbr.rel (%p468) target = $region12
      $region11: #{tpu_custom_call.1} parent=5 // pred_region
        %s472 = ssub.s32 %s28, 1
        // Predicated region
        $region13: #{tpu_custom_call.1} parent=11 // pred_check
          %p473 = pneg %p75
        $region14: #{tpu_custom_call.1} parent=11 // pred_check_branch
          %475 = sbr.rel (%p473) target = $region16
        $region15: #{tpu_custom_call.1} parent=11 // pred_region
          _
        $region16: #{tpu_custom_call.1} parent=11 // pred_fallthru
          _
        // Predicated region
        $region17: #{tpu_custom_call.1} parent=11 // pred_check
          %p476 = pneg %p96
        $region18: #{tpu_custom_call.1} parent=11 // pred_check_branch
          %478 = sbr.rel (%p476) target = $region20
        $region19: #{tpu_custom_call.1} parent=11 // pred_region
          _
        $region20: #{tpu_custom_call.1} parent=11 // pred_fallthru
          _
        // Predicated region
        $region21: #{tpu_custom_call.1} parent=11 // pred_check
          %p479 = pneg %p117
        $region22: #{tpu_custom_call.1} parent=11 // pred_check_branch
          %481 = sbr.rel (%p479) target = $region24
        $region23: #{tpu_custom_call.1} parent=11 // pred_region
          _
        $region24: #{tpu_custom_call.1} parent=11 // pred_fallthru
          _
        // Predicated region
        $region25: #{tpu_custom_call.1} parent=11 // pred_check
          %p482 = pneg %p138
        $region26: #{tpu_custom_call.1} parent=11 // pred_check_branch
          %484 = sbr.rel (%p482) target = $region28
        $region27: #{tpu_custom_call.1} parent=11 // pred_region
          _
        $region28: #{tpu_custom_call.1} parent=11 // pred_fallthru
          _
        // Predicated region
        $region29: #{tpu_custom_call.1} parent=11 // pred_check
          %p485 = pneg %p159
        $region30: #{tpu_custom_call.1} parent=11 // pred_check_branch
          %487 = sbr.rel (%p485) target = $region32
        $region31: #{tpu_custom_call.1} parent=11 // pred_region
          _
        $region32: #{tpu_custom_call.1} parent=11 // pred_fallthru
          _
        // Predicated region
        $region33: #{tpu_custom_call.1} parent=11 // pred_check
          %p488 = pneg %p180
        $region34: #{tpu_custom_call.1} parent=11 // pred_check_branch
          %490 = sbr.rel (%p488) target = $region36
        $region35: #{tpu_custom_call.1} parent=11 // pred_region
          _
        $region36: #{tpu_custom_call.1} parent=11 // pred_fallthru
          _
        // Predicated region
        $region37: #{tpu_custom_call.1} parent=11 // pred_check
          %p491 = pneg %p201
        $region38: #{tpu_custom_call.1} parent=11 // pred_check_branch
          %493 = sbr.rel (%p491) target = $region40
        $region39: #{tpu_custom_call.1} parent=11 // pred_region
          _
        $region40: #{tpu_custom_call.1} parent=11 // pred_fallthru
          _
        // Predicated region
        $region41: #{tpu_custom_call.1} parent=11 // pred_check
          %p494 = pneg %p222
        $region42: #{tpu_custom_call.1} parent=11 // pred_check_branch
          %496 = sbr.rel (%p494) target = $region44
        $region43: #{tpu_custom_call.1} parent=11 // pred_region
          _
        $region44: #{tpu_custom_call.1} parent=11 // pred_fallthru
          _
        // Predicated region
        $region45: #{tpu_custom_call.1} parent=11 // pred_check
          %p497 = pneg %p243
        $region46: #{tpu_custom_call.1} parent=11 // pred_check_branch
          %499 = sbr.rel (%p497) target = $region48
        $region47: #{tpu_custom_call.1} parent=11 // pred_region
          _
        $region48: #{tpu_custom_call.1} parent=11 // pred_fallthru
          _
        // Predicated region
        $region49: #{tpu_custom_call.1} parent=11 // pred_check
          %p500 = pneg %p264
        $region50: #{tpu_custom_call.1} parent=11 // pred_check_branch
          %502 = sbr.rel (%p500) target = $region52
        $region51: #{tpu_custom_call.1} parent=11 // pred_region
          _
        $region52: #{tpu_custom_call.1} parent=11 // pred_fallthru
          _
        // Predicated region
        $region53: #{tpu_custom_call.1} parent=11 // pred_check
          %p503 = pneg %p285
        $region54: #{tpu_custom_call.1} parent=11 // pred_check_branch
          %505 = sbr.rel (%p503) target = $region56
        $region55: #{tpu_custom_call.1} parent=11 // pred_region
          _
        $region56: #{tpu_custom_call.1} parent=11 // pred_fallthru
          _
        // Predicated region
        $region57: #{tpu_custom_call.1} parent=11 // pred_check
          %p506 = pneg %p306
        $region58: #{tpu_custom_call.1} parent=11 // pred_check_branch
          %508 = sbr.rel (%p506) target = $region60
        $region59: #{tpu_custom_call.1} parent=11 // pred_region
          _
        $region60: #{tpu_custom_call.1} parent=11 // pred_fallthru
          _
        // Predicated region
        $region61: #{tpu_custom_call.1} parent=11 // pred_check
          %p509 = pneg %p327
        $region62: #{tpu_custom_call.1} parent=11 // pred_check_branch
          %511 = sbr.rel (%p509) target = $region64
        $region63: #{tpu_custom_call.1} parent=11 // pred_region
          _
        $region64: #{tpu_custom_call.1} parent=11 // pred_fallthru
          _
        // Predicated region
        $region65: #{tpu_custom_call.1} parent=11 // pred_check
          %p512 = pneg %p348
        $region66: #{tpu_custom_call.1} parent=11 // pred_check_branch
          %514 = sbr.rel (%p512) target = $region68
        $region67: #{tpu_custom_call.1} parent=11 // pred_region
          _
        $region68: #{tpu_custom_call.1} parent=11 // pred_fallthru
          _
        // Predicated region
        $region69: #{tpu_custom_call.1} parent=11 // pred_check
          %p515 = pneg %p369
        $region70: #{tpu_custom_call.1} parent=11 // pred_check_branch
          %517 = sbr.rel (%p515) target = $region72
        $region71: #{tpu_custom_call.1} parent=11 // pred_region
          _
        $region72: #{tpu_custom_call.1} parent=11 // pred_fallthru
          _
        // Predicated region
        $region73: #{tpu_custom_call.1} parent=11 // pred_check
          %p518 = pneg %p390
        $region74: #{tpu_custom_call.1} parent=11 // pred_check_branch
          %520 = sbr.rel (%p518) target = $region76
        $region75: #{tpu_custom_call.1} parent=11 // pred_region
          _
        $region76: #{tpu_custom_call.1} parent=11 // pred_fallthru
          _
        // Predicated region
        $region77: #{tpu_custom_call.1} parent=11 // pred_check
          %p521 = pneg %p411
        $region78: #{tpu_custom_call.1} parent=11 // pred_check_branch
          %523 = sbr.rel (%p521) target = $region80
        $region79: #{tpu_custom_call.1} parent=11 // pred_region
          _
        $region80: #{tpu_custom_call.1} parent=11 // pred_fallthru
          _
        // Predicated region
        $region81: #{tpu_custom_call.1} parent=11 // pred_check
          %p524 = pneg %p432
        $region82: #{tpu_custom_call.1} parent=11 // pred_check_branch
          %526 = sbr.rel (%p524) target = $region84
        $region83: #{tpu_custom_call.1} parent=11 // pred_region
          _
        $region84: #{tpu_custom_call.1} parent=11 // pred_fallthru
          _
      $region12: #{tpu_custom_call.1} parent=5 // pred_fallthru
        _
      %p527 = scmp.lt.s32.totalorder %s28, 2
      // Predicated region
      $region85: #{tpu_custom_call.1} parent=5 // pred_check
        %p528 = pneg %p527
      $region86: #{tpu_custom_call.1} parent=5 // pred_check_branch
        %530 = sbr.rel (%p528) target = $region88
      $region87: #{tpu_custom_call.1} parent=5 // pred_region
        // Predicated region
        $region89: #{tpu_custom_call.1} parent=87 // pred_check
          %p531 = pneg %p48
        $region90: #{tpu_custom_call.1} parent=87 // pred_check_branch
          %533 = sbr.rel (%p531) target = $region92
        $region91: #{tpu_custom_call.1} parent=87 // pred_region
          %p534 = scmp.lt.s32.totalorder %s28, 1
          %s535 = scalar_select %p534, %s28, 1
          %s536 = smul.addr %s535, 12
          %s537 = smul.addr %s536, 8
          %s538 = scalar_lea.vmem %s0, %s537
        $region92: #{tpu_custom_call.1} parent=87 // pred_fallthru
          _
      $region88: #{tpu_custom_call.1} parent=5 // pred_fallthru
        _
      %p539 = scmp.le.s32.totalorder 1, %s28
      %p540 = scmp.lt.s32.totalorder %s28, 3
      %p541 = pnand %p539, %p540
      %p542 = pneg %p541
      // Predicated region
      $region93: #{tpu_custom_call.1} parent=5 // pred_check
        _
      $region94: #{tpu_custom_call.1} parent=5 // pred_check_branch
        %544 = sbr.rel (%p541) target = $region96
      $region95: #{tpu_custom_call.1} parent=5 // pred_region
        %s545 = ssub.s32 %s28, 1
        %p546 = scmp.lt.s32.totalorder %s33, 1
        %s547 = scalar_select %p546, %s33, 1
        %s548 = smul.addr %s547, 12
        %s549 = smul.addr %s548, 8
        %s550 = scalar_lea.vmem %s0, %s549
        %p551 = pneg %p54
        %p552 = pneg %p51
        %p553 = pneg %p75
        %p554 = pneg %p72
        %p555 = pneg %p96
        %p556 = pneg %p93
        %p557 = pneg %p117
        %p558 = pneg %p114
        %p559 = pneg %p138
        %p560 = pneg %p135
        %p561 = pneg %p159
        %p562 = pneg %p156
        %p563 = pneg %p180
        %p564 = pneg %p177
        %p565 = pneg %p201
        %p566 = pneg %p198
        %p567 = pneg %p222
        %p568 = pneg %p219
        %p569 = pneg %p243
        %p570 = pneg %p240
        %p571 = pneg %p264
        %p572 = pneg %p261
        %p573 = pneg %p285
        %p574 = pneg %p282
        %p575 = pneg %p306
        %p576 = pneg %p303
        %p577 = pneg %p327
        %p578 = pneg %p324
        %p579 = pneg %p348
        %p580 = pneg %p345
        %p581 = pneg %p369
        %p582 = pneg %p366
        %p583 = pneg %p390
        %p584 = pneg %p387
        %p585 = pneg %p411
        %p586 = pneg %p408
        %p587 = pneg %p432
        %p588 = pneg %p429
        %p589 = pneg %p458
        %p590 = pneg %p455
        %s591 = sand.u32 %s445, 1
        %s592 = scalar_lea.sflag [#allocation6], %s591
        %s593 = sand.u32 %s445, 1
        %s594 = smul.addr %s593, 128
        %s595 = scalar_lea.vmem [#allocation5], %s594
        %p596 = scmp.lt.s32.totalorder %s33, 1
        %s597 = scalar_select %p596, %s33, 1
        %s598 = smul.addr %s597, 12
        %s599 = smul.addr %s598, 8
        %s600 = scalar_lea.vmem %s0, %s599
        %v601 = vld [vmem:[%s600] sm:$0xff]
        %v602 = vld [vmem:[%s600 + $0x8] sm:$0xff]
        %v603 = vld [vmem:[%s600 + $0x10] sm:$0xff]
        %v604 = vld [vmem:[%s600 + $0x18] sm:$0xff]
        %v605 = vld [vmem:[%s600 + $0x20] sm:$0xff]
        %v606 = vld [vmem:[%s600 + $0x28] sm:$0xff]
        %v607 = vld [vmem:[%s600 + $0x30] sm:$0xff]
        %v608 = vld [vmem:[%s600 + $0x38] sm:$0xff]
        %v609 = vld [vmem:[%s600 + $0x40] sm:$0xff]
        %v610 = vld [vmem:[%s600 + $0x48] sm:$0xff]
        %v611 = vld [vmem:[%s600 + $0x50] sm:$0xff]
        %v612 = vld [vmem:[%s600 + $0x58] sm:$0xff]
        %613 = vxpose.xlu0.b32.start [1/16] %v601, 128
        %614 = vxpose.xlu0.b32.cont [2/16] %v602, 128
        %615 = vxpose.xlu0.b32.cont [3/16] %v603, 128
        %616 = vxpose.xlu0.b32.cont [4/16] %v604, 128
        %617 = vxpose.xlu0.b32.cont [5/16] %v605, 128
        %618 = vxpose.xlu0.b32.cont [6/16] %v606, 128
        %619 = vxpose.xlu0.b32.cont [7/16] %v607, 128
        %620 = vxpose.xlu0.b32.cont [8/16] %v608, 128
        %621 = vxpose.xlu0.b32.cont [9/16] %v609, 128
        %622 = vxpose.xlu0.b32.cont [10/16] %v610, 128
        %623 = vxpose.xlu0.b32.cont [11/16] %v611, 128
        %624 = vxpose.xlu0.b32.cont [12/16] %v612, 128
        %625 = vxpose.xlu0.b32.cont [13/16] 0.0, 128
        %626 = vxpose.xlu0.b32.cont [14/16] 0.0, 128
        %627 = vxpose.xlu0.b32.cont [15/16] 0.0, 128
        %628 = vxpose.xlu0.b32.end [16/16] 0.0, 128
        %v629 = vpop.trf.xlu0
        %v630 = vpop.trf.xlu0
        %v631 = vpop.trf.xlu0
        %v632 = vpop.trf.xlu0
        %v633 = vpop.trf.xlu0
        %v634 = vpop.trf.xlu0
        %v635 = vpop.trf.xlu0
        %v636 = vpop.trf.xlu0
        %v637 = vpop.trf.xlu0
        %v638 = vpop.trf.xlu0
        %v639 = vpop.trf.xlu0
        %v640 = vpop.trf.xlu0
        %v641 = vpop.trf.xlu0
        %v642 = vpop.trf.xlu0
        %v643 = vpop.trf.xlu0
        %v644 = vpop.trf.xlu0
        %v645 = vld [vmem:[%s1] sm:$0xff]
        %v646 = vld [vmem:[%s1 + $0x8] sm:$0xff]
        %v647 = vld [vmem:[%s1 + $0x10] sm:$0xff]
        %v648 = vld [vmem:[%s1 + $0x18] sm:$0xff]
        %v649 = vld [vmem:[%s1 + $0x20] sm:$0xff]
        %v650 = vld [vmem:[%s1 + $0x28] sm:$0xff]
        %v651 = vld [vmem:[%s1 + $0x30] sm:$0xff]
        %v652 = vld [vmem:[%s1 + $0x38] sm:$0xff]
        %v653 = vld [vmem:[%s3] sm:$0x3]
        %v654 = vld [vmem:[%s2] sm:$0xff]
        %v655 = vld [vmem:[%s2 + $0x8] sm:$0xff]
        %v656 = vld [vmem:[%s2 + $0x10] sm:$0xff]
        %v657 = vld [vmem:[%s2 + $0x18] sm:$0xff]
        %v658 = vld [vmem:[%s2 + $0x20] sm:$0xff]
        %v659 = vld [vmem:[%s2 + $0x28] sm:$0xff]
        %v660 = vld [vmem:[%s2 + $0x30] sm:$0xff]
        %v661 = vld [vmem:[%s2 + $0x38] sm:$0xff]
        %v662 = vld [vmem:[%s2 + $0x40] sm:$0xff]
        %v663 = vld [vmem:[%s2 + $0x48] sm:$0xff]
        %v664 = vld [vmem:[%s2 + $0x50] sm:$0xff]
        %v665 = vld [vmem:[%s2 + $0x58] sm:$0xff]
        %vm666 = vcmask 785408
        %v668 = vsel %vm666, %v629, 0
        %v671 = vsel %vm666, %v630, 0
        %v674 = vsel %vm666, %v631, 0
        %v677 = vsel %vm666, %v632, 0
        %v680 = vsel %vm666, %v633, 0
        %v683 = vsel %vm666, %v634, 0
        %v686 = vsel %vm666, %v635, 0
        %v689 = vsel %vm666, %v636, 0
        %691 = vmatprep.subr.mxu0 0.0
        %692 = vmatpush1.msra.mxu0 %v654
        %693 = vmatprep.subr.mxu0 0.0
        %694 = vmatpush1.msra.mxu0 %v655
        %695 = vmatprep.subr.mxu0 0.0
        %696 = vmatpush1.msra.mxu0 %v656
        %697 = vmatprep.subr.mxu0 0.0
        %698 = vmatpush1.msra.mxu0 %v657
        %699 = vmatprep.subr.mxu0 0.0
        %700 = vmatpush1.msra.mxu0 %v658
        %701 = vmatprep.subr.mxu0 0.0
        %702 = vmatpush1.msra.mxu0 %v659
        %703 = vmatprep.subr.mxu0 0.0
        %704 = vmatpush1.msra.mxu0 %v660
        %705 = vmatprep.subr.mxu0 0.0
        %706 = vmatpush1.msra.mxu0 %v661
        %707 = vmatprep.subr.mxu0 0.0
        %708 = vmatpush1.msra.mxu0 %v662
        %709 = vmatprep.subr.mxu0 0.0
        %710 = vmatpush1.msra.mxu0 %v663
        %711 = vmatprep.subr.mxu0 0.0
        %712 = vmatpush1.msra.mxu0 %v664
        %713 = vmatprep.subr.mxu0 0.0
        %714 = vmatpush1.msra.mxu0 %v665
        %715 = vmatprep.subr.mxu0 0.0
        %716 = vmatpush1.msra.mxu0 0.0
        %717 = vmatprep.subr.mxu0 0.0
        %718 = vmatpush1.msra.mxu0 0.0
        %719 = vmatprep.subr.mxu0 0.0
        %720 = vmatpush1.msra.mxu0 0.0
        %721 = vmatprep.subr.mxu0 0.0
        %722 = vmatpush1.msra.mxu0 0.0
        %723 = vmatprep.subr.mxu0 0.0
        %724 = vmatpush1.msra.mxu0 0.0
        %725 = vmatprep.subr.mxu0 0.0
        %726 = vmatpush1.msra.mxu0 0.0
        %727 = vmatprep.subr.mxu0 0.0
        %728 = vmatpush1.msra.mxu0 0.0
        %729 = vmatprep.subr.mxu0 0.0
        %730 = vmatpush1.msra.mxu0 0.0
        %731 = vmatprep.subr.mxu0 0.0
        %732 = vmatpush1.msra.mxu0 0.0
        %733 = vmatprep.subr.mxu0 0.0
        %734 = vmatpush1.msra.mxu0 0.0
        %735 = vmatprep.subr.mxu0 0.0
        %736 = vmatpush1.msra.mxu0 0.0
        %737 = vmatprep.subr.mxu0 0.0
        %738 = vmatpush1.msra.mxu0 0.0
        %739 = vmatprep.subr.mxu0 0.0
        %740 = vmatpush1.msra.mxu0 0.0
        %741 = vmatprep.subr.mxu0 0.0
        %742 = vmatpush1.msra.mxu0 0.0
        %743 = vmatprep.subr.mxu0 0.0
        %744 = vmatpush1.msra.mxu0 0.0
        %745 = vmatprep.subr.mxu0 0.0
        %746 = vmatpush1.msra.mxu0 0.0
        %747 = vmatprep.subr.mxu0 0.0
        %748 = vmatpush1.msra.mxu0 0.0
        %749 = vmatprep.subr.mxu0 0.0
        %750 = vmatpush1.msra.mxu0 0.0
        %751 = vmatprep.subr.mxu0 0.0
        %752 = vmatpush1.msra.mxu0 0.0
        %753 = vmatprep.subr.mxu0 0.0
        %754 = vmatpush1.msra.mxu0 0.0
        %755 = vmatprep.mubr.f32.mxu0 0.0
        %756 = vmatmul.mubr.f32.gmra.mrb[0].mxu0 %v668
        %v757 = vpop.f32.mrb[0].mxu0
        %v758 = vadd.f32 0.0, %v757
        %v759 = vpop.f32.mrb[0].mxu0
        %760 = vmatprep.mubr.f32.mxu0 0.0
        %761 = vmatmul.mubr.f32.gmra.mrb[0].mxu0 %v671
        %v762 = vpop.f32.mrb[0].mxu0
        %v763 = vadd.f32 0.0, %v762
        %v764 = vpop.f32.mrb[0].mxu0
        %765 = vmatprep.mubr.f32.mxu0 0.0
        %766 = vmatmul.mubr.f32.gmra.mrb[0].mxu0 %v674
        %v767 = vpop.f32.mrb[0].mxu0
        %v768 = vadd.f32 0.0, %v767
        %v769 = vpop.f32.mrb[0].mxu0
        %770 = vmatprep.mubr.f32.mxu0 0.0
        %771 = vmatmul.mubr.f32.gmra.mrb[0].mxu0 %v677
        %v772 = vpop.f32.mrb[0].mxu0
        %v773 = vadd.f32 0.0, %v772
        %v774 = vpop.f32.mrb[0].mxu0
        %775 = vmatprep.mubr.f32.mxu0 0.0
        %776 = vmatmul.mubr.f32.gmra.mrb[0].mxu0 %v680
        %v777 = vpop.f32.mrb[0].mxu0
        %v778 = vadd.f32 0.0, %v777
        %v779 = vpop.f32.mrb[0].mxu0
        %780 = vmatprep.mubr.f32.mxu0 0.0
        %781 = vmatmul.mubr.f32.gmra.mrb[0].mxu0 %v683
        %v782 = vpop.f32.mrb[0].mxu0
        %v783 = vadd.f32 0.0, %v782
        %v784 = vpop.f32.mrb[0].mxu0
        %785 = vmatprep.mubr.f32.mxu0 0.0
        %786 = vmatmul.mubr.f32.gmra.mrb[0].mxu0 %v686
        %v787 = vpop.f32.mrb[0].mxu0
        %v788 = vadd.f32 0.0, %v787
        %v789 = vpop.f32.mrb[0].mxu0
        %790 = vmatprep.mubr.f32.mxu0 0.0
        %791 = vmatmul.mubr.f32.gmra.mrb[0].mxu0 %v689
        %v792 = vpop.f32.mrb[0].mxu0
        %v793 = vadd.f32 0.0, %v792
        %v794 = vpop.f32.mrb[0].mxu0
        %795 = vdwg.mxu0
        %v796 = vlaneseq
        %v797 = vshrl.u32 %v796, 7
        %v798 = vsub.s32 0, %v797
        %v799 = vrot.slane %v653, %v798
        %v800 = vmul.f32 %v758, %v799
        %v801 = vmul.f32 %v763, %v799
        %v802 = vmul.f32 %v768, %v799
        %v803 = vmul.f32 %v773, %v799
        %v804 = vmul.f32 %v778, %v799
        %v805 = vmul.f32 %v783, %v799
        %v806 = vmul.f32 %v788, %v799
        %v807 = vmul.f32 %v793, %v799
        %v808 = vlaneseq
        %v809 = vshrl.u32 %v808, 7
        %v810 = vsub.s32 1, %v809
        %v811 = vrot.slane %v653, %v810
        %v812 = vadd.f32 %v800, %v811
        %v813 = vadd.f32 %v801, %v811
        %v814 = vadd.f32 %v802, %v811
        %v815 = vadd.f32 %v803, %v811
        %v816 = vadd.f32 %v804, %v811
        %v817 = vadd.f32 %v805, %v811
        %v818 = vadd.f32 %v806, %v811
        %v819 = vadd.f32 %v807, %v811
        %v820 = vmax.f32 %v812, 0.0
        %v821 = vmax.f32 %v813, 0.0
        %v822 = vmax.f32 %v814, 0.0
        %v823 = vmax.f32 %v815, 0.0
        %v824 = vmax.f32 %v816, 0.0
        %v825 = vmax.f32 %v817, 0.0
        %v826 = vmax.f32 %v818, 0.0
        %v827 = vmax.f32 %v819, 0.0
        %v828 = vld [vmem:[%s5] sm:$0x7]
        %v829 = vld [vmem:[%s4] sm:$0xff]
        %v830 = vld [vmem:[%s4 + $0x8] sm:$0xff]
        %v831 = vld [vmem:[%s4 + $0x10] sm:$0xff]
        %v832 = vld [vmem:[%s4 + $0x18] sm:$0xff]
        %v833 = vld [vmem:[%s4 + $0x20] sm:$0xff]
        %v834 = vld [vmem:[%s4 + $0x28] sm:$0xff]
        %v835 = vlaneseq
        %v836 = vshrl.u32 %v835, 7
        %v837 = vsub.s32 0, %v836
        %v838 = vrot.slane %v828, %v837
        %vm839 = vcmask 392192
        %v841 = vsel %vm839, %v820, 0
        %v844 = vsel %vm839, %v821, 0
        %v847 = vsel %vm839, %v822, 0
        %v850 = vsel %vm839, %v823, 0
        %v853 = vsel %vm839, %v824, 0
        %v856 = vsel %vm839, %v825, 0
        %v859 = vsel %vm839, %v826, 0
        %v862 = vsel %vm839, %v827, 0
        %864 = vmatprep.subr.mxu0 0.0
        %865 = vmatpush1.msra.mxu0 %v829
        %866 = vmatprep.subr.mxu0 0.0
        %867 = vmatpush1.msra.mxu0 %v830
        %868 = vmatprep.subr.mxu0 0.0
        %869 = vmatpush1.msra.mxu0 %v831
        %870 = vmatprep.subr.mxu0 0.0
        %871 = vmatpush1.msra.mxu0 %v832
        %872 = vmatprep.subr.mxu0 0.0
        %873 = vmatpush1.msra.mxu0 %v833
        %874 = vmatprep.subr.mxu0 0.0
        %875 = vmatpush1.msra.mxu0 %v834
        %876 = vmatprep.subr.mxu0 0.0
        %877 = vmatpush1.msra.mxu0 0.0
        %878 = vmatprep.subr.mxu0 0.0
        %879 = vmatpush1.msra.mxu0 0.0
        %880 = vmatprep.subr.mxu0 0.0
        %881 = vmatpush1.msra.mxu0 0.0
        %882 = vmatprep.subr.mxu0 0.0
        %883 = vmatpush1.msra.mxu0 0.0
        %884 = vmatprep.subr.mxu0 0.0
        %885 = vmatpush1.msra.mxu0 0.0
        %886 = vmatprep.subr.mxu0 0.0
        %887 = vmatpush1.msra.mxu0 0.0
        %888 = vmatprep.subr.mxu0 0.0
        %889 = vmatpush1.msra.mxu0 0.0
        %890 = vmatprep.subr.mxu0 0.0
        %891 = vmatpush1.msra.mxu0 0.0
        %892 = vmatprep.subr.mxu0 0.0
        %893 = vmatpush1.msra.mxu0 0.0
        %894 = vmatprep.subr.mxu0 0.0
        %895 = vmatpush1.msra.mxu0 0.0
        %896 = vmatprep.subr.mxu0 0.0
        %897 = vmatpush1.msra.mxu0 0.0
        %898 = vmatprep.subr.mxu0 0.0
        %899 = vmatpush1.msra.mxu0 0.0
        %900 = vmatprep.subr.mxu0 0.0
        %901 = vmatpush1.msra.mxu0 0.0
        %902 = vmatprep.subr.mxu0 0.0
        %903 = vmatpush1.msra.mxu0 0.0
        %904 = vmatprep.subr.mxu0 0.0
        %905 = vmatpush1.msra.mxu0 0.0
        %906 = vmatprep.subr.mxu0 0.0
        %907 = vmatpush1.msra.mxu0 0.0
        %908 = vmatprep.subr.mxu0 0.0
        %909 = vmatpush1.msra.mxu0 0.0
        %910 = vmatprep.subr.mxu0 0.0
        %911 = vmatpush1.msra.mxu0 0.0
        %912 = vmatprep.subr.mxu0 0.0
        %913 = vmatpush1.msra.mxu0 0.0
        %914 = vmatprep.subr.mxu0 0.0
        %915 = vmatpush1.msra.mxu0 0.0
        %916 = vmatprep.subr.mxu0 0.0
        %917 = vmatpush1.msra.mxu0 0.0
        %918 = vmatprep.subr.mxu0 0.0
        %919 = vmatpush1.msra.mxu0 0.0
        %920 = vmatprep.subr.mxu0 0.0
        %921 = vmatpush1.msra.mxu0 0.0
        %922 = vmatprep.subr.mxu0 0.0
        %923 = vmatpush1.msra.mxu0 0.0
        %924 = vmatprep.subr.mxu0 0.0
        %925 = vmatpush1.msra.mxu0 0.0
        %926 = vmatprep.subr.mxu0 0.0
        %927 = vmatpush1.msra.mxu0 0.0
        %928 = vmatprep.mubr.f32.mxu0 0.0
        %929 = vmatmul.mubr.f32.gmra.mrb[0].mxu0 %v841
        %v930 = vpop.f32.mrb[0].mxu0
        %v931 = vadd.f32 %v838, %v930
        %v932 = vpop.f32.mrb[0].mxu0
        %933 = vmatprep.mubr.f32.mxu0 0.0
        %934 = vmatmul.mubr.f32.gmra.mrb[0].mxu0 %v844
        %v935 = vpop.f32.mrb[0].mxu0
        %v936 = vadd.f32 %v838, %v935
        %v937 = vpop.f32.mrb[0].mxu0
        %938 = vmatprep.mubr.f32.mxu0 0.0
        %939 = vmatmul.mubr.f32.gmra.mrb[0].mxu0 %v847
        %v940 = vpop.f32.mrb[0].mxu0
        %v941 = vadd.f32 %v838, %v940
        %v942 = vpop.f32.mrb[0].mxu0
        %943 = vmatprep.mubr.f32.mxu0 0.0
        %944 = vmatmul.mubr.f32.gmra.mrb[0].mxu0 %v850
        %v945 = vpop.f32.mrb[0].mxu0
        %v946 = vadd.f32 %v838, %v945
        %v947 = vpop.f32.mrb[0].mxu0
        %948 = vmatprep.mubr.f32.mxu0 0.0
        %949 = vmatmul.mubr.f32.gmra.mrb[0].mxu0 %v853
        %v950 = vpop.f32.mrb[0].mxu0
        %v951 = vadd.f32 %v838, %v950
        %v952 = vpop.f32.mrb[0].mxu0
        %953 = vmatprep.mubr.f32.mxu0 0.0
        %954 = vmatmul.mubr.f32.gmra.mrb[0].mxu0 %v856
        %v955 = vpop.f32.mrb[0].mxu0
        %v956 = vadd.f32 %v838, %v955
        %v957 = vpop.f32.mrb[0].mxu0
        %958 = vmatprep.mubr.f32.mxu0 0.0
        %959 = vmatmul.mubr.f32.gmra.mrb[0].mxu0 %v859
        %v960 = vpop.f32.mrb[0].mxu0
        %v961 = vadd.f32 %v838, %v960
        %v962 = vpop.f32.mrb[0].mxu0
        %963 = vmatprep.mubr.f32.mxu0 0.0
        %964 = vmatmul.mubr.f32.gmra.mrb[0].mxu0 %v862
        %v965 = vpop.f32.mrb[0].mxu0
        %v966 = vadd.f32 %v838, %v965
        %v967 = vpop.f32.mrb[0].mxu0
        %968 = vdwg.mxu0
        %v969 = vmax.f32 %v931, 0.0
        %v970 = vmax.f32 %v936, 0.0
        %v971 = vmax.f32 %v941, 0.0
        %v972 = vmax.f32 %v946, 0.0
        %v973 = vmax.f32 %v951, 0.0
        %v974 = vmax.f32 %v956, 0.0
        %v975 = vmax.f32 %v961, 0.0
        %v976 = vmax.f32 %v966, 0.0
        %v977 = vlaneseq
        %v978 = vshrl.u32 %v977, 7
        %v979 = vsub.s32 1, %v978
        %v980 = vrot.slane %v828, %v979
        %v981 = vmul.f32 %v969, %v980
        %v982 = vmul.f32 %v970, %v980
        %v983 = vmul.f32 %v971, %v980
        %v984 = vmul.f32 %v972, %v980
        %v985 = vmul.f32 %v973, %v980
        %v986 = vmul.f32 %v974, %v980
        %v987 = vmul.f32 %v975, %v980
        %v988 = vmul.f32 %v976, %v980
        %v989 = vlaneseq
        %v990 = vshrl.u32 %v989, 7
        %v991 = vsub.s32 2, %v990
        %v992 = vrot.slane %v828, %v991
        %v993 = vadd.f32 %v981, %v992
        %v994 = vadd.f32 %v982, %v992
        %v995 = vadd.f32 %v983, %v992
        %v996 = vadd.f32 %v984, %v992
        %v997 = vadd.f32 %v985, %v992
        %v998 = vadd.f32 %v986, %v992
        %v999 = vadd.f32 %v987, %v992
        %v1000 = vadd.f32 %v988, %v992
        %vm1001 = vcmask 64512
        %1002 = vst.msk [vmem:[#allocation2] sm:$0xff] %vm1001, 0.0
        %1003 = vst.msk [vmem:[#allocation2 + $0x8] sm:$0xff] %vm1001, 0.0
        %1004 = vst.msk [vmem:[#allocation2 + $0x10] sm:$0xff] %vm1001, 0.0
        %1005 = vst.msk [vmem:[#allocation2 + $0x18] sm:$0xff] %vm1001, 0.0
        %1006 = vst.msk [vmem:[#allocation2 + $0x20] sm:$0xff] %vm1001, %v993
        %1007 = vst.msk [vmem:[#allocation2 + $0x28] sm:$0xff] %vm1001, %v994
        %1008 = vst.msk [vmem:[#allocation2 + $0x30] sm:$0xff] %vm1001, %v995
        %1009 = vst.msk [vmem:[#allocation2 + $0x38] sm:$0xff] %vm1001, %v996
        %1010 = vst.msk [vmem:[#allocation2 + $0x40] sm:$0xff] %vm1001, %v997
        %1011 = vst.msk [vmem:[#allocation2 + $0x48] sm:$0xff] %vm1001, %v998
        %1012 = vst.msk [vmem:[#allocation2 + $0x50] sm:$0xff] %vm1001, %v999
        %1013 = vst.msk [vmem:[#allocation2 + $0x58] sm:$0xff] %vm1001, %v1000
        %1014 = vst.msk [vmem:[#allocation2 + $0x60] sm:$0xff] %vm1001, 0.0
        %1015 = vst.msk [vmem:[#allocation2 + $0x68] sm:$0xff] %vm1001, 0.0
        %1016 = vst.msk [vmem:[#allocation2 + $0x70] sm:$0xff] %vm1001, 0.0
        %1017 = vst.msk [vmem:[#allocation2 + $0x78] sm:$0xff] %vm1001, 0.0
        %v1018 = vld [vmem:[%s6] sm:$0xff]
        %v1019 = vld [vmem:[%s6 + $0x8] sm:$0xff]
        %v1020 = vld [vmem:[%s6 + $0x10] sm:$0xff]
        %v1021 = vld [vmem:[%s6 + $0x18] sm:$0xff]
        %v1022 = vld [vmem:[%s6 + $0x20] sm:$0xff]
        %v1023 = vld [vmem:[%s6 + $0x28] sm:$0xff]
        %v1024 = vld [vmem:[%s6 + $0x30] sm:$0x1]
        %v1025 = vld [vmem:[#allocation2 + $0x5] sm:$0xff]
        %v1026 = vld [vmem:[#allocation2 + $0xd] sm:$0xff]
        %v1027 = vld [vmem:[#allocation2 + $0x15] sm:$0xff]
        %v1028 = vld [vmem:[#allocation2 + $0x1d] sm:$0xff]
        %v1029 = vld [vmem:[#allocation2 + $0x25] sm:$0xff]
        %v1030 = vld [vmem:[#allocation2 + $0x2d] sm:$0xff]
        %v1031 = vld [vmem:[#allocation2 + $0x35] sm:$0xff]
        %v1032 = vld [vmem:[#allocation2 + $0x3d] sm:$0xff]
        %v1033 = vlaneseq
        %v1034 = vshrl.u32 %v1033, 7
        %v1035 = vsub.s32 0, %v1034
        %v1036 = vrot.slane %v1018, %v1035
        %v1037 = vmul.f32 %v1025, %v1036
        %v1038 = vmul.f32 %v1026, %v1036
        %v1039 = vmul.f32 %v1027, %v1036
        %v1040 = vmul.f32 %v1028, %v1036
        %v1041 = vmul.f32 %v1029, %v1036
        %v1042 = vmul.f32 %v1030, %v1036
        %v1043 = vmul.f32 %v1031, %v1036
        %v1044 = vmul.f32 %v1032, %v1036
        %v1045 = vld [vmem:[#allocation2 + $0x45] sm:$0xff]
        %v1046 = vlaneseq
        %v1047 = vshrl.u32 %v1046, 7
        %v1048 = vsub.s32 7, %v1047
        %v1049 = vrot.slane %v1018, %v1048
        %v1050 = vmul.f32 %v1026, %v1049
        %v1051 = vmul.f32 %v1027, %v1049
        %v1052 = vmul.f32 %v1028, %v1049
        %v1053 = vmul.f32 %v1029, %v1049
        %v1054 = vmul.f32 %v1030, %v1049
        %v1055 = vmul.f32 %v1031, %v1049
        %v1056 = vmul.f32 %v1032, %v1049
        %v1057 = vmul.f32 %v1045, %v1049
        %v1058 = vadd.f32 %v1037, %v1050
        %v1059 = vadd.f32 %v1038, %v1051
        %v1060 = vadd.f32 %v1039, %v1052
        %v1061 = vadd.f32 %v1040, %v1053
        %v1062 = vadd.f32 %v1041, %v1054
        %v1063 = vadd.f32 %v1042, %v1055
        %v1064 = vadd.f32 %v1043, %v1056
        %v1065 = vadd.f32 %v1044, %v1057
        %v1066 = vld [vmem:[#allocation2 + $0x4d] sm:$0xff]
        %v1067 = vlaneseq
        %v1068 = vshrl.u32 %v1067, 7
        %v1069 = vsub.s32 6, %v1068
        %v1070 = vrot.slane %v1019, %v1069
        %v1071 = vmul.f32 %v1027, %v1070
        %v1072 = vmul.f32 %v1028, %v1070
        %v1073 = vmul.f32 %v1029, %v1070
        %v1074 = vmul.f32 %v1030, %v1070
        %v1075 = vmul.f32 %v1031, %v1070
        %v1076 = vmul.f32 %v1032, %v1070
        %v1077 = vmul.f32 %v1045, %v1070
        %v1078 = vmul.f32 %v1066, %v1070
        %v1079 = vadd.f32 %v1058, %v1071
        %v1080 = vadd.f32 %v1059, %v1072
        %v1081 = vadd.f32 %v1060, %v1073
        %v1082 = vadd.f32 %v1061, %v1074
        %v1083 = vadd.f32 %v1062, %v1075
        %v1084 = vadd.f32 %v1063, %v1076
        %v1085 = vadd.f32 %v1064, %v1077
        %v1086 = vadd.f32 %v1065, %v1078
        %v1087 = vld [vmem:[#allocation2 + $0x55] sm:$0xff]
        %v1088 = vlaneseq
        %v1089 = vshrl.u32 %v1088, 7
        %v1090 = vsub.s32 5, %v1089
        %v1091 = vrot.slane %v1020, %v1090
        %v1092 = vmul.f32 %v1028, %v1091
        %v1093 = vmul.f32 %v1029, %v1091
        %v1094 = vmul.f32 %v1030, %v1091
        %v1095 = vmul.f32 %v1031, %v1091
        %v1096 = vmul.f32 %v1032, %v1091
        %v1097 = vmul.f32 %v1045, %v1091
        %v1098 = vmul.f32 %v1066, %v1091
        %v1099 = vmul.f32 %v1087, %v1091
        %v1100 = vadd.f32 %v1079, %v1092
        %v1101 = vadd.f32 %v1080, %v1093
        %v1102 = vadd.f32 %v1081, %v1094
        %v1103 = vadd.f32 %v1082, %v1095
        %v1104 = vadd.f32 %v1083, %v1096
        %v1105 = vadd.f32 %v1084, %v1097
        %v1106 = vadd.f32 %v1085, %v1098
        %v1107 = vadd.f32 %v1086, %v1099
        %v1108 = vld [vmem:[#allocation2 + $0x5d] sm:$0xff]
        %v1109 = vlaneseq
        %v1110 = vshrl.u32 %v1109, 7
        %v1111 = vsub.s32 4, %v1110
        %v1112 = vrot.slane %v1021, %v1111
        %v1113 = vmul.f32 %v1029, %v1112
        %v1114 = vmul.f32 %v1030, %v1112
        %v1115 = vmul.f32 %v1031, %v1112
        %v1116 = vmul.f32 %v1032, %v1112
        %v1117 = vmul.f32 %v1045, %v1112
        %v1118 = vmul.f32 %v1066, %v1112
        %v1119 = vmul.f32 %v1087, %v1112
        %v1120 = vmul.f32 %v1108, %v1112
        %v1121 = vadd.f32 %v1100, %v1113
        %v1122 = vadd.f32 %v1101, %v1114
        %v1123 = vadd.f32 %v1102, %v1115
        %v1124 = vadd.f32 %v1103, %v1116
        %v1125 = vadd.f32 %v1104, %v1117
        %v1126 = vadd.f32 %v1105, %v1118
        %v1127 = vadd.f32 %v1106, %v1119
        %v1128 = vadd.f32 %v1107, %v1120
        %v1129 = vld [vmem:[#allocation2 + $0x65] sm:$0xff]
        %v1130 = vlaneseq
        %v1131 = vshrl.u32 %v1130, 7
        %v1132 = vsub.s32 3, %v1131
        %v1133 = vrot.slane %v1022, %v1132
        %v1134 = vmul.f32 %v1030, %v1133
        %v1135 = vmul.f32 %v1031, %v1133
        %v1136 = vmul.f32 %v1032, %v1133
        %v1137 = vmul.f32 %v1045, %v1133
        %v1138 = vmul.f32 %v1066, %v1133
        %v1139 = vmul.f32 %v1087, %v1133
        %v1140 = vmul.f32 %v1108, %v1133
        %v1141 = vmul.f32 %v1129, %v1133
        %v1142 = vadd.f32 %v1121, %v1134
        %v1143 = vadd.f32 %v1122, %v1135
        %v1144 = vadd.f32 %v1123, %v1136
        %v1145 = vadd.f32 %v1124, %v1137
        %v1146 = vadd.f32 %v1125, %v1138
        %v1147 = vadd.f32 %v1126, %v1139
        %v1148 = vadd.f32 %v1127, %v1140
        %v1149 = vadd.f32 %v1128, %v1141
        %v1150 = vld [vmem:[#allocation2 + $0x6d] sm:$0xff]
        %v1151 = vlaneseq
        %v1152 = vshrl.u32 %v1151, 7
        %v1153 = vsub.s32 2, %v1152
        %v1154 = vrot.slane %v1023, %v1153
        %v1155 = vmul.f32 %v1031, %v1154
        %v1156 = vmul.f32 %v1032, %v1154
        %v1157 = vmul.f32 %v1045, %v1154
        %v1158 = vmul.f32 %v1066, %v1154
        %v1159 = vmul.f32 %v1087, %v1154
        %v1160 = vmul.f32 %v1108, %v1154
        %v1161 = vmul.f32 %v1129, %v1154
        %v1162 = vmul.f32 %v1150, %v1154
        %v1163 = vadd.f32 %v1142, %v1155
        %v1164 = vadd.f32 %v1143, %v1156
        %v1165 = vadd.f32 %v1144, %v1157
        %v1166 = vadd.f32 %v1145, %v1158
        %v1167 = vadd.f32 %v1146, %v1159
        %v1168 = vadd.f32 %v1147, %v1160
        %v1169 = vadd.f32 %v1148, %v1161
        %v1170 = vadd.f32 %v1149, %v1162
        %1172 = vset.pattern.permute.xlu0 0
        %1173 = vperm.xlu0 %1172, %v645
        %v1174 = vpop.permute.xlu0 %1173
        %1177 = vset.pattern.permute.xlu0 0
        %1178 = vperm.xlu0 %1177, %v646
        %v1179 = vpop.permute.xlu0 %1178
        %1182 = vset.pattern.permute.xlu0 0
        %1183 = vperm.xlu0 %1182, %v647
        %v1184 = vpop.permute.xlu0 %1183
        %1187 = vset.pattern.permute.xlu0 0
        %1188 = vperm.xlu0 %1187, %v648
        %v1189 = vpop.permute.xlu0 %1188
        %1192 = vset.pattern.permute.xlu0 0
        %1193 = vperm.xlu0 %1192, %v649
        %v1194 = vpop.permute.xlu0 %1193
        %1197 = vset.pattern.permute.xlu0 0
        %1198 = vperm.xlu0 %1197, %v650
        %v1199 = vpop.permute.xlu0 %1198
        %1202 = vset.pattern.permute.xlu0 0
        %1203 = vperm.xlu0 %1202, %v651
        %v1204 = vpop.permute.xlu0 %1203
        %1207 = vset.pattern.permute.xlu0 0
        %1208 = vperm.xlu0 %1207, %v652
        %v1209 = vpop.permute.xlu0 %1208
        %v1211 = vmul.f32 %v1163, %v1174
        %v1212 = vmul.f32 %v1164, %v1179
        %v1213 = vmul.f32 %v1165, %v1184
        %v1214 = vmul.f32 %v1166, %v1189
        %v1215 = vmul.f32 %v1167, %v1194
        %v1216 = vmul.f32 %v1168, %v1199
        %v1217 = vmul.f32 %v1169, %v1204
        %v1218 = vmul.f32 %v1170, %v1209
        %v1219 = vld [vmem:[#allocation2 + $0x6] sm:$0xff]
        %v1220 = vld [vmem:[#allocation2 + $0xe] sm:$0xff]
        %v1221 = vld [vmem:[#allocation2 + $0x16] sm:$0xff]
        %v1222 = vld [vmem:[#allocation2 + $0x1e] sm:$0xff]
        %v1223 = vld [vmem:[#allocation2 + $0x26] sm:$0xff]
        %v1224 = vld [vmem:[#allocation2 + $0x2e] sm:$0xff]
        %v1225 = vld [vmem:[#allocation2 + $0x36] sm:$0xff]
        %v1226 = vld [vmem:[#allocation2 + $0x3e] sm:$0xff]
        %v1227 = vlaneseq
        %v1228 = vshrl.u32 %v1227, 7
        %v1229 = vsub.s32 1, %v1228
        %v1230 = vrot.slane %v1018, %v1229
        %v1231 = vmul.f32 %v1219, %v1230
        %v1232 = vmul.f32 %v1220, %v1230
        %v1233 = vmul.f32 %v1221, %v1230
        %v1234 = vmul.f32 %v1222, %v1230
        %v1235 = vmul.f32 %v1223, %v1230
        %v1236 = vmul.f32 %v1224, %v1230
        %v1237 = vmul.f32 %v1225, %v1230
        %v1238 = vmul.f32 %v1226, %v1230
        %v1239 = vld [vmem:[#allocation2 + $0x46] sm:$0xff]
        %v1240 = vlaneseq
        %v1241 = vshrl.u32 %v1240, 7
        %v1242 = vsub.s32 0, %v1241
        %v1243 = vrot.slane %v1019, %v1242
        %v1244 = vmul.f32 %v1220, %v1243
        %v1245 = vmul.f32 %v1221, %v1243
        %v1246 = vmul.f32 %v1222, %v1243
        %v1247 = vmul.f32 %v1223, %v1243
        %v1248 = vmul.f32 %v1224, %v1243
        %v1249 = vmul.f32 %v1225, %v1243
        %v1250 = vmul.f32 %v1226, %v1243
        %v1251 = vmul.f32 %v1239, %v1243
        %v1252 = vadd.f32 %v1231, %v1244
        %v1253 = vadd.f32 %v1232, %v1245
        %v1254 = vadd.f32 %v1233, %v1246
        %v1255 = vadd.f32 %v1234, %v1247
        %v1256 = vadd.f32 %v1235, %v1248
        %v1257 = vadd.f32 %v1236, %v1249
        %v1258 = vadd.f32 %v1237, %v1250
        %v1259 = vadd.f32 %v1238, %v1251
        %v1260 = vld [vmem:[#allocation2 + $0x4e] sm:$0xff]
        %v1261 = vlaneseq
        %v1262 = vshrl.u32 %v1261, 7
        %v1263 = vsub.s32 7, %v1262
        %v1264 = vrot.slane %v1019, %v1263
        %v1265 = vmul.f32 %v1221, %v1264
        %v1266 = vmul.f32 %v1222, %v1264
        %v1267 = vmul.f32 %v1223, %v1264
        %v1268 = vmul.f32 %v1224, %v1264
        %v1269 = vmul.f32 %v1225, %v1264
        %v1270 = vmul.f32 %v1226, %v1264
        %v1271 = vmul.f32 %v1239, %v1264
        %v1272 = vmul.f32 %v1260, %v1264
        %v1273 = vadd.f32 %v1252, %v1265
        %v1274 = vadd.f32 %v1253, %v1266
        %v1275 = vadd.f32 %v1254, %v1267
        %v1276 = vadd.f32 %v1255, %v1268
        %v1277 = vadd.f32 %v1256, %v1269
        %v1278 = vadd.f32 %v1257, %v1270
        %v1279 = vadd.f32 %v1258, %v1271
        %v1280 = vadd.f32 %v1259, %v1272
        %v1281 = vld [vmem:[#allocation2 + $0x56] sm:$0xff]
        %v1282 = vlaneseq
        %v1283 = vshrl.u32 %v1282, 7
        %v1284 = vsub.s32 6, %v1283
        %v1285 = vrot.slane %v1020, %v1284
        %v1286 = vmul.f32 %v1222, %v1285
        %v1287 = vmul.f32 %v1223, %v1285
        %v1288 = vmul.f32 %v1224, %v1285
        %v1289 = vmul.f32 %v1225, %v1285
        %v1290 = vmul.f32 %v1226, %v1285
        %v1291 = vmul.f32 %v1239, %v1285
        %v1292 = vmul.f32 %v1260, %v1285
        %v1293 = vmul.f32 %v1281, %v1285
        %v1294 = vadd.f32 %v1273, %v1286
        %v1295 = vadd.f32 %v1274, %v1287
        %v1296 = vadd.f32 %v1275, %v1288
        %v1297 = vadd.f32 %v1276, %v1289
        %v1298 = vadd.f32 %v1277, %v1290
        %v1299 = vadd.f32 %v1278, %v1291
        %v1300 = vadd.f32 %v1279, %v1292
        %v1301 = vadd.f32 %v1280, %v1293
        %v1302 = vld [vmem:[#allocation2 + $0x5e] sm:$0xff]
        %v1303 = vlaneseq
        %v1304 = vshrl.u32 %v1303, 7
        %v1305 = vsub.s32 5, %v1304
        %v1306 = vrot.slane %v1021, %v1305
        %v1307 = vmul.f32 %v1223, %v1306
        %v1308 = vmul.f32 %v1224, %v1306
        %v1309 = vmul.f32 %v1225, %v1306
        %v1310 = vmul.f32 %v1226, %v1306
        %v1311 = vmul.f32 %v1239, %v1306
        %v1312 = vmul.f32 %v1260, %v1306
        %v1313 = vmul.f32 %v1281, %v1306
        %v1314 = vmul.f32 %v1302, %v1306
        %v1315 = vadd.f32 %v1294, %v1307
        %v1316 = vadd.f32 %v1295, %v1308
        %v1317 = vadd.f32 %v1296, %v1309
        %v1318 = vadd.f32 %v1297, %v1310
        %v1319 = vadd.f32 %v1298, %v1311
        %v1320 = vadd.f32 %v1299, %v1312
        %v1321 = vadd.f32 %v1300, %v1313
        %v1322 = vadd.f32 %v1301, %v1314
        %v1323 = vld [vmem:[#allocation2 + $0x66] sm:$0xff]
        %v1324 = vlaneseq
        %v1325 = vshrl.u32 %v1324, 7
        %v1326 = vsub.s32 4, %v1325
        %v1327 = vrot.slane %v1022, %v1326
        %v1328 = vmul.f32 %v1224, %v1327
        %v1329 = vmul.f32 %v1225, %v1327
        %v1330 = vmul.f32 %v1226, %v1327
        %v1331 = vmul.f32 %v1239, %v1327
        %v1332 = vmul.f32 %v1260, %v1327
        %v1333 = vmul.f32 %v1281, %v1327
        %v1334 = vmul.f32 %v1302, %v1327
        %v1335 = vmul.f32 %v1323, %v1327
        %v1336 = vadd.f32 %v1315, %v1328
        %v1337 = vadd.f32 %v1316, %v1329
        %v1338 = vadd.f32 %v1317, %v1330
        %v1339 = vadd.f32 %v1318, %v1331
        %v1340 = vadd.f32 %v1319, %v1332
        %v1341 = vadd.f32 %v1320, %v1333
        %v1342 = vadd.f32 %v1321, %v1334
        %v1343 = vadd.f32 %v1322, %v1335
        %v1344 = vld [vmem:[#allocation2 + $0x6e] sm:$0xff]
        %v1345 = vlaneseq
        %v1346 = vshrl.u32 %v1345, 7
        %v1347 = vsub.s32 3, %v1346
        %v1348 = vrot.slane %v1023, %v1347
        %v1349 = vmul.f32 %v1225, %v1348
        %v1350 = vmul.f32 %v1226, %v1348
        %v1351 = vmul.f32 %v1239, %v1348
        %v1352 = vmul.f32 %v1260, %v1348
        %v1353 = vmul.f32 %v1281, %v1348
        %v1354 = vmul.f32 %v1302, %v1348
        %v1355 = vmul.f32 %v1323, %v1348
        %v1356 = vmul.f32 %v1344, %v1348
        %v1357 = vadd.f32 %v1336, %v1349
        %v1358 = vadd.f32 %v1337, %v1350
        %v1359 = vadd.f32 %v1338, %v1351
        %v1360 = vadd.f32 %v1339, %v1352
        %v1361 = vadd.f32 %v1340, %v1353
        %v1362 = vadd.f32 %v1341, %v1354
        %v1363 = vadd.f32 %v1342, %v1355
        %v1364 = vadd.f32 %v1343, %v1356
        %1365 = vset.pattern.permute.xlu0 1
        %1366 = vperm.xlu0 %1365, %v645
        %v1367 = vpop.permute.xlu0 %1366
        %1369 = vset.pattern.permute.xlu0 1
        %1370 = vperm.xlu0 %1369, %v646
        %v1371 = vpop.permute.xlu0 %1370
        %1373 = vset.pattern.permute.xlu0 1
        %1374 = vperm.xlu0 %1373, %v647
        %v1375 = vpop.permute.xlu0 %1374
        %1377 = vset.pattern.permute.xlu0 1
        %1378 = vperm.xlu0 %1377, %v648
        %v1379 = vpop.permute.xlu0 %1378
        %1381 = vset.pattern.permute.xlu0 1
        %1382 = vperm.xlu0 %1381, %v649
        %v1383 = vpop.permute.xlu0 %1382
        %1385 = vset.pattern.permute.xlu0 1
        %1386 = vperm.xlu0 %1385, %v650
        %v1387 = vpop.permute.xlu0 %1386
        %1389 = vset.pattern.permute.xlu0 1
        %1390 = vperm.xlu0 %1389, %v651
        %v1391 = vpop.permute.xlu0 %1390
        %1393 = vset.pattern.permute.xlu0 1
        %1394 = vperm.xlu0 %1393, %v652
        %v1395 = vpop.permute.xlu0 %1394
        %v1397 = vmul.f32 %v1357, %v1367
        %v1398 = vmul.f32 %v1358, %v1371
        %v1399 = vmul.f32 %v1359, %v1375
        %v1400 = vmul.f32 %v1360, %v1379
        %v1401 = vmul.f32 %v1361, %v1383
        %v1402 = vmul.f32 %v1362, %v1387
        %v1403 = vmul.f32 %v1363, %v1391
        %v1404 = vmul.f32 %v1364, %v1395
        %v1405 = vadd.f32 %v1211, %v1397
        %v1406 = vadd.f32 %v1212, %v1398
        %v1407 = vadd.f32 %v1213, %v1399
        %v1408 = vadd.f32 %v1214, %v1400
        %v1409 = vadd.f32 %v1215, %v1401
        %v1410 = vadd.f32 %v1216, %v1402
        %v1411 = vadd.f32 %v1217, %v1403
        %v1412 = vadd.f32 %v1218, %v1404
        %v1413 = vld [vmem:[#allocation2 + $0x7] sm:$0xff]
        %v1414 = vld [vmem:[#allocation2 + $0xf] sm:$0xff]
        %v1415 = vld [vmem:[#allocation2 + $0x17] sm:$0xff]
        %v1416 = vld [vmem:[#allocation2 + $0x1f] sm:$0xff]
        %v1417 = vld [vmem:[#allocation2 + $0x27] sm:$0xff]
        %v1418 = vld [vmem:[#allocation2 + $0x2f] sm:$0xff]
        %v1419 = vld [vmem:[#allocation2 + $0x37] sm:$0xff]
        %v1420 = vld [vmem:[#allocation2 + $0x3f] sm:$0xff]
        %v1421 = vlaneseq
        %v1422 = vshrl.u32 %v1421, 7
        %v1423 = vsub.s32 2, %v1422
        %v1424 = vrot.slane %v1018, %v1423
        %v1425 = vmul.f32 %v1413, %v1424
        %v1426 = vmul.f32 %v1414, %v1424
        %v1427 = vmul.f32 %v1415, %v1424
        %v1428 = vmul.f32 %v1416, %v1424
        %v1429 = vmul.f32 %v1417, %v1424
        %v1430 = vmul.f32 %v1418, %v1424
        %v1431 = vmul.f32 %v1419, %v1424
        %v1432 = vmul.f32 %v1420, %v1424
        %v1433 = vld [vmem:[#allocation2 + $0x47] sm:$0xff]
        %v1434 = vlaneseq
        %v1435 = vshrl.u32 %v1434, 7
        %v1436 = vsub.s32 1, %v1435
        %v1437 = vrot.slane %v1019, %v1436
        %v1438 = vmul.f32 %v1414, %v1437
        %v1439 = vmul.f32 %v1415, %v1437
        %v1440 = vmul.f32 %v1416, %v1437
        %v1441 = vmul.f32 %v1417, %v1437
        %v1442 = vmul.f32 %v1418, %v1437
        %v1443 = vmul.f32 %v1419, %v1437
        %v1444 = vmul.f32 %v1420, %v1437
        %v1445 = vmul.f32 %v1433, %v1437
        %v1446 = vadd.f32 %v1425, %v1438
        %v1447 = vadd.f32 %v1426, %v1439
        %v1448 = vadd.f32 %v1427, %v1440
        %v1449 = vadd.f32 %v1428, %v1441
        %v1450 = vadd.f32 %v1429, %v1442
        %v1451 = vadd.f32 %v1430, %v1443
        %v1452 = vadd.f32 %v1431, %v1444
        %v1453 = vadd.f32 %v1432, %v1445
        %v1454 = vld [vmem:[#allocation2 + $0x4f] sm:$0xff]
        %v1455 = vlaneseq
        %v1456 = vshrl.u32 %v1455, 7
        %v1457 = vsub.s32 0, %v1456
        %v1458 = vrot.slane %v1020, %v1457
        %v1459 = vmul.f32 %v1415, %v1458
        %v1460 = vmul.f32 %v1416, %v1458
        %v1461 = vmul.f32 %v1417, %v1458
        %v1462 = vmul.f32 %v1418, %v1458
        %v1463 = vmul.f32 %v1419, %v1458
        %v1464 = vmul.f32 %v1420, %v1458
        %v1465 = vmul.f32 %v1433, %v1458
        %v1466 = vmul.f32 %v1454, %v1458
        %v1467 = vadd.f32 %v1446, %v1459
        %v1468 = vadd.f32 %v1447, %v1460
        %v1469 = vadd.f32 %v1448, %v1461
        %v1470 = vadd.f32 %v1449, %v1462
        %v1471 = vadd.f32 %v1450, %v1463
        %v1472 = vadd.f32 %v1451, %v1464
        %v1473 = vadd.f32 %v1452, %v1465
        %v1474 = vadd.f32 %v1453, %v1466
        %v1475 = vld [vmem:[#allocation2 + $0x57] sm:$0xff]
        %v1476 = vlaneseq
        %v1477 = vshrl.u32 %v1476, 7
        %v1478 = vsub.s32 7, %v1477
        %v1479 = vrot.slane %v1020, %v1478
        %v1480 = vmul.f32 %v1416, %v1479
        %v1481 = vmul.f32 %v1417, %v1479
        %v1482 = vmul.f32 %v1418, %v1479
        %v1483 = vmul.f32 %v1419, %v1479
        %v1484 = vmul.f32 %v1420, %v1479
        %v1485 = vmul.f32 %v1433, %v1479
        %v1486 = vmul.f32 %v1454, %v1479
        %v1487 = vmul.f32 %v1475, %v1479
        %v1488 = vadd.f32 %v1467, %v1480
        %v1489 = vadd.f32 %v1468, %v1481
        %v1490 = vadd.f32 %v1469, %v1482
        %v1491 = vadd.f32 %v1470, %v1483
        %v1492 = vadd.f32 %v1471, %v1484
        %v1493 = vadd.f32 %v1472, %v1485
        %v1494 = vadd.f32 %v1473, %v1486
        %v1495 = vadd.f32 %v1474, %v1487
        %v1496 = vld [vmem:[#allocation2 + $0x5f] sm:$0xff]
        %v1497 = vlaneseq
        %v1498 = vshrl.u32 %v1497, 7
        %v1499 = vsub.s32 6, %v1498
        %v1500 = vrot.slane %v1021, %v1499
        %v1501 = vmul.f32 %v1417, %v1500
        %v1502 = vmul.f32 %v1418, %v1500
        %v1503 = vmul.f32 %v1419, %v1500
        %v1504 = vmul.f32 %v1420, %v1500
        %v1505 = vmul.f32 %v1433, %v1500
        %v1506 = vmul.f32 %v1454, %v1500
        %v1507 = vmul.f32 %v1475, %v1500
        %v1508 = vmul.f32 %v1496, %v1500
        %v1509 = vadd.f32 %v1488, %v1501
        %v1510 = vadd.f32 %v1489, %v1502
        %v1511 = vadd.f32 %v1490, %v1503
        %v1512 = vadd.f32 %v1491, %v1504
        %v1513 = vadd.f32 %v1492, %v1505
        %v1514 = vadd.f32 %v1493, %v1506
        %v1515 = vadd.f32 %v1494, %v1507
        %v1516 = vadd.f32 %v1495, %v1508
        %v1517 = vld [vmem:[#allocation2 + $0x67] sm:$0xff]
        %v1518 = vlaneseq
        %v1519 = vshrl.u32 %v1518, 7
        %v1520 = vsub.s32 5, %v1519
        %v1521 = vrot.slane %v1022, %v1520
        %v1522 = vmul.f32 %v1418, %v1521
        %v1523 = vmul.f32 %v1419, %v1521
        %v1524 = vmul.f32 %v1420, %v1521
        %v1525 = vmul.f32 %v1433, %v1521
        %v1526 = vmul.f32 %v1454, %v1521
        %v1527 = vmul.f32 %v1475, %v1521
        %v1528 = vmul.f32 %v1496, %v1521
        %v1529 = vmul.f32 %v1517, %v1521
        %v1530 = vadd.f32 %v1509, %v1522
        %v1531 = vadd.f32 %v1510, %v1523
        %v1532 = vadd.f32 %v1511, %v1524
        %v1533 = vadd.f32 %v1512, %v1525
        %v1534 = vadd.f32 %v1513, %v1526
        %v1535 = vadd.f32 %v1514, %v1527
        %v1536 = vadd.f32 %v1515, %v1528
        %v1537 = vadd.f32 %v1516, %v1529
        %v1538 = vld [vmem:[#allocation2 + $0x6f] sm:$0xff]
        %v1539 = vlaneseq
        %v1540 = vshrl.u32 %v1539, 7
        %v1541 = vsub.s32 4, %v1540
        %v1542 = vrot.slane %v1023, %v1541
        %v1543 = vmul.f32 %v1419, %v1542
        %v1544 = vmul.f32 %v1420, %v1542
        %v1545 = vmul.f32 %v1433, %v1542
        %v1546 = vmul.f32 %v1454, %v1542
        %v1547 = vmul.f32 %v1475, %v1542
        %v1548 = vmul.f32 %v1496, %v1542
        %v1549 = vmul.f32 %v1517, %v1542
        %v1550 = vmul.f32 %v1538, %v1542
        %v1551 = vadd.f32 %v1530, %v1543
        %v1552 = vadd.f32 %v1531, %v1544
        %v1553 = vadd.f32 %v1532, %v1545
        %v1554 = vadd.f32 %v1533, %v1546
        %v1555 = vadd.f32 %v1534, %v1547
        %v1556 = vadd.f32 %v1535, %v1548
        %v1557 = vadd.f32 %v1536, %v1549
        %v1558 = vadd.f32 %v1537, %v1550
        %1559 = vset.pattern.permute.xlu0 2
        %1560 = vperm.xlu0 %1559, %v645
        %v1561 = vpop.permute.xlu0 %1560
        %1563 = vset.pattern.permute.xlu0 2
        %1564 = vperm.xlu0 %1563, %v646
        %v1565 = vpop.permute.xlu0 %1564
        %1567 = vset.pattern.permute.xlu0 2
        %1568 = vperm.xlu0 %1567, %v647
        %v1569 = vpop.permute.xlu0 %1568
        %1571 = vset.pattern.permute.xlu0 2
        %1572 = vperm.xlu0 %1571, %v648
        %v1573 = vpop.permute.xlu0 %1572
        %1575 = vset.pattern.permute.xlu0 2
        %1576 = vperm.xlu0 %1575, %v649
        %v1577 = vpop.permute.xlu0 %1576
        %1579 = vset.pattern.permute.xlu0 2
        %1580 = vperm.xlu0 %1579, %v650
        %v1581 = vpop.permute.xlu0 %1580
        %1583 = vset.pattern.permute.xlu0 2
        %1584 = vperm.xlu0 %1583, %v651
        %v1585 = vpop.permute.xlu0 %1584
        %1587 = vset.pattern.permute.xlu0 2
        %1588 = vperm.xlu0 %1587, %v652
        %v1589 = vpop.permute.xlu0 %1588
        %v1591 = vmul.f32 %v1551, %v1561
        %v1592 = vmul.f32 %v1552, %v1565
        %v1593 = vmul.f32 %v1553, %v1569
        %v1594 = vmul.f32 %v1554, %v1573
        %v1595 = vmul.f32 %v1555, %v1577
        %v1596 = vmul.f32 %v1556, %v1581
        %v1597 = vmul.f32 %v1557, %v1585
        %v1598 = vmul.f32 %v1558, %v1589
        %v1599 = vadd.f32 %v1405, %v1591
        %v1600 = vadd.f32 %v1406, %v1592
        %v1601 = vadd.f32 %v1407, %v1593
        %v1602 = vadd.f32 %v1408, %v1594
        %v1603 = vadd.f32 %v1409, %v1595
        %v1604 = vadd.f32 %v1410, %v1596
        %v1605 = vadd.f32 %v1411, %v1597
        %v1606 = vadd.f32 %v1412, %v1598
        %v1607 = vld [vmem:[#allocation2 + $0x8] sm:$0xff]
        %v1608 = vld [vmem:[#allocation2 + $0x10] sm:$0xff]
        %v1609 = vld [vmem:[#allocation2 + $0x18] sm:$0xff]
        %v1610 = vld [vmem:[#allocation2 + $0x20] sm:$0xff]
        %v1611 = vld [vmem:[#allocation2 + $0x28] sm:$0xff]
        %v1612 = vld [vmem:[#allocation2 + $0x30] sm:$0xff]
        %v1613 = vld [vmem:[#allocation2 + $0x38] sm:$0xff]
        %v1614 = vld [vmem:[#allocation2 + $0x40] sm:$0xff]
        %v1615 = vlaneseq
        %v1616 = vshrl.u32 %v1615, 7
        %v1617 = vsub.s32 3, %v1616
        %v1618 = vrot.slane %v1018, %v1617
        %v1619 = vmul.f32 %v1607, %v1618
        %v1620 = vmul.f32 %v1608, %v1618
        %v1621 = vmul.f32 %v1609, %v1618
        %v1622 = vmul.f32 %v1610, %v1618
        %v1623 = vmul.f32 %v1611, %v1618
        %v1624 = vmul.f32 %v1612, %v1618
        %v1625 = vmul.f32 %v1613, %v1618
        %v1626 = vmul.f32 %v1614, %v1618
        %v1627 = vld [vmem:[#allocation2 + $0x48] sm:$0xff]
        %v1628 = vlaneseq
        %v1629 = vshrl.u32 %v1628, 7
        %v1630 = vsub.s32 2, %v1629
        %v1631 = vrot.slane %v1019, %v1630
        %v1632 = vmul.f32 %v1608, %v1631
        %v1633 = vmul.f32 %v1609, %v1631
        %v1634 = vmul.f32 %v1610, %v1631
        %v1635 = vmul.f32 %v1611, %v1631
        %v1636 = vmul.f32 %v1612, %v1631
        %v1637 = vmul.f32 %v1613, %v1631
        %v1638 = vmul.f32 %v1614, %v1631
        %v1639 = vmul.f32 %v1627, %v1631
        %v1640 = vadd.f32 %v1619, %v1632
        %v1641 = vadd.f32 %v1620, %v1633
        %v1642 = vadd.f32 %v1621, %v1634
        %v1643 = vadd.f32 %v1622, %v1635
        %v1644 = vadd.f32 %v1623, %v1636
        %v1645 = vadd.f32 %v1624, %v1637
        %v1646 = vadd.f32 %v1625, %v1638
        %v1647 = vadd.f32 %v1626, %v1639
        %v1648 = vld [vmem:[#allocation2 + $0x50] sm:$0xff]
        %v1649 = vlaneseq
        %v1650 = vshrl.u32 %v1649, 7
        %v1651 = vsub.s32 1, %v1650
        %v1652 = vrot.slane %v1020, %v1651
        %v1653 = vmul.f32 %v1609, %v1652
        %v1654 = vmul.f32 %v1610, %v1652
        %v1655 = vmul.f32 %v1611, %v1652
        %v1656 = vmul.f32 %v1612, %v1652
        %v1657 = vmul.f32 %v1613, %v1652
        %v1658 = vmul.f32 %v1614, %v1652
        %v1659 = vmul.f32 %v1627, %v1652
        %v1660 = vmul.f32 %v1648, %v1652
        %v1661 = vadd.f32 %v1640, %v1653
        %v1662 = vadd.f32 %v1641, %v1654
        %v1663 = vadd.f32 %v1642, %v1655
        %v1664 = vadd.f32 %v1643, %v1656
        %v1665 = vadd.f32 %v1644, %v1657
        %v1666 = vadd.f32 %v1645, %v1658
        %v1667 = vadd.f32 %v1646, %v1659
        %v1668 = vadd.f32 %v1647, %v1660
        %v1669 = vld [vmem:[#allocation2 + $0x58] sm:$0xff]
        %v1670 = vlaneseq
        %v1671 = vshrl.u32 %v1670, 7
        %v1672 = vsub.s32 0, %v1671
        %v1673 = vrot.slane %v1021, %v1672
        %v1674 = vmul.f32 %v1610, %v1673
        %v1675 = vmul.f32 %v1611, %v1673
        %v1676 = vmul.f32 %v1612, %v1673
        %v1677 = vmul.f32 %v1613, %v1673
        %v1678 = vmul.f32 %v1614, %v1673
        %v1679 = vmul.f32 %v1627, %v1673
        %v1680 = vmul.f32 %v1648, %v1673
        %v1681 = vmul.f32 %v1669, %v1673
        %v1682 = vadd.f32 %v1661, %v1674
        %v1683 = vadd.f32 %v1662, %v1675
        %v1684 = vadd.f32 %v1663, %v1676
        %v1685 = vadd.f32 %v1664, %v1677
        %v1686 = vadd.f32 %v1665, %v1678
        %v1687 = vadd.f32 %v1666, %v1679
        %v1688 = vadd.f32 %v1667, %v1680
        %v1689 = vadd.f32 %v1668, %v1681
        %v1690 = vld [vmem:[#allocation2 + $0x60] sm:$0xff]
        %v1691 = vlaneseq
        %v1692 = vshrl.u32 %v1691, 7
        %v1693 = vsub.s32 7, %v1692
        %v1694 = vrot.slane %v1021, %v1693
        %v1695 = vmul.f32 %v1611, %v1694
        %v1696 = vmul.f32 %v1612, %v1694
        %v1697 = vmul.f32 %v1613, %v1694
        %v1698 = vmul.f32 %v1614, %v1694
        %v1699 = vmul.f32 %v1627, %v1694
        %v1700 = vmul.f32 %v1648, %v1694
        %v1701 = vmul.f32 %v1669, %v1694
        %v1702 = vmul.f32 %v1690, %v1694
        %v1703 = vadd.f32 %v1682, %v1695
        %v1704 = vadd.f32 %v1683, %v1696
        %v1705 = vadd.f32 %v1684, %v1697
        %v1706 = vadd.f32 %v1685, %v1698
        %v1707 = vadd.f32 %v1686, %v1699
        %v1708 = vadd.f32 %v1687, %v1700
        %v1709 = vadd.f32 %v1688, %v1701
        %v1710 = vadd.f32 %v1689, %v1702
        %v1711 = vld [vmem:[#allocation2 + $0x68] sm:$0xff]
        %v1712 = vlaneseq
        %v1713 = vshrl.u32 %v1712, 7
        %v1714 = vsub.s32 6, %v1713
        %v1715 = vrot.slane %v1022, %v1714
        %v1716 = vmul.f32 %v1612, %v1715
        %v1717 = vmul.f32 %v1613, %v1715
        %v1718 = vmul.f32 %v1614, %v1715
        %v1719 = vmul.f32 %v1627, %v1715
        %v1720 = vmul.f32 %v1648, %v1715
        %v1721 = vmul.f32 %v1669, %v1715
        %v1722 = vmul.f32 %v1690, %v1715
        %v1723 = vmul.f32 %v1711, %v1715
        %v1724 = vadd.f32 %v1703, %v1716
        %v1725 = vadd.f32 %v1704, %v1717
        %v1726 = vadd.f32 %v1705, %v1718
        %v1727 = vadd.f32 %v1706, %v1719
        %v1728 = vadd.f32 %v1707, %v1720
        %v1729 = vadd.f32 %v1708, %v1721
        %v1730 = vadd.f32 %v1709, %v1722
        %v1731 = vadd.f32 %v1710, %v1723
        %v1732 = vld [vmem:[#allocation2 + $0x70] sm:$0xff]
        %v1733 = vlaneseq
        %v1734 = vshrl.u32 %v1733, 7
        %v1735 = vsub.s32 5, %v1734
        %v1736 = vrot.slane %v1023, %v1735
        %v1737 = vmul.f32 %v1613, %v1736
        %v1738 = vmul.f32 %v1614, %v1736
        %v1739 = vmul.f32 %v1627, %v1736
        %v1740 = vmul.f32 %v1648, %v1736
        %v1741 = vmul.f32 %v1669, %v1736
        %v1742 = vmul.f32 %v1690, %v1736
        %v1743 = vmul.f32 %v1711, %v1736
        %v1744 = vmul.f32 %v1732, %v1736
        %v1745 = vadd.f32 %v1724, %v1737
        %v1746 = vadd.f32 %v1725, %v1738
        %v1747 = vadd.f32 %v1726, %v1739
        %v1748 = vadd.f32 %v1727, %v1740
        %v1749 = vadd.f32 %v1728, %v1741
        %v1750 = vadd.f32 %v1729, %v1742
        %v1751 = vadd.f32 %v1730, %v1743
        %v1752 = vadd.f32 %v1731, %v1744
        %v1753 = vadd.f32 %v1599, %v1745
        %v1754 = vadd.f32 %v1600, %v1746
        %v1755 = vadd.f32 %v1601, %v1747
        %v1756 = vadd.f32 %v1602, %v1748
        %v1757 = vadd.f32 %v1603, %v1749
        %v1758 = vadd.f32 %v1604, %v1750
        %v1759 = vadd.f32 %v1605, %v1751
        %v1760 = vadd.f32 %v1606, %v1752
        %v1761 = vld [vmem:[#allocation2 + $0x9] sm:$0xff]
        %v1762 = vld [vmem:[#allocation2 + $0x11] sm:$0xff]
        %v1763 = vld [vmem:[#allocation2 + $0x19] sm:$0xff]
        %v1764 = vld [vmem:[#allocation2 + $0x21] sm:$0xff]
        %v1765 = vld [vmem:[#allocation2 + $0x29] sm:$0xff]
        %v1766 = vld [vmem:[#allocation2 + $0x31] sm:$0xff]
        %v1767 = vld [vmem:[#allocation2 + $0x39] sm:$0xff]
        %v1768 = vld [vmem:[#allocation2 + $0x41] sm:$0xff]
        %v1769 = vlaneseq
        %v1770 = vshrl.u32 %v1769, 7
        %v1771 = vsub.s32 4, %v1770
        %v1772 = vrot.slane %v1018, %v1771
        %v1773 = vmul.f32 %v1761, %v1772
        %v1774 = vmul.f32 %v1762, %v1772
        %v1775 = vmul.f32 %v1763, %v1772
        %v1776 = vmul.f32 %v1764, %v1772
        %v1777 = vmul.f32 %v1765, %v1772
        %v1778 = vmul.f32 %v1766, %v1772
        %v1779 = vmul.f32 %v1767, %v1772
        %v1780 = vmul.f32 %v1768, %v1772
        %v1781 = vld [vmem:[#allocation2 + $0x49] sm:$0xff]
        %v1782 = vlaneseq
        %v1783 = vshrl.u32 %v1782, 7
        %v1784 = vsub.s32 3, %v1783
        %v1785 = vrot.slane %v1019, %v1784
        %v1786 = vmul.f32 %v1762, %v1785
        %v1787 = vmul.f32 %v1763, %v1785
        %v1788 = vmul.f32 %v1764, %v1785
        %v1789 = vmul.f32 %v1765, %v1785
        %v1790 = vmul.f32 %v1766, %v1785
        %v1791 = vmul.f32 %v1767, %v1785
        %v1792 = vmul.f32 %v1768, %v1785
        %v1793 = vmul.f32 %v1781, %v1785
        %v1794 = vadd.f32 %v1773, %v1786
        %v1795 = vadd.f32 %v1774, %v1787
        %v1796 = vadd.f32 %v1775, %v1788
        %v1797 = vadd.f32 %v1776, %v1789
        %v1798 = vadd.f32 %v1777, %v1790
        %v1799 = vadd.f32 %v1778, %v1791
        %v1800 = vadd.f32 %v1779, %v1792
        %v1801 = vadd.f32 %v1780, %v1793
        %v1802 = vld [vmem:[#allocation2 + $0x51] sm:$0xff]
        %v1803 = vlaneseq
        %v1804 = vshrl.u32 %v1803, 7
        %v1805 = vsub.s32 2, %v1804
        %v1806 = vrot.slane %v1020, %v1805
        %v1807 = vmul.f32 %v1763, %v1806
        %v1808 = vmul.f32 %v1764, %v1806
        %v1809 = vmul.f32 %v1765, %v1806
        %v1810 = vmul.f32 %v1766, %v1806
        %v1811 = vmul.f32 %v1767, %v1806
        %v1812 = vmul.f32 %v1768, %v1806
        %v1813 = vmul.f32 %v1781, %v1806
        %v1814 = vmul.f32 %v1802, %v1806
        %v1815 = vadd.f32 %v1794, %v1807
        %v1816 = vadd.f32 %v1795, %v1808
        %v1817 = vadd.f32 %v1796, %v1809
        %v1818 = vadd.f32 %v1797, %v1810
        %v1819 = vadd.f32 %v1798, %v1811
        %v1820 = vadd.f32 %v1799, %v1812
        %v1821 = vadd.f32 %v1800, %v1813
        %v1822 = vadd.f32 %v1801, %v1814
        %v1823 = vld [vmem:[#allocation2 + $0x59] sm:$0xff]
        %v1824 = vlaneseq
        %v1825 = vshrl.u32 %v1824, 7
        %v1826 = vsub.s32 1, %v1825
        %v1827 = vrot.slane %v1021, %v1826
        %v1828 = vmul.f32 %v1764, %v1827
        %v1829 = vmul.f32 %v1765, %v1827
        %v1830 = vmul.f32 %v1766, %v1827
        %v1831 = vmul.f32 %v1767, %v1827
        %v1832 = vmul.f32 %v1768, %v1827
        %v1833 = vmul.f32 %v1781, %v1827
        %v1834 = vmul.f32 %v1802, %v1827
        %v1835 = vmul.f32 %v1823, %v1827
        %v1836 = vadd.f32 %v1815, %v1828
        %v1837 = vadd.f32 %v1816, %v1829
        %v1838 = vadd.f32 %v1817, %v1830
        %v1839 = vadd.f32 %v1818, %v1831
        %v1840 = vadd.f32 %v1819, %v1832
        %v1841 = vadd.f32 %v1820, %v1833
        %v1842 = vadd.f32 %v1821, %v1834
        %v1843 = vadd.f32 %v1822, %v1835
        %v1844 = vld [vmem:[#allocation2 + $0x61] sm:$0xff]
        %v1845 = vlaneseq
        %v1846 = vshrl.u32 %v1845, 7
        %v1847 = vsub.s32 0, %v1846
        %v1848 = vrot.slane %v1022, %v1847
        %v1849 = vmul.f32 %v1765, %v1848
        %v1850 = vmul.f32 %v1766, %v1848
        %v1851 = vmul.f32 %v1767, %v1848
        %v1852 = vmul.f32 %v1768, %v1848
        %v1853 = vmul.f32 %v1781, %v1848
        %v1854 = vmul.f32 %v1802, %v1848
        %v1855 = vmul.f32 %v1823, %v1848
        %v1856 = vmul.f32 %v1844, %v1848
        %v1857 = vadd.f32 %v1836, %v1849
        %v1858 = vadd.f32 %v1837, %v1850
        %v1859 = vadd.f32 %v1838, %v1851
        %v1860 = vadd.f32 %v1839, %v1852
        %v1861 = vadd.f32 %v1840, %v1853
        %v1862 = vadd.f32 %v1841, %v1854
        %v1863 = vadd.f32 %v1842, %v1855
        %v1864 = vadd.f32 %v1843, %v1856
        %v1865 = vld [vmem:[#allocation2 + $0x69] sm:$0xff]
        %v1866 = vlaneseq
        %v1867 = vshrl.u32 %v1866, 7
        %v1868 = vsub.s32 7, %v1867
        %v1869 = vrot.slane %v1022, %v1868
        %v1870 = vmul.f32 %v1766, %v1869
        %v1871 = vmul.f32 %v1767, %v1869
        %v1872 = vmul.f32 %v1768, %v1869
        %v1873 = vmul.f32 %v1781, %v1869
        %v1874 = vmul.f32 %v1802, %v1869
        %v1875 = vmul.f32 %v1823, %v1869
        %v1876 = vmul.f32 %v1844, %v1869
        %v1877 = vmul.f32 %v1865, %v1869
        %v1878 = vadd.f32 %v1857, %v1870
        %v1879 = vadd.f32 %v1858, %v1871
        %v1880 = vadd.f32 %v1859, %v1872
        %v1881 = vadd.f32 %v1860, %v1873
        %v1882 = vadd.f32 %v1861, %v1874
        %v1883 = vadd.f32 %v1862, %v1875
        %v1884 = vadd.f32 %v1863, %v1876
        %v1885 = vadd.f32 %v1864, %v1877
        %v1886 = vld [vmem:[#allocation2 + $0x71] sm:$0xff]
        %v1887 = vlaneseq
        %v1888 = vshrl.u32 %v1887, 7
        %v1889 = vsub.s32 6, %v1888
        %v1890 = vrot.slane %v1023, %v1889
        %v1891 = vmul.f32 %v1767, %v1890
        %v1892 = vmul.f32 %v1768, %v1890
        %v1893 = vmul.f32 %v1781, %v1890
        %v1894 = vmul.f32 %v1802, %v1890
        %v1895 = vmul.f32 %v1823, %v1890
        %v1896 = vmul.f32 %v1844, %v1890
        %v1897 = vmul.f32 %v1865, %v1890
        %v1898 = vmul.f32 %v1886, %v1890
        %v1899 = vadd.f32 %v1878, %v1891
        %v1900 = vadd.f32 %v1879, %v1892
        %v1901 = vadd.f32 %v1880, %v1893
        %v1902 = vadd.f32 %v1881, %v1894
        %v1903 = vadd.f32 %v1882, %v1895
        %v1904 = vadd.f32 %v1883, %v1896
        %v1905 = vadd.f32 %v1884, %v1897
        %v1906 = vadd.f32 %v1885, %v1898
        %1907 = vset.pattern.permute.xlu0 4
        %1908 = vperm.xlu0 %1907, %v645
        %v1909 = vpop.permute.xlu0 %1908
        %1911 = vset.pattern.permute.xlu0 4
        %1912 = vperm.xlu0 %1911, %v646
        %v1913 = vpop.permute.xlu0 %1912
        %1915 = vset.pattern.permute.xlu0 4
        %1916 = vperm.xlu0 %1915, %v647
        %v1917 = vpop.permute.xlu0 %1916
        %1919 = vset.pattern.permute.xlu0 4
        %1920 = vperm.xlu0 %1919, %v648
        %v1921 = vpop.permute.xlu0 %1920
        %1923 = vset.pattern.permute.xlu0 4
        %1924 = vperm.xlu0 %1923, %v649
        %v1925 = vpop.permute.xlu0 %1924
        %1927 = vset.pattern.permute.xlu0 4
        %1928 = vperm.xlu0 %1927, %v650
        %v1929 = vpop.permute.xlu0 %1928
        %1931 = vset.pattern.permute.xlu0 4
        %1932 = vperm.xlu0 %1931, %v651
        %v1933 = vpop.permute.xlu0 %1932
        %1935 = vset.pattern.permute.xlu0 4
        %1936 = vperm.xlu0 %1935, %v652
        %v1937 = vpop.permute.xlu0 %1936
        %v1939 = vmul.f32 %v1899, %v1909
        %v1940 = vmul.f32 %v1900, %v1913
        %v1941 = vmul.f32 %v1901, %v1917
        %v1942 = vmul.f32 %v1902, %v1921
        %v1943 = vmul.f32 %v1903, %v1925
        %v1944 = vmul.f32 %v1904, %v1929
        %v1945 = vmul.f32 %v1905, %v1933
        %v1946 = vmul.f32 %v1906, %v1937
        %v1947 = vadd.f32 %v1753, %v1939
        %v1948 = vadd.f32 %v1754, %v1940
        %v1949 = vadd.f32 %v1755, %v1941
        %v1950 = vadd.f32 %v1756, %v1942
        %v1951 = vadd.f32 %v1757, %v1943
        %v1952 = vadd.f32 %v1758, %v1944
        %v1953 = vadd.f32 %v1759, %v1945
        %v1954 = vadd.f32 %v1760, %v1946
        %v1955 = vld [vmem:[#allocation2 + $0xa] sm:$0xff]
        %v1956 = vld [vmem:[#allocation2 + $0x12] sm:$0xff]
        %v1957 = vld [vmem:[#allocation2 + $0x1a] sm:$0xff]
        %v1958 = vld [vmem:[#allocation2 + $0x22] sm:$0xff]
        %v1959 = vld [vmem:[#allocation2 + $0x2a] sm:$0xff]
        %v1960 = vld [vmem:[#allocation2 + $0x32] sm:$0xff]
        %v1961 = vld [vmem:[#allocation2 + $0x3a] sm:$0xff]
        %v1962 = vld [vmem:[#allocation2 + $0x42] sm:$0xff]
        %v1963 = vlaneseq
        %v1964 = vshrl.u32 %v1963, 7
        %v1965 = vsub.s32 5, %v1964
        %v1966 = vrot.slane %v1018, %v1965
        %v1967 = vmul.f32 %v1955, %v1966
        %v1968 = vmul.f32 %v1956, %v1966
        %v1969 = vmul.f32 %v1957, %v1966
        %v1970 = vmul.f32 %v1958, %v1966
        %v1971 = vmul.f32 %v1959, %v1966
        %v1972 = vmul.f32 %v1960, %v1966
        %v1973 = vmul.f32 %v1961, %v1966
        %v1974 = vmul.f32 %v1962, %v1966
        %v1975 = vld [vmem:[#allocation2 + $0x4a] sm:$0xff]
        %v1976 = vlaneseq
        %v1977 = vshrl.u32 %v1976, 7
        %v1978 = vsub.s32 4, %v1977
        %v1979 = vrot.slane %v1019, %v1978
        %v1980 = vmul.f32 %v1956, %v1979
        %v1981 = vmul.f32 %v1957, %v1979
        %v1982 = vmul.f32 %v1958, %v1979
        %v1983 = vmul.f32 %v1959, %v1979
        %v1984 = vmul.f32 %v1960, %v1979
        %v1985 = vmul.f32 %v1961, %v1979
        %v1986 = vmul.f32 %v1962, %v1979
        %v1987 = vmul.f32 %v1975, %v1979
        %v1988 = vadd.f32 %v1967, %v1980
        %v1989 = vadd.f32 %v1968, %v1981
        %v1990 = vadd.f32 %v1969, %v1982
        %v1991 = vadd.f32 %v1970, %v1983
        %v1992 = vadd.f32 %v1971, %v1984
        %v1993 = vadd.f32 %v1972, %v1985
        %v1994 = vadd.f32 %v1973, %v1986
        %v1995 = vadd.f32 %v1974, %v1987
        %v1996 = vld [vmem:[#allocation2 + $0x52] sm:$0xff]
        %v1997 = vlaneseq
        %v1998 = vshrl.u32 %v1997, 7
        %v1999 = vsub.s32 3, %v1998
        %v2000 = vrot.slane %v1020, %v1999
        %v2001 = vmul.f32 %v1957, %v2000
        %v2002 = vmul.f32 %v1958, %v2000
        %v2003 = vmul.f32 %v1959, %v2000
        %v2004 = vmul.f32 %v1960, %v2000
        %v2005 = vmul.f32 %v1961, %v2000
        %v2006 = vmul.f32 %v1962, %v2000
        %v2007 = vmul.f32 %v1975, %v2000
        %v2008 = vmul.f32 %v1996, %v2000
        %v2009 = vadd.f32 %v1988, %v2001
        %v2010 = vadd.f32 %v1989, %v2002
        %v2011 = vadd.f32 %v1990, %v2003
        %v2012 = vadd.f32 %v1991, %v2004
        %v2013 = vadd.f32 %v1992, %v2005
        %v2014 = vadd.f32 %v1993, %v2006
        %v2015 = vadd.f32 %v1994, %v2007
        %v2016 = vadd.f32 %v1995, %v2008
        %v2017 = vld [vmem:[#allocation2 + $0x5a] sm:$0xff]
        %v2018 = vlaneseq
        %v2019 = vshrl.u32 %v2018, 7
        %v2020 = vsub.s32 2, %v2019
        %v2021 = vrot.slane %v1021, %v2020
        %v2022 = vmul.f32 %v1958, %v2021
        %v2023 = vmul.f32 %v1959, %v2021
        %v2024 = vmul.f32 %v1960, %v2021
        %v2025 = vmul.f32 %v1961, %v2021
        %v2026 = vmul.f32 %v1962, %v2021
        %v2027 = vmul.f32 %v1975, %v2021
        %v2028 = vmul.f32 %v1996, %v2021
        %v2029 = vmul.f32 %v2017, %v2021
        %v2030 = vadd.f32 %v2009, %v2022
        %v2031 = vadd.f32 %v2010, %v2023
        %v2032 = vadd.f32 %v2011, %v2024
        %v2033 = vadd.f32 %v2012, %v2025
        %v2034 = vadd.f32 %v2013, %v2026
        %v2035 = vadd.f32 %v2014, %v2027
        %v2036 = vadd.f32 %v2015, %v2028
        %v2037 = vadd.f32 %v2016, %v2029
        %v2038 = vld [vmem:[#allocation2 + $0x62] sm:$0xff]
        %v2039 = vlaneseq
        %v2040 = vshrl.u32 %v2039, 7
        %v2041 = vsub.s32 1, %v2040
        %v2042 = vrot.slane %v1022, %v2041
        %v2043 = vmul.f32 %v1959, %v2042
        %v2044 = vmul.f32 %v1960, %v2042
        %v2045 = vmul.f32 %v1961, %v2042
        %v2046 = vmul.f32 %v1962, %v2042
        %v2047 = vmul.f32 %v1975, %v2042
        %v2048 = vmul.f32 %v1996, %v2042
        %v2049 = vmul.f32 %v2017, %v2042
        %v2050 = vmul.f32 %v2038, %v2042
        %v2051 = vadd.f32 %v2030, %v2043
        %v2052 = vadd.f32 %v2031, %v2044
        %v2053 = vadd.f32 %v2032, %v2045
        %v2054 = vadd.f32 %v2033, %v2046
        %v2055 = vadd.f32 %v2034, %v2047
        %v2056 = vadd.f32 %v2035, %v2048
        %v2057 = vadd.f32 %v2036, %v2049
        %v2058 = vadd.f32 %v2037, %v2050
        %v2059 = vld [vmem:[#allocation2 + $0x6a] sm:$0xff]
        %v2060 = vlaneseq
        %v2061 = vshrl.u32 %v2060, 7
        %v2062 = vsub.s32 0, %v2061
        %v2063 = vrot.slane %v1023, %v2062
        %v2064 = vmul.f32 %v1960, %v2063
        %v2065 = vmul.f32 %v1961, %v2063
        %v2066 = vmul.f32 %v1962, %v2063
        %v2067 = vmul.f32 %v1975, %v2063
        %v2068 = vmul.f32 %v1996, %v2063
        %v2069 = vmul.f32 %v2017, %v2063
        %v2070 = vmul.f32 %v2038, %v2063
        %v2071 = vmul.f32 %v2059, %v2063
        %v2072 = vadd.f32 %v2051, %v2064
        %v2073 = vadd.f32 %v2052, %v2065
        %v2074 = vadd.f32 %v2053, %v2066
        %v2075 = vadd.f32 %v2054, %v2067
        %v2076 = vadd.f32 %v2055, %v2068
        %v2077 = vadd.f32 %v2056, %v2069
        %v2078 = vadd.f32 %v2057, %v2070
        %v2079 = vadd.f32 %v2058, %v2071
        %v2080 = vld [vmem:[#allocation2 + $0x72] sm:$0xff]
        %v2081 = vlaneseq
        %v2082 = vshrl.u32 %v2081, 7
        %v2083 = vsub.s32 7, %v2082
        %v2084 = vrot.slane %v1023, %v2083
        %v2085 = vmul.f32 %v1961, %v2084
        %v2086 = vmul.f32 %v1962, %v2084
        %v2087 = vmul.f32 %v1975, %v2084
        %v2088 = vmul.f32 %v1996, %v2084
        %v2089 = vmul.f32 %v2017, %v2084
        %v2090 = vmul.f32 %v2038, %v2084
        %v2091 = vmul.f32 %v2059, %v2084
        %v2092 = vmul.f32 %v2080, %v2084
        %v2093 = vadd.f32 %v2072, %v2085
        %v2094 = vadd.f32 %v2073, %v2086
        %v2095 = vadd.f32 %v2074, %v2087
        %v2096 = vadd.f32 %v2075, %v2088
        %v2097 = vadd.f32 %v2076, %v2089
        %v2098 = vadd.f32 %v2077, %v2090
        %v2099 = vadd.f32 %v2078, %v2091
        %v2100 = vadd.f32 %v2079, %v2092
        %2101 = vset.pattern.permute.xlu0 5
        %2102 = vperm.xlu0 %2101, %v645
        %v2103 = vpop.permute.xlu0 %2102
        %2105 = vset.pattern.permute.xlu0 5
        %2106 = vperm.xlu0 %2105, %v646
        %v2107 = vpop.permute.xlu0 %2106
        %2109 = vset.pattern.permute.xlu0 5
        %2110 = vperm.xlu0 %2109, %v647
        %v2111 = vpop.permute.xlu0 %2110
        %2113 = vset.pattern.permute.xlu0 5
        %2114 = vperm.xlu0 %2113, %v648
        %v2115 = vpop.permute.xlu0 %2114
        %2117 = vset.pattern.permute.xlu0 5
        %2118 = vperm.xlu0 %2117, %v649
        %v2119 = vpop.permute.xlu0 %2118
        %2121 = vset.pattern.permute.xlu0 5
        %2122 = vperm.xlu0 %2121, %v650
        %v2123 = vpop.permute.xlu0 %2122
        %2125 = vset.pattern.permute.xlu0 5
        %2126 = vperm.xlu0 %2125, %v651
        %v2127 = vpop.permute.xlu0 %2126
        %2129 = vset.pattern.permute.xlu0 5
        %2130 = vperm.xlu0 %2129, %v652
        %v2131 = vpop.permute.xlu0 %2130
        %v2133 = vmul.f32 %v2093, %v2103
        %v2134 = vmul.f32 %v2094, %v2107
        %v2135 = vmul.f32 %v2095, %v2111
        %v2136 = vmul.f32 %v2096, %v2115
        %v2137 = vmul.f32 %v2097, %v2119
        %v2138 = vmul.f32 %v2098, %v2123
        %v2139 = vmul.f32 %v2099, %v2127
        %v2140 = vmul.f32 %v2100, %v2131
        %v2141 = vadd.f32 %v1947, %v2133
        %v2142 = vadd.f32 %v1948, %v2134
        %v2143 = vadd.f32 %v1949, %v2135
        %v2144 = vadd.f32 %v1950, %v2136
        %v2145 = vadd.f32 %v1951, %v2137
        %v2146 = vadd.f32 %v1952, %v2138
        %v2147 = vadd.f32 %v1953, %v2139
        %v2148 = vadd.f32 %v1954, %v2140
        %v2149 = vld [vmem:[#allocation2 + $0xb] sm:$0xff]
        %v2150 = vld [vmem:[#allocation2 + $0x13] sm:$0xff]
        %v2151 = vld [vmem:[#allocation2 + $0x1b] sm:$0xff]
        %v2152 = vld [vmem:[#allocation2 + $0x23] sm:$0xff]
        %v2153 = vld [vmem:[#allocation2 + $0x2b] sm:$0xff]
        %v2154 = vld [vmem:[#allocation2 + $0x33] sm:$0xff]
        %v2155 = vld [vmem:[#allocation2 + $0x3b] sm:$0xff]
        %v2156 = vld [vmem:[#allocation2 + $0x43] sm:$0xff]
        %v2157 = vlaneseq
        %v2158 = vshrl.u32 %v2157, 7
        %v2159 = vsub.s32 6, %v2158
        %v2160 = vrot.slane %v1018, %v2159
        %v2161 = vmul.f32 %v2149, %v2160
        %v2162 = vmul.f32 %v2150, %v2160
        %v2163 = vmul.f32 %v2151, %v2160
        %v2164 = vmul.f32 %v2152, %v2160
        %v2165 = vmul.f32 %v2153, %v2160
        %v2166 = vmul.f32 %v2154, %v2160
        %v2167 = vmul.f32 %v2155, %v2160
        %v2168 = vmul.f32 %v2156, %v2160
        %v2169 = vld [vmem:[#allocation2 + $0x4b] sm:$0xff]
        %v2170 = vlaneseq
        %v2171 = vshrl.u32 %v2170, 7
        %v2172 = vsub.s32 5, %v2171
        %v2173 = vrot.slane %v1019, %v2172
        %v2174 = vmul.f32 %v2150, %v2173
        %v2175 = vmul.f32 %v2151, %v2173
        %v2176 = vmul.f32 %v2152, %v2173
        %v2177 = vmul.f32 %v2153, %v2173
        %v2178 = vmul.f32 %v2154, %v2173
        %v2179 = vmul.f32 %v2155, %v2173
        %v2180 = vmul.f32 %v2156, %v2173
        %v2181 = vmul.f32 %v2169, %v2173
        %v2182 = vadd.f32 %v2161, %v2174
        %v2183 = vadd.f32 %v2162, %v2175
        %v2184 = vadd.f32 %v2163, %v2176
        %v2185 = vadd.f32 %v2164, %v2177
        %v2186 = vadd.f32 %v2165, %v2178
        %v2187 = vadd.f32 %v2166, %v2179
        %v2188 = vadd.f32 %v2167, %v2180
        %v2189 = vadd.f32 %v2168, %v2181
        %v2190 = vld [vmem:[#allocation2 + $0x53] sm:$0xff]
        %v2191 = vlaneseq
        %v2192 = vshrl.u32 %v2191, 7
        %v2193 = vsub.s32 4, %v2192
        %v2194 = vrot.slane %v1020, %v2193
        %v2195 = vmul.f32 %v2151, %v2194
        %v2196 = vmul.f32 %v2152, %v2194
        %v2197 = vmul.f32 %v2153, %v2194
        %v2198 = vmul.f32 %v2154, %v2194
        %v2199 = vmul.f32 %v2155, %v2194
        %v2200 = vmul.f32 %v2156, %v2194
        %v2201 = vmul.f32 %v2169, %v2194
        %v2202 = vmul.f32 %v2190, %v2194
        %v2203 = vadd.f32 %v2182, %v2195
        %v2204 = vadd.f32 %v2183, %v2196
        %v2205 = vadd.f32 %v2184, %v2197
        %v2206 = vadd.f32 %v2185, %v2198
        %v2207 = vadd.f32 %v2186, %v2199
        %v2208 = vadd.f32 %v2187, %v2200
        %v2209 = vadd.f32 %v2188, %v2201
        %v2210 = vadd.f32 %v2189, %v2202
        %v2211 = vld [vmem:[#allocation2 + $0x5b] sm:$0xff]
        %v2212 = vlaneseq
        %v2213 = vshrl.u32 %v2212, 7
        %v2214 = vsub.s32 3, %v2213
        %v2215 = vrot.slane %v1021, %v2214
        %v2216 = vmul.f32 %v2152, %v2215
        %v2217 = vmul.f32 %v2153, %v2215
        %v2218 = vmul.f32 %v2154, %v2215
        %v2219 = vmul.f32 %v2155, %v2215
        %v2220 = vmul.f32 %v2156, %v2215
        %v2221 = vmul.f32 %v2169, %v2215
        %v2222 = vmul.f32 %v2190, %v2215
        %v2223 = vmul.f32 %v2211, %v2215
        %v2224 = vadd.f32 %v2203, %v2216
        %v2225 = vadd.f32 %v2204, %v2217
        %v2226 = vadd.f32 %v2205, %v2218
        %v2227 = vadd.f32 %v2206, %v2219
        %v2228 = vadd.f32 %v2207, %v2220
        %v2229 = vadd.f32 %v2208, %v2221
        %v2230 = vadd.f32 %v2209, %v2222
        %v2231 = vadd.f32 %v2210, %v2223
        %v2232 = vld [vmem:[#allocation2 + $0x63] sm:$0xff]
        %v2233 = vlaneseq
        %v2234 = vshrl.u32 %v2233, 7
        %v2235 = vsub.s32 2, %v2234
        %v2236 = vrot.slane %v1022, %v2235
        %v2237 = vmul.f32 %v2153, %v2236
        %v2238 = vmul.f32 %v2154, %v2236
        %v2239 = vmul.f32 %v2155, %v2236
        %v2240 = vmul.f32 %v2156, %v2236
        %v2241 = vmul.f32 %v2169, %v2236
        %v2242 = vmul.f32 %v2190, %v2236
        %v2243 = vmul.f32 %v2211, %v2236
        %v2244 = vmul.f32 %v2232, %v2236
        %v2245 = vadd.f32 %v2224, %v2237
        %v2246 = vadd.f32 %v2225, %v2238
        %v2247 = vadd.f32 %v2226, %v2239
        %v2248 = vadd.f32 %v2227, %v2240
        %v2249 = vadd.f32 %v2228, %v2241
        %v2250 = vadd.f32 %v2229, %v2242
        %v2251 = vadd.f32 %v2230, %v2243
        %v2252 = vadd.f32 %v2231, %v2244
        %v2253 = vld [vmem:[#allocation2 + $0x6b] sm:$0xff]
        %v2254 = vlaneseq
        %v2255 = vshrl.u32 %v2254, 7
        %v2256 = vsub.s32 1, %v2255
        %v2257 = vrot.slane %v1023, %v2256
        %v2258 = vmul.f32 %v2154, %v2257
        %v2259 = vmul.f32 %v2155, %v2257
        %v2260 = vmul.f32 %v2156, %v2257
        %v2261 = vmul.f32 %v2169, %v2257
        %v2262 = vmul.f32 %v2190, %v2257
        %v2263 = vmul.f32 %v2211, %v2257
        %v2264 = vmul.f32 %v2232, %v2257
        %v2265 = vmul.f32 %v2253, %v2257
        %v2266 = vadd.f32 %v2245, %v2258
        %v2267 = vadd.f32 %v2246, %v2259
        %v2268 = vadd.f32 %v2247, %v2260
        %v2269 = vadd.f32 %v2248, %v2261
        %v2270 = vadd.f32 %v2249, %v2262
        %v2271 = vadd.f32 %v2250, %v2263
        %v2272 = vadd.f32 %v2251, %v2264
        %v2273 = vadd.f32 %v2252, %v2265
        %v2274 = vld [vmem:[#allocation2 + $0x73] sm:$0xff]
        %v2275 = vlaneseq
        %v2276 = vshrl.u32 %v2275, 7
        %v2277 = vsub.s32 0, %v2276
        %v2278 = vrot.slane %v1024, %v2277
        %v2279 = vmul.f32 %v2155, %v2278
        %v2280 = vmul.f32 %v2156, %v2278
        %v2281 = vmul.f32 %v2169, %v2278
        %v2282 = vmul.f32 %v2190, %v2278
        %v2283 = vmul.f32 %v2211, %v2278
        %v2284 = vmul.f32 %v2232, %v2278
        %v2285 = vmul.f32 %v2253, %v2278
        %v2286 = vmul.f32 %v2274, %v2278
        %v2287 = vadd.f32 %v2266, %v2279
        %v2288 = vadd.f32 %v2267, %v2280
        %v2289 = vadd.f32 %v2268, %v2281
        %v2290 = vadd.f32 %v2269, %v2282
        %v2291 = vadd.f32 %v2270, %v2283
        %v2292 = vadd.f32 %v2271, %v2284
        %v2293 = vadd.f32 %v2272, %v2285
        %v2294 = vadd.f32 %v2273, %v2286
        %2295 = vset.pattern.permute.xlu0 6
        %2296 = vperm.xlu0 %2295, %v645
        %v2297 = vpop.permute.xlu0 %2296
        %2299 = vset.pattern.permute.xlu0 6
        %2300 = vperm.xlu0 %2299, %v646
        %v2301 = vpop.permute.xlu0 %2300
        %2303 = vset.pattern.permute.xlu0 6
        %2304 = vperm.xlu0 %2303, %v647
        %v2305 = vpop.permute.xlu0 %2304
        %2307 = vset.pattern.permute.xlu0 6
        %2308 = vperm.xlu0 %2307, %v648
        %v2309 = vpop.permute.xlu0 %2308
        %2311 = vset.pattern.permute.xlu0 6
        %2312 = vperm.xlu0 %2311, %v649
        %v2313 = vpop.permute.xlu0 %2312
        %2315 = vset.pattern.permute.xlu0 6
        %2316 = vperm.xlu0 %2315, %v650
        %v2317 = vpop.permute.xlu0 %2316
        %2319 = vset.pattern.permute.xlu0 6
        %2320 = vperm.xlu0 %2319, %v651
        %v2321 = vpop.permute.xlu0 %2320
        %2323 = vset.pattern.permute.xlu0 6
        %2324 = vperm.xlu0 %2323, %v652
        %v2325 = vpop.permute.xlu0 %2324
        %v2327 = vmul.f32 %v2287, %v2297
        %v2328 = vmul.f32 %v2288, %v2301
        %v2329 = vmul.f32 %v2289, %v2305
        %v2330 = vmul.f32 %v2290, %v2309
        %v2331 = vmul.f32 %v2291, %v2313
        %v2332 = vmul.f32 %v2292, %v2317
        %v2333 = vmul.f32 %v2293, %v2321
        %v2334 = vmul.f32 %v2294, %v2325
        %v2335 = vadd.f32 %v2141, %v2327
        %v2336 = vadd.f32 %v2142, %v2328
        %v2337 = vadd.f32 %v2143, %v2329
        %v2338 = vadd.f32 %v2144, %v2330
        %v2339 = vadd.f32 %v2145, %v2331
        %v2340 = vadd.f32 %v2146, %v2332
        %v2341 = vadd.f32 %v2147, %v2333
        %v2342 = vadd.f32 %v2148, %v2334
        %v2343 = vld [vmem:[%s8] sm:$0x7]
        %2352 = vrot.lane.b32.xlu0 %v2335, 8
        %v2353 = vpop.permute.xlu0 %2352
        %2354 = vrot.lane.b32.xlu0 %v2336, 8
        %v2355 = vpop.permute.xlu0 %2354
        %2356 = vrot.lane.b32.xlu0 %v2337, 8
        %v2357 = vpop.permute.xlu0 %2356
        %2358 = vrot.lane.b32.xlu0 %v2338, 8
        %v2359 = vpop.permute.xlu0 %2358
        %2360 = vrot.lane.b32.xlu0 %v2339, 8
        %v2361 = vpop.permute.xlu0 %2360
        %2362 = vrot.lane.b32.xlu0 %v2340, 8
        %v2363 = vpop.permute.xlu0 %2362
        %2364 = vrot.lane.b32.xlu0 %v2341, 8
        %v2365 = vpop.permute.xlu0 %2364
        %2366 = vrot.lane.b32.xlu0 %v2342, 8
        %v2367 = vpop.permute.xlu0 %2366
        %v2376 = vsel %vm1001, %v993, %v2353
        %v2377 = vsel %vm1001, %v994, %v2355
        %v2378 = vsel %vm1001, %v995, %v2357
        %v2379 = vsel %vm1001, %v996, %v2359
        %v2380 = vsel %vm1001, %v997, %v2361
        %v2381 = vsel %vm1001, %v998, %v2363
        %v2382 = vsel %vm1001, %v999, %v2365
        %v2383 = vsel %vm1001, %v1000, %v2367
        %v2384 = vld [vmem:[%s7] sm:$0xff]
        %v2385 = vld [vmem:[%s7 + $0x8] sm:$0xff]
        %v2386 = vlaneseq
        %v2387 = vshrl.u32 %v2386, 7
        %v2388 = vsub.s32 0, %v2387
        %v2389 = vrot.slane %v2343, %v2388
        %vm2390 = vcmask 130048
        %v2392 = vsel %vm2390, %v2376, 0
        %v2395 = vsel %vm2390, %v2377, 0
        %v2398 = vsel %vm2390, %v2378, 0
        %v2401 = vsel %vm2390, %v2379, 0
        %v2404 = vsel %vm2390, %v2380, 0
        %v2407 = vsel %vm2390, %v2381, 0
        %v2410 = vsel %vm2390, %v2382, 0
        %v2413 = vsel %vm2390, %v2383, 0
        %2415 = vmatprep.subr.mxu0 0.0
        %2416 = vmatpush1.msra.mxu0 %v2384
        %2417 = vmatprep.subr.mxu0 0.0
        %2418 = vmatpush1.msra.mxu0 %v2385
        %2419 = vmatprep.subr.mxu0 0.0
        %2420 = vmatpush1.msra.mxu0 0.0
        %2421 = vmatprep.subr.mxu0 0.0
        %2422 = vmatpush1.msra.mxu0 0.0
        %2423 = vmatprep.subr.mxu0 0.0
        %2424 = vmatpush1.msra.mxu0 0.0
        %2425 = vmatprep.subr.mxu0 0.0
        %2426 = vmatpush1.msra.mxu0 0.0
        %2427 = vmatprep.subr.mxu0 0.0
        %2428 = vmatpush1.msra.mxu0 0.0
        %2429 = vmatprep.subr.mxu0 0.0
        %2430 = vmatpush1.msra.mxu0 0.0
        %2431 = vmatprep.subr.mxu0 0.0
        %2432 = vmatpush1.msra.mxu0 0.0
        %2433 = vmatprep.subr.mxu0 0.0
        %2434 = vmatpush1.msra.mxu0 0.0
        %2435 = vmatprep.subr.mxu0 0.0
        %2436 = vmatpush1.msra.mxu0 0.0
        %2437 = vmatprep.subr.mxu0 0.0
        %2438 = vmatpush1.msra.mxu0 0.0
        %2439 = vmatprep.subr.mxu0 0.0
        %2440 = vmatpush1.msra.mxu0 0.0
        %2441 = vmatprep.subr.mxu0 0.0
        %2442 = vmatpush1.msra.mxu0 0.0
        %2443 = vmatprep.subr.mxu0 0.0
        %2444 = vmatpush1.msra.mxu0 0.0
        %2445 = vmatprep.subr.mxu0 0.0
        %2446 = vmatpush1.msra.mxu0 0.0
        %2447 = vmatprep.subr.mxu0 0.0
        %2448 = vmatpush1.msra.mxu0 0.0
        %2449 = vmatprep.subr.mxu0 0.0
        %2450 = vmatpush1.msra.mxu0 0.0
        %2451 = vmatprep.subr.mxu0 0.0
        %2452 = vmatpush1.msra.mxu0 0.0
        %2453 = vmatprep.subr.mxu0 0.0
        %2454 = vmatpush1.msra.mxu0 0.0
        %2455 = vmatprep.subr.mxu0 0.0
        %2456 = vmatpush1.msra.mxu0 0.0
        %2457 = vmatprep.subr.mxu0 0.0
        %2458 = vmatpush1.msra.mxu0 0.0
        %2459 = vmatprep.subr.mxu0 0.0
        %2460 = vmatpush1.msra.mxu0 0.0
        %2461 = vmatprep.subr.mxu0 0.0
        %2462 = vmatpush1.msra.mxu0 0.0
        %2463 = vmatprep.subr.mxu0 0.0
        %2464 = vmatpush1.msra.mxu0 0.0
        %2465 = vmatprep.subr.mxu0 0.0
        %2466 = vmatpush1.msra.mxu0 0.0
        %2467 = vmatprep.subr.mxu0 0.0
        %2468 = vmatpush1.msra.mxu0 0.0
        %2469 = vmatprep.subr.mxu0 0.0
        %2470 = vmatpush1.msra.mxu0 0.0
        %2471 = vmatprep.subr.mxu0 0.0
        %2472 = vmatpush1.msra.mxu0 0.0
        %2473 = vmatprep.subr.mxu0 0.0
        %2474 = vmatpush1.msra.mxu0 0.0
        %2475 = vmatprep.subr.mxu0 0.0
        %2476 = vmatpush1.msra.mxu0 0.0
        %2477 = vmatprep.subr.mxu0 0.0
        %2478 = vmatpush1.msra.mxu0 0.0
        %2479 = vmatprep.mubr.f32.mxu0 0.0
        %2480 = vmatmul.mubr.f32.gmra.mrb[0].mxu0 %v2392
        %v2481 = vpop.f32.mrb[0].mxu0
        %v2482 = vadd.f32 %v2389, %v2481
        %v2483 = vpop.f32.mrb[0].mxu0
        %2484 = vmatprep.mubr.f32.mxu0 0.0
        %2485 = vmatmul.mubr.f32.gmra.mrb[0].mxu0 %v2395
        %v2486 = vpop.f32.mrb[0].mxu0
        %v2487 = vadd.f32 %v2389, %v2486
        %v2488 = vpop.f32.mrb[0].mxu0
        %2489 = vmatprep.mubr.f32.mxu0 0.0
        %2490 = vmatmul.mubr.f32.gmra.mrb[0].mxu0 %v2398
        %v2491 = vpop.f32.mrb[0].mxu0
        %v2492 = vadd.f32 %v2389, %v2491
        %v2493 = vpop.f32.mrb[0].mxu0
        %2494 = vmatprep.mubr.f32.mxu0 0.0
        %2495 = vmatmul.mubr.f32.gmra.mrb[0].mxu0 %v2401
        %v2496 = vpop.f32.mrb[0].mxu0
        %v2497 = vadd.f32 %v2389, %v2496
        %v2498 = vpop.f32.mrb[0].mxu0
        %2499 = vmatprep.mubr.f32.mxu0 0.0
        %2500 = vmatmul.mubr.f32.gmra.mrb[0].mxu0 %v2404
        %v2501 = vpop.f32.mrb[0].mxu0
        %v2502 = vadd.f32 %v2389, %v2501
        %v2503 = vpop.f32.mrb[0].mxu0
        %2504 = vmatprep.mubr.f32.mxu0 0.0
        %2505 = vmatmul.mubr.f32.gmra.mrb[0].mxu0 %v2407
        %v2506 = vpop.f32.mrb[0].mxu0
        %v2507 = vadd.f32 %v2389, %v2506
        %v2508 = vpop.f32.mrb[0].mxu0
        %2509 = vmatprep.mubr.f32.mxu0 0.0
        %2510 = vmatmul.mubr.f32.gmra.mrb[0].mxu0 %v2410
        %v2511 = vpop.f32.mrb[0].mxu0
        %v2512 = vadd.f32 %v2389, %v2511
        %v2513 = vpop.f32.mrb[0].mxu0
        %2514 = vmatprep.mubr.f32.mxu0 0.0
        %2515 = vmatmul.mubr.f32.gmra.mrb[0].mxu0 %v2413
        %v2516 = vpop.f32.mrb[0].mxu0
        %v2517 = vadd.f32 %v2389, %v2516
        %v2518 = vpop.f32.mrb[0].mxu0
        %2519 = vdwg.mxu0
        %v2520 = vmax.f32 %v2482, 0.0
        %v2521 = vmax.f32 %v2487, 0.0
        %v2522 = vmax.f32 %v2492, 0.0
        %v2523 = vmax.f32 %v2497, 0.0
        %v2524 = vmax.f32 %v2502, 0.0
        %v2525 = vmax.f32 %v2507, 0.0
        %v2526 = vmax.f32 %v2512, 0.0
        %v2527 = vmax.f32 %v2517, 0.0
        %v2528 = vlaneseq
        %v2529 = vshrl.u32 %v2528, 7
        %v2530 = vsub.s32 1, %v2529
        %v2531 = vrot.slane %v2343, %v2530
        %v2532 = vmul.f32 %v2520, %v2531
        %v2533 = vmul.f32 %v2521, %v2531
        %v2534 = vmul.f32 %v2522, %v2531
        %v2535 = vmul.f32 %v2523, %v2531
        %v2536 = vmul.f32 %v2524, %v2531
        %v2537 = vmul.f32 %v2525, %v2531
        %v2538 = vmul.f32 %v2526, %v2531
        %v2539 = vmul.f32 %v2527, %v2531
        %v2540 = vlaneseq
        %v2541 = vshrl.u32 %v2540, 7
        %v2542 = vsub.s32 2, %v2541
        %v2543 = vrot.slane %v2343, %v2542
        %v2544 = vadd.f32 %v2532, %v2543
        %v2545 = vadd.f32 %v2533, %v2543
        %v2546 = vadd.f32 %v2534, %v2543
        %v2547 = vadd.f32 %v2535, %v2543
        %v2548 = vadd.f32 %v2536, %v2543
        %v2549 = vadd.f32 %v2537, %v2543
        %v2550 = vadd.f32 %v2538, %v2543
        %v2551 = vadd.f32 %v2539, %v2543
        %v2552 = vld [vmem:[%s10] sm:$0x7]
        %v2553 = vld [vmem:[%s9] sm:$0xff]
        %v2554 = vld [vmem:[%s9 + $0x8] sm:$0xff]
        %v2555 = vld [vmem:[%s9 + $0x10] sm:$0xff]
        %v2556 = vld [vmem:[%s9 + $0x18] sm:$0xff]
        %v2557 = vld [vmem:[%s9 + $0x20] sm:$0xff]
        %v2558 = vld [vmem:[%s9 + $0x28] sm:$0xff]
        %v2559 = vld [vmem:[%s9 + $0x30] sm:$0xff]
        %v2560 = vld [vmem:[%s9 + $0x38] sm:$0xff]
        %v2561 = vlaneseq
        %v2562 = vshrl.u32 %v2561, 7
        %v2563 = vsub.s32 0, %v2562
        %v2564 = vrot.slane %v2552, %v2563
        %vm2565 = vcmask 523264
        %v2567 = vsel %vm2565, %v2544, 0
        %v2570 = vsel %vm2565, %v2545, 0
        %v2573 = vsel %vm2565, %v2546, 0
        %v2576 = vsel %vm2565, %v2547, 0
        %v2579 = vsel %vm2565, %v2548, 0
        %v2582 = vsel %vm2565, %v2549, 0
        %v2585 = vsel %vm2565, %v2550, 0
        %v2588 = vsel %vm2565, %v2551, 0
        %2590 = vmatprep.subr.mxu0 0.0
        %2591 = vmatpush1.msra.mxu0 %v2553
        %2592 = vmatprep.subr.mxu0 0.0
        %2593 = vmatpush1.msra.mxu0 %v2554
        %2594 = vmatprep.subr.mxu0 0.0
        %2595 = vmatpush1.msra.mxu0 %v2555
        %2596 = vmatprep.subr.mxu0 0.0
        %2597 = vmatpush1.msra.mxu0 %v2556
        %2598 = vmatprep.subr.mxu0 0.0
        %2599 = vmatpush1.msra.mxu0 %v2557
        %2600 = vmatprep.subr.mxu0 0.0
        %2601 = vmatpush1.msra.mxu0 %v2558
        %2602 = vmatprep.subr.mxu0 0.0
        %2603 = vmatpush1.msra.mxu0 %v2559
        %2604 = vmatprep.subr.mxu0 0.0
        %2605 = vmatpush1.msra.mxu0 %v2560
        %2606 = vmatprep.subr.mxu0 0.0
        %2607 = vmatpush1.msra.mxu0 0.0
        %2608 = vmatprep.subr.mxu0 0.0
        %2609 = vmatpush1.msra.mxu0 0.0
        %2610 = vmatprep.subr.mxu0 0.0
        %2611 = vmatpush1.msra.mxu0 0.0
        %2612 = vmatprep.subr.mxu0 0.0
        %2613 = vmatpush1.msra.mxu0 0.0
        %2614 = vmatprep.subr.mxu0 0.0
        %2615 = vmatpush1.msra.mxu0 0.0
        %2616 = vmatprep.subr.mxu0 0.0
        %2617 = vmatpush1.msra.mxu0 0.0
        %2618 = vmatprep.subr.mxu0 0.0
        %2619 = vmatpush1.msra.mxu0 0.0
        %2620 = vmatprep.subr.mxu0 0.0
        %2621 = vmatpush1.msra.mxu0 0.0
        %2622 = vmatprep.subr.mxu0 0.0
        %2623 = vmatpush1.msra.mxu0 0.0
        %2624 = vmatprep.subr.mxu0 0.0
        %2625 = vmatpush1.msra.mxu0 0.0
        %2626 = vmatprep.subr.mxu0 0.0
        %2627 = vmatpush1.msra.mxu0 0.0
        %2628 = vmatprep.subr.mxu0 0.0
        %2629 = vmatpush1.msra.mxu0 0.0
        %2630 = vmatprep.subr.mxu0 0.0
        %2631 = vmatpush1.msra.mxu0 0.0
        %2632 = vmatprep.subr.mxu0 0.0
        %2633 = vmatpush1.msra.mxu0 0.0
        %2634 = vmatprep.subr.mxu0 0.0
        %2635 = vmatpush1.msra.mxu0 0.0
        %2636 = vmatprep.subr.mxu0 0.0
        %2637 = vmatpush1.msra.mxu0 0.0
        %2638 = vmatprep.subr.mxu0 0.0
        %2639 = vmatpush1.msra.mxu0 0.0
        %2640 = vmatprep.subr.mxu0 0.0
        %2641 = vmatpush1.msra.mxu0 0.0
        %2642 = vmatprep.subr.mxu0 0.0
        %2643 = vmatpush1.msra.mxu0 0.0
        %2644 = vmatprep.subr.mxu0 0.0
        %2645 = vmatpush1.msra.mxu0 0.0
        %2646 = vmatprep.subr.mxu0 0.0
        %2647 = vmatpush1.msra.mxu0 0.0
        %2648 = vmatprep.subr.mxu0 0.0
        %2649 = vmatpush1.msra.mxu0 0.0
        %2650 = vmatprep.subr.mxu0 0.0
        %2651 = vmatpush1.msra.mxu0 0.0
        %2652 = vmatprep.subr.mxu0 0.0
        %2653 = vmatpush1.msra.mxu0 0.0
        %2654 = vmatprep.mubr.f32.mxu0 0.0
        %2655 = vmatmul.mubr.f32.gmra.mrb[0].mxu0 %v2567
        %v2656 = vpop.f32.mrb[0].mxu0
        %v2657 = vadd.f32 %v2564, %v2656
        %v2658 = vpop.f32.mrb[0].mxu0
        %2659 = vmatprep.mubr.f32.mxu0 0.0
        %2660 = vmatmul.mubr.f32.gmra.mrb[0].mxu0 %v2570
        %v2661 = vpop.f32.mrb[0].mxu0
        %v2662 = vadd.f32 %v2564, %v2661
        %v2663 = vpop.f32.mrb[0].mxu0
        %2664 = vmatprep.mubr.f32.mxu0 0.0
        %2665 = vmatmul.mubr.f32.gmra.mrb[0].mxu0 %v2573
        %v2666 = vpop.f32.mrb[0].mxu0
        %v2667 = vadd.f32 %v2564, %v2666
        %v2668 = vpop.f32.mrb[0].mxu0
        %2669 = vmatprep.mubr.f32.mxu0 0.0
        %2670 = vmatmul.mubr.f32.gmra.mrb[0].mxu0 %v2576
        %v2671 = vpop.f32.mrb[0].mxu0
        %v2672 = vadd.f32 %v2564, %v2671
        %v2673 = vpop.f32.mrb[0].mxu0
        %2674 = vmatprep.mubr.f32.mxu0 0.0
        %2675 = vmatmul.mubr.f32.gmra.mrb[0].mxu0 %v2579
        %v2676 = vpop.f32.mrb[0].mxu0
        %v2677 = vadd.f32 %v2564, %v2676
        %v2678 = vpop.f32.mrb[0].mxu0
        %2679 = vmatprep.mubr.f32.mxu0 0.0
        %2680 = vmatmul.mubr.f32.gmra.mrb[0].mxu0 %v2582
        %v2681 = vpop.f32.mrb[0].mxu0
        %v2682 = vadd.f32 %v2564, %v2681
        %v2683 = vpop.f32.mrb[0].mxu0
        %2684 = vmatprep.mubr.f32.mxu0 0.0
        %2685 = vmatmul.mubr.f32.gmra.mrb[0].mxu0 %v2585
        %v2686 = vpop.f32.mrb[0].mxu0
        %v2687 = vadd.f32 %v2564, %v2686
        %v2688 = vpop.f32.mrb[0].mxu0
        %2689 = vmatprep.mubr.f32.mxu0 0.0
        %2690 = vmatmul.mubr.f32.gmra.mrb[0].mxu0 %v2588
        %v2691 = vpop.f32.mrb[0].mxu0
        %v2692 = vadd.f32 %v2564, %v2691
        %v2693 = vpop.f32.mrb[0].mxu0
        %2694 = vdwg.mxu0
        %v2695 = vmax.f32 %v2657, 0.0
        %v2696 = vmax.f32 %v2662, 0.0
        %v2697 = vmax.f32 %v2667, 0.0
        %v2698 = vmax.f32 %v2672, 0.0
        %v2699 = vmax.f32 %v2677, 0.0
        %v2700 = vmax.f32 %v2682, 0.0
        %v2701 = vmax.f32 %v2687, 0.0
        %v2702 = vmax.f32 %v2692, 0.0
        %v2703 = vlaneseq
        %v2704 = vshrl.u32 %v2703, 7
        %v2705 = vsub.s32 1, %v2704
        %v2706 = vrot.slane %v2552, %v2705
        %v2707 = vmul.f32 %v2695, %v2706
        %v2708 = vmul.f32 %v2696, %v2706
        %v2709 = vmul.f32 %v2697, %v2706
        %v2710 = vmul.f32 %v2698, %v2706
        %v2711 = vmul.f32 %v2699, %v2706
        %v2712 = vmul.f32 %v2700, %v2706
        %v2713 = vmul.f32 %v2701, %v2706
        %v2714 = vmul.f32 %v2702, %v2706
        %v2715 = vlaneseq
        %v2716 = vshrl.u32 %v2715, 7
        %v2717 = vsub.s32 2, %v2716
        %v2718 = vrot.slane %v2552, %v2717
        %v2719 = vadd.f32 %v2707, %v2718
        %v2720 = vadd.f32 %v2708, %v2718
        %v2721 = vadd.f32 %v2709, %v2718
        %v2722 = vadd.f32 %v2710, %v2718
        %v2723 = vadd.f32 %v2711, %v2718
        %v2724 = vadd.f32 %v2712, %v2718
        %v2725 = vadd.f32 %v2713, %v2718
        %v2726 = vadd.f32 %v2714, %v2718
        %2727 = vst.msk [vmem:[#allocation3] sm:$0xff] %vm1001, 0.0
        %2728 = vst.msk [vmem:[#allocation3 + $0x8] sm:$0xff] %vm1001, 0.0
        %2729 = vst.msk [vmem:[#allocation3 + $0x10] sm:$0xff] %vm1001, 0.0
        %2730 = vst.msk [vmem:[#allocation3 + $0x18] sm:$0xff] %vm1001, 0.0
        %2731 = vst.msk [vmem:[#allocation3 + $0x20] sm:$0xff] %vm1001, %v2719
        %2732 = vst.msk [vmem:[#allocation3 + $0x28] sm:$0xff] %vm1001, %v2720
        %2733 = vst.msk [vmem:[#allocation3 + $0x30] sm:$0xff] %vm1001, %v2721
        %2734 = vst.msk [vmem:[#allocation3 + $0x38] sm:$0xff] %vm1001, %v2722
        %2735 = vst.msk [vmem:[#allocation3 + $0x40] sm:$0xff] %vm1001, %v2723
        %2736 = vst.msk [vmem:[#allocation3 + $0x48] sm:$0xff] %vm1001, %v2724
        %2737 = vst.msk [vmem:[#allocation3 + $0x50] sm:$0xff] %vm1001, %v2725
        %2738 = vst.msk [vmem:[#allocation3 + $0x58] sm:$0xff] %vm1001, %v2726
        %2739 = vst.msk [vmem:[#allocation3 + $0x60] sm:$0xff] %vm1001, 0.0
        %2740 = vst.msk [vmem:[#allocation3 + $0x68] sm:$0xff] %vm1001, 0.0
        %2741 = vst.msk [vmem:[#allocation3 + $0x70] sm:$0xff] %vm1001, 0.0
        %2742 = vst.msk [vmem:[#allocation3 + $0x78] sm:$0xff] %vm1001, 0.0
        %v2743 = vld [vmem:[%s11] sm:$0xff]
        %v2744 = vld [vmem:[%s11 + $0x8] sm:$0xff]
        %v2745 = vld [vmem:[%s11 + $0x10] sm:$0xff]
        %v2746 = vld [vmem:[%s11 + $0x18] sm:$0xff]
        %v2747 = vld [vmem:[%s11 + $0x20] sm:$0xff]
        %v2748 = vld [vmem:[%s11 + $0x28] sm:$0xff]
        %v2749 = vld [vmem:[%s11 + $0x30] sm:$0x1]
        %v2750 = vld [vmem:[#allocation3 + $0x5] sm:$0xff]
        %v2751 = vld [vmem:[#allocation3 + $0xd] sm:$0xff]
        %v2752 = vld [vmem:[#allocation3 + $0x15] sm:$0xff]
        %v2753 = vld [vmem:[#allocation3 + $0x1d] sm:$0xff]
        %v2754 = vld [vmem:[#allocation3 + $0x25] sm:$0xff]
        %v2755 = vld [vmem:[#allocation3 + $0x2d] sm:$0xff]
        %v2756 = vld [vmem:[#allocation3 + $0x35] sm:$0xff]
        %v2757 = vld [vmem:[#allocation3 + $0x3d] sm:$0xff]
        %v2758 = vlaneseq
        %v2759 = vshrl.u32 %v2758, 7
        %v2760 = vsub.s32 0, %v2759
        %v2761 = vrot.slane %v2743, %v2760
        %v2762 = vmul.f32 %v2750, %v2761
        %v2763 = vmul.f32 %v2751, %v2761
        %v2764 = vmul.f32 %v2752, %v2761
        %v2765 = vmul.f32 %v2753, %v2761
        %v2766 = vmul.f32 %v2754, %v2761
        %v2767 = vmul.f32 %v2755, %v2761
        %v2768 = vmul.f32 %v2756, %v2761
        %v2769 = vmul.f32 %v2757, %v2761
        %v2770 = vld [vmem:[#allocation3 + $0x45] sm:$0xff]
        %v2771 = vlaneseq
        %v2772 = vshrl.u32 %v2771, 7
        %v2773 = vsub.s32 7, %v2772
        %v2774 = vrot.slane %v2743, %v2773
        %v2775 = vmul.f32 %v2751, %v2774
        %v2776 = vmul.f32 %v2752, %v2774
        %v2777 = vmul.f32 %v2753, %v2774
        %v2778 = vmul.f32 %v2754, %v2774
        %v2779 = vmul.f32 %v2755, %v2774
        %v2780 = vmul.f32 %v2756, %v2774
        %v2781 = vmul.f32 %v2757, %v2774
        %v2782 = vmul.f32 %v2770, %v2774
        %v2783 = vadd.f32 %v2762, %v2775
        %v2784 = vadd.f32 %v2763, %v2776
        %v2785 = vadd.f32 %v2764, %v2777
        %v2786 = vadd.f32 %v2765, %v2778
        %v2787 = vadd.f32 %v2766, %v2779
        %v2788 = vadd.f32 %v2767, %v2780
        %v2789 = vadd.f32 %v2768, %v2781
        %v2790 = vadd.f32 %v2769, %v2782
        %v2791 = vld [vmem:[#allocation3 + $0x4d] sm:$0xff]
        %v2792 = vlaneseq
        %v2793 = vshrl.u32 %v2792, 7
        %v2794 = vsub.s32 6, %v2793
        %v2795 = vrot.slane %v2744, %v2794
        %v2796 = vmul.f32 %v2752, %v2795
        %v2797 = vmul.f32 %v2753, %v2795
        %v2798 = vmul.f32 %v2754, %v2795
        %v2799 = vmul.f32 %v2755, %v2795
        %v2800 = vmul.f32 %v2756, %v2795
        %v2801 = vmul.f32 %v2757, %v2795
        %v2802 = vmul.f32 %v2770, %v2795
        %v2803 = vmul.f32 %v2791, %v2795
        %v2804 = vadd.f32 %v2783, %v2796
        %v2805 = vadd.f32 %v2784, %v2797
        %v2806 = vadd.f32 %v2785, %v2798
        %v2807 = vadd.f32 %v2786, %v2799
        %v2808 = vadd.f32 %v2787, %v2800
        %v2809 = vadd.f32 %v2788, %v2801
        %v2810 = vadd.f32 %v2789, %v2802
        %v2811 = vadd.f32 %v2790, %v2803
        %v2812 = vld [vmem:[#allocation3 + $0x55] sm:$0xff]
        %v2813 = vlaneseq
        %v2814 = vshrl.u32 %v2813, 7
        %v2815 = vsub.s32 5, %v2814
        %v2816 = vrot.slane %v2745, %v2815
        %v2817 = vmul.f32 %v2753, %v2816
        %v2818 = vmul.f32 %v2754, %v2816
        %v2819 = vmul.f32 %v2755, %v2816
        %v2820 = vmul.f32 %v2756, %v2816
        %v2821 = vmul.f32 %v2757, %v2816
        %v2822 = vmul.f32 %v2770, %v2816
        %v2823 = vmul.f32 %v2791, %v2816
        %v2824 = vmul.f32 %v2812, %v2816
        %v2825 = vadd.f32 %v2804, %v2817
        %v2826 = vadd.f32 %v2805, %v2818
        %v2827 = vadd.f32 %v2806, %v2819
        %v2828 = vadd.f32 %v2807, %v2820
        %v2829 = vadd.f32 %v2808, %v2821
        %v2830 = vadd.f32 %v2809, %v2822
        %v2831 = vadd.f32 %v2810, %v2823
        %v2832 = vadd.f32 %v2811, %v2824
        %v2833 = vld [vmem:[#allocation3 + $0x5d] sm:$0xff]
        %v2834 = vlaneseq
        %v2835 = vshrl.u32 %v2834, 7
        %v2836 = vsub.s32 4, %v2835
        %v2837 = vrot.slane %v2746, %v2836
        %v2838 = vmul.f32 %v2754, %v2837
        %v2839 = vmul.f32 %v2755, %v2837
        %v2840 = vmul.f32 %v2756, %v2837
        %v2841 = vmul.f32 %v2757, %v2837
        %v2842 = vmul.f32 %v2770, %v2837
        %v2843 = vmul.f32 %v2791, %v2837
        %v2844 = vmul.f32 %v2812, %v2837
        %v2845 = vmul.f32 %v2833, %v2837
        %v2846 = vadd.f32 %v2825, %v2838
        %v2847 = vadd.f32 %v2826, %v2839
        %v2848 = vadd.f32 %v2827, %v2840
        %v2849 = vadd.f32 %v2828, %v2841
        %v2850 = vadd.f32 %v2829, %v2842
        %v2851 = vadd.f32 %v2830, %v2843
        %v2852 = vadd.f32 %v2831, %v2844
        %v2853 = vadd.f32 %v2832, %v2845
        %v2854 = vld [vmem:[#allocation3 + $0x65] sm:$0xff]
        %v2855 = vlaneseq
        %v2856 = vshrl.u32 %v2855, 7
        %v2857 = vsub.s32 3, %v2856
        %v2858 = vrot.slane %v2747, %v2857
        %v2859 = vmul.f32 %v2755, %v2858
        %v2860 = vmul.f32 %v2756, %v2858
        %v2861 = vmul.f32 %v2757, %v2858
        %v2862 = vmul.f32 %v2770, %v2858
        %v2863 = vmul.f32 %v2791, %v2858
        %v2864 = vmul.f32 %v2812, %v2858
        %v2865 = vmul.f32 %v2833, %v2858
        %v2866 = vmul.f32 %v2854, %v2858
        %v2867 = vadd.f32 %v2846, %v2859
        %v2868 = vadd.f32 %v2847, %v2860
        %v2869 = vadd.f32 %v2848, %v2861
        %v2870 = vadd.f32 %v2849, %v2862
        %v2871 = vadd.f32 %v2850, %v2863
        %v2872 = vadd.f32 %v2851, %v2864
        %v2873 = vadd.f32 %v2852, %v2865
        %v2874 = vadd.f32 %v2853, %v2866
        %v2875 = vld [vmem:[#allocation3 + $0x6d] sm:$0xff]
        %v2876 = vlaneseq
        %v2877 = vshrl.u32 %v2876, 7
        %v2878 = vsub.s32 2, %v2877
        %v2879 = vrot.slane %v2748, %v2878
        %v2880 = vmul.f32 %v2756, %v2879
        %v2881 = vmul.f32 %v2757, %v2879
        %v2882 = vmul.f32 %v2770, %v2879
        %v2883 = vmul.f32 %v2791, %v2879
        %v2884 = vmul.f32 %v2812, %v2879
        %v2885 = vmul.f32 %v2833, %v2879
        %v2886 = vmul.f32 %v2854, %v2879
        %v2887 = vmul.f32 %v2875, %v2879
        %v2888 = vadd.f32 %v2867, %v2880
        %v2889 = vadd.f32 %v2868, %v2881
        %v2890 = vadd.f32 %v2869, %v2882
        %v2891 = vadd.f32 %v2870, %v2883
        %v2892 = vadd.f32 %v2871, %v2884
        %v2893 = vadd.f32 %v2872, %v2885
        %v2894 = vadd.f32 %v2873, %v2886
        %v2895 = vadd.f32 %v2874, %v2887
        %v2896 = vmul.f32 %v2888, %v1174
        %v2897 = vmul.f32 %v2889, %v1179
        %v2898 = vmul.f32 %v2890, %v1184
        %v2899 = vmul.f32 %v2891, %v1189
        %v2900 = vmul.f32 %v2892, %v1194
        %v2901 = vmul.f32 %v2893, %v1199
        %v2902 = vmul.f32 %v2894, %v1204
        %v2903 = vmul.f32 %v2895, %v1209
        %v2904 = vld [vmem:[#allocation3 + $0x6] sm:$0xff]
        %v2905 = vld [vmem:[#allocation3 + $0xe] sm:$0xff]
        %v2906 = vld [vmem:[#allocation3 + $0x16] sm:$0xff]
        %v2907 = vld [vmem:[#allocation3 + $0x1e] sm:$0xff]
        %v2908 = vld [vmem:[#allocation3 + $0x26] sm:$0xff]
        %v2909 = vld [vmem:[#allocation3 + $0x2e] sm:$0xff]
        %v2910 = vld [vmem:[#allocation3 + $0x36] sm:$0xff]
        %v2911 = vld [vmem:[#allocation3 + $0x3e] sm:$0xff]
        %v2912 = vlaneseq
        %v2913 = vshrl.u32 %v2912, 7
        %v2914 = vsub.s32 1, %v2913
        %v2915 = vrot.slane %v2743, %v2914
        %v2916 = vmul.f32 %v2904, %v2915
        %v2917 = vmul.f32 %v2905, %v2915
        %v2918 = vmul.f32 %v2906, %v2915
        %v2919 = vmul.f32 %v2907, %v2915
        %v2920 = vmul.f32 %v2908, %v2915
        %v2921 = vmul.f32 %v2909, %v2915
        %v2922 = vmul.f32 %v2910, %v2915
        %v2923 = vmul.f32 %v2911, %v2915
        %v2924 = vld [vmem:[#allocation3 + $0x46] sm:$0xff]
        %v2925 = vlaneseq
        %v2926 = vshrl.u32 %v2925, 7
        %v2927 = vsub.s32 0, %v2926
        %v2928 = vrot.slane %v2744, %v2927
        %v2929 = vmul.f32 %v2905, %v2928
        %v2930 = vmul.f32 %v2906, %v2928
        %v2931 = vmul.f32 %v2907, %v2928
        %v2932 = vmul.f32 %v2908, %v2928
        %v2933 = vmul.f32 %v2909, %v2928
        %v2934 = vmul.f32 %v2910, %v2928
        %v2935 = vmul.f32 %v2911, %v2928
        %v2936 = vmul.f32 %v2924, %v2928
        %v2937 = vadd.f32 %v2916, %v2929
        %v2938 = vadd.f32 %v2917, %v2930
        %v2939 = vadd.f32 %v2918, %v2931
        %v2940 = vadd.f32 %v2919, %v2932
        %v2941 = vadd.f32 %v2920, %v2933
        %v2942 = vadd.f32 %v2921, %v2934
        %v2943 = vadd.f32 %v2922, %v2935
        %v2944 = vadd.f32 %v2923, %v2936
        %v2945 = vld [vmem:[#allocation3 + $0x4e] sm:$0xff]
        %v2946 = vlaneseq
        %v2947 = vshrl.u32 %v2946, 7
        %v2948 = vsub.s32 7, %v2947
        %v2949 = vrot.slane %v2744, %v2948
        %v2950 = vmul.f32 %v2906, %v2949
        %v2951 = vmul.f32 %v2907, %v2949
        %v2952 = vmul.f32 %v2908, %v2949
        %v2953 = vmul.f32 %v2909, %v2949
        %v2954 = vmul.f32 %v2910, %v2949
        %v2955 = vmul.f32 %v2911, %v2949
        %v2956 = vmul.f32 %v2924, %v2949
        %v2957 = vmul.f32 %v2945, %v2949
        %v2958 = vadd.f32 %v2937, %v2950
        %v2959 = vadd.f32 %v2938, %v2951
        %v2960 = vadd.f32 %v2939, %v2952
        %v2961 = vadd.f32 %v2940, %v2953
        %v2962 = vadd.f32 %v2941, %v2954
        %v2963 = vadd.f32 %v2942, %v2955
        %v2964 = vadd.f32 %v2943, %v2956
        %v2965 = vadd.f32 %v2944, %v2957
        %v2966 = vld [vmem:[#allocation3 + $0x56] sm:$0xff]
        %v2967 = vlaneseq
        %v2968 = vshrl.u32 %v2967, 7
        %v2969 = vsub.s32 6, %v2968
        %v2970 = vrot.slane %v2745, %v2969
        %v2971 = vmul.f32 %v2907, %v2970
        %v2972 = vmul.f32 %v2908, %v2970
        %v2973 = vmul.f32 %v2909, %v2970
        %v2974 = vmul.f32 %v2910, %v2970
        %v2975 = vmul.f32 %v2911, %v2970
        %v2976 = vmul.f32 %v2924, %v2970
        %v2977 = vmul.f32 %v2945, %v2970
        %v2978 = vmul.f32 %v2966, %v2970
        %v2979 = vadd.f32 %v2958, %v2971
        %v2980 = vadd.f32 %v2959, %v2972
        %v2981 = vadd.f32 %v2960, %v2973
        %v2982 = vadd.f32 %v2961, %v2974
        %v2983 = vadd.f32 %v2962, %v2975
        %v2984 = vadd.f32 %v2963, %v2976
        %v2985 = vadd.f32 %v2964, %v2977
        %v2986 = vadd.f32 %v2965, %v2978
        %v2987 = vld [vmem:[#allocation3 + $0x5e] sm:$0xff]
        %v2988 = vlaneseq
        %v2989 = vshrl.u32 %v2988, 7
        %v2990 = vsub.s32 5, %v2989
        %v2991 = vrot.slane %v2746, %v2990
        %v2992 = vmul.f32 %v2908, %v2991
        %v2993 = vmul.f32 %v2909, %v2991
        %v2994 = vmul.f32 %v2910, %v2991
        %v2995 = vmul.f32 %v2911, %v2991
        %v2996 = vmul.f32 %v2924, %v2991
        %v2997 = vmul.f32 %v2945, %v2991
        %v2998 = vmul.f32 %v2966, %v2991
        %v2999 = vmul.f32 %v2987, %v2991
        %v3000 = vadd.f32 %v2979, %v2992
        %v3001 = vadd.f32 %v2980, %v2993
        %v3002 = vadd.f32 %v2981, %v2994
        %v3003 = vadd.f32 %v2982, %v2995
        %v3004 = vadd.f32 %v2983, %v2996
        %v3005 = vadd.f32 %v2984, %v2997
        %v3006 = vadd.f32 %v2985, %v2998
        %v3007 = vadd.f32 %v2986, %v2999
        %v3008 = vld [vmem:[#allocation3 + $0x66] sm:$0xff]
        %v3009 = vlaneseq
        %v3010 = vshrl.u32 %v3009, 7
        %v3011 = vsub.s32 4, %v3010
        %v3012 = vrot.slane %v2747, %v3011
        %v3013 = vmul.f32 %v2909, %v3012
        %v3014 = vmul.f32 %v2910, %v3012
        %v3015 = vmul.f32 %v2911, %v3012
        %v3016 = vmul.f32 %v2924, %v3012
        %v3017 = vmul.f32 %v2945, %v3012
        %v3018 = vmul.f32 %v2966, %v3012
        %v3019 = vmul.f32 %v2987, %v3012
        %v3020 = vmul.f32 %v3008, %v3012
        %v3021 = vadd.f32 %v3000, %v3013
        %v3022 = vadd.f32 %v3001, %v3014
        %v3023 = vadd.f32 %v3002, %v3015
        %v3024 = vadd.f32 %v3003, %v3016
        %v3025 = vadd.f32 %v3004, %v3017
        %v3026 = vadd.f32 %v3005, %v3018
        %v3027 = vadd.f32 %v3006, %v3019
        %v3028 = vadd.f32 %v3007, %v3020
        %v3029 = vld [vmem:[#allocation3 + $0x6e] sm:$0xff]
        %v3030 = vlaneseq
        %v3031 = vshrl.u32 %v3030, 7
        %v3032 = vsub.s32 3, %v3031
        %v3033 = vrot.slane %v2748, %v3032
        %v3034 = vmul.f32 %v2910, %v3033
        %v3035 = vmul.f32 %v2911, %v3033
        %v3036 = vmul.f32 %v2924, %v3033
        %v3037 = vmul.f32 %v2945, %v3033
        %v3038 = vmul.f32 %v2966, %v3033
        %v3039 = vmul.f32 %v2987, %v3033
        %v3040 = vmul.f32 %v3008, %v3033
        %v3041 = vmul.f32 %v3029, %v3033
        %v3042 = vadd.f32 %v3021, %v3034
        %v3043 = vadd.f32 %v3022, %v3035
        %v3044 = vadd.f32 %v3023, %v3036
        %v3045 = vadd.f32 %v3024, %v3037
        %v3046 = vadd.f32 %v3025, %v3038
        %v3047 = vadd.f32 %v3026, %v3039
        %v3048 = vadd.f32 %v3027, %v3040
        %v3049 = vadd.f32 %v3028, %v3041
        %v3050 = vmul.f32 %v3042, %v1367
        %v3051 = vmul.f32 %v3043, %v1371
        %v3052 = vmul.f32 %v3044, %v1375
        %v3053 = vmul.f32 %v3045, %v1379
        %v3054 = vmul.f32 %v3046, %v1383
        %v3055 = vmul.f32 %v3047, %v1387
        %v3056 = vmul.f32 %v3048, %v1391
        %v3057 = vmul.f32 %v3049, %v1395
        %v3058 = vadd.f32 %v2896, %v3050
        %v3059 = vadd.f32 %v2897, %v3051
        %v3060 = vadd.f32 %v2898, %v3052
        %v3061 = vadd.f32 %v2899, %v3053
        %v3062 = vadd.f32 %v2900, %v3054
        %v3063 = vadd.f32 %v2901, %v3055
        %v3064 = vadd.f32 %v2902, %v3056
        %v3065 = vadd.f32 %v2903, %v3057
        %v3066 = vld [vmem:[#allocation3 + $0x7] sm:$0xff]
        %v3067 = vld [vmem:[#allocation3 + $0xf] sm:$0xff]
        %v3068 = vld [vmem:[#allocation3 + $0x17] sm:$0xff]
        %v3069 = vld [vmem:[#allocation3 + $0x1f] sm:$0xff]
        %v3070 = vld [vmem:[#allocation3 + $0x27] sm:$0xff]
        %v3071 = vld [vmem:[#allocation3 + $0x2f] sm:$0xff]
        %v3072 = vld [vmem:[#allocation3 + $0x37] sm:$0xff]
        %v3073 = vld [vmem:[#allocation3 + $0x3f] sm:$0xff]
        %v3074 = vlaneseq
        %v3075 = vshrl.u32 %v3074, 7
        %v3076 = vsub.s32 2, %v3075
        %v3077 = vrot.slane %v2743, %v3076
        %v3078 = vmul.f32 %v3066, %v3077
        %v3079 = vmul.f32 %v3067, %v3077
        %v3080 = vmul.f32 %v3068, %v3077
        %v3081 = vmul.f32 %v3069, %v3077
        %v3082 = vmul.f32 %v3070, %v3077
        %v3083 = vmul.f32 %v3071, %v3077
        %v3084 = vmul.f32 %v3072, %v3077
        %v3085 = vmul.f32 %v3073, %v3077
        %v3086 = vld [vmem:[#allocation3 + $0x47] sm:$0xff]
        %v3087 = vlaneseq
        %v3088 = vshrl.u32 %v3087, 7
        %v3089 = vsub.s32 1, %v3088
        %v3090 = vrot.slane %v2744, %v3089
        %v3091 = vmul.f32 %v3067, %v3090
        %v3092 = vmul.f32 %v3068, %v3090
        %v3093 = vmul.f32 %v3069, %v3090
        %v3094 = vmul.f32 %v3070, %v3090
        %v3095 = vmul.f32 %v3071, %v3090
        %v3096 = vmul.f32 %v3072, %v3090
        %v3097 = vmul.f32 %v3073, %v3090
        %v3098 = vmul.f32 %v3086, %v3090
        %v3099 = vadd.f32 %v3078, %v3091
        %v3100 = vadd.f32 %v3079, %v3092
        %v3101 = vadd.f32 %v3080, %v3093
        %v3102 = vadd.f32 %v3081, %v3094
        %v3103 = vadd.f32 %v3082, %v3095
        %v3104 = vadd.f32 %v3083, %v3096
        %v3105 = vadd.f32 %v3084, %v3097
        %v3106 = vadd.f32 %v3085, %v3098
        %v3107 = vld [vmem:[#allocation3 + $0x4f] sm:$0xff]
        %v3108 = vlaneseq
        %v3109 = vshrl.u32 %v3108, 7
        %v3110 = vsub.s32 0, %v3109
        %v3111 = vrot.slane %v2745, %v3110
        %v3112 = vmul.f32 %v3068, %v3111
        %v3113 = vmul.f32 %v3069, %v3111
        %v3114 = vmul.f32 %v3070, %v3111
        %v3115 = vmul.f32 %v3071, %v3111
        %v3116 = vmul.f32 %v3072, %v3111
        %v3117 = vmul.f32 %v3073, %v3111
        %v3118 = vmul.f32 %v3086, %v3111
        %v3119 = vmul.f32 %v3107, %v3111
        %v3120 = vadd.f32 %v3099, %v3112
        %v3121 = vadd.f32 %v3100, %v3113
        %v3122 = vadd.f32 %v3101, %v3114
        %v3123 = vadd.f32 %v3102, %v3115
        %v3124 = vadd.f32 %v3103, %v3116
        %v3125 = vadd.f32 %v3104, %v3117
        %v3126 = vadd.f32 %v3105, %v3118
        %v3127 = vadd.f32 %v3106, %v3119
        %v3128 = vld [vmem:[#allocation3 + $0x57] sm:$0xff]
        %v3129 = vlaneseq
        %v3130 = vshrl.u32 %v3129, 7
        %v3131 = vsub.s32 7, %v3130
        %v3132 = vrot.slane %v2745, %v3131
        %v3133 = vmul.f32 %v3069, %v3132
        %v3134 = vmul.f32 %v3070, %v3132
        %v3135 = vmul.f32 %v3071, %v3132
        %v3136 = vmul.f32 %v3072, %v3132
        %v3137 = vmul.f32 %v3073, %v3132
        %v3138 = vmul.f32 %v3086, %v3132
        %v3139 = vmul.f32 %v3107, %v3132
        %v3140 = vmul.f32 %v3128, %v3132
        %v3141 = vadd.f32 %v3120, %v3133
        %v3142 = vadd.f32 %v3121, %v3134
        %v3143 = vadd.f32 %v3122, %v3135
        %v3144 = vadd.f32 %v3123, %v3136
        %v3145 = vadd.f32 %v3124, %v3137
        %v3146 = vadd.f32 %v3125, %v3138
        %v3147 = vadd.f32 %v3126, %v3139
        %v3148 = vadd.f32 %v3127, %v3140
        %v3149 = vld [vmem:[#allocation3 + $0x5f] sm:$0xff]
        %v3150 = vlaneseq
        %v3151 = vshrl.u32 %v3150, 7
        %v3152 = vsub.s32 6, %v3151
        %v3153 = vrot.slane %v2746, %v3152
        %v3154 = vmul.f32 %v3070, %v3153
        %v3155 = vmul.f32 %v3071, %v3153
        %v3156 = vmul.f32 %v3072, %v3153
        %v3157 = vmul.f32 %v3073, %v3153
        %v3158 = vmul.f32 %v3086, %v3153
        %v3159 = vmul.f32 %v3107, %v3153
        %v3160 = vmul.f32 %v3128, %v3153
        %v3161 = vmul.f32 %v3149, %v3153
        %v3162 = vadd.f32 %v3141, %v3154
        %v3163 = vadd.f32 %v3142, %v3155
        %v3164 = vadd.f32 %v3143, %v3156
        %v3165 = vadd.f32 %v3144, %v3157
        %v3166 = vadd.f32 %v3145, %v3158
        %v3167 = vadd.f32 %v3146, %v3159
        %v3168 = vadd.f32 %v3147, %v3160
        %v3169 = vadd.f32 %v3148, %v3161
        %v3170 = vld [vmem:[#allocation3 + $0x67] sm:$0xff]
        %v3171 = vlaneseq
        %v3172 = vshrl.u32 %v3171, 7
        %v3173 = vsub.s32 5, %v3172
        %v3174 = vrot.slane %v2747, %v3173
        %v3175 = vmul.f32 %v3071, %v3174
        %v3176 = vmul.f32 %v3072, %v3174
        %v3177 = vmul.f32 %v3073, %v3174
        %v3178 = vmul.f32 %v3086, %v3174
        %v3179 = vmul.f32 %v3107, %v3174
        %v3180 = vmul.f32 %v3128, %v3174
        %v3181 = vmul.f32 %v3149, %v3174
        %v3182 = vmul.f32 %v3170, %v3174
        %v3183 = vadd.f32 %v3162, %v3175
        %v3184 = vadd.f32 %v3163, %v3176
        %v3185 = vadd.f32 %v3164, %v3177
        %v3186 = vadd.f32 %v3165, %v3178
        %v3187 = vadd.f32 %v3166, %v3179
        %v3188 = vadd.f32 %v3167, %v3180
        %v3189 = vadd.f32 %v3168, %v3181
        %v3190 = vadd.f32 %v3169, %v3182
        %v3191 = vld [vmem:[#allocation3 + $0x6f] sm:$0xff]
        %v3192 = vlaneseq
        %v3193 = vshrl.u32 %v3192, 7
        %v3194 = vsub.s32 4, %v3193
        %v3195 = vrot.slane %v2748, %v3194
        %v3196 = vmul.f32 %v3072, %v3195
        %v3197 = vmul.f32 %v3073, %v3195
        %v3198 = vmul.f32 %v3086, %v3195
        %v3199 = vmul.f32 %v3107, %v3195
        %v3200 = vmul.f32 %v3128, %v3195
        %v3201 = vmul.f32 %v3149, %v3195
        %v3202 = vmul.f32 %v3170, %v3195
        %v3203 = vmul.f32 %v3191, %v3195
        %v3204 = vadd.f32 %v3183, %v3196
        %v3205 = vadd.f32 %v3184, %v3197
        %v3206 = vadd.f32 %v3185, %v3198
        %v3207 = vadd.f32 %v3186, %v3199
        %v3208 = vadd.f32 %v3187, %v3200
        %v3209 = vadd.f32 %v3188, %v3201
        %v3210 = vadd.f32 %v3189, %v3202
        %v3211 = vadd.f32 %v3190, %v3203
        %v3212 = vmul.f32 %v3204, %v1561
        %v3213 = vmul.f32 %v3205, %v1565
        %v3214 = vmul.f32 %v3206, %v1569
        %v3215 = vmul.f32 %v3207, %v1573
        %v3216 = vmul.f32 %v3208, %v1577
        %v3217 = vmul.f32 %v3209, %v1581
        %v3218 = vmul.f32 %v3210, %v1585
        %v3219 = vmul.f32 %v3211, %v1589
        %v3220 = vadd.f32 %v3058, %v3212
        %v3221 = vadd.f32 %v3059, %v3213
        %v3222 = vadd.f32 %v3060, %v3214
        %v3223 = vadd.f32 %v3061, %v3215
        %v3224 = vadd.f32 %v3062, %v3216
        %v3225 = vadd.f32 %v3063, %v3217
        %v3226 = vadd.f32 %v3064, %v3218
        %v3227 = vadd.f32 %v3065, %v3219
        %v3228 = vld [vmem:[#allocation3 + $0x8] sm:$0xff]
        %v3229 = vld [vmem:[#allocation3 + $0x10] sm:$0xff]
        %v3230 = vld [vmem:[#allocation3 + $0x18] sm:$0xff]
        %v3231 = vld [vmem:[#allocation3 + $0x20] sm:$0xff]
        %v3232 = vld [vmem:[#allocation3 + $0x28] sm:$0xff]
        %v3233 = vld [vmem:[#allocation3 + $0x30] sm:$0xff]
        %v3234 = vld [vmem:[#allocation3 + $0x38] sm:$0xff]
        %v3235 = vld [vmem:[#allocation3 + $0x40] sm:$0xff]
        %v3236 = vlaneseq
        %v3237 = vshrl.u32 %v3236, 7
        %v3238 = vsub.s32 3, %v3237
        %v3239 = vrot.slane %v2743, %v3238
        %v3240 = vmul.f32 %v3228, %v3239
        %v3241 = vmul.f32 %v3229, %v3239
        %v3242 = vmul.f32 %v3230, %v3239
        %v3243 = vmul.f32 %v3231, %v3239
        %v3244 = vmul.f32 %v3232, %v3239
        %v3245 = vmul.f32 %v3233, %v3239
        %v3246 = vmul.f32 %v3234, %v3239
        %v3247 = vmul.f32 %v3235, %v3239
        %v3248 = vld [vmem:[#allocation3 + $0x48] sm:$0xff]
        %v3249 = vlaneseq
        %v3250 = vshrl.u32 %v3249, 7
        %v3251 = vsub.s32 2, %v3250
        %v3252 = vrot.slane %v2744, %v3251
        %v3253 = vmul.f32 %v3229, %v3252
        %v3254 = vmul.f32 %v3230, %v3252
        %v3255 = vmul.f32 %v3231, %v3252
        %v3256 = vmul.f32 %v3232, %v3252
        %v3257 = vmul.f32 %v3233, %v3252
        %v3258 = vmul.f32 %v3234, %v3252
        %v3259 = vmul.f32 %v3235, %v3252
        %v3260 = vmul.f32 %v3248, %v3252
        %v3261 = vadd.f32 %v3240, %v3253
        %v3262 = vadd.f32 %v3241, %v3254
        %v3263 = vadd.f32 %v3242, %v3255
        %v3264 = vadd.f32 %v3243, %v3256
        %v3265 = vadd.f32 %v3244, %v3257
        %v3266 = vadd.f32 %v3245, %v3258
        %v3267 = vadd.f32 %v3246, %v3259
        %v3268 = vadd.f32 %v3247, %v3260
        %v3269 = vld [vmem:[#allocation3 + $0x50] sm:$0xff]
        %v3270 = vlaneseq
        %v3271 = vshrl.u32 %v3270, 7
        %v3272 = vsub.s32 1, %v3271
        %v3273 = vrot.slane %v2745, %v3272
        %v3274 = vmul.f32 %v3230, %v3273
        %v3275 = vmul.f32 %v3231, %v3273
        %v3276 = vmul.f32 %v3232, %v3273
        %v3277 = vmul.f32 %v3233, %v3273
        %v3278 = vmul.f32 %v3234, %v3273
        %v3279 = vmul.f32 %v3235, %v3273
        %v3280 = vmul.f32 %v3248, %v3273
        %v3281 = vmul.f32 %v3269, %v3273
        %v3282 = vadd.f32 %v3261, %v3274
        %v3283 = vadd.f32 %v3262, %v3275
        %v3284 = vadd.f32 %v3263, %v3276
        %v3285 = vadd.f32 %v3264, %v3277
        %v3286 = vadd.f32 %v3265, %v3278
        %v3287 = vadd.f32 %v3266, %v3279
        %v3288 = vadd.f32 %v3267, %v3280
        %v3289 = vadd.f32 %v3268, %v3281
        %v3290 = vld [vmem:[#allocation3 + $0x58] sm:$0xff]
        %v3291 = vlaneseq
        %v3292 = vshrl.u32 %v3291, 7
        %v3293 = vsub.s32 0, %v3292
        %v3294 = vrot.slane %v2746, %v3293
        %v3295 = vmul.f32 %v3231, %v3294
        %v3296 = vmul.f32 %v3232, %v3294
        %v3297 = vmul.f32 %v3233, %v3294
        %v3298 = vmul.f32 %v3234, %v3294
        %v3299 = vmul.f32 %v3235, %v3294
        %v3300 = vmul.f32 %v3248, %v3294
        %v3301 = vmul.f32 %v3269, %v3294
        %v3302 = vmul.f32 %v3290, %v3294
        %v3303 = vadd.f32 %v3282, %v3295
        %v3304 = vadd.f32 %v3283, %v3296
        %v3305 = vadd.f32 %v3284, %v3297
        %v3306 = vadd.f32 %v3285, %v3298
        %v3307 = vadd.f32 %v3286, %v3299
        %v3308 = vadd.f32 %v3287, %v3300
        %v3309 = vadd.f32 %v3288, %v3301
        %v3310 = vadd.f32 %v3289, %v3302
        %v3311 = vld [vmem:[#allocation3 + $0x60] sm:$0xff]
        %v3312 = vlaneseq
        %v3313 = vshrl.u32 %v3312, 7
        %v3314 = vsub.s32 7, %v3313
        %v3315 = vrot.slane %v2746, %v3314
        %v3316 = vmul.f32 %v3232, %v3315
        %v3317 = vmul.f32 %v3233, %v3315
        %v3318 = vmul.f32 %v3234, %v3315
        %v3319 = vmul.f32 %v3235, %v3315
        %v3320 = vmul.f32 %v3248, %v3315
        %v3321 = vmul.f32 %v3269, %v3315
        %v3322 = vmul.f32 %v3290, %v3315
        %v3323 = vmul.f32 %v3311, %v3315
        %v3324 = vadd.f32 %v3303, %v3316
        %v3325 = vadd.f32 %v3304, %v3317
        %v3326 = vadd.f32 %v3305, %v3318
        %v3327 = vadd.f32 %v3306, %v3319
        %v3328 = vadd.f32 %v3307, %v3320
        %v3329 = vadd.f32 %v3308, %v3321
        %v3330 = vadd.f32 %v3309, %v3322
        %v3331 = vadd.f32 %v3310, %v3323
        %v3332 = vld [vmem:[#allocation3 + $0x68] sm:$0xff]
        %v3333 = vlaneseq
        %v3334 = vshrl.u32 %v3333, 7
        %v3335 = vsub.s32 6, %v3334
        %v3336 = vrot.slane %v2747, %v3335
        %v3337 = vmul.f32 %v3233, %v3336
        %v3338 = vmul.f32 %v3234, %v3336
        %v3339 = vmul.f32 %v3235, %v3336
        %v3340 = vmul.f32 %v3248, %v3336
        %v3341 = vmul.f32 %v3269, %v3336
        %v3342 = vmul.f32 %v3290, %v3336
        %v3343 = vmul.f32 %v3311, %v3336
        %v3344 = vmul.f32 %v3332, %v3336
        %v3345 = vadd.f32 %v3324, %v3337
        %v3346 = vadd.f32 %v3325, %v3338
        %v3347 = vadd.f32 %v3326, %v3339
        %v3348 = vadd.f32 %v3327, %v3340
        %v3349 = vadd.f32 %v3328, %v3341
        %v3350 = vadd.f32 %v3329, %v3342
        %v3351 = vadd.f32 %v3330, %v3343
        %v3352 = vadd.f32 %v3331, %v3344
        %v3353 = vld [vmem:[#allocation3 + $0x70] sm:$0xff]
        %v3354 = vlaneseq
        %v3355 = vshrl.u32 %v3354, 7
        %v3356 = vsub.s32 5, %v3355
        %v3357 = vrot.slane %v2748, %v3356
        %v3358 = vmul.f32 %v3234, %v3357
        %v3359 = vmul.f32 %v3235, %v3357
        %v3360 = vmul.f32 %v3248, %v3357
        %v3361 = vmul.f32 %v3269, %v3357
        %v3362 = vmul.f32 %v3290, %v3357
        %v3363 = vmul.f32 %v3311, %v3357
        %v3364 = vmul.f32 %v3332, %v3357
        %v3365 = vmul.f32 %v3353, %v3357
        %v3366 = vadd.f32 %v3345, %v3358
        %v3367 = vadd.f32 %v3346, %v3359
        %v3368 = vadd.f32 %v3347, %v3360
        %v3369 = vadd.f32 %v3348, %v3361
        %v3370 = vadd.f32 %v3349, %v3362
        %v3371 = vadd.f32 %v3350, %v3363
        %v3372 = vadd.f32 %v3351, %v3364
        %v3373 = vadd.f32 %v3352, %v3365
        %v3374 = vadd.f32 %v3220, %v3366
        %v3375 = vadd.f32 %v3221, %v3367
        %v3376 = vadd.f32 %v3222, %v3368
        %v3377 = vadd.f32 %v3223, %v3369
        %v3378 = vadd.f32 %v3224, %v3370
        %v3379 = vadd.f32 %v3225, %v3371
        %v3380 = vadd.f32 %v3226, %v3372
        %v3381 = vadd.f32 %v3227, %v3373
        %v3382 = vld [vmem:[#allocation3 + $0x9] sm:$0xff]
        %v3383 = vld [vmem:[#allocation3 + $0x11] sm:$0xff]
        %v3384 = vld [vmem:[#allocation3 + $0x19] sm:$0xff]
        %v3385 = vld [vmem:[#allocation3 + $0x21] sm:$0xff]
        %v3386 = vld [vmem:[#allocation3 + $0x29] sm:$0xff]
        %v3387 = vld [vmem:[#allocation3 + $0x31] sm:$0xff]
        %v3388 = vld [vmem:[#allocation3 + $0x39] sm:$0xff]
        %v3389 = vld [vmem:[#allocation3 + $0x41] sm:$0xff]
        %v3390 = vlaneseq
        %v3391 = vshrl.u32 %v3390, 7
        %v3392 = vsub.s32 4, %v3391
        %v3393 = vrot.slane %v2743, %v3392
        %v3394 = vmul.f32 %v3382, %v3393
        %v3395 = vmul.f32 %v3383, %v3393
        %v3396 = vmul.f32 %v3384, %v3393
        %v3397 = vmul.f32 %v3385, %v3393
        %v3398 = vmul.f32 %v3386, %v3393
        %v3399 = vmul.f32 %v3387, %v3393
        %v3400 = vmul.f32 %v3388, %v3393
        %v3401 = vmul.f32 %v3389, %v3393
        %v3402 = vld [vmem:[#allocation3 + $0x49] sm:$0xff]
        %v3403 = vlaneseq
        %v3404 = vshrl.u32 %v3403, 7
        %v3405 = vsub.s32 3, %v3404
        %v3406 = vrot.slane %v2744, %v3405
        %v3407 = vmul.f32 %v3383, %v3406
        %v3408 = vmul.f32 %v3384, %v3406
        %v3409 = vmul.f32 %v3385, %v3406
        %v3410 = vmul.f32 %v3386, %v3406
        %v3411 = vmul.f32 %v3387, %v3406
        %v3412 = vmul.f32 %v3388, %v3406
        %v3413 = vmul.f32 %v3389, %v3406
        %v3414 = vmul.f32 %v3402, %v3406
        %v3415 = vadd.f32 %v3394, %v3407
        %v3416 = vadd.f32 %v3395, %v3408
        %v3417 = vadd.f32 %v3396, %v3409
        %v3418 = vadd.f32 %v3397, %v3410
        %v3419 = vadd.f32 %v3398, %v3411
        %v3420 = vadd.f32 %v3399, %v3412
        %v3421 = vadd.f32 %v3400, %v3413
        %v3422 = vadd.f32 %v3401, %v3414
        %v3423 = vld [vmem:[#allocation3 + $0x51] sm:$0xff]
        %v3424 = vlaneseq
        %v3425 = vshrl.u32 %v3424, 7
        %v3426 = vsub.s32 2, %v3425
        %v3427 = vrot.slane %v2745, %v3426
        %v3428 = vmul.f32 %v3384, %v3427
        %v3429 = vmul.f32 %v3385, %v3427
        %v3430 = vmul.f32 %v3386, %v3427
        %v3431 = vmul.f32 %v3387, %v3427
        %v3432 = vmul.f32 %v3388, %v3427
        %v3433 = vmul.f32 %v3389, %v3427
        %v3434 = vmul.f32 %v3402, %v3427
        %v3435 = vmul.f32 %v3423, %v3427
        %v3436 = vadd.f32 %v3415, %v3428
        %v3437 = vadd.f32 %v3416, %v3429
        %v3438 = vadd.f32 %v3417, %v3430
        %v3439 = vadd.f32 %v3418, %v3431
        %v3440 = vadd.f32 %v3419, %v3432
        %v3441 = vadd.f32 %v3420, %v3433
        %v3442 = vadd.f32 %v3421, %v3434
        %v3443 = vadd.f32 %v3422, %v3435
        %v3444 = vld [vmem:[#allocation3 + $0x59] sm:$0xff]
        %v3445 = vlaneseq
        %v3446 = vshrl.u32 %v3445, 7
        %v3447 = vsub.s32 1, %v3446
        %v3448 = vrot.slane %v2746, %v3447
        %v3449 = vmul.f32 %v3385, %v3448
        %v3450 = vmul.f32 %v3386, %v3448
        %v3451 = vmul.f32 %v3387, %v3448
        %v3452 = vmul.f32 %v3388, %v3448
        %v3453 = vmul.f32 %v3389, %v3448
        %v3454 = vmul.f32 %v3402, %v3448
        %v3455 = vmul.f32 %v3423, %v3448
        %v3456 = vmul.f32 %v3444, %v3448
        %v3457 = vadd.f32 %v3436, %v3449
        %v3458 = vadd.f32 %v3437, %v3450
        %v3459 = vadd.f32 %v3438, %v3451
        %v3460 = vadd.f32 %v3439, %v3452
        %v3461 = vadd.f32 %v3440, %v3453
        %v3462 = vadd.f32 %v3441, %v3454
        %v3463 = vadd.f32 %v3442, %v3455
        %v3464 = vadd.f32 %v3443, %v3456
        %v3465 = vld [vmem:[#allocation3 + $0x61] sm:$0xff]
        %v3466 = vlaneseq
        %v3467 = vshrl.u32 %v3466, 7
        %v3468 = vsub.s32 0, %v3467
        %v3469 = vrot.slane %v2747, %v3468
        %v3470 = vmul.f32 %v3386, %v3469
        %v3471 = vmul.f32 %v3387, %v3469
        %v3472 = vmul.f32 %v3388, %v3469
        %v3473 = vmul.f32 %v3389, %v3469
        %v3474 = vmul.f32 %v3402, %v3469
        %v3475 = vmul.f32 %v3423, %v3469
        %v3476 = vmul.f32 %v3444, %v3469
        %v3477 = vmul.f32 %v3465, %v3469
        %v3478 = vadd.f32 %v3457, %v3470
        %v3479 = vadd.f32 %v3458, %v3471
        %v3480 = vadd.f32 %v3459, %v3472
        %v3481 = vadd.f32 %v3460, %v3473
        %v3482 = vadd.f32 %v3461, %v3474
        %v3483 = vadd.f32 %v3462, %v3475
        %v3484 = vadd.f32 %v3463, %v3476
        %v3485 = vadd.f32 %v3464, %v3477
        %v3486 = vld [vmem:[#allocation3 + $0x69] sm:$0xff]
        %v3487 = vlaneseq
        %v3488 = vshrl.u32 %v3487, 7
        %v3489 = vsub.s32 7, %v3488
        %v3490 = vrot.slane %v2747, %v3489
        %v3491 = vmul.f32 %v3387, %v3490
        %v3492 = vmul.f32 %v3388, %v3490
        %v3493 = vmul.f32 %v3389, %v3490
        %v3494 = vmul.f32 %v3402, %v3490
        %v3495 = vmul.f32 %v3423, %v3490
        %v3496 = vmul.f32 %v3444, %v3490
        %v3497 = vmul.f32 %v3465, %v3490
        %v3498 = vmul.f32 %v3486, %v3490
        %v3499 = vadd.f32 %v3478, %v3491
        %v3500 = vadd.f32 %v3479, %v3492
        %v3501 = vadd.f32 %v3480, %v3493
        %v3502 = vadd.f32 %v3481, %v3494
        %v3503 = vadd.f32 %v3482, %v3495
        %v3504 = vadd.f32 %v3483, %v3496
        %v3505 = vadd.f32 %v3484, %v3497
        %v3506 = vadd.f32 %v3485, %v3498
        %v3507 = vld [vmem:[#allocation3 + $0x71] sm:$0xff]
        %v3508 = vlaneseq
        %v3509 = vshrl.u32 %v3508, 7
        %v3510 = vsub.s32 6, %v3509
        %v3511 = vrot.slane %v2748, %v3510
        %v3512 = vmul.f32 %v3388, %v3511
        %v3513 = vmul.f32 %v3389, %v3511
        %v3514 = vmul.f32 %v3402, %v3511
        %v3515 = vmul.f32 %v3423, %v3511
        %v3516 = vmul.f32 %v3444, %v3511
        %v3517 = vmul.f32 %v3465, %v3511
        %v3518 = vmul.f32 %v3486, %v3511
        %v3519 = vmul.f32 %v3507, %v3511
        %v3520 = vadd.f32 %v3499, %v3512
        %v3521 = vadd.f32 %v3500, %v3513
        %v3522 = vadd.f32 %v3501, %v3514
        %v3523 = vadd.f32 %v3502, %v3515
        %v3524 = vadd.f32 %v3503, %v3516
        %v3525 = vadd.f32 %v3504, %v3517
        %v3526 = vadd.f32 %v3505, %v3518
        %v3527 = vadd.f32 %v3506, %v3519
        %v3528 = vmul.f32 %v3520, %v1909
        %v3529 = vmul.f32 %v3521, %v1913
        %v3530 = vmul.f32 %v3522, %v1917
        %v3531 = vmul.f32 %v3523, %v1921
        %v3532 = vmul.f32 %v3524, %v1925
        %v3533 = vmul.f32 %v3525, %v1929
        %v3534 = vmul.f32 %v3526, %v1933
        %v3535 = vmul.f32 %v3527, %v1937
        %v3536 = vadd.f32 %v3374, %v3528
        %v3537 = vadd.f32 %v3375, %v3529
        %v3538 = vadd.f32 %v3376, %v3530
        %v3539 = vadd.f32 %v3377, %v3531
        %v3540 = vadd.f32 %v3378, %v3532
        %v3541 = vadd.f32 %v3379, %v3533
        %v3542 = vadd.f32 %v3380, %v3534
        %v3543 = vadd.f32 %v3381, %v3535
        %v3544 = vld [vmem:[#allocation3 + $0xa] sm:$0xff]
        %v3545 = vld [vmem:[#allocation3 + $0x12] sm:$0xff]
        %v3546 = vld [vmem:[#allocation3 + $0x1a] sm:$0xff]
        %v3547 = vld [vmem:[#allocation3 + $0x22] sm:$0xff]
        %v3548 = vld [vmem:[#allocation3 + $0x2a] sm:$0xff]
        %v3549 = vld [vmem:[#allocation3 + $0x32] sm:$0xff]
        %v3550 = vld [vmem:[#allocation3 + $0x3a] sm:$0xff]
        %v3551 = vld [vmem:[#allocation3 + $0x42] sm:$0xff]
        %v3552 = vlaneseq
        %v3553 = vshrl.u32 %v3552, 7
        %v3554 = vsub.s32 5, %v3553
        %v3555 = vrot.slane %v2743, %v3554
        %v3556 = vmul.f32 %v3544, %v3555
        %v3557 = vmul.f32 %v3545, %v3555
        %v3558 = vmul.f32 %v3546, %v3555
        %v3559 = vmul.f32 %v3547, %v3555
        %v3560 = vmul.f32 %v3548, %v3555
        %v3561 = vmul.f32 %v3549, %v3555
        %v3562 = vmul.f32 %v3550, %v3555
        %v3563 = vmul.f32 %v3551, %v3555
        %v3564 = vld [vmem:[#allocation3 + $0x4a] sm:$0xff]
        %v3565 = vlaneseq
        %v3566 = vshrl.u32 %v3565, 7
        %v3567 = vsub.s32 4, %v3566
        %v3568 = vrot.slane %v2744, %v3567
        %v3569 = vmul.f32 %v3545, %v3568
        %v3570 = vmul.f32 %v3546, %v3568
        %v3571 = vmul.f32 %v3547, %v3568
        %v3572 = vmul.f32 %v3548, %v3568
        %v3573 = vmul.f32 %v3549, %v3568
        %v3574 = vmul.f32 %v3550, %v3568
        %v3575 = vmul.f32 %v3551, %v3568
        %v3576 = vmul.f32 %v3564, %v3568
        %v3577 = vadd.f32 %v3556, %v3569
        %v3578 = vadd.f32 %v3557, %v3570
        %v3579 = vadd.f32 %v3558, %v3571
        %v3580 = vadd.f32 %v3559, %v3572
        %v3581 = vadd.f32 %v3560, %v3573
        %v3582 = vadd.f32 %v3561, %v3574
        %v3583 = vadd.f32 %v3562, %v3575
        %v3584 = vadd.f32 %v3563, %v3576
        %v3585 = vld [vmem:[#allocation3 + $0x52] sm:$0xff]
        %v3586 = vlaneseq
        %v3587 = vshrl.u32 %v3586, 7
        %v3588 = vsub.s32 3, %v3587
        %v3589 = vrot.slane %v2745, %v3588
        %v3590 = vmul.f32 %v3546, %v3589
        %v3591 = vmul.f32 %v3547, %v3589
        %v3592 = vmul.f32 %v3548, %v3589
        %v3593 = vmul.f32 %v3549, %v3589
        %v3594 = vmul.f32 %v3550, %v3589
        %v3595 = vmul.f32 %v3551, %v3589
        %v3596 = vmul.f32 %v3564, %v3589
        %v3597 = vmul.f32 %v3585, %v3589
        %v3598 = vadd.f32 %v3577, %v3590
        %v3599 = vadd.f32 %v3578, %v3591
        %v3600 = vadd.f32 %v3579, %v3592
        %v3601 = vadd.f32 %v3580, %v3593
        %v3602 = vadd.f32 %v3581, %v3594
        %v3603 = vadd.f32 %v3582, %v3595
        %v3604 = vadd.f32 %v3583, %v3596
        %v3605 = vadd.f32 %v3584, %v3597
        %v3606 = vld [vmem:[#allocation3 + $0x5a] sm:$0xff]
        %v3607 = vlaneseq
        %v3608 = vshrl.u32 %v3607, 7
        %v3609 = vsub.s32 2, %v3608
        %v3610 = vrot.slane %v2746, %v3609
        %v3611 = vmul.f32 %v3547, %v3610
        %v3612 = vmul.f32 %v3548, %v3610
        %v3613 = vmul.f32 %v3549, %v3610
        %v3614 = vmul.f32 %v3550, %v3610
        %v3615 = vmul.f32 %v3551, %v3610
        %v3616 = vmul.f32 %v3564, %v3610
        %v3617 = vmul.f32 %v3585, %v3610
        %v3618 = vmul.f32 %v3606, %v3610
        %v3619 = vadd.f32 %v3598, %v3611
        %v3620 = vadd.f32 %v3599, %v3612
        %v3621 = vadd.f32 %v3600, %v3613
        %v3622 = vadd.f32 %v3601, %v3614
        %v3623 = vadd.f32 %v3602, %v3615
        %v3624 = vadd.f32 %v3603, %v3616
        %v3625 = vadd.f32 %v3604, %v3617
        %v3626 = vadd.f32 %v3605, %v3618
        %v3627 = vld [vmem:[#allocation3 + $0x62] sm:$0xff]
        %v3628 = vlaneseq
        %v3629 = vshrl.u32 %v3628, 7
        %v3630 = vsub.s32 1, %v3629
        %v3631 = vrot.slane %v2747, %v3630
        %v3632 = vmul.f32 %v3548, %v3631
        %v3633 = vmul.f32 %v3549, %v3631
        %v3634 = vmul.f32 %v3550, %v3631
        %v3635 = vmul.f32 %v3551, %v3631
        %v3636 = vmul.f32 %v3564, %v3631
        %v3637 = vmul.f32 %v3585, %v3631
        %v3638 = vmul.f32 %v3606, %v3631
        %v3639 = vmul.f32 %v3627, %v3631
        %v3640 = vadd.f32 %v3619, %v3632
        %v3641 = vadd.f32 %v3620, %v3633
        %v3642 = vadd.f32 %v3621, %v3634
        %v3643 = vadd.f32 %v3622, %v3635
        %v3644 = vadd.f32 %v3623, %v3636
        %v3645 = vadd.f32 %v3624, %v3637
        %v3646 = vadd.f32 %v3625, %v3638
        %v3647 = vadd.f32 %v3626, %v3639
        %v3648 = vld [vmem:[#allocation3 + $0x6a] sm:$0xff]
        %v3649 = vlaneseq
        %v3650 = vshrl.u32 %v3649, 7
        %v3651 = vsub.s32 0, %v3650
        %v3652 = vrot.slane %v2748, %v3651
        %v3653 = vmul.f32 %v3549, %v3652
        %v3654 = vmul.f32 %v3550, %v3652
        %v3655 = vmul.f32 %v3551, %v3652
        %v3656 = vmul.f32 %v3564, %v3652
        %v3657 = vmul.f32 %v3585, %v3652
        %v3658 = vmul.f32 %v3606, %v3652
        %v3659 = vmul.f32 %v3627, %v3652
        %v3660 = vmul.f32 %v3648, %v3652
        %v3661 = vadd.f32 %v3640, %v3653
        %v3662 = vadd.f32 %v3641, %v3654
        %v3663 = vadd.f32 %v3642, %v3655
        %v3664 = vadd.f32 %v3643, %v3656
        %v3665 = vadd.f32 %v3644, %v3657
        %v3666 = vadd.f32 %v3645, %v3658
        %v3667 = vadd.f32 %v3646, %v3659
        %v3668 = vadd.f32 %v3647, %v3660
        %v3669 = vld [vmem:[#allocation3 + $0x72] sm:$0xff]
        %v3670 = vlaneseq
        %v3671 = vshrl.u32 %v3670, 7
        %v3672 = vsub.s32 7, %v3671
        %v3673 = vrot.slane %v2748, %v3672
        %v3674 = vmul.f32 %v3550, %v3673
        %v3675 = vmul.f32 %v3551, %v3673
        %v3676 = vmul.f32 %v3564, %v3673
        %v3677 = vmul.f32 %v3585, %v3673
        %v3678 = vmul.f32 %v3606, %v3673
        %v3679 = vmul.f32 %v3627, %v3673
        %v3680 = vmul.f32 %v3648, %v3673
        %v3681 = vmul.f32 %v3669, %v3673
        %v3682 = vadd.f32 %v3661, %v3674
        %v3683 = vadd.f32 %v3662, %v3675
        %v3684 = vadd.f32 %v3663, %v3676
        %v3685 = vadd.f32 %v3664, %v3677
        %v3686 = vadd.f32 %v3665, %v3678
        %v3687 = vadd.f32 %v3666, %v3679
        %v3688 = vadd.f32 %v3667, %v3680
        %v3689 = vadd.f32 %v3668, %v3681
        %v3690 = vmul.f32 %v3682, %v2103
        %v3691 = vmul.f32 %v3683, %v2107
        %v3692 = vmul.f32 %v3684, %v2111
        %v3693 = vmul.f32 %v3685, %v2115
        %v3694 = vmul.f32 %v3686, %v2119
        %v3695 = vmul.f32 %v3687, %v2123
        %v3696 = vmul.f32 %v3688, %v2127
        %v3697 = vmul.f32 %v3689, %v2131
        %v3698 = vadd.f32 %v3536, %v3690
        %v3699 = vadd.f32 %v3537, %v3691
        %v3700 = vadd.f32 %v3538, %v3692
        %v3701 = vadd.f32 %v3539, %v3693
        %v3702 = vadd.f32 %v3540, %v3694
        %v3703 = vadd.f32 %v3541, %v3695
        %v3704 = vadd.f32 %v3542, %v3696
        %v3705 = vadd.f32 %v3543, %v3697
        %v3706 = vld [vmem:[#allocation3 + $0xb] sm:$0xff]
        %v3707 = vld [vmem:[#allocation3 + $0x13] sm:$0xff]
        %v3708 = vld [vmem:[#allocation3 + $0x1b] sm:$0xff]
        %v3709 = vld [vmem:[#allocation3 + $0x23] sm:$0xff]
        %v3710 = vld [vmem:[#allocation3 + $0x2b] sm:$0xff]
        %v3711 = vld [vmem:[#allocation3 + $0x33] sm:$0xff]
        %v3712 = vld [vmem:[#allocation3 + $0x3b] sm:$0xff]
        %v3713 = vld [vmem:[#allocation3 + $0x43] sm:$0xff]
        %v3714 = vlaneseq
        %v3715 = vshrl.u32 %v3714, 7
        %v3716 = vsub.s32 6, %v3715
        %v3717 = vrot.slane %v2743, %v3716
        %v3718 = vmul.f32 %v3706, %v3717
        %v3719 = vmul.f32 %v3707, %v3717
        %v3720 = vmul.f32 %v3708, %v3717
        %v3721 = vmul.f32 %v3709, %v3717
        %v3722 = vmul.f32 %v3710, %v3717
        %v3723 = vmul.f32 %v3711, %v3717
        %v3724 = vmul.f32 %v3712, %v3717
        %v3725 = vmul.f32 %v3713, %v3717
        %v3726 = vld [vmem:[#allocation3 + $0x4b] sm:$0xff]
        %v3727 = vlaneseq
        %v3728 = vshrl.u32 %v3727, 7
        %v3729 = vsub.s32 5, %v3728
        %v3730 = vrot.slane %v2744, %v3729
        %v3731 = vmul.f32 %v3707, %v3730
        %v3732 = vmul.f32 %v3708, %v3730
        %v3733 = vmul.f32 %v3709, %v3730
        %v3734 = vmul.f32 %v3710, %v3730
        %v3735 = vmul.f32 %v3711, %v3730
        %v3736 = vmul.f32 %v3712, %v3730
        %v3737 = vmul.f32 %v3713, %v3730
        %v3738 = vmul.f32 %v3726, %v3730
        %v3739 = vadd.f32 %v3718, %v3731
        %v3740 = vadd.f32 %v3719, %v3732
        %v3741 = vadd.f32 %v3720, %v3733
        %v3742 = vadd.f32 %v3721, %v3734
        %v3743 = vadd.f32 %v3722, %v3735
        %v3744 = vadd.f32 %v3723, %v3736
        %v3745 = vadd.f32 %v3724, %v3737
        %v3746 = vadd.f32 %v3725, %v3738
        %v3747 = vld [vmem:[#allocation3 + $0x53] sm:$0xff]
        %v3748 = vlaneseq
        %v3749 = vshrl.u32 %v3748, 7
        %v3750 = vsub.s32 4, %v3749
        %v3751 = vrot.slane %v2745, %v3750
        %v3752 = vmul.f32 %v3708, %v3751
        %v3753 = vmul.f32 %v3709, %v3751
        %v3754 = vmul.f32 %v3710, %v3751
        %v3755 = vmul.f32 %v3711, %v3751
        %v3756 = vmul.f32 %v3712, %v3751
        %v3757 = vmul.f32 %v3713, %v3751
        %v3758 = vmul.f32 %v3726, %v3751
        %v3759 = vmul.f32 %v3747, %v3751
        %v3760 = vadd.f32 %v3739, %v3752
        %v3761 = vadd.f32 %v3740, %v3753
        %v3762 = vadd.f32 %v3741, %v3754
        %v3763 = vadd.f32 %v3742, %v3755
        %v3764 = vadd.f32 %v3743, %v3756
        %v3765 = vadd.f32 %v3744, %v3757
        %v3766 = vadd.f32 %v3745, %v3758
        %v3767 = vadd.f32 %v3746, %v3759
        %v3768 = vld [vmem:[#allocation3 + $0x5b] sm:$0xff]
        %v3769 = vlaneseq
        %v3770 = vshrl.u32 %v3769, 7
        %v3771 = vsub.s32 3, %v3770
        %v3772 = vrot.slane %v2746, %v3771
        %v3773 = vmul.f32 %v3709, %v3772
        %v3774 = vmul.f32 %v3710, %v3772
        %v3775 = vmul.f32 %v3711, %v3772
        %v3776 = vmul.f32 %v3712, %v3772
        %v3777 = vmul.f32 %v3713, %v3772
        %v3778 = vmul.f32 %v3726, %v3772
        %v3779 = vmul.f32 %v3747, %v3772
        %v3780 = vmul.f32 %v3768, %v3772
        %v3781 = vadd.f32 %v3760, %v3773
        %v3782 = vadd.f32 %v3761, %v3774
        %v3783 = vadd.f32 %v3762, %v3775
        %v3784 = vadd.f32 %v3763, %v3776
        %v3785 = vadd.f32 %v3764, %v3777
        %v3786 = vadd.f32 %v3765, %v3778
        %v3787 = vadd.f32 %v3766, %v3779
        %v3788 = vadd.f32 %v3767, %v3780
        %v3789 = vld [vmem:[#allocation3 + $0x63] sm:$0xff]
        %v3790 = vlaneseq
        %v3791 = vshrl.u32 %v3790, 7
        %v3792 = vsub.s32 2, %v3791
        %v3793 = vrot.slane %v2747, %v3792
        %v3794 = vmul.f32 %v3710, %v3793
        %v3795 = vmul.f32 %v3711, %v3793
        %v3796 = vmul.f32 %v3712, %v3793
        %v3797 = vmul.f32 %v3713, %v3793
        %v3798 = vmul.f32 %v3726, %v3793
        %v3799 = vmul.f32 %v3747, %v3793
        %v3800 = vmul.f32 %v3768, %v3793
        %v3801 = vmul.f32 %v3789, %v3793
        %v3802 = vadd.f32 %v3781, %v3794
        %v3803 = vadd.f32 %v3782, %v3795
        %v3804 = vadd.f32 %v3783, %v3796
        %v3805 = vadd.f32 %v3784, %v3797
        %v3806 = vadd.f32 %v3785, %v3798
        %v3807 = vadd.f32 %v3786, %v3799
        %v3808 = vadd.f32 %v3787, %v3800
        %v3809 = vadd.f32 %v3788, %v3801
        %v3810 = vld [vmem:[#allocation3 + $0x6b] sm:$0xff]
        %v3811 = vlaneseq
        %v3812 = vshrl.u32 %v3811, 7
        %v3813 = vsub.s32 1, %v3812
        %v3814 = vrot.slane %v2748, %v3813
        %v3815 = vmul.f32 %v3711, %v3814
        %v3816 = vmul.f32 %v3712, %v3814
        %v3817 = vmul.f32 %v3713, %v3814
        %v3818 = vmul.f32 %v3726, %v3814
        %v3819 = vmul.f32 %v3747, %v3814
        %v3820 = vmul.f32 %v3768, %v3814
        %v3821 = vmul.f32 %v3789, %v3814
        %v3822 = vmul.f32 %v3810, %v3814
        %v3823 = vadd.f32 %v3802, %v3815
        %v3824 = vadd.f32 %v3803, %v3816
        %v3825 = vadd.f32 %v3804, %v3817
        %v3826 = vadd.f32 %v3805, %v3818
        %v3827 = vadd.f32 %v3806, %v3819
        %v3828 = vadd.f32 %v3807, %v3820
        %v3829 = vadd.f32 %v3808, %v3821
        %v3830 = vadd.f32 %v3809, %v3822
        %v3831 = vld [vmem:[#allocation3 + $0x73] sm:$0xff]
        %v3832 = vlaneseq
        %v3833 = vshrl.u32 %v3832, 7
        %v3834 = vsub.s32 0, %v3833
        %v3835 = vrot.slane %v2749, %v3834
        %v3836 = vmul.f32 %v3712, %v3835
        %v3837 = vmul.f32 %v3713, %v3835
        %v3838 = vmul.f32 %v3726, %v3835
        %v3839 = vmul.f32 %v3747, %v3835
        %v3840 = vmul.f32 %v3768, %v3835
        %v3841 = vmul.f32 %v3789, %v3835
        %v3842 = vmul.f32 %v3810, %v3835
        %v3843 = vmul.f32 %v3831, %v3835
        %v3844 = vadd.f32 %v3823, %v3836
        %v3845 = vadd.f32 %v3824, %v3837
        %v3846 = vadd.f32 %v3825, %v3838
        %v3847 = vadd.f32 %v3826, %v3839
        %v3848 = vadd.f32 %v3827, %v3840
        %v3849 = vadd.f32 %v3828, %v3841
        %v3850 = vadd.f32 %v3829, %v3842
        %v3851 = vadd.f32 %v3830, %v3843
        %v3852 = vmul.f32 %v3844, %v2297
        %v3853 = vmul.f32 %v3845, %v2301
        %v3854 = vmul.f32 %v3846, %v2305
        %v3855 = vmul.f32 %v3847, %v2309
        %v3856 = vmul.f32 %v3848, %v2313
        %v3857 = vmul.f32 %v3849, %v2317
        %v3858 = vmul.f32 %v3850, %v2321
        %v3859 = vmul.f32 %v3851, %v2325
        %v3860 = vadd.f32 %v3698, %v3852
        %v3861 = vadd.f32 %v3699, %v3853
        %v3862 = vadd.f32 %v3700, %v3854
        %v3863 = vadd.f32 %v3701, %v3855
        %v3864 = vadd.f32 %v3702, %v3856
        %v3865 = vadd.f32 %v3703, %v3857
        %v3866 = vadd.f32 %v3704, %v3858
        %v3867 = vadd.f32 %v3705, %v3859
        %v3868 = vld [vmem:[%s13] sm:$0x7]
        %3877 = vrot.lane.b32.xlu0 %v3860, 8
        %v3878 = vpop.permute.xlu0 %3877
        %3879 = vrot.lane.b32.xlu0 %v3861, 8
        %v3880 = vpop.permute.xlu0 %3879
        %3881 = vrot.lane.b32.xlu0 %v3862, 8
        %v3882 = vpop.permute.xlu0 %3881
        %3883 = vrot.lane.b32.xlu0 %v3863, 8
        %v3884 = vpop.permute.xlu0 %3883
        %3885 = vrot.lane.b32.xlu0 %v3864, 8
        %v3886 = vpop.permute.xlu0 %3885
        %3887 = vrot.lane.b32.xlu0 %v3865, 8
        %v3888 = vpop.permute.xlu0 %3887
        %3889 = vrot.lane.b32.xlu0 %v3866, 8
        %v3890 = vpop.permute.xlu0 %3889
        %3891 = vrot.lane.b32.xlu0 %v3867, 8
        %v3892 = vpop.permute.xlu0 %3891
        %v3901 = vsel %vm1001, %v2719, %v3878
        %v3902 = vsel %vm1001, %v2720, %v3880
        %v3903 = vsel %vm1001, %v2721, %v3882
        %v3904 = vsel %vm1001, %v2722, %v3884
        %v3905 = vsel %vm1001, %v2723, %v3886
        %v3906 = vsel %vm1001, %v2724, %v3888
        %v3907 = vsel %vm1001, %v2725, %v3890
        %v3908 = vsel %vm1001, %v2726, %v3892
        %v3909 = vld [vmem:[%s12] sm:$0xff]
        %v3910 = vld [vmem:[%s12 + $0x8] sm:$0xff]
        %v3911 = vlaneseq
        %v3912 = vshrl.u32 %v3911, 7
        %v3913 = vsub.s32 0, %v3912
        %v3914 = vrot.slane %v3868, %v3913
        %v3916 = vsel %vm2390, %v3901, 0
        %v3919 = vsel %vm2390, %v3902, 0
        %v3922 = vsel %vm2390, %v3903, 0
        %v3925 = vsel %vm2390, %v3904, 0
        %v3928 = vsel %vm2390, %v3905, 0
        %v3931 = vsel %vm2390, %v3906, 0
        %v3934 = vsel %vm2390, %v3907, 0
        %v3937 = vsel %vm2390, %v3908, 0
        %3939 = vmatprep.subr.mxu0 0.0
        %3940 = vmatpush1.msra.mxu0 %v3909
        %3941 = vmatprep.subr.mxu0 0.0
        %3942 = vmatpush1.msra.mxu0 %v3910
        %3943 = vmatprep.subr.mxu0 0.0
        %3944 = vmatpush1.msra.mxu0 0.0
        %3945 = vmatprep.subr.mxu0 0.0
        %3946 = vmatpush1.msra.mxu0 0.0
        %3947 = vmatprep.subr.mxu0 0.0
        %3948 = vmatpush1.msra.mxu0 0.0
        %3949 = vmatprep.subr.mxu0 0.0
        %3950 = vmatpush1.msra.mxu0 0.0
        %3951 = vmatprep.subr.mxu0 0.0
        %3952 = vmatpush1.msra.mxu0 0.0
        %3953 = vmatprep.subr.mxu0 0.0
        %3954 = vmatpush1.msra.mxu0 0.0
        %3955 = vmatprep.subr.mxu0 0.0
        %3956 = vmatpush1.msra.mxu0 0.0
        %3957 = vmatprep.subr.mxu0 0.0
        %3958 = vmatpush1.msra.mxu0 0.0
        %3959 = vmatprep.subr.mxu0 0.0
        %3960 = vmatpush1.msra.mxu0 0.0
        %3961 = vmatprep.subr.mxu0 0.0
        %3962 = vmatpush1.msra.mxu0 0.0
        %3963 = vmatprep.subr.mxu0 0.0
        %3964 = vmatpush1.msra.mxu0 0.0
        %3965 = vmatprep.subr.mxu0 0.0
        %3966 = vmatpush1.msra.mxu0 0.0
        %3967 = vmatprep.subr.mxu0 0.0
        %3968 = vmatpush1.msra.mxu0 0.0
        %3969 = vmatprep.subr.mxu0 0.0
        %3970 = vmatpush1.msra.mxu0 0.0
        %3971 = vmatprep.subr.mxu0 0.0
        %3972 = vmatpush1.msra.mxu0 0.0
        %3973 = vmatprep.subr.mxu0 0.0
        %3974 = vmatpush1.msra.mxu0 0.0
        %3975 = vmatprep.subr.mxu0 0.0
        %3976 = vmatpush1.msra.mxu0 0.0
        %3977 = vmatprep.subr.mxu0 0.0
        %3978 = vmatpush1.msra.mxu0 0.0
        %3979 = vmatprep.subr.mxu0 0.0
        %3980 = vmatpush1.msra.mxu0 0.0
        %3981 = vmatprep.subr.mxu0 0.0
        %3982 = vmatpush1.msra.mxu0 0.0
        %3983 = vmatprep.subr.mxu0 0.0
        %3984 = vmatpush1.msra.mxu0 0.0
        %3985 = vmatprep.subr.mxu0 0.0
        %3986 = vmatpush1.msra.mxu0 0.0
        %3987 = vmatprep.subr.mxu0 0.0
        %3988 = vmatpush1.msra.mxu0 0.0
        %3989 = vmatprep.subr.mxu0 0.0
        %3990 = vmatpush1.msra.mxu0 0.0
        %3991 = vmatprep.subr.mxu0 0.0
        %3992 = vmatpush1.msra.mxu0 0.0
        %3993 = vmatprep.subr.mxu0 0.0
        %3994 = vmatpush1.msra.mxu0 0.0
        %3995 = vmatprep.subr.mxu0 0.0
        %3996 = vmatpush1.msra.mxu0 0.0
        %3997 = vmatprep.subr.mxu0 0.0
        %3998 = vmatpush1.msra.mxu0 0.0
        %3999 = vmatprep.subr.mxu0 0.0
        %4000 = vmatpush1.msra.mxu0 0.0
        %4001 = vmatprep.subr.mxu0 0.0
        %4002 = vmatpush1.msra.mxu0 0.0
        %4003 = vmatprep.mubr.f32.mxu0 0.0
        %4004 = vmatmul.mubr.f32.gmra.mrb[0].mxu0 %v3916
        %v4005 = vpop.f32.mrb[0].mxu0
        %v4006 = vadd.f32 %v3914, %v4005
        %v4007 = vpop.f32.mrb[0].mxu0
        %4008 = vmatprep.mubr.f32.mxu0 0.0
        %4009 = vmatmul.mubr.f32.gmra.mrb[0].mxu0 %v3919
        %v4010 = vpop.f32.mrb[0].mxu0
        %v4011 = vadd.f32 %v3914, %v4010
        %v4012 = vpop.f32.mrb[0].mxu0
        %4013 = vmatprep.mubr.f32.mxu0 0.0
        %4014 = vmatmul.mubr.f32.gmra.mrb[0].mxu0 %v3922
        %v4015 = vpop.f32.mrb[0].mxu0
        %v4016 = vadd.f32 %v3914, %v4015
        %v4017 = vpop.f32.mrb[0].mxu0
        %4018 = vmatprep.mubr.f32.mxu0 0.0
        %4019 = vmatmul.mubr.f32.gmra.mrb[0].mxu0 %v3925
        %v4020 = vpop.f32.mrb[0].mxu0
        %v4021 = vadd.f32 %v3914, %v4020
        %v4022 = vpop.f32.mrb[0].mxu0
        %4023 = vmatprep.mubr.f32.mxu0 0.0
        %4024 = vmatmul.mubr.f32.gmra.mrb[0].mxu0 %v3928
        %v4025 = vpop.f32.mrb[0].mxu0
        %v4026 = vadd.f32 %v3914, %v4025
        %v4027 = vpop.f32.mrb[0].mxu0
        %4028 = vmatprep.mubr.f32.mxu0 0.0
        %4029 = vmatmul.mubr.f32.gmra.mrb[0].mxu0 %v3931
        %v4030 = vpop.f32.mrb[0].mxu0
        %v4031 = vadd.f32 %v3914, %v4030
        %v4032 = vpop.f32.mrb[0].mxu0
        %4033 = vmatprep.mubr.f32.mxu0 0.0
        %4034 = vmatmul.mubr.f32.gmra.mrb[0].mxu0 %v3934
        %v4035 = vpop.f32.mrb[0].mxu0
        %v4036 = vadd.f32 %v3914, %v4035
        %v4037 = vpop.f32.mrb[0].mxu0
        %4038 = vmatprep.mubr.f32.mxu0 0.0
        %4039 = vmatmul.mubr.f32.gmra.mrb[0].mxu0 %v3937
        %v4040 = vpop.f32.mrb[0].mxu0
        %v4041 = vadd.f32 %v3914, %v4040
        %v4042 = vpop.f32.mrb[0].mxu0
        %4043 = vdwg.mxu0
        %v4044 = vmax.f32 %v4006, 0.0
        %v4045 = vmax.f32 %v4011, 0.0
        %v4046 = vmax.f32 %v4016, 0.0
        %v4047 = vmax.f32 %v4021, 0.0
        %v4048 = vmax.f32 %v4026, 0.0
        %v4049 = vmax.f32 %v4031, 0.0
        %v4050 = vmax.f32 %v4036, 0.0
        %v4051 = vmax.f32 %v4041, 0.0
        %v4052 = vlaneseq
        %v4053 = vshrl.u32 %v4052, 7
        %v4054 = vsub.s32 1, %v4053
        %v4055 = vrot.slane %v3868, %v4054
        %v4056 = vmul.f32 %v4044, %v4055
        %v4057 = vmul.f32 %v4045, %v4055
        %v4058 = vmul.f32 %v4046, %v4055
        %v4059 = vmul.f32 %v4047, %v4055
        %v4060 = vmul.f32 %v4048, %v4055
        %v4061 = vmul.f32 %v4049, %v4055
        %v4062 = vmul.f32 %v4050, %v4055
        %v4063 = vmul.f32 %v4051, %v4055
        %v4064 = vlaneseq
        %v4065 = vshrl.u32 %v4064, 7
        %v4066 = vsub.s32 2, %v4065
        %v4067 = vrot.slane %v3868, %v4066
        %v4068 = vadd.f32 %v4056, %v4067
        %v4069 = vadd.f32 %v4057, %v4067
        %v4070 = vadd.f32 %v4058, %v4067
        %v4071 = vadd.f32 %v4059, %v4067
        %v4072 = vadd.f32 %v4060, %v4067
        %v4073 = vadd.f32 %v4061, %v4067
        %v4074 = vadd.f32 %v4062, %v4067
        %v4075 = vadd.f32 %v4063, %v4067
        %v4076 = vadd.f32 %v4068, %v2544
        %v4077 = vadd.f32 %v4069, %v2545
        %v4078 = vadd.f32 %v4070, %v2546
        %v4079 = vadd.f32 %v4071, %v2547
        %v4080 = vadd.f32 %v4072, %v2548
        %v4081 = vadd.f32 %v4073, %v2549
        %v4082 = vadd.f32 %v4074, %v2550
        %v4083 = vadd.f32 %v4075, %v2551
        %v4084 = vld [vmem:[%s15] sm:$0x7]
        %v4085 = vld [vmem:[%s14] sm:$0xff]
        %v4086 = vld [vmem:[%s14 + $0x8] sm:$0xff]
        %v4087 = vld [vmem:[%s14 + $0x10] sm:$0xff]
        %v4088 = vld [vmem:[%s14 + $0x18] sm:$0xff]
        %v4089 = vld [vmem:[%s14 + $0x20] sm:$0xff]
        %v4090 = vld [vmem:[%s14 + $0x28] sm:$0xff]
        %v4091 = vld [vmem:[%s14 + $0x30] sm:$0xff]
        %v4092 = vld [vmem:[%s14 + $0x38] sm:$0xff]
        %v4093 = vlaneseq
        %v4094 = vshrl.u32 %v4093, 7
        %v4095 = vsub.s32 0, %v4094
        %v4096 = vrot.slane %v4084, %v4095
        %v4098 = vsel %vm2565, %v4076, 0
        %v4101 = vsel %vm2565, %v4077, 0
        %v4104 = vsel %vm2565, %v4078, 0
        %v4107 = vsel %vm2565, %v4079, 0
        %v4110 = vsel %vm2565, %v4080, 0
        %v4113 = vsel %vm2565, %v4081, 0
        %v4116 = vsel %vm2565, %v4082, 0
        %v4119 = vsel %vm2565, %v4083, 0
        %4121 = vmatprep.subr.mxu0 0.0
        %4122 = vmatpush1.msra.mxu0 %v4085
        %4123 = vmatprep.subr.mxu0 0.0
        %4124 = vmatpush1.msra.mxu0 %v4086
        %4125 = vmatprep.subr.mxu0 0.0
        %4126 = vmatpush1.msra.mxu0 %v4087
        %4127 = vmatprep.subr.mxu0 0.0
        %4128 = vmatpush1.msra.mxu0 %v4088
        %4129 = vmatprep.subr.mxu0 0.0
        %4130 = vmatpush1.msra.mxu0 %v4089
        %4131 = vmatprep.subr.mxu0 0.0
        %4132 = vmatpush1.msra.mxu0 %v4090
        %4133 = vmatprep.subr.mxu0 0.0
        %4134 = vmatpush1.msra.mxu0 %v4091
        %4135 = vmatprep.subr.mxu0 0.0
        %4136 = vmatpush1.msra.mxu0 %v4092
        %4137 = vmatprep.subr.mxu0 0.0
        %4138 = vmatpush1.msra.mxu0 0.0
        %4139 = vmatprep.subr.mxu0 0.0
        %4140 = vmatpush1.msra.mxu0 0.0
        %4141 = vmatprep.subr.mxu0 0.0
        %4142 = vmatpush1.msra.mxu0 0.0
        %4143 = vmatprep.subr.mxu0 0.0
        %4144 = vmatpush1.msra.mxu0 0.0
        %4145 = vmatprep.subr.mxu0 0.0
        %4146 = vmatpush1.msra.mxu0 0.0
        %4147 = vmatprep.subr.mxu0 0.0
        %4148 = vmatpush1.msra.mxu0 0.0
        %4149 = vmatprep.subr.mxu0 0.0
        %4150 = vmatpush1.msra.mxu0 0.0
        %4151 = vmatprep.subr.mxu0 0.0
        %4152 = vmatpush1.msra.mxu0 0.0
        %4153 = vmatprep.subr.mxu0 0.0
        %4154 = vmatpush1.msra.mxu0 0.0
        %4155 = vmatprep.subr.mxu0 0.0
        %4156 = vmatpush1.msra.mxu0 0.0
        %4157 = vmatprep.subr.mxu0 0.0
        %4158 = vmatpush1.msra.mxu0 0.0
        %4159 = vmatprep.subr.mxu0 0.0
        %4160 = vmatpush1.msra.mxu0 0.0
        %4161 = vmatprep.subr.mxu0 0.0
        %4162 = vmatpush1.msra.mxu0 0.0
        %4163 = vmatprep.subr.mxu0 0.0
        %4164 = vmatpush1.msra.mxu0 0.0
        %4165 = vmatprep.subr.mxu0 0.0
        %4166 = vmatpush1.msra.mxu0 0.0
        %4167 = vmatprep.subr.mxu0 0.0
        %4168 = vmatpush1.msra.mxu0 0.0
        %4169 = vmatprep.subr.mxu0 0.0
        %4170 = vmatpush1.msra.mxu0 0.0
        %4171 = vmatprep.subr.mxu0 0.0
        %4172 = vmatpush1.msra.mxu0 0.0
        %4173 = vmatprep.subr.mxu0 0.0
        %4174 = vmatpush1.msra.mxu0 0.0
        %4175 = vmatprep.subr.mxu0 0.0
        %4176 = vmatpush1.msra.mxu0 0.0
        %4177 = vmatprep.subr.mxu0 0.0
        %4178 = vmatpush1.msra.mxu0 0.0
        %4179 = vmatprep.subr.mxu0 0.0
        %4180 = vmatpush1.msra.mxu0 0.0
        %4181 = vmatprep.subr.mxu0 0.0
        %4182 = vmatpush1.msra.mxu0 0.0
        %4183 = vmatprep.subr.mxu0 0.0
        %4184 = vmatpush1.msra.mxu0 0.0
        %4185 = vmatprep.mubr.f32.mxu0 0.0
        %4186 = vmatmul.mubr.f32.gmra.mrb[0].mxu0 %v4098
        %v4187 = vpop.f32.mrb[0].mxu0
        %v4188 = vadd.f32 %v4096, %v4187
        %v4189 = vpop.f32.mrb[0].mxu0
        %4190 = vmatprep.mubr.f32.mxu0 0.0
        %4191 = vmatmul.mubr.f32.gmra.mrb[0].mxu0 %v4101
        %v4192 = vpop.f32.mrb[0].mxu0
        %v4193 = vadd.f32 %v4096, %v4192
        %v4194 = vpop.f32.mrb[0].mxu0
        %4195 = vmatprep.mubr.f32.mxu0 0.0
        %4196 = vmatmul.mubr.f32.gmra.mrb[0].mxu0 %v4104
        %v4197 = vpop.f32.mrb[0].mxu0
        %v4198 = vadd.f32 %v4096, %v4197
        %v4199 = vpop.f32.mrb[0].mxu0
        %4200 = vmatprep.mubr.f32.mxu0 0.0
        %4201 = vmatmul.mubr.f32.gmra.mrb[0].mxu0 %v4107
        %v4202 = vpop.f32.mrb[0].mxu0
        %v4203 = vadd.f32 %v4096, %v4202
        %v4204 = vpop.f32.mrb[0].mxu0
        %4205 = vmatprep.mubr.f32.mxu0 0.0
        %4206 = vmatmul.mubr.f32.gmra.mrb[0].mxu0 %v4110
        %v4207 = vpop.f32.mrb[0].mxu0
        %v4208 = vadd.f32 %v4096, %v4207
        %v4209 = vpop.f32.mrb[0].mxu0
        %4210 = vmatprep.mubr.f32.mxu0 0.0
        %4211 = vmatmul.mubr.f32.gmra.mrb[0].mxu0 %v4113
        %v4212 = vpop.f32.mrb[0].mxu0
        %v4213 = vadd.f32 %v4096, %v4212
        %v4214 = vpop.f32.mrb[0].mxu0
        %4215 = vmatprep.mubr.f32.mxu0 0.0
        %4216 = vmatmul.mubr.f32.gmra.mrb[0].mxu0 %v4116
        %v4217 = vpop.f32.mrb[0].mxu0
        %v4218 = vadd.f32 %v4096, %v4217
        %v4219 = vpop.f32.mrb[0].mxu0
        %4220 = vmatprep.mubr.f32.mxu0 0.0
        %4221 = vmatmul.mubr.f32.gmra.mrb[0].mxu0 %v4119
        %v4222 = vpop.f32.mrb[0].mxu0
        %v4223 = vadd.f32 %v4096, %v4222
        %v4224 = vpop.f32.mrb[0].mxu0
        %4225 = vdwg.mxu0
        %v4226 = vmax.f32 %v4188, 0.0
        %v4227 = vmax.f32 %v4193, 0.0
        %v4228 = vmax.f32 %v4198, 0.0
        %v4229 = vmax.f32 %v4203, 0.0
        %v4230 = vmax.f32 %v4208, 0.0
        %v4231 = vmax.f32 %v4213, 0.0
        %v4232 = vmax.f32 %v4218, 0.0
        %v4233 = vmax.f32 %v4223, 0.0
        %v4234 = vlaneseq
        %v4235 = vshrl.u32 %v4234, 7
        %v4236 = vsub.s32 1, %v4235
        %v4237 = vrot.slane %v4084, %v4236
        %v4238 = vmul.f32 %v4226, %v4237
        %v4239 = vmul.f32 %v4227, %v4237
        %v4240 = vmul.f32 %v4228, %v4237
        %v4241 = vmul.f32 %v4229, %v4237
        %v4242 = vmul.f32 %v4230, %v4237
        %v4243 = vmul.f32 %v4231, %v4237
        %v4244 = vmul.f32 %v4232, %v4237
        %v4245 = vmul.f32 %v4233, %v4237
        %v4246 = vlaneseq
        %v4247 = vshrl.u32 %v4246, 7
        %v4248 = vsub.s32 2, %v4247
        %v4249 = vrot.slane %v4084, %v4248
        %v4250 = vadd.f32 %v4238, %v4249
        %v4251 = vadd.f32 %v4239, %v4249
        %v4252 = vadd.f32 %v4240, %v4249
        %v4253 = vadd.f32 %v4241, %v4249
        %v4254 = vadd.f32 %v4242, %v4249
        %v4255 = vadd.f32 %v4243, %v4249
        %v4256 = vadd.f32 %v4244, %v4249
        %v4257 = vadd.f32 %v4245, %v4249
        %4258 = vst.msk [vmem:[#allocation4] sm:$0xff] %vm2390, 0.0
        %4259 = vst.msk [vmem:[#allocation4 + $0x8] sm:$0xff] %vm2390, 0.0
        %4260 = vst.msk [vmem:[#allocation4 + $0x10] sm:$0xff] %vm2390, 0.0
        %4261 = vst.msk [vmem:[#allocation4 + $0x18] sm:$0xff] %vm2390, 0.0
        %4262 = vst.msk [vmem:[#allocation4 + $0x20] sm:$0xff] %vm2390, %v4250
        %4263 = vst.msk [vmem:[#allocation4 + $0x28] sm:$0xff] %vm2390, %v4251
        %4264 = vst.msk [vmem:[#allocation4 + $0x30] sm:$0xff] %vm2390, %v4252
        %4265 = vst.msk [vmem:[#allocation4 + $0x38] sm:$0xff] %vm2390, %v4253
        %4266 = vst.msk [vmem:[#allocation4 + $0x40] sm:$0xff] %vm2390, %v4254
        %4267 = vst.msk [vmem:[#allocation4 + $0x48] sm:$0xff] %vm2390, %v4255
        %4268 = vst.msk [vmem:[#allocation4 + $0x50] sm:$0xff] %vm2390, %v4256
        %4269 = vst.msk [vmem:[#allocation4 + $0x58] sm:$0xff] %vm2390, %v4257
        %4270 = vst.msk [vmem:[#allocation4 + $0x60] sm:$0xff] %vm2390, 0.0
        %4271 = vst.msk [vmem:[#allocation4 + $0x68] sm:$0xff] %vm2390, 0.0
        %4272 = vst.msk [vmem:[#allocation4 + $0x70] sm:$0xff] %vm2390, 0.0
        %4273 = vst.msk [vmem:[#allocation4 + $0x78] sm:$0xff] %vm2390, 0.0
        %v4274 = vld [vmem:[%s16] sm:$0xff]
        %v4275 = vld [vmem:[%s16 + $0x8] sm:$0xff]
        %v4276 = vld [vmem:[%s16 + $0x10] sm:$0xff]
        %v4277 = vld [vmem:[%s16 + $0x18] sm:$0xff]
        %v4278 = vld [vmem:[%s16 + $0x20] sm:$0xff]
        %v4279 = vld [vmem:[%s16 + $0x28] sm:$0xff]
        %v4280 = vld [vmem:[%s16 + $0x30] sm:$0x1]
        %v4281 = vld [vmem:[#allocation4 + $0x5] sm:$0xff]
        %v4282 = vld [vmem:[#allocation4 + $0xd] sm:$0xff]
        %v4283 = vld [vmem:[#allocation4 + $0x15] sm:$0xff]
        %v4284 = vld [vmem:[#allocation4 + $0x1d] sm:$0xff]
        %v4285 = vld [vmem:[#allocation4 + $0x25] sm:$0xff]
        %v4286 = vld [vmem:[#allocation4 + $0x2d] sm:$0xff]
        %v4287 = vld [vmem:[#allocation4 + $0x35] sm:$0xff]
        %v4288 = vld [vmem:[#allocation4 + $0x3d] sm:$0xff]
        %v4289 = vlaneseq
        %v4290 = vshrl.u32 %v4289, 7
        %v4291 = vsub.s32 0, %v4290
        %v4292 = vrot.slane %v4274, %v4291
        %v4293 = vmul.f32 %v4281, %v4292
        %v4294 = vmul.f32 %v4282, %v4292
        %v4295 = vmul.f32 %v4283, %v4292
        %v4296 = vmul.f32 %v4284, %v4292
        %v4297 = vmul.f32 %v4285, %v4292
        %v4298 = vmul.f32 %v4286, %v4292
        %v4299 = vmul.f32 %v4287, %v4292
        %v4300 = vmul.f32 %v4288, %v4292
        %v4301 = vld [vmem:[#allocation4 + $0x45] sm:$0xff]
        %v4302 = vlaneseq
        %v4303 = vshrl.u32 %v4302, 7
        %v4304 = vsub.s32 7, %v4303
        %v4305 = vrot.slane %v4274, %v4304
        %v4306 = vmul.f32 %v4282, %v4305
        %v4307 = vmul.f32 %v4283, %v4305
        %v4308 = vmul.f32 %v4284, %v4305
        %v4309 = vmul.f32 %v4285, %v4305
        %v4310 = vmul.f32 %v4286, %v4305
        %v4311 = vmul.f32 %v4287, %v4305
        %v4312 = vmul.f32 %v4288, %v4305
        %v4313 = vmul.f32 %v4301, %v4305
        %v4314 = vadd.f32 %v4293, %v4306
        %v4315 = vadd.f32 %v4294, %v4307
        %v4316 = vadd.f32 %v4295, %v4308
        %v4317 = vadd.f32 %v4296, %v4309
        %v4318 = vadd.f32 %v4297, %v4310
        %v4319 = vadd.f32 %v4298, %v4311
        %v4320 = vadd.f32 %v4299, %v4312
        %v4321 = vadd.f32 %v4300, %v4313
        %v4322 = vld [vmem:[#allocation4 + $0x4d] sm:$0xff]
        %v4323 = vlaneseq
        %v4324 = vshrl.u32 %v4323, 7
        %v4325 = vsub.s32 6, %v4324
        %v4326 = vrot.slane %v4275, %v4325
        %v4327 = vmul.f32 %v4283, %v4326
        %v4328 = vmul.f32 %v4284, %v4326
        %v4329 = vmul.f32 %v4285, %v4326
        %v4330 = vmul.f32 %v4286, %v4326
        %v4331 = vmul.f32 %v4287, %v4326
        %v4332 = vmul.f32 %v4288, %v4326
        %v4333 = vmul.f32 %v4301, %v4326
        %v4334 = vmul.f32 %v4322, %v4326
        %v4335 = vadd.f32 %v4314, %v4327
        %v4336 = vadd.f32 %v4315, %v4328
        %v4337 = vadd.f32 %v4316, %v4329
        %v4338 = vadd.f32 %v4317, %v4330
        %v4339 = vadd.f32 %v4318, %v4331
        %v4340 = vadd.f32 %v4319, %v4332
        %v4341 = vadd.f32 %v4320, %v4333
        %v4342 = vadd.f32 %v4321, %v4334
        %v4343 = vld [vmem:[#allocation4 + $0x55] sm:$0xff]
        %v4344 = vlaneseq
        %v4345 = vshrl.u32 %v4344, 7
        %v4346 = vsub.s32 5, %v4345
        %v4347 = vrot.slane %v4276, %v4346
        %v4348 = vmul.f32 %v4284, %v4347
        %v4349 = vmul.f32 %v4285, %v4347
        %v4350 = vmul.f32 %v4286, %v4347
        %v4351 = vmul.f32 %v4287, %v4347
        %v4352 = vmul.f32 %v4288, %v4347
        %v4353 = vmul.f32 %v4301, %v4347
        %v4354 = vmul.f32 %v4322, %v4347
        %v4355 = vmul.f32 %v4343, %v4347
        %v4356 = vadd.f32 %v4335, %v4348
        %v4357 = vadd.f32 %v4336, %v4349
        %v4358 = vadd.f32 %v4337, %v4350
        %v4359 = vadd.f32 %v4338, %v4351
        %v4360 = vadd.f32 %v4339, %v4352
        %v4361 = vadd.f32 %v4340, %v4353
        %v4362 = vadd.f32 %v4341, %v4354
        %v4363 = vadd.f32 %v4342, %v4355
        %v4364 = vld [vmem:[#allocation4 + $0x5d] sm:$0xff]
        %v4365 = vlaneseq
        %v4366 = vshrl.u32 %v4365, 7
        %v4367 = vsub.s32 4, %v4366
        %v4368 = vrot.slane %v4277, %v4367
        %v4369 = vmul.f32 %v4285, %v4368
        %v4370 = vmul.f32 %v4286, %v4368
        %v4371 = vmul.f32 %v4287, %v4368
        %v4372 = vmul.f32 %v4288, %v4368
        %v4373 = vmul.f32 %v4301, %v4368
        %v4374 = vmul.f32 %v4322, %v4368
        %v4375 = vmul.f32 %v4343, %v4368
        %v4376 = vmul.f32 %v4364, %v4368
        %v4377 = vadd.f32 %v4356, %v4369
        %v4378 = vadd.f32 %v4357, %v4370
        %v4379 = vadd.f32 %v4358, %v4371
        %v4380 = vadd.f32 %v4359, %v4372
        %v4381 = vadd.f32 %v4360, %v4373
        %v4382 = vadd.f32 %v4361, %v4374
        %v4383 = vadd.f32 %v4362, %v4375
        %v4384 = vadd.f32 %v4363, %v4376
        %v4385 = vld [vmem:[#allocation4 + $0x65] sm:$0xff]
        %v4386 = vlaneseq
        %v4387 = vshrl.u32 %v4386, 7
        %v4388 = vsub.s32 3, %v4387
        %v4389 = vrot.slane %v4278, %v4388
        %v4390 = vmul.f32 %v4286, %v4389
        %v4391 = vmul.f32 %v4287, %v4389
        %v4392 = vmul.f32 %v4288, %v4389
        %v4393 = vmul.f32 %v4301, %v4389
        %v4394 = vmul.f32 %v4322, %v4389
        %v4395 = vmul.f32 %v4343, %v4389
        %v4396 = vmul.f32 %v4364, %v4389
        %v4397 = vmul.f32 %v4385, %v4389
        %v4398 = vadd.f32 %v4377, %v4390
        %v4399 = vadd.f32 %v4378, %v4391
        %v4400 = vadd.f32 %v4379, %v4392
        %v4401 = vadd.f32 %v4380, %v4393
        %v4402 = vadd.f32 %v4381, %v4394
        %v4403 = vadd.f32 %v4382, %v4395
        %v4404 = vadd.f32 %v4383, %v4396
        %v4405 = vadd.f32 %v4384, %v4397
        %v4406 = vld [vmem:[#allocation4 + $0x6d] sm:$0xff]
        %v4407 = vlaneseq
        %v4408 = vshrl.u32 %v4407, 7
        %v4409 = vsub.s32 2, %v4408
        %v4410 = vrot.slane %v4279, %v4409
        %v4411 = vmul.f32 %v4287, %v4410
        %v4412 = vmul.f32 %v4288, %v4410
        %v4413 = vmul.f32 %v4301, %v4410
        %v4414 = vmul.f32 %v4322, %v4410
        %v4415 = vmul.f32 %v4343, %v4410
        %v4416 = vmul.f32 %v4364, %v4410
        %v4417 = vmul.f32 %v4385, %v4410
        %v4418 = vmul.f32 %v4406, %v4410
        %v4419 = vadd.f32 %v4398, %v4411
        %v4420 = vadd.f32 %v4399, %v4412
        %v4421 = vadd.f32 %v4400, %v4413
        %v4422 = vadd.f32 %v4401, %v4414
        %v4423 = vadd.f32 %v4402, %v4415
        %v4424 = vadd.f32 %v4403, %v4416
        %v4425 = vadd.f32 %v4404, %v4417
        %v4426 = vadd.f32 %v4405, %v4418
        %v4427 = vmul.f32 %v4419, %v1174
        %v4428 = vmul.f32 %v4420, %v1179
        %v4429 = vmul.f32 %v4421, %v1184
        %v4430 = vmul.f32 %v4422, %v1189
        %v4431 = vmul.f32 %v4423, %v1194
        %v4432 = vmul.f32 %v4424, %v1199
        %v4433 = vmul.f32 %v4425, %v1204
        %v4434 = vmul.f32 %v4426, %v1209
        %v4435 = vld [vmem:[#allocation4 + $0x6] sm:$0xff]
        %v4436 = vld [vmem:[#allocation4 + $0xe] sm:$0xff]
        %v4437 = vld [vmem:[#allocation4 + $0x16] sm:$0xff]
        %v4438 = vld [vmem:[#allocation4 + $0x1e] sm:$0xff]
        %v4439 = vld [vmem:[#allocation4 + $0x26] sm:$0xff]
        %v4440 = vld [vmem:[#allocation4 + $0x2e] sm:$0xff]
        %v4441 = vld [vmem:[#allocation4 + $0x36] sm:$0xff]
        %v4442 = vld [vmem:[#allocation4 + $0x3e] sm:$0xff]
        %v4443 = vlaneseq
        %v4444 = vshrl.u32 %v4443, 7
        %v4445 = vsub.s32 1, %v4444
        %v4446 = vrot.slane %v4274, %v4445
        %v4447 = vmul.f32 %v4435, %v4446
        %v4448 = vmul.f32 %v4436, %v4446
        %v4449 = vmul.f32 %v4437, %v4446
        %v4450 = vmul.f32 %v4438, %v4446
        %v4451 = vmul.f32 %v4439, %v4446
        %v4452 = vmul.f32 %v4440, %v4446
        %v4453 = vmul.f32 %v4441, %v4446
        %v4454 = vmul.f32 %v4442, %v4446
        %v4455 = vld [vmem:[#allocation4 + $0x46] sm:$0xff]
        %v4456 = vlaneseq
        %v4457 = vshrl.u32 %v4456, 7
        %v4458 = vsub.s32 0, %v4457
        %v4459 = vrot.slane %v4275, %v4458
        %v4460 = vmul.f32 %v4436, %v4459
        %v4461 = vmul.f32 %v4437, %v4459
        %v4462 = vmul.f32 %v4438, %v4459
        %v4463 = vmul.f32 %v4439, %v4459
        %v4464 = vmul.f32 %v4440, %v4459
        %v4465 = vmul.f32 %v4441, %v4459
        %v4466 = vmul.f32 %v4442, %v4459
        %v4467 = vmul.f32 %v4455, %v4459
        %v4468 = vadd.f32 %v4447, %v4460
        %v4469 = vadd.f32 %v4448, %v4461
        %v4470 = vadd.f32 %v4449, %v4462
        %v4471 = vadd.f32 %v4450, %v4463
        %v4472 = vadd.f32 %v4451, %v4464
        %v4473 = vadd.f32 %v4452, %v4465
        %v4474 = vadd.f32 %v4453, %v4466
        %v4475 = vadd.f32 %v4454, %v4467
        %v4476 = vld [vmem:[#allocation4 + $0x4e] sm:$0xff]
        %v4477 = vlaneseq
        %v4478 = vshrl.u32 %v4477, 7
        %v4479 = vsub.s32 7, %v4478
        %v4480 = vrot.slane %v4275, %v4479
        %v4481 = vmul.f32 %v4437, %v4480
        %v4482 = vmul.f32 %v4438, %v4480
        %v4483 = vmul.f32 %v4439, %v4480
        %v4484 = vmul.f32 %v4440, %v4480
        %v4485 = vmul.f32 %v4441, %v4480
        %v4486 = vmul.f32 %v4442, %v4480
        %v4487 = vmul.f32 %v4455, %v4480
        %v4488 = vmul.f32 %v4476, %v4480
        %v4489 = vadd.f32 %v4468, %v4481
        %v4490 = vadd.f32 %v4469, %v4482
        %v4491 = vadd.f32 %v4470, %v4483
        %v4492 = vadd.f32 %v4471, %v4484
        %v4493 = vadd.f32 %v4472, %v4485
        %v4494 = vadd.f32 %v4473, %v4486
        %v4495 = vadd.f32 %v4474, %v4487
        %v4496 = vadd.f32 %v4475, %v4488
        %v4497 = vld [vmem:[#allocation4 + $0x56] sm:$0xff]
        %v4498 = vlaneseq
        %v4499 = vshrl.u32 %v4498, 7
        %v4500 = vsub.s32 6, %v4499
        %v4501 = vrot.slane %v4276, %v4500
        %v4502 = vmul.f32 %v4438, %v4501
        %v4503 = vmul.f32 %v4439, %v4501
        %v4504 = vmul.f32 %v4440, %v4501
        %v4505 = vmul.f32 %v4441, %v4501
        %v4506 = vmul.f32 %v4442, %v4501
        %v4507 = vmul.f32 %v4455, %v4501
        %v4508 = vmul.f32 %v4476, %v4501
        %v4509 = vmul.f32 %v4497, %v4501
        %v4510 = vadd.f32 %v4489, %v4502
        %v4511 = vadd.f32 %v4490, %v4503
        %v4512 = vadd.f32 %v4491, %v4504
        %v4513 = vadd.f32 %v4492, %v4505
        %v4514 = vadd.f32 %v4493, %v4506
        %v4515 = vadd.f32 %v4494, %v4507
        %v4516 = vadd.f32 %v4495, %v4508
        %v4517 = vadd.f32 %v4496, %v4509
        %v4518 = vld [vmem:[#allocation4 + $0x5e] sm:$0xff]
        %v4519 = vlaneseq
        %v4520 = vshrl.u32 %v4519, 7
        %v4521 = vsub.s32 5, %v4520
        %v4522 = vrot.slane %v4277, %v4521
        %v4523 = vmul.f32 %v4439, %v4522
        %v4524 = vmul.f32 %v4440, %v4522
        %v4525 = vmul.f32 %v4441, %v4522
        %v4526 = vmul.f32 %v4442, %v4522
        %v4527 = vmul.f32 %v4455, %v4522
        %v4528 = vmul.f32 %v4476, %v4522
        %v4529 = vmul.f32 %v4497, %v4522
        %v4530 = vmul.f32 %v4518, %v4522
        %v4531 = vadd.f32 %v4510, %v4523
        %v4532 = vadd.f32 %v4511, %v4524
        %v4533 = vadd.f32 %v4512, %v4525
        %v4534 = vadd.f32 %v4513, %v4526
        %v4535 = vadd.f32 %v4514, %v4527
        %v4536 = vadd.f32 %v4515, %v4528
        %v4537 = vadd.f32 %v4516, %v4529
        %v4538 = vadd.f32 %v4517, %v4530
        %v4539 = vld [vmem:[#allocation4 + $0x66] sm:$0xff]
        %v4540 = vlaneseq
        %v4541 = vshrl.u32 %v4540, 7
        %v4542 = vsub.s32 4, %v4541
        %v4543 = vrot.slane %v4278, %v4542
        %v4544 = vmul.f32 %v4440, %v4543
        %v4545 = vmul.f32 %v4441, %v4543
        %v4546 = vmul.f32 %v4442, %v4543
        %v4547 = vmul.f32 %v4455, %v4543
        %v4548 = vmul.f32 %v4476, %v4543
        %v4549 = vmul.f32 %v4497, %v4543
        %v4550 = vmul.f32 %v4518, %v4543
        %v4551 = vmul.f32 %v4539, %v4543
        %v4552 = vadd.f32 %v4531, %v4544
        %v4553 = vadd.f32 %v4532, %v4545
        %v4554 = vadd.f32 %v4533, %v4546
        %v4555 = vadd.f32 %v4534, %v4547
        %v4556 = vadd.f32 %v4535, %v4548
        %v4557 = vadd.f32 %v4536, %v4549
        %v4558 = vadd.f32 %v4537, %v4550
        %v4559 = vadd.f32 %v4538, %v4551
        %v4560 = vld [vmem:[#allocation4 + $0x6e] sm:$0xff]
        %v4561 = vlaneseq
        %v4562 = vshrl.u32 %v4561, 7
        %v4563 = vsub.s32 3, %v4562
        %v4564 = vrot.slane %v4279, %v4563
        %v4565 = vmul.f32 %v4441, %v4564
        %v4566 = vmul.f32 %v4442, %v4564
        %v4567 = vmul.f32 %v4455, %v4564
        %v4568 = vmul.f32 %v4476, %v4564
        %v4569 = vmul.f32 %v4497, %v4564
        %v4570 = vmul.f32 %v4518, %v4564
        %v4571 = vmul.f32 %v4539, %v4564
        %v4572 = vmul.f32 %v4560, %v4564
        %v4573 = vadd.f32 %v4552, %v4565
        %v4574 = vadd.f32 %v4553, %v4566
        %v4575 = vadd.f32 %v4554, %v4567
        %v4576 = vadd.f32 %v4555, %v4568
        %v4577 = vadd.f32 %v4556, %v4569
        %v4578 = vadd.f32 %v4557, %v4570
        %v4579 = vadd.f32 %v4558, %v4571
        %v4580 = vadd.f32 %v4559, %v4572
        %v4581 = vmul.f32 %v4573, %v1367
        %v4582 = vmul.f32 %v4574, %v1371
        %v4583 = vmul.f32 %v4575, %v1375
        %v4584 = vmul.f32 %v4576, %v1379
        %v4585 = vmul.f32 %v4577, %v1383
        %v4586 = vmul.f32 %v4578, %v1387
        %v4587 = vmul.f32 %v4579, %v1391
        %v4588 = vmul.f32 %v4580, %v1395
        %v4589 = vadd.f32 %v4427, %v4581
        %v4590 = vadd.f32 %v4428, %v4582
        %v4591 = vadd.f32 %v4429, %v4583
        %v4592 = vadd.f32 %v4430, %v4584
        %v4593 = vadd.f32 %v4431, %v4585
        %v4594 = vadd.f32 %v4432, %v4586
        %v4595 = vadd.f32 %v4433, %v4587
        %v4596 = vadd.f32 %v4434, %v4588
        %v4597 = vld [vmem:[#allocation4 + $0x7] sm:$0xff]
        %v4598 = vld [vmem:[#allocation4 + $0xf] sm:$0xff]
        %v4599 = vld [vmem:[#allocation4 + $0x17] sm:$0xff]
        %v4600 = vld [vmem:[#allocation4 + $0x1f] sm:$0xff]
        %v4601 = vld [vmem:[#allocation4 + $0x27] sm:$0xff]
        %v4602 = vld [vmem:[#allocation4 + $0x2f] sm:$0xff]
        %v4603 = vld [vmem:[#allocation4 + $0x37] sm:$0xff]
        %v4604 = vld [vmem:[#allocation4 + $0x3f] sm:$0xff]
        %v4605 = vlaneseq
        %v4606 = vshrl.u32 %v4605, 7
        %v4607 = vsub.s32 2, %v4606
        %v4608 = vrot.slane %v4274, %v4607
        %v4609 = vmul.f32 %v4597, %v4608
        %v4610 = vmul.f32 %v4598, %v4608
        %v4611 = vmul.f32 %v4599, %v4608
        %v4612 = vmul.f32 %v4600, %v4608
        %v4613 = vmul.f32 %v4601, %v4608
        %v4614 = vmul.f32 %v4602, %v4608
        %v4615 = vmul.f32 %v4603, %v4608
        %v4616 = vmul.f32 %v4604, %v4608
        %v4617 = vld [vmem:[#allocation4 + $0x47] sm:$0xff]
        %v4618 = vlaneseq
        %v4619 = vshrl.u32 %v4618, 7
        %v4620 = vsub.s32 1, %v4619
        %v4621 = vrot.slane %v4275, %v4620
        %v4622 = vmul.f32 %v4598, %v4621
        %v4623 = vmul.f32 %v4599, %v4621
        %v4624 = vmul.f32 %v4600, %v4621
        %v4625 = vmul.f32 %v4601, %v4621
        %v4626 = vmul.f32 %v4602, %v4621
        %v4627 = vmul.f32 %v4603, %v4621
        %v4628 = vmul.f32 %v4604, %v4621
        %v4629 = vmul.f32 %v4617, %v4621
        %v4630 = vadd.f32 %v4609, %v4622
        %v4631 = vadd.f32 %v4610, %v4623
        %v4632 = vadd.f32 %v4611, %v4624
        %v4633 = vadd.f32 %v4612, %v4625
        %v4634 = vadd.f32 %v4613, %v4626
        %v4635 = vadd.f32 %v4614, %v4627
        %v4636 = vadd.f32 %v4615, %v4628
        %v4637 = vadd.f32 %v4616, %v4629
        %v4638 = vld [vmem:[#allocation4 + $0x4f] sm:$0xff]
        %v4639 = vlaneseq
        %v4640 = vshrl.u32 %v4639, 7
        %v4641 = vsub.s32 0, %v4640
        %v4642 = vrot.slane %v4276, %v4641
        %v4643 = vmul.f32 %v4599, %v4642
        %v4644 = vmul.f32 %v4600, %v4642
        %v4645 = vmul.f32 %v4601, %v4642
        %v4646 = vmul.f32 %v4602, %v4642
        %v4647 = vmul.f32 %v4603, %v4642
        %v4648 = vmul.f32 %v4604, %v4642
        %v4649 = vmul.f32 %v4617, %v4642
        %v4650 = vmul.f32 %v4638, %v4642
        %v4651 = vadd.f32 %v4630, %v4643
        %v4652 = vadd.f32 %v4631, %v4644
        %v4653 = vadd.f32 %v4632, %v4645
        %v4654 = vadd.f32 %v4633, %v4646
        %v4655 = vadd.f32 %v4634, %v4647
        %v4656 = vadd.f32 %v4635, %v4648
        %v4657 = vadd.f32 %v4636, %v4649
        %v4658 = vadd.f32 %v4637, %v4650
        %v4659 = vld [vmem:[#allocation4 + $0x57] sm:$0xff]
        %v4660 = vlaneseq
        %v4661 = vshrl.u32 %v4660, 7
        %v4662 = vsub.s32 7, %v4661
        %v4663 = vrot.slane %v4276, %v4662
        %v4664 = vmul.f32 %v4600, %v4663
        %v4665 = vmul.f32 %v4601, %v4663
        %v4666 = vmul.f32 %v4602, %v4663
        %v4667 = vmul.f32 %v4603, %v4663
        %v4668 = vmul.f32 %v4604, %v4663
        %v4669 = vmul.f32 %v4617, %v4663
        %v4670 = vmul.f32 %v4638, %v4663
        %v4671 = vmul.f32 %v4659, %v4663
        %v4672 = vadd.f32 %v4651, %v4664
        %v4673 = vadd.f32 %v4652, %v4665
        %v4674 = vadd.f32 %v4653, %v4666
        %v4675 = vadd.f32 %v4654, %v4667
        %v4676 = vadd.f32 %v4655, %v4668
        %v4677 = vadd.f32 %v4656, %v4669
        %v4678 = vadd.f32 %v4657, %v4670
        %v4679 = vadd.f32 %v4658, %v4671
        %v4680 = vld [vmem:[#allocation4 + $0x5f] sm:$0xff]
        %v4681 = vlaneseq
        %v4682 = vshrl.u32 %v4681, 7
        %v4683 = vsub.s32 6, %v4682
        %v4684 = vrot.slane %v4277, %v4683
        %v4685 = vmul.f32 %v4601, %v4684
        %v4686 = vmul.f32 %v4602, %v4684
        %v4687 = vmul.f32 %v4603, %v4684
        %v4688 = vmul.f32 %v4604, %v4684
        %v4689 = vmul.f32 %v4617, %v4684
        %v4690 = vmul.f32 %v4638, %v4684
        %v4691 = vmul.f32 %v4659, %v4684
        %v4692 = vmul.f32 %v4680, %v4684
        %v4693 = vadd.f32 %v4672, %v4685
        %v4694 = vadd.f32 %v4673, %v4686
        %v4695 = vadd.f32 %v4674, %v4687
        %v4696 = vadd.f32 %v4675, %v4688
        %v4697 = vadd.f32 %v4676, %v4689
        %v4698 = vadd.f32 %v4677, %v4690
        %v4699 = vadd.f32 %v4678, %v4691
        %v4700 = vadd.f32 %v4679, %v4692
        %v4701 = vld [vmem:[#allocation4 + $0x67] sm:$0xff]
        %v4702 = vlaneseq
        %v4703 = vshrl.u32 %v4702, 7
        %v4704 = vsub.s32 5, %v4703
        %v4705 = vrot.slane %v4278, %v4704
        %v4706 = vmul.f32 %v4602, %v4705
        %v4707 = vmul.f32 %v4603, %v4705
        %v4708 = vmul.f32 %v4604, %v4705
        %v4709 = vmul.f32 %v4617, %v4705
        %v4710 = vmul.f32 %v4638, %v4705
        %v4711 = vmul.f32 %v4659, %v4705
        %v4712 = vmul.f32 %v4680, %v4705
        %v4713 = vmul.f32 %v4701, %v4705
        %v4714 = vadd.f32 %v4693, %v4706
        %v4715 = vadd.f32 %v4694, %v4707
        %v4716 = vadd.f32 %v4695, %v4708
        %v4717 = vadd.f32 %v4696, %v4709
        %v4718 = vadd.f32 %v4697, %v4710
        %v4719 = vadd.f32 %v4698, %v4711
        %v4720 = vadd.f32 %v4699, %v4712
        %v4721 = vadd.f32 %v4700, %v4713
        %v4722 = vld [vmem:[#allocation4 + $0x6f] sm:$0xff]
        %v4723 = vlaneseq
        %v4724 = vshrl.u32 %v4723, 7
        %v4725 = vsub.s32 4, %v4724
        %v4726 = vrot.slane %v4279, %v4725
        %v4727 = vmul.f32 %v4603, %v4726
        %v4728 = vmul.f32 %v4604, %v4726
        %v4729 = vmul.f32 %v4617, %v4726
        %v4730 = vmul.f32 %v4638, %v4726
        %v4731 = vmul.f32 %v4659, %v4726
        %v4732 = vmul.f32 %v4680, %v4726
        %v4733 = vmul.f32 %v4701, %v4726
        %v4734 = vmul.f32 %v4722, %v4726
        %v4735 = vadd.f32 %v4714, %v4727
        %v4736 = vadd.f32 %v4715, %v4728
        %v4737 = vadd.f32 %v4716, %v4729
        %v4738 = vadd.f32 %v4717, %v4730
        %v4739 = vadd.f32 %v4718, %v4731
        %v4740 = vadd.f32 %v4719, %v4732
        %v4741 = vadd.f32 %v4720, %v4733
        %v4742 = vadd.f32 %v4721, %v4734
        %v4743 = vmul.f32 %v4735, %v1561
        %v4744 = vmul.f32 %v4736, %v1565
        %v4745 = vmul.f32 %v4737, %v1569
        %v4746 = vmul.f32 %v4738, %v1573
        %v4747 = vmul.f32 %v4739, %v1577
        %v4748 = vmul.f32 %v4740, %v1581
        %v4749 = vmul.f32 %v4741, %v1585
        %v4750 = vmul.f32 %v4742, %v1589
        %v4751 = vadd.f32 %v4589, %v4743
        %v4752 = vadd.f32 %v4590, %v4744
        %v4753 = vadd.f32 %v4591, %v4745
        %v4754 = vadd.f32 %v4592, %v4746
        %v4755 = vadd.f32 %v4593, %v4747
        %v4756 = vadd.f32 %v4594, %v4748
        %v4757 = vadd.f32 %v4595, %v4749
        %v4758 = vadd.f32 %v4596, %v4750
        %v4759 = vld [vmem:[#allocation4 + $0x8] sm:$0xff]
        %v4760 = vld [vmem:[#allocation4 + $0x10] sm:$0xff]
        %v4761 = vld [vmem:[#allocation4 + $0x18] sm:$0xff]
        %v4762 = vld [vmem:[#allocation4 + $0x20] sm:$0xff]
        %v4763 = vld [vmem:[#allocation4 + $0x28] sm:$0xff]
        %v4764 = vld [vmem:[#allocation4 + $0x30] sm:$0xff]
        %v4765 = vld [vmem:[#allocation4 + $0x38] sm:$0xff]
        %v4766 = vld [vmem:[#allocation4 + $0x40] sm:$0xff]
        %v4767 = vlaneseq
        %v4768 = vshrl.u32 %v4767, 7
        %v4769 = vsub.s32 3, %v4768
        %v4770 = vrot.slane %v4274, %v4769
        %v4771 = vmul.f32 %v4759, %v4770
        %v4772 = vmul.f32 %v4760, %v4770
        %v4773 = vmul.f32 %v4761, %v4770
        %v4774 = vmul.f32 %v4762, %v4770
        %v4775 = vmul.f32 %v4763, %v4770
        %v4776 = vmul.f32 %v4764, %v4770
        %v4777 = vmul.f32 %v4765, %v4770
        %v4778 = vmul.f32 %v4766, %v4770
        %v4779 = vld [vmem:[#allocation4 + $0x48] sm:$0xff]
        %v4780 = vlaneseq
        %v4781 = vshrl.u32 %v4780, 7
        %v4782 = vsub.s32 2, %v4781
        %v4783 = vrot.slane %v4275, %v4782
        %v4784 = vmul.f32 %v4760, %v4783
        %v4785 = vmul.f32 %v4761, %v4783
        %v4786 = vmul.f32 %v4762, %v4783
        %v4787 = vmul.f32 %v4763, %v4783
        %v4788 = vmul.f32 %v4764, %v4783
        %v4789 = vmul.f32 %v4765, %v4783
        %v4790 = vmul.f32 %v4766, %v4783
        %v4791 = vmul.f32 %v4779, %v4783
        %v4792 = vadd.f32 %v4771, %v4784
        %v4793 = vadd.f32 %v4772, %v4785
        %v4794 = vadd.f32 %v4773, %v4786
        %v4795 = vadd.f32 %v4774, %v4787
        %v4796 = vadd.f32 %v4775, %v4788
        %v4797 = vadd.f32 %v4776, %v4789
        %v4798 = vadd.f32 %v4777, %v4790
        %v4799 = vadd.f32 %v4778, %v4791
        %v4800 = vld [vmem:[#allocation4 + $0x50] sm:$0xff]
        %v4801 = vlaneseq
        %v4802 = vshrl.u32 %v4801, 7
        %v4803 = vsub.s32 1, %v4802
        %v4804 = vrot.slane %v4276, %v4803
        %v4805 = vmul.f32 %v4761, %v4804
        %v4806 = vmul.f32 %v4762, %v4804
        %v4807 = vmul.f32 %v4763, %v4804
        %v4808 = vmul.f32 %v4764, %v4804
        %v4809 = vmul.f32 %v4765, %v4804
        %v4810 = vmul.f32 %v4766, %v4804
        %v4811 = vmul.f32 %v4779, %v4804
        %v4812 = vmul.f32 %v4800, %v4804
        %v4813 = vadd.f32 %v4792, %v4805
        %v4814 = vadd.f32 %v4793, %v4806
        %v4815 = vadd.f32 %v4794, %v4807
        %v4816 = vadd.f32 %v4795, %v4808
        %v4817 = vadd.f32 %v4796, %v4809
        %v4818 = vadd.f32 %v4797, %v4810
        %v4819 = vadd.f32 %v4798, %v4811
        %v4820 = vadd.f32 %v4799, %v4812
        %v4821 = vld [vmem:[#allocation4 + $0x58] sm:$0xff]
        %v4822 = vlaneseq
        %v4823 = vshrl.u32 %v4822, 7
        %v4824 = vsub.s32 0, %v4823
        %v4825 = vrot.slane %v4277, %v4824
        %v4826 = vmul.f32 %v4762, %v4825
        %v4827 = vmul.f32 %v4763, %v4825
        %v4828 = vmul.f32 %v4764, %v4825
        %v4829 = vmul.f32 %v4765, %v4825
        %v4830 = vmul.f32 %v4766, %v4825
        %v4831 = vmul.f32 %v4779, %v4825
        %v4832 = vmul.f32 %v4800, %v4825
        %v4833 = vmul.f32 %v4821, %v4825
        %v4834 = vadd.f32 %v4813, %v4826
        %v4835 = vadd.f32 %v4814, %v4827
        %v4836 = vadd.f32 %v4815, %v4828
        %v4837 = vadd.f32 %v4816, %v4829
        %v4838 = vadd.f32 %v4817, %v4830
        %v4839 = vadd.f32 %v4818, %v4831
        %v4840 = vadd.f32 %v4819, %v4832
        %v4841 = vadd.f32 %v4820, %v4833
        %v4842 = vld [vmem:[#allocation4 + $0x60] sm:$0xff]
        %v4843 = vlaneseq
        %v4844 = vshrl.u32 %v4843, 7
        %v4845 = vsub.s32 7, %v4844
        %v4846 = vrot.slane %v4277, %v4845
        %v4847 = vmul.f32 %v4763, %v4846
        %v4848 = vmul.f32 %v4764, %v4846
        %v4849 = vmul.f32 %v4765, %v4846
        %v4850 = vmul.f32 %v4766, %v4846
        %v4851 = vmul.f32 %v4779, %v4846
        %v4852 = vmul.f32 %v4800, %v4846
        %v4853 = vmul.f32 %v4821, %v4846
        %v4854 = vmul.f32 %v4842, %v4846
        %v4855 = vadd.f32 %v4834, %v4847
        %v4856 = vadd.f32 %v4835, %v4848
        %v4857 = vadd.f32 %v4836, %v4849
        %v4858 = vadd.f32 %v4837, %v4850
        %v4859 = vadd.f32 %v4838, %v4851
        %v4860 = vadd.f32 %v4839, %v4852
        %v4861 = vadd.f32 %v4840, %v4853
        %v4862 = vadd.f32 %v4841, %v4854
        %v4863 = vld [vmem:[#allocation4 + $0x68] sm:$0xff]
        %v4864 = vlaneseq
        %v4865 = vshrl.u32 %v4864, 7
        %v4866 = vsub.s32 6, %v4865
        %v4867 = vrot.slane %v4278, %v4866
        %v4868 = vmul.f32 %v4764, %v4867
        %v4869 = vmul.f32 %v4765, %v4867
        %v4870 = vmul.f32 %v4766, %v4867
        %v4871 = vmul.f32 %v4779, %v4867
        %v4872 = vmul.f32 %v4800, %v4867
        %v4873 = vmul.f32 %v4821, %v4867
        %v4874 = vmul.f32 %v4842, %v4867
        %v4875 = vmul.f32 %v4863, %v4867
        %v4876 = vadd.f32 %v4855, %v4868
        %v4877 = vadd.f32 %v4856, %v4869
        %v4878 = vadd.f32 %v4857, %v4870
        %v4879 = vadd.f32 %v4858, %v4871
        %v4880 = vadd.f32 %v4859, %v4872
        %v4881 = vadd.f32 %v4860, %v4873
        %v4882 = vadd.f32 %v4861, %v4874
        %v4883 = vadd.f32 %v4862, %v4875
        %v4884 = vld [vmem:[#allocation4 + $0x70] sm:$0xff]
        %v4885 = vlaneseq
        %v4886 = vshrl.u32 %v4885, 7
        %v4887 = vsub.s32 5, %v4886
        %v4888 = vrot.slane %v4279, %v4887
        %v4889 = vmul.f32 %v4765, %v4888
        %v4890 = vmul.f32 %v4766, %v4888
        %v4891 = vmul.f32 %v4779, %v4888
        %v4892 = vmul.f32 %v4800, %v4888
        %v4893 = vmul.f32 %v4821, %v4888
        %v4894 = vmul.f32 %v4842, %v4888
        %v4895 = vmul.f32 %v4863, %v4888
        %v4896 = vmul.f32 %v4884, %v4888
        %v4897 = vadd.f32 %v4876, %v4889
        %v4898 = vadd.f32 %v4877, %v4890
        %v4899 = vadd.f32 %v4878, %v4891
        %v4900 = vadd.f32 %v4879, %v4892
        %v4901 = vadd.f32 %v4880, %v4893
        %v4902 = vadd.f32 %v4881, %v4894
        %v4903 = vadd.f32 %v4882, %v4895
        %v4904 = vadd.f32 %v4883, %v4896
        %v4905 = vadd.f32 %v4751, %v4897
        %v4906 = vadd.f32 %v4752, %v4898
        %v4907 = vadd.f32 %v4753, %v4899
        %v4908 = vadd.f32 %v4754, %v4900
        %v4909 = vadd.f32 %v4755, %v4901
        %v4910 = vadd.f32 %v4756, %v4902
        %v4911 = vadd.f32 %v4757, %v4903
        %v4912 = vadd.f32 %v4758, %v4904
        %v4913 = vld [vmem:[#allocation4 + $0x9] sm:$0xff]
        %v4914 = vld [vmem:[#allocation4 + $0x11] sm:$0xff]
        %v4915 = vld [vmem:[#allocation4 + $0x19] sm:$0xff]
        %v4916 = vld [vmem:[#allocation4 + $0x21] sm:$0xff]
        %v4917 = vld [vmem:[#allocation4 + $0x29] sm:$0xff]
        %v4918 = vld [vmem:[#allocation4 + $0x31] sm:$0xff]
        %v4919 = vld [vmem:[#allocation4 + $0x39] sm:$0xff]
        %v4920 = vld [vmem:[#allocation4 + $0x41] sm:$0xff]
        %v4921 = vlaneseq
        %v4922 = vshrl.u32 %v4921, 7
        %v4923 = vsub.s32 4, %v4922
        %v4924 = vrot.slane %v4274, %v4923
        %v4925 = vmul.f32 %v4913, %v4924
        %v4926 = vmul.f32 %v4914, %v4924
        %v4927 = vmul.f32 %v4915, %v4924
        %v4928 = vmul.f32 %v4916, %v4924
        %v4929 = vmul.f32 %v4917, %v4924
        %v4930 = vmul.f32 %v4918, %v4924
        %v4931 = vmul.f32 %v4919, %v4924
        %v4932 = vmul.f32 %v4920, %v4924
        %v4933 = vld [vmem:[#allocation4 + $0x49] sm:$0xff]
        %v4934 = vlaneseq
        %v4935 = vshrl.u32 %v4934, 7
        %v4936 = vsub.s32 3, %v4935
        %v4937 = vrot.slane %v4275, %v4936
        %v4938 = vmul.f32 %v4914, %v4937
        %v4939 = vmul.f32 %v4915, %v4937
        %v4940 = vmul.f32 %v4916, %v4937
        %v4941 = vmul.f32 %v4917, %v4937
        %v4942 = vmul.f32 %v4918, %v4937
        %v4943 = vmul.f32 %v4919, %v4937
        %v4944 = vmul.f32 %v4920, %v4937
        %v4945 = vmul.f32 %v4933, %v4937
        %v4946 = vadd.f32 %v4925, %v4938
        %v4947 = vadd.f32 %v4926, %v4939
        %v4948 = vadd.f32 %v4927, %v4940
        %v4949 = vadd.f32 %v4928, %v4941
        %v4950 = vadd.f32 %v4929, %v4942
        %v4951 = vadd.f32 %v4930, %v4943
        %v4952 = vadd.f32 %v4931, %v4944
        %v4953 = vadd.f32 %v4932, %v4945
        %v4954 = vld [vmem:[#allocation4 + $0x51] sm:$0xff]
        %v4955 = vlaneseq
        %v4956 = vshrl.u32 %v4955, 7
        %v4957 = vsub.s32 2, %v4956
        %v4958 = vrot.slane %v4276, %v4957
        %v4959 = vmul.f32 %v4915, %v4958
        %v4960 = vmul.f32 %v4916, %v4958
        %v4961 = vmul.f32 %v4917, %v4958
        %v4962 = vmul.f32 %v4918, %v4958
        %v4963 = vmul.f32 %v4919, %v4958
        %v4964 = vmul.f32 %v4920, %v4958
        %v4965 = vmul.f32 %v4933, %v4958
        %v4966 = vmul.f32 %v4954, %v4958
        %v4967 = vadd.f32 %v4946, %v4959
        %v4968 = vadd.f32 %v4947, %v4960
        %v4969 = vadd.f32 %v4948, %v4961
        %v4970 = vadd.f32 %v4949, %v4962
        %v4971 = vadd.f32 %v4950, %v4963
        %v4972 = vadd.f32 %v4951, %v4964
        %v4973 = vadd.f32 %v4952, %v4965
        %v4974 = vadd.f32 %v4953, %v4966
        %v4975 = vld [vmem:[#allocation4 + $0x59] sm:$0xff]
        %v4976 = vlaneseq
        %v4977 = vshrl.u32 %v4976, 7
        %v4978 = vsub.s32 1, %v4977
        %v4979 = vrot.slane %v4277, %v4978
        %v4980 = vmul.f32 %v4916, %v4979
        %v4981 = vmul.f32 %v4917, %v4979
        %v4982 = vmul.f32 %v4918, %v4979
        %v4983 = vmul.f32 %v4919, %v4979
        %v4984 = vmul.f32 %v4920, %v4979
        %v4985 = vmul.f32 %v4933, %v4979
        %v4986 = vmul.f32 %v4954, %v4979
        %v4987 = vmul.f32 %v4975, %v4979
        %v4988 = vadd.f32 %v4967, %v4980
        %v4989 = vadd.f32 %v4968, %v4981
        %v4990 = vadd.f32 %v4969, %v4982
        %v4991 = vadd.f32 %v4970, %v4983
        %v4992 = vadd.f32 %v4971, %v4984
        %v4993 = vadd.f32 %v4972, %v4985
        %v4994 = vadd.f32 %v4973, %v4986
        %v4995 = vadd.f32 %v4974, %v4987
        %v4996 = vld [vmem:[#allocation4 + $0x61] sm:$0xff]
        %v4997 = vlaneseq
        %v4998 = vshrl.u32 %v4997, 7
        %v4999 = vsub.s32 0, %v4998
        %v5000 = vrot.slane %v4278, %v4999
        %v5001 = vmul.f32 %v4917, %v5000
        %v5002 = vmul.f32 %v4918, %v5000
        %v5003 = vmul.f32 %v4919, %v5000
        %v5004 = vmul.f32 %v4920, %v5000
        %v5005 = vmul.f32 %v4933, %v5000
        %v5006 = vmul.f32 %v4954, %v5000
        %v5007 = vmul.f32 %v4975, %v5000
        %v5008 = vmul.f32 %v4996, %v5000
        %v5009 = vadd.f32 %v4988, %v5001
        %v5010 = vadd.f32 %v4989, %v5002
        %v5011 = vadd.f32 %v4990, %v5003
        %v5012 = vadd.f32 %v4991, %v5004
        %v5013 = vadd.f32 %v4992, %v5005
        %v5014 = vadd.f32 %v4993, %v5006
        %v5015 = vadd.f32 %v4994, %v5007
        %v5016 = vadd.f32 %v4995, %v5008
        %v5017 = vld [vmem:[#allocation4 + $0x69] sm:$0xff]
        %v5018 = vlaneseq
        %v5019 = vshrl.u32 %v5018, 7
        %v5020 = vsub.s32 7, %v5019
        %v5021 = vrot.slane %v4278, %v5020
        %v5022 = vmul.f32 %v4918, %v5021
        %v5023 = vmul.f32 %v4919, %v5021
        %v5024 = vmul.f32 %v4920, %v5021
        %v5025 = vmul.f32 %v4933, %v5021
        %v5026 = vmul.f32 %v4954, %v5021
        %v5027 = vmul.f32 %v4975, %v5021
        %v5028 = vmul.f32 %v4996, %v5021
        %v5029 = vmul.f32 %v5017, %v5021
        %v5030 = vadd.f32 %v5009, %v5022
        %v5031 = vadd.f32 %v5010, %v5023
        %v5032 = vadd.f32 %v5011, %v5024
        %v5033 = vadd.f32 %v5012, %v5025
        %v5034 = vadd.f32 %v5013, %v5026
        %v5035 = vadd.f32 %v5014, %v5027
        %v5036 = vadd.f32 %v5015, %v5028
        %v5037 = vadd.f32 %v5016, %v5029
        %v5038 = vld [vmem:[#allocation4 + $0x71] sm:$0xff]
        %v5039 = vlaneseq
        %v5040 = vshrl.u32 %v5039, 7
        %v5041 = vsub.s32 6, %v5040
        %v5042 = vrot.slane %v4279, %v5041
        %v5043 = vmul.f32 %v4919, %v5042
        %v5044 = vmul.f32 %v4920, %v5042
        %v5045 = vmul.f32 %v4933, %v5042
        %v5046 = vmul.f32 %v4954, %v5042
        %v5047 = vmul.f32 %v4975, %v5042
        %v5048 = vmul.f32 %v4996, %v5042
        %v5049 = vmul.f32 %v5017, %v5042
        %v5050 = vmul.f32 %v5038, %v5042
        %v5051 = vadd.f32 %v5030, %v5043
        %v5052 = vadd.f32 %v5031, %v5044
        %v5053 = vadd.f32 %v5032, %v5045
        %v5054 = vadd.f32 %v5033, %v5046
        %v5055 = vadd.f32 %v5034, %v5047
        %v5056 = vadd.f32 %v5035, %v5048
        %v5057 = vadd.f32 %v5036, %v5049
        %v5058 = vadd.f32 %v5037, %v5050
        %v5059 = vmul.f32 %v5051, %v1909
        %v5060 = vmul.f32 %v5052, %v1913
        %v5061 = vmul.f32 %v5053, %v1917
        %v5062 = vmul.f32 %v5054, %v1921
        %v5063 = vmul.f32 %v5055, %v1925
        %v5064 = vmul.f32 %v5056, %v1929
        %v5065 = vmul.f32 %v5057, %v1933
        %v5066 = vmul.f32 %v5058, %v1937
        %v5067 = vadd.f32 %v4905, %v5059
        %v5068 = vadd.f32 %v4906, %v5060
        %v5069 = vadd.f32 %v4907, %v5061
        %v5070 = vadd.f32 %v4908, %v5062
        %v5071 = vadd.f32 %v4909, %v5063
        %v5072 = vadd.f32 %v4910, %v5064
        %v5073 = vadd.f32 %v4911, %v5065
        %v5074 = vadd.f32 %v4912, %v5066
        %v5075 = vld [vmem:[#allocation4 + $0xa] sm:$0xff]
        %v5076 = vld [vmem:[#allocation4 + $0x12] sm:$0xff]
        %v5077 = vld [vmem:[#allocation4 + $0x1a] sm:$0xff]
        %v5078 = vld [vmem:[#allocation4 + $0x22] sm:$0xff]
        %v5079 = vld [vmem:[#allocation4 + $0x2a] sm:$0xff]
        %v5080 = vld [vmem:[#allocation4 + $0x32] sm:$0xff]
        %v5081 = vld [vmem:[#allocation4 + $0x3a] sm:$0xff]
        %v5082 = vld [vmem:[#allocation4 + $0x42] sm:$0xff]
        %v5083 = vlaneseq
        %v5084 = vshrl.u32 %v5083, 7
        %v5085 = vsub.s32 5, %v5084
        %v5086 = vrot.slane %v4274, %v5085
        %v5087 = vmul.f32 %v5075, %v5086
        %v5088 = vmul.f32 %v5076, %v5086
        %v5089 = vmul.f32 %v5077, %v5086
        %v5090 = vmul.f32 %v5078, %v5086
        %v5091 = vmul.f32 %v5079, %v5086
        %v5092 = vmul.f32 %v5080, %v5086
        %v5093 = vmul.f32 %v5081, %v5086
        %v5094 = vmul.f32 %v5082, %v5086
        %v5095 = vld [vmem:[#allocation4 + $0x4a] sm:$0xff]
        %v5096 = vlaneseq
        %v5097 = vshrl.u32 %v5096, 7
        %v5098 = vsub.s32 4, %v5097
        %v5099 = vrot.slane %v4275, %v5098
        %v5100 = vmul.f32 %v5076, %v5099
        %v5101 = vmul.f32 %v5077, %v5099
        %v5102 = vmul.f32 %v5078, %v5099
        %v5103 = vmul.f32 %v5079, %v5099
        %v5104 = vmul.f32 %v5080, %v5099
        %v5105 = vmul.f32 %v5081, %v5099
        %v5106 = vmul.f32 %v5082, %v5099
        %v5107 = vmul.f32 %v5095, %v5099
        %v5108 = vadd.f32 %v5087, %v5100
        %v5109 = vadd.f32 %v5088, %v5101
        %v5110 = vadd.f32 %v5089, %v5102
        %v5111 = vadd.f32 %v5090, %v5103
        %v5112 = vadd.f32 %v5091, %v5104
        %v5113 = vadd.f32 %v5092, %v5105
        %v5114 = vadd.f32 %v5093, %v5106
        %v5115 = vadd.f32 %v5094, %v5107
        %v5116 = vld [vmem:[#allocation4 + $0x52] sm:$0xff]
        %v5117 = vlaneseq
        %v5118 = vshrl.u32 %v5117, 7
        %v5119 = vsub.s32 3, %v5118
        %v5120 = vrot.slane %v4276, %v5119
        %v5121 = vmul.f32 %v5077, %v5120
        %v5122 = vmul.f32 %v5078, %v5120
        %v5123 = vmul.f32 %v5079, %v5120
        %v5124 = vmul.f32 %v5080, %v5120
        %v5125 = vmul.f32 %v5081, %v5120
        %v5126 = vmul.f32 %v5082, %v5120
        %v5127 = vmul.f32 %v5095, %v5120
        %v5128 = vmul.f32 %v5116, %v5120
        %v5129 = vadd.f32 %v5108, %v5121
        %v5130 = vadd.f32 %v5109, %v5122
        %v5131 = vadd.f32 %v5110, %v5123
        %v5132 = vadd.f32 %v5111, %v5124
        %v5133 = vadd.f32 %v5112, %v5125
        %v5134 = vadd.f32 %v5113, %v5126
        %v5135 = vadd.f32 %v5114, %v5127
        %v5136 = vadd.f32 %v5115, %v5128
        %v5137 = vld [vmem:[#allocation4 + $0x5a] sm:$0xff]
        %v5138 = vlaneseq
        %v5139 = vshrl.u32 %v5138, 7
        %v5140 = vsub.s32 2, %v5139
        %v5141 = vrot.slane %v4277, %v5140
        %v5142 = vmul.f32 %v5078, %v5141
        %v5143 = vmul.f32 %v5079, %v5141
        %v5144 = vmul.f32 %v5080, %v5141
        %v5145 = vmul.f32 %v5081, %v5141
        %v5146 = vmul.f32 %v5082, %v5141
        %v5147 = vmul.f32 %v5095, %v5141
        %v5148 = vmul.f32 %v5116, %v5141
        %v5149 = vmul.f32 %v5137, %v5141
        %v5150 = vadd.f32 %v5129, %v5142
        %v5151 = vadd.f32 %v5130, %v5143
        %v5152 = vadd.f32 %v5131, %v5144
        %v5153 = vadd.f32 %v5132, %v5145
        %v5154 = vadd.f32 %v5133, %v5146
        %v5155 = vadd.f32 %v5134, %v5147
        %v5156 = vadd.f32 %v5135, %v5148
        %v5157 = vadd.f32 %v5136, %v5149
        %v5158 = vld [vmem:[#allocation4 + $0x62] sm:$0xff]
        %v5159 = vlaneseq
        %v5160 = vshrl.u32 %v5159, 7
        %v5161 = vsub.s32 1, %v5160
        %v5162 = vrot.slane %v4278, %v5161
        %v5163 = vmul.f32 %v5079, %v5162
        %v5164 = vmul.f32 %v5080, %v5162
        %v5165 = vmul.f32 %v5081, %v5162
        %v5166 = vmul.f32 %v5082, %v5162
        %v5167 = vmul.f32 %v5095, %v5162
        %v5168 = vmul.f32 %v5116, %v5162
        %v5169 = vmul.f32 %v5137, %v5162
        %v5170 = vmul.f32 %v5158, %v5162
        %v5171 = vadd.f32 %v5150, %v5163
        %v5172 = vadd.f32 %v5151, %v5164
        %v5173 = vadd.f32 %v5152, %v5165
        %v5174 = vadd.f32 %v5153, %v5166
        %v5175 = vadd.f32 %v5154, %v5167
        %v5176 = vadd.f32 %v5155, %v5168
        %v5177 = vadd.f32 %v5156, %v5169
        %v5178 = vadd.f32 %v5157, %v5170
        %v5179 = vld [vmem:[#allocation4 + $0x6a] sm:$0xff]
        %v5180 = vlaneseq
        %v5181 = vshrl.u32 %v5180, 7
        %v5182 = vsub.s32 0, %v5181
        %v5183 = vrot.slane %v4279, %v5182
        %v5184 = vmul.f32 %v5080, %v5183
        %v5185 = vmul.f32 %v5081, %v5183
        %v5186 = vmul.f32 %v5082, %v5183
        %v5187 = vmul.f32 %v5095, %v5183
        %v5188 = vmul.f32 %v5116, %v5183
        %v5189 = vmul.f32 %v5137, %v5183
        %v5190 = vmul.f32 %v5158, %v5183
        %v5191 = vmul.f32 %v5179, %v5183
        %v5192 = vadd.f32 %v5171, %v5184
        %v5193 = vadd.f32 %v5172, %v5185
        %v5194 = vadd.f32 %v5173, %v5186
        %v5195 = vadd.f32 %v5174, %v5187
        %v5196 = vadd.f32 %v5175, %v5188
        %v5197 = vadd.f32 %v5176, %v5189
        %v5198 = vadd.f32 %v5177, %v5190
        %v5199 = vadd.f32 %v5178, %v5191
        %v5200 = vld [vmem:[#allocation4 + $0x72] sm:$0xff]
        %v5201 = vlaneseq
        %v5202 = vshrl.u32 %v5201, 7
        %v5203 = vsub.s32 7, %v5202
        %v5204 = vrot.slane %v4279, %v5203
        %v5205 = vmul.f32 %v5081, %v5204
        %v5206 = vmul.f32 %v5082, %v5204
        %v5207 = vmul.f32 %v5095, %v5204
        %v5208 = vmul.f32 %v5116, %v5204
        %v5209 = vmul.f32 %v5137, %v5204
        %v5210 = vmul.f32 %v5158, %v5204
        %v5211 = vmul.f32 %v5179, %v5204
        %v5212 = vmul.f32 %v5200, %v5204
        %v5213 = vadd.f32 %v5192, %v5205
        %v5214 = vadd.f32 %v5193, %v5206
        %v5215 = vadd.f32 %v5194, %v5207
        %v5216 = vadd.f32 %v5195, %v5208
        %v5217 = vadd.f32 %v5196, %v5209
        %v5218 = vadd.f32 %v5197, %v5210
        %v5219 = vadd.f32 %v5198, %v5211
        %v5220 = vadd.f32 %v5199, %v5212
        %v5221 = vmul.f32 %v5213, %v2103
        %v5222 = vmul.f32 %v5214, %v2107
        %v5223 = vmul.f32 %v5215, %v2111
        %v5224 = vmul.f32 %v5216, %v2115
        %v5225 = vmul.f32 %v5217, %v2119
        %v5226 = vmul.f32 %v5218, %v2123
        %v5227 = vmul.f32 %v5219, %v2127
        %v5228 = vmul.f32 %v5220, %v2131
        %v5229 = vadd.f32 %v5067, %v5221
        %v5230 = vadd.f32 %v5068, %v5222
        %v5231 = vadd.f32 %v5069, %v5223
        %v5232 = vadd.f32 %v5070, %v5224
        %v5233 = vadd.f32 %v5071, %v5225
        %v5234 = vadd.f32 %v5072, %v5226
        %v5235 = vadd.f32 %v5073, %v5227
        %v5236 = vadd.f32 %v5074, %v5228
        %v5237 = vld [vmem:[#allocation4 + $0xb] sm:$0xff]
        %v5238 = vld [vmem:[#allocation4 + $0x13] sm:$0xff]
        %v5239 = vld [vmem:[#allocation4 + $0x1b] sm:$0xff]
        %v5240 = vld [vmem:[#allocation4 + $0x23] sm:$0xff]
        %v5241 = vld [vmem:[#allocation4 + $0x2b] sm:$0xff]
        %v5242 = vld [vmem:[#allocation4 + $0x33] sm:$0xff]
        %v5243 = vld [vmem:[#allocation4 + $0x3b] sm:$0xff]
        %v5244 = vld [vmem:[#allocation4 + $0x43] sm:$0xff]
        %v5245 = vlaneseq
        %v5246 = vshrl.u32 %v5245, 7
        %v5247 = vsub.s32 6, %v5246
        %v5248 = vrot.slane %v4274, %v5247
        %v5249 = vmul.f32 %v5237, %v5248
        %v5250 = vmul.f32 %v5238, %v5248
        %v5251 = vmul.f32 %v5239, %v5248
        %v5252 = vmul.f32 %v5240, %v5248
        %v5253 = vmul.f32 %v5241, %v5248
        %v5254 = vmul.f32 %v5242, %v5248
        %v5255 = vmul.f32 %v5243, %v5248
        %v5256 = vmul.f32 %v5244, %v5248
        %v5257 = vld [vmem:[#allocation4 + $0x4b] sm:$0xff]
        %v5258 = vlaneseq
        %v5259 = vshrl.u32 %v5258, 7
        %v5260 = vsub.s32 5, %v5259
        %v5261 = vrot.slane %v4275, %v5260
        %v5262 = vmul.f32 %v5238, %v5261
        %v5263 = vmul.f32 %v5239, %v5261
        %v5264 = vmul.f32 %v5240, %v5261
        %v5265 = vmul.f32 %v5241, %v5261
        %v5266 = vmul.f32 %v5242, %v5261
        %v5267 = vmul.f32 %v5243, %v5261
        %v5268 = vmul.f32 %v5244, %v5261
        %v5269 = vmul.f32 %v5257, %v5261
        %v5270 = vadd.f32 %v5249, %v5262
        %v5271 = vadd.f32 %v5250, %v5263
        %v5272 = vadd.f32 %v5251, %v5264
        %v5273 = vadd.f32 %v5252, %v5265
        %v5274 = vadd.f32 %v5253, %v5266
        %v5275 = vadd.f32 %v5254, %v5267
        %v5276 = vadd.f32 %v5255, %v5268
        %v5277 = vadd.f32 %v5256, %v5269
        %v5278 = vld [vmem:[#allocation4 + $0x53] sm:$0xff]
        %v5279 = vlaneseq
        %v5280 = vshrl.u32 %v5279, 7
        %v5281 = vsub.s32 4, %v5280
        %v5282 = vrot.slane %v4276, %v5281
        %v5283 = vmul.f32 %v5239, %v5282
        %v5284 = vmul.f32 %v5240, %v5282
        %v5285 = vmul.f32 %v5241, %v5282
        %v5286 = vmul.f32 %v5242, %v5282
        %v5287 = vmul.f32 %v5243, %v5282
        %v5288 = vmul.f32 %v5244, %v5282
        %v5289 = vmul.f32 %v5257, %v5282
        %v5290 = vmul.f32 %v5278, %v5282
        %v5291 = vadd.f32 %v5270, %v5283
        %v5292 = vadd.f32 %v5271, %v5284
        %v5293 = vadd.f32 %v5272, %v5285
        %v5294 = vadd.f32 %v5273, %v5286
        %v5295 = vadd.f32 %v5274, %v5287
        %v5296 = vadd.f32 %v5275, %v5288
        %v5297 = vadd.f32 %v5276, %v5289
        %v5298 = vadd.f32 %v5277, %v5290
        %v5299 = vld [vmem:[#allocation4 + $0x5b] sm:$0xff]
        %v5300 = vlaneseq
        %v5301 = vshrl.u32 %v5300, 7
        %v5302 = vsub.s32 3, %v5301
        %v5303 = vrot.slane %v4277, %v5302
        %v5304 = vmul.f32 %v5240, %v5303
        %v5305 = vmul.f32 %v5241, %v5303
        %v5306 = vmul.f32 %v5242, %v5303
        %v5307 = vmul.f32 %v5243, %v5303
        %v5308 = vmul.f32 %v5244, %v5303
        %v5309 = vmul.f32 %v5257, %v5303
        %v5310 = vmul.f32 %v5278, %v5303
        %v5311 = vmul.f32 %v5299, %v5303
        %v5312 = vadd.f32 %v5291, %v5304
        %v5313 = vadd.f32 %v5292, %v5305
        %v5314 = vadd.f32 %v5293, %v5306
        %v5315 = vadd.f32 %v5294, %v5307
        %v5316 = vadd.f32 %v5295, %v5308
        %v5317 = vadd.f32 %v5296, %v5309
        %v5318 = vadd.f32 %v5297, %v5310
        %v5319 = vadd.f32 %v5298, %v5311
        %v5320 = vld [vmem:[#allocation4 + $0x63] sm:$0xff]
        %v5321 = vlaneseq
        %v5322 = vshrl.u32 %v5321, 7
        %v5323 = vsub.s32 2, %v5322
        %v5324 = vrot.slane %v4278, %v5323
        %v5325 = vmul.f32 %v5241, %v5324
        %v5326 = vmul.f32 %v5242, %v5324
        %v5327 = vmul.f32 %v5243, %v5324
        %v5328 = vmul.f32 %v5244, %v5324
        %v5329 = vmul.f32 %v5257, %v5324
        %v5330 = vmul.f32 %v5278, %v5324
        %v5331 = vmul.f32 %v5299, %v5324
        %v5332 = vmul.f32 %v5320, %v5324
        %v5333 = vadd.f32 %v5312, %v5325
        %v5334 = vadd.f32 %v5313, %v5326
        %v5335 = vadd.f32 %v5314, %v5327
        %v5336 = vadd.f32 %v5315, %v5328
        %v5337 = vadd.f32 %v5316, %v5329
        %v5338 = vadd.f32 %v5317, %v5330
        %v5339 = vadd.f32 %v5318, %v5331
        %v5340 = vadd.f32 %v5319, %v5332
        %v5341 = vld [vmem:[#allocation4 + $0x6b] sm:$0xff]
        %v5342 = vlaneseq
        %v5343 = vshrl.u32 %v5342, 7
        %v5344 = vsub.s32 1, %v5343
        %v5345 = vrot.slane %v4279, %v5344
        %v5346 = vmul.f32 %v5242, %v5345
        %v5347 = vmul.f32 %v5243, %v5345
        %v5348 = vmul.f32 %v5244, %v5345
        %v5349 = vmul.f32 %v5257, %v5345
        %v5350 = vmul.f32 %v5278, %v5345
        %v5351 = vmul.f32 %v5299, %v5345
        %v5352 = vmul.f32 %v5320, %v5345
        %v5353 = vmul.f32 %v5341, %v5345
        %v5354 = vadd.f32 %v5333, %v5346
        %v5355 = vadd.f32 %v5334, %v5347
        %v5356 = vadd.f32 %v5335, %v5348
        %v5357 = vadd.f32 %v5336, %v5349
        %v5358 = vadd.f32 %v5337, %v5350
        %v5359 = vadd.f32 %v5338, %v5351
        %v5360 = vadd.f32 %v5339, %v5352
        %v5361 = vadd.f32 %v5340, %v5353
        %v5362 = vld [vmem:[#allocation4 + $0x73] sm:$0xff]
        %v5363 = vlaneseq
        %v5364 = vshrl.u32 %v5363, 7
        %v5365 = vsub.s32 0, %v5364
        %v5366 = vrot.slane %v4280, %v5365
        %v5367 = vmul.f32 %v5243, %v5366
        %v5368 = vmul.f32 %v5244, %v5366
        %v5369 = vmul.f32 %v5257, %v5366
        %v5370 = vmul.f32 %v5278, %v5366
        %v5371 = vmul.f32 %v5299, %v5366
        %v5372 = vmul.f32 %v5320, %v5366
        %v5373 = vmul.f32 %v5341, %v5366
        %v5374 = vmul.f32 %v5362, %v5366
        %v5375 = vadd.f32 %v5354, %v5367
        %v5376 = vadd.f32 %v5355, %v5368
        %v5377 = vadd.f32 %v5356, %v5369
        %v5378 = vadd.f32 %v5357, %v5370
        %v5379 = vadd.f32 %v5358, %v5371
        %v5380 = vadd.f32 %v5359, %v5372
        %v5381 = vadd.f32 %v5360, %v5373
        %v5382 = vadd.f32 %v5361, %v5374
        %v5383 = vmul.f32 %v5375, %v2297
        %v5384 = vmul.f32 %v5376, %v2301
        %v5385 = vmul.f32 %v5377, %v2305
        %v5386 = vmul.f32 %v5378, %v2309
        %v5387 = vmul.f32 %v5379, %v2313
        %v5388 = vmul.f32 %v5380, %v2317
        %v5389 = vmul.f32 %v5381, %v2321
        %v5390 = vmul.f32 %v5382, %v2325
        %v5391 = vadd.f32 %v5229, %v5383
        %v5392 = vadd.f32 %v5230, %v5384
        %v5393 = vadd.f32 %v5231, %v5385
        %v5394 = vadd.f32 %v5232, %v5386
        %v5395 = vadd.f32 %v5233, %v5387
        %v5396 = vadd.f32 %v5234, %v5388
        %v5397 = vadd.f32 %v5235, %v5389
        %v5398 = vadd.f32 %v5236, %v5390
        %v5399 = vld [vmem:[%s18] sm:$0x77]
        %5408 = vrot.lane.b32.xlu0 %v5391, 16
        %v5409 = vpop.permute.xlu0 %5408
        %5410 = vrot.lane.b32.xlu0 %v5392, 16
        %v5411 = vpop.permute.xlu0 %5410
        %5412 = vrot.lane.b32.xlu0 %v5393, 16
        %v5413 = vpop.permute.xlu0 %5412
        %5414 = vrot.lane.b32.xlu0 %v5394, 16
        %v5415 = vpop.permute.xlu0 %5414
        %5416 = vrot.lane.b32.xlu0 %v5395, 16
        %v5417 = vpop.permute.xlu0 %5416
        %5418 = vrot.lane.b32.xlu0 %v5396, 16
        %v5419 = vpop.permute.xlu0 %5418
        %5420 = vrot.lane.b32.xlu0 %v5397, 16
        %v5421 = vpop.permute.xlu0 %5420
        %5422 = vrot.lane.b32.xlu0 %v5398, 16
        %v5423 = vpop.permute.xlu0 %5422
        %v5432 = vsel %vm2390, %v4250, %v5409
        %v5433 = vsel %vm2390, %v4251, %v5411
        %v5434 = vsel %vm2390, %v4252, %v5413
        %v5435 = vsel %vm2390, %v4253, %v5415
        %v5436 = vsel %vm2390, %v4254, %v5417
        %v5437 = vsel %vm2390, %v4255, %v5419
        %v5438 = vsel %vm2390, %v4256, %v5421
        %v5439 = vsel %vm2390, %v4257, %v5423
        %v5440 = vld [vmem:[%s17] sm:$0xff]
        %v5441 = vld [vmem:[%s17 + $0x8] sm:$0xff]
        %v5442 = vld [vmem:[%s17 + $0x10] sm:$0xff]
        %v5443 = vld [vmem:[%s17 + $0x18] sm:$0xff]
        %v5444 = vld [vmem:[%s17 + $0x20] sm:$0xff]
        %v5445 = vld [vmem:[%s17 + $0x28] sm:$0xff]
        %v5446 = vld [vmem:[%s17 + $0x30] sm:$0xff]
        %v5447 = vld [vmem:[%s17 + $0x38] sm:$0xff]
        %v5449 = vlaneseq
        %v5450 = vshrl.u32 %v5449, 7
        %v5451 = vsub.s32 0, %v5450
        %v5452 = vrot.slane %v5399, %v5451
        %v5453 = vlaneseq
        %v5454 = vshrl.u32 %v5453, 7
        %v5455 = vsub.s32 4, %v5454
        %v5456 = vrot.slane %v5399, %v5455
        %v5459 = vlaneseq
        %v5460 = vshrl.u32 %v5459, 7
        %v5461 = vsub.s32 0, %v5460
        %v5462 = vrot.slane %v5452, %v5461
        %v5463 = vlaneseq
        %v5464 = vshrl.u32 %v5463, 7
        %v5465 = vsub.s32 0, %v5464
        %v5466 = vrot.slane %v5456, %v5465
        %vm5467 = vcmask 261120
        %v5469 = vsel %vm5467, %v5432, 0
        %v5472 = vsel %vm5467, %v5433, 0
        %v5475 = vsel %vm5467, %v5434, 0
        %v5478 = vsel %vm5467, %v5435, 0
        %v5481 = vsel %vm5467, %v5436, 0
        %v5484 = vsel %vm5467, %v5437, 0
        %v5487 = vsel %vm5467, %v5438, 0
        %v5490 = vsel %vm5467, %v5439, 0
        %5492 = vmatprep.subr.mxu0 %v5441
        %5493 = vmatpush1.msra.mxu0 %v5440
        %5494 = vmatprep.subr.mxu0 %v5443
        %5495 = vmatpush1.msra.mxu0 %v5442
        %5496 = vmatprep.subr.mxu0 %v5445
        %5497 = vmatpush1.msra.mxu0 %v5444
        %5498 = vmatprep.subr.mxu0 %v5447
        %5499 = vmatpush1.msra.mxu0 %v5446
        %5500 = vmatprep.subr.mxu0 0.0
        %5501 = vmatpush1.msra.mxu0 0.0
        %5502 = vmatprep.subr.mxu0 0.0
        %5503 = vmatpush1.msra.mxu0 0.0
        %5504 = vmatprep.subr.mxu0 0.0
        %5505 = vmatpush1.msra.mxu0 0.0
        %5506 = vmatprep.subr.mxu0 0.0
        %5507 = vmatpush1.msra.mxu0 0.0
        %5508 = vmatprep.subr.mxu0 0.0
        %5509 = vmatpush1.msra.mxu0 0.0
        %5510 = vmatprep.subr.mxu0 0.0
        %5511 = vmatpush1.msra.mxu0 0.0
        %5512 = vmatprep.subr.mxu0 0.0
        %5513 = vmatpush1.msra.mxu0 0.0
        %5514 = vmatprep.subr.mxu0 0.0
        %5515 = vmatpush1.msra.mxu0 0.0
        %5516 = vmatprep.subr.mxu0 0.0
        %5517 = vmatpush1.msra.mxu0 0.0
        %5518 = vmatprep.subr.mxu0 0.0
        %5519 = vmatpush1.msra.mxu0 0.0
        %5520 = vmatprep.subr.mxu0 0.0
        %5521 = vmatpush1.msra.mxu0 0.0
        %5522 = vmatprep.subr.mxu0 0.0
        %5523 = vmatpush1.msra.mxu0 0.0
        %5524 = vmatprep.subr.mxu0 0.0
        %5525 = vmatpush1.msra.mxu0 0.0
        %5526 = vmatprep.subr.mxu0 0.0
        %5527 = vmatpush1.msra.mxu0 0.0
        %5528 = vmatprep.subr.mxu0 0.0
        %5529 = vmatpush1.msra.mxu0 0.0
        %5530 = vmatprep.subr.mxu0 0.0
        %5531 = vmatpush1.msra.mxu0 0.0
        %5532 = vmatprep.subr.mxu0 0.0
        %5533 = vmatpush1.msra.mxu0 0.0
        %5534 = vmatprep.subr.mxu0 0.0
        %5535 = vmatpush1.msra.mxu0 0.0
        %5536 = vmatprep.subr.mxu0 0.0
        %5537 = vmatpush1.msra.mxu0 0.0
        %5538 = vmatprep.subr.mxu0 0.0
        %5539 = vmatpush1.msra.mxu0 0.0
        %5540 = vmatprep.subr.mxu0 0.0
        %5541 = vmatpush1.msra.mxu0 0.0
        %5542 = vmatprep.subr.mxu0 0.0
        %5543 = vmatpush1.msra.mxu0 0.0
        %5544 = vmatprep.subr.mxu0 0.0
        %5545 = vmatpush1.msra.mxu0 0.0
        %5546 = vmatprep.subr.mxu0 0.0
        %5547 = vmatpush1.msra.mxu0 0.0
        %5548 = vmatprep.subr.mxu0 0.0
        %5549 = vmatpush1.msra.mxu0 0.0
        %5550 = vmatprep.subr.mxu0 0.0
        %5551 = vmatpush1.msra.mxu0 0.0
        %5552 = vmatprep.subr.mxu0 0.0
        %5553 = vmatpush1.msra.mxu0 0.0
        %5554 = vmatprep.subr.mxu0 0.0
        %5555 = vmatpush1.msra.mxu0 0.0
        %5556 = vmatprep.mubr.f32.mxu0 0.0
        %5557 = vmatmul.mubr.f32.gmra.mrb[0].mxu0 %v5469
        %v5558 = vpop.f32.mrb[0].mxu0
        %v5559 = vadd.f32 %v5462, %v5558
        %v5560 = vpop.f32.mrb[0].mxu0
        %v5561 = vadd.f32 %v5466, %v5560
        %5562 = vmatprep.mubr.f32.mxu0 0.0
        %5563 = vmatmul.mubr.f32.gmra.mrb[0].mxu0 %v5472
        %v5564 = vpop.f32.mrb[0].mxu0
        %v5565 = vadd.f32 %v5462, %v5564
        %v5566 = vpop.f32.mrb[0].mxu0
        %v5567 = vadd.f32 %v5466, %v5566
        %5568 = vmatprep.mubr.f32.mxu0 0.0
        %5569 = vmatmul.mubr.f32.gmra.mrb[0].mxu0 %v5475
        %v5570 = vpop.f32.mrb[0].mxu0
        %v5571 = vadd.f32 %v5462, %v5570
        %v5572 = vpop.f32.mrb[0].mxu0
        %v5573 = vadd.f32 %v5466, %v5572
        %5574 = vmatprep.mubr.f32.mxu0 0.0
        %5575 = vmatmul.mubr.f32.gmra.mrb[0].mxu0 %v5478
        %v5576 = vpop.f32.mrb[0].mxu0
        %v5577 = vadd.f32 %v5462, %v5576
        %v5578 = vpop.f32.mrb[0].mxu0
        %v5579 = vadd.f32 %v5466, %v5578
        %5580 = vmatprep.mubr.f32.mxu0 0.0
        %5581 = vmatmul.mubr.f32.gmra.mrb[0].mxu0 %v5481
        %v5582 = vpop.f32.mrb[0].mxu0
        %v5583 = vadd.f32 %v5462, %v5582
        %v5584 = vpop.f32.mrb[0].mxu0
        %v5585 = vadd.f32 %v5466, %v5584
        %5586 = vmatprep.mubr.f32.mxu0 0.0
        %5587 = vmatmul.mubr.f32.gmra.mrb[0].mxu0 %v5484
        %v5588 = vpop.f32.mrb[0].mxu0
        %v5589 = vadd.f32 %v5462, %v5588
        %v5590 = vpop.f32.mrb[0].mxu0
        %v5591 = vadd.f32 %v5466, %v5590
        %5592 = vmatprep.mubr.f32.mxu0 0.0
        %5593 = vmatmul.mubr.f32.gmra.mrb[0].mxu0 %v5487
        %v5594 = vpop.f32.mrb[0].mxu0
        %v5595 = vadd.f32 %v5462, %v5594
        %v5596 = vpop.f32.mrb[0].mxu0
        %v5597 = vadd.f32 %v5466, %v5596
        %5598 = vmatprep.mubr.f32.mxu0 0.0
        %5599 = vmatmul.mubr.f32.gmra.mrb[0].mxu0 %v5490
        %v5600 = vpop.f32.mrb[0].mxu0
        %v5601 = vadd.f32 %v5462, %v5600
        %v5602 = vpop.f32.mrb[0].mxu0
        %v5603 = vadd.f32 %v5466, %v5602
        %5604 = vdwg.mxu0
        %v5605 = vmax.f32 %v5559, 0.0
        %v5606 = vmax.f32 %v5561, 0.0
        %v5607 = vmax.f32 %v5565, 0.0
        %v5608 = vmax.f32 %v5567, 0.0
        %v5609 = vmax.f32 %v5571, 0.0
        %v5610 = vmax.f32 %v5573, 0.0
        %v5611 = vmax.f32 %v5577, 0.0
        %v5612 = vmax.f32 %v5579, 0.0
        %v5613 = vmax.f32 %v5583, 0.0
        %v5614 = vmax.f32 %v5585, 0.0
        %v5615 = vmax.f32 %v5589, 0.0
        %v5616 = vmax.f32 %v5591, 0.0
        %v5617 = vmax.f32 %v5595, 0.0
        %v5618 = vmax.f32 %v5597, 0.0
        %v5619 = vmax.f32 %v5601, 0.0
        %v5620 = vmax.f32 %v5603, 0.0
        %v5621 = vlaneseq
        %v5622 = vshrl.u32 %v5621, 7
        %v5623 = vsub.s32 1, %v5622
        %v5624 = vrot.slane %v5399, %v5623
        %v5625 = vlaneseq
        %v5626 = vshrl.u32 %v5625, 7
        %v5627 = vsub.s32 5, %v5626
        %v5628 = vrot.slane %v5399, %v5627
        %v5631 = vlaneseq
        %v5632 = vshrl.u32 %v5631, 7
        %v5633 = vsub.s32 1, %v5632
        %v5634 = vrot.slane %v5624, %v5633
        %v5635 = vlaneseq
        %v5636 = vshrl.u32 %v5635, 7
        %v5637 = vsub.s32 1, %v5636
        %v5638 = vrot.slane %v5628, %v5637
        %v5639 = vmul.f32 %v5605, %v5634
        %v5640 = vmul.f32 %v5606, %v5638
        %v5641 = vmul.f32 %v5607, %v5634
        %v5642 = vmul.f32 %v5608, %v5638
        %v5643 = vmul.f32 %v5609, %v5634
        %v5644 = vmul.f32 %v5610, %v5638
        %v5645 = vmul.f32 %v5611, %v5634
        %v5646 = vmul.f32 %v5612, %v5638
        %v5647 = vmul.f32 %v5613, %v5634
        %v5648 = vmul.f32 %v5614, %v5638
        %v5649 = vmul.f32 %v5615, %v5634
        %v5650 = vmul.f32 %v5616, %v5638
        %v5651 = vmul.f32 %v5617, %v5634
        %v5652 = vmul.f32 %v5618, %v5638
        %v5653 = vmul.f32 %v5619, %v5634
        %v5654 = vmul.f32 %v5620, %v5638
        %v5655 = vlaneseq
        %v5656 = vshrl.u32 %v5655, 7
        %v5657 = vsub.s32 2, %v5656
        %v5658 = vrot.slane %v5399, %v5657
        %v5659 = vlaneseq
        %v5660 = vshrl.u32 %v5659, 7
        %v5661 = vsub.s32 6, %v5660
        %v5662 = vrot.slane %v5399, %v5661
        %v5665 = vlaneseq
        %v5666 = vshrl.u32 %v5665, 7
        %v5667 = vsub.s32 2, %v5666
        %v5668 = vrot.slane %v5658, %v5667
        %v5669 = vlaneseq
        %v5670 = vshrl.u32 %v5669, 7
        %v5671 = vsub.s32 2, %v5670
        %v5672 = vrot.slane %v5662, %v5671
        %v5673 = vadd.f32 %v5639, %v5668
        %v5674 = vadd.f32 %v5640, %v5672
        %v5675 = vadd.f32 %v5641, %v5668
        %v5676 = vadd.f32 %v5642, %v5672
        %v5677 = vadd.f32 %v5643, %v5668
        %v5678 = vadd.f32 %v5644, %v5672
        %v5679 = vadd.f32 %v5645, %v5668
        %v5680 = vadd.f32 %v5646, %v5672
        %v5681 = vadd.f32 %v5647, %v5668
        %v5682 = vadd.f32 %v5648, %v5672
        %v5683 = vadd.f32 %v5649, %v5668
        %v5684 = vadd.f32 %v5650, %v5672
        %v5685 = vadd.f32 %v5651, %v5668
        %v5686 = vadd.f32 %v5652, %v5672
        %v5687 = vadd.f32 %v5653, %v5668
        %v5688 = vadd.f32 %v5654, %v5672
        %5689 = vst [vmem:[%s595] sm:$0xff] %v5673
        %5690 = vst.msk [vmem:[%s595 + $0x8] sm:$0xff] %vm5467, %v5674
        %5691 = vst [vmem:[%s595 + $0x10] sm:$0xff] %v5675
        %5692 = vst.msk [vmem:[%s595 + $0x18] sm:$0xff] %vm5467, %v5676
        %5693 = vst [vmem:[%s595 + $0x20] sm:$0xff] %v5677
        %5694 = vst.msk [vmem:[%s595 + $0x28] sm:$0xff] %vm5467, %v5678
        %5695 = vst [vmem:[%s595 + $0x30] sm:$0xff] %v5679
        %5696 = vst.msk [vmem:[%s595 + $0x38] sm:$0xff] %vm5467, %v5680
        %5697 = vst [vmem:[%s595 + $0x40] sm:$0xff] %v5681
        %5698 = vst.msk [vmem:[%s595 + $0x48] sm:$0xff] %vm5467, %v5682
        %5699 = vst [vmem:[%s595 + $0x50] sm:$0xff] %v5683
        %5700 = vst.msk [vmem:[%s595 + $0x58] sm:$0xff] %vm5467, %v5684
        %5701 = vst [vmem:[%s595 + $0x60] sm:$0xff] %v5685
        %5702 = vst.msk [vmem:[%s595 + $0x68] sm:$0xff] %vm5467, %v5686
        %5703 = vst [vmem:[%s595 + $0x70] sm:$0xff] %v5687
        %5704 = vst.msk [vmem:[%s595 + $0x78] sm:$0xff] %vm5467, %v5688
        %5705 = vrot.lane.b32.xlu0 %v629, 32
        %v5706 = vpop.permute.xlu0 %5705
        %5707 = vrot.lane.b32.xlu0 %v630, 32
        %v5708 = vpop.permute.xlu0 %5707
        %5709 = vrot.lane.b32.xlu0 %v631, 32
        %v5710 = vpop.permute.xlu0 %5709
        %5711 = vrot.lane.b32.xlu0 %v632, 32
        %v5712 = vpop.permute.xlu0 %5711
        %5713 = vrot.lane.b32.xlu0 %v633, 32
        %v5714 = vpop.permute.xlu0 %5713
        %5715 = vrot.lane.b32.xlu0 %v634, 32
        %v5716 = vpop.permute.xlu0 %5715
        %5717 = vrot.lane.b32.xlu0 %v635, 32
        %v5718 = vpop.permute.xlu0 %5717
        %5719 = vrot.lane.b32.xlu0 %v636, 32
        %v5720 = vpop.permute.xlu0 %5719
        %vm5729 = vcmask 1047808
        %5730 = vst.msk [vmem:[%s595 + $0x8] sm:$0xff] %vm5729, %v5706
        %5731 = vst.msk [vmem:[%s595 + $0x18] sm:$0xff] %vm5729, %v5708
        %5732 = vst.msk [vmem:[%s595 + $0x28] sm:$0xff] %vm5729, %v5710
        %5733 = vst.msk [vmem:[%s595 + $0x38] sm:$0xff] %vm5729, %v5712
        %5734 = vst.msk [vmem:[%s595 + $0x48] sm:$0xff] %vm5729, %v5714
        %5735 = vst.msk [vmem:[%s595 + $0x58] sm:$0xff] %vm5729, %v5716
        %5736 = vst.msk [vmem:[%s595 + $0x68] sm:$0xff] %vm5729, %v5718
        %5737 = vst.msk [vmem:[%s595 + $0x78] sm:$0xff] %vm5729, %v5720
        %s5738 = sand.u32 %s445, 1
        %s5739 = scalar_lea.sflag [#allocation6], %s5738
        %s5740 = sand.u32 %s445, 1
        %s5741 = smul.addr %s5740, 128
        %s5742 = scalar_lea.vmem [#allocation5], %s5741
        // Predicated region
        $region97: #{tpu_custom_call.1} parent=95 // pred_check
          %p5743 = pneg %p455
        $region98: #{tpu_custom_call.1} parent=95 // pred_check_branch
          %5745 = sbr.rel (%p5743) target = $region100
        $region99: #{tpu_custom_call.1} parent=95 // pred_region
          %s5747 = ssub.s32 2048, 2048
          %5748 = vsyncadd %s5739, %s5747
          %s5749 = smul.addr %s33, 16
          %s5750 = smul.addr %s5749, 128
          %s5751 = scalar_lea.hbm %s19, %s5750
          %s5752 = sshll.u32 %s5742, 4
          %s5753 = int_to_ptr.vmem [resolvable:$true] %s5752
          %5758 = dma.vmem_to_hbm [thread:$0]  %s5753, 2048, %s5751, %s5739, 256, 256, 16
        $region100: #{tpu_custom_call.1} parent=95 // pred_fallthru
          _
      $region96: #{tpu_custom_call.1} parent=5 // pred_fallthru
        _
      %p5759 = scmp.le.s32.totalorder 2, %s28
      // Predicated region
      $region101: #{tpu_custom_call.1} parent=5 // pred_check
        %p5760 = pneg %p5759
      $region102: #{tpu_custom_call.1} parent=5 // pred_check_branch
        %5762 = sbr.rel (%p5760) target = $region104
      $region103: #{tpu_custom_call.1} parent=5 // pred_region
        %s5763 = ssub.s32 %s28, 2
        // Predicated region
        $region105: #{tpu_custom_call.1} parent=103 // pred_check
          %p5764 = pneg %p461
        $region106: #{tpu_custom_call.1} parent=103 // pred_check_branch
          %5766 = sbr.rel (%p5764) target = $region108
        $region107: #{tpu_custom_call.1} parent=103 // pred_region
          %s5767 = sand.u32 %s446, 1
          %s5768 = scalar_lea.sflag [#allocation6], %s5767
          %s5769 = sand.u32 %s446, 1
          %s5770 = smul.addr %s5769, 128
          %s5771 = scalar_lea.vmem [#allocation5], %s5770
          %5772 = dma.done %s5768, 2048
        $region108: #{tpu_custom_call.1} parent=103 // pred_fallthru
          _
      $region104: #{tpu_custom_call.1} parent=5 // pred_fallthru
        _
    $region6: #{tpu_custom_call.1} parent=1 // loop_footer
      %s32 = sadd.s32 1, %s28
    $region7: #{tpu_custom_call.1} parent=1 // loop_footer_branch
      %27 = sbr.rel target = $region3
    $region8: #{tpu_custom_call.1} parent=1 // loop_exit
      _
    %5773 = vsyncpa [#allocation6], 1
    %s5774 = scalar_lea.sflag [#allocation6], 1
    %5775 = vsyncpa %s5774, 1

</llo_original>
